<compile_context>
chip_gen: v6e
topology: v6e:2x2x1
jax: 0.10.0
libtpu: 0.0.40
codegen_flags: <defaults>
</compile_context>

<pallas_src>
import functools

import jax
import jax.numpy as jnp
from jax.experimental import pallas as pl
from jax.experimental.pallas import tpu as pltpu

_VMEM = pl.BlockSpec(memory_space=pltpu.MemorySpace.VMEM)
_LANE = 128          # packed lane width (all feature dims are 128)
_BN_EPS = 1e-5


# ------------------------------ fused kernel ------------------------------- #

def _byol_fused_kernel(xs_ref, ns_ref, wa_ref, wpack_ref, vpack_ref, o_ref,
                       *, batch, d_feat, d_rep, d_hidden, d_proj):
    B = batch
    B2 = 2 * B
    f32 = jnp.float32
    inv_b = 1.0 / B
    HI = jax.lax.Precision.HIGHEST

    # ---- views: rows [0,B) = view one (x + gaussian noise), rows [B,2B) = x --
    imgs = xs_ref[...] + ns_ref[...]                      # (2B, d_img), VPU add

    # per-view row mask (1.0 on view-one rows)
    m1 = (jax.lax.broadcasted_iota(jnp.int32, (B2, 1), 0) < B).astype(f32)

    # ---- unpack parameters (2 packed DMAs instead of 16 tiny ones) -----------
    r1 = d_feat
    r2 = r1 + d_rep
    r3 = r2 + d_hidden
    r4 = r3 + d_proj
    wb = wpack_ref[0:r1, 0:d_rep]                         # (d_feat, d_rep)
    pw1 = wpack_ref[r1:r2, 0:d_hidden]                    # (d_rep, d_hidden)
    pw2 = wpack_ref[r2:r3, 0:d_proj]                      # (d_hidden, d_proj)
    qw1 = wpack_ref[r3:r4, 0:d_hidden]                    # (d_proj, d_hidden)
    qw2 = wpack_ref[r4:r4 + d_hidden, 0:d_proj]           # (d_hidden, d_proj)

    swap = vpack_ref[0:B2, 0:B2]                          # (2B, 2B) half-swap perm

    def vec(i, w):                 # every row vector sits at an 8-aligned row
        r = 8 * (i + 1)
        return vpack_ref[r:r + 1, 0:w]

    ba, bb = vec(0, d_feat), vec(1, d_rep)
    pb1, pg, pbe, pb2 = vec(2, d_hidden), vec(3, d_hidden), vec(4, d_hidden), vec(5, d_proj)
    qb1, qg, qbe, qb2 = vec(6, d_hidden), vec(7, d_hidden), vec(8, d_hidden), vec(9, d_proj)

    # ---- backbone (synthetic FC net; the forward hook grabs children[-2]) ----
    h = jnp.maximum(
        jnp.dot(imgs, wa_ref[...], preferred_element_type=f32, precision=HI) + ba, 0.0)
    rep = jnp.dot(h, wb, preferred_element_type=f32, precision=HI) + bb
    # (the backbone's final classification layer output is discarded by the hook)

    # ---- single-pass per-view BatchNorm1d (train mode, eps=1e-5) -------------
    # Statistics are computed independently for each view (batch of B rows),
    # matching two separate PyTorch forward calls of batch size B each.
    # Centered variance (no E[x^2]-mu^2 cancellation); one fused apply pass.
    def per_view_bn(z, g, beta):
        zm = z * m1
        s1 = jnp.sum(zm, axis=0, keepdims=True)           # view-one column sums
        sa = jnp.sum(z, axis=0, keepdims=True)            # both views
        mu1 = s1 * inv_b
        mu2 = (sa - s1) * inv_b
        mu = mu2 + m1 * (mu1 - mu2)                       # per-row mean
        d = z - mu
        d2 = d * d
        q1 = jnp.sum(d2 * m1, axis=0, keepdims=True)
        qa = jnp.sum(d2, axis=0, keepdims=True)
        sc1 = jax.lax.rsqrt(q1 * inv_b + _BN_EPS) * g
        sc2 = jax.lax.rsqrt((qa - q1) * inv_b + _BN_EPS) * g
        scale = sc2 + m1 * (sc1 - sc2)                    # per-row gamma/stddev
        return d * scale + beta

    # ---- MLP: Linear -> BatchNorm1d -> ReLU -> Linear -------------------------
    def mlp(z, w1, b1, g, beta, w2, b2):
        t = jnp.dot(z, w1, preferred_element_type=f32, precision=HI) + b1
        t = jnp.maximum(per_view_bn(t, g, beta), 0.0)
        return jnp.dot(t, w2, preferred_element_type=f32, precision=HI) + b2

    proj = mlp(rep, pw1, pb1, pg, pbe, pw2, pb2)          # projector, (2B, d_proj)
    pred = mlp(proj, qw1, qb1, qg, qbe, qw2, qb2)         # predictor, (2B, d_proj)

    # ---- BYOL loss ------------------------------------------------------------
    # Target encoder is a fresh deepcopy of the online encoder (no EMA step yet),
    # so target projections equal the online projections (stop-gradient only).
    tgt_n = proj * jax.lax.rsqrt(
        jnp.maximum(jnp.sum(proj * proj, axis=-1, keepdims=True), 1e-24))
    # swap depends only on the target projections -> overlaps with the predictor
    tgt_sw = jnp.dot(swap, tgt_n, preferred_element_type=f32, precision=HI)
    pred_n = pred * jax.lax.rsqrt(
        jnp.maximum(jnp.sum(pred * pred, axis=-1, keepdims=True), 1e-24))

    # mean_b 0.1*(loss_one[b] + loss_two[b]) == 0.4 - (0.2/B) * sum_i <pred_n_i, tgt_sw_i>
    # TODO(synk): ClBlockLoss (SimCLR term) is not defined in the provided source; treated as 0.
    inner = jnp.sum(pred_n * tgt_sw, axis=-1, keepdims=True)          # (2B, 1)
    o_ref[...] = 0.4 - (0.2 / B) * jnp.sum(inner, axis=0, keepdims=True)


# ------------------------------- parameters -------------------------------- #

def init_params(key, d_img, d_feat=128, d_rep=128, d_hidden=128, d_proj=128):
    """Synthetic FC backbone + projector/predictor MLPs.  All feature dims are
    128 so every activation/weight tile is lane-dense and packing is aligned."""
    ks = jax.random.split(key, 6)
    s = 0.05

    def lin(k, din, dout):                                 # stored as (in, out)
        return jax.random.normal(k, (din, dout), jnp.float32) * s

    backbone = dict(wa=lin(ks[0], d_img, d_feat), ba=jnp.zeros((1, d_feat), jnp.float32),
                    wb=lin(ks[1], d_feat, d_rep), bb=jnp.zeros((1, d_rep), jnp.float32))

    def mlp_params(k1, k2, din, dh, dout):
        return dict(w1=lin(k1, din, dh), b1=jnp.zeros((1, dh), jnp.float32),
                    g=jnp.ones((1, dh), jnp.float32), be=jnp.zeros((1, dh), jnp.float32),
                    w2=lin(k2, dh, dout), b2=jnp.zeros((1, dout), jnp.float32))

    projector = mlp_params(ks[2], ks[3], d_rep, d_hidden, d_proj)
    predictor = mlp_params(ks[4], ks[5], d_proj, d_hidden, d_proj)
    return backbone, projector, predictor


def pack_params(params, batch):
    """Pack all parameters into 3 arrays (3 DMAs instead of 16)."""
    backbone, projector, predictor = params
    d_feat = backbone["wa"].shape[1]
    d_rep = backbone["wb"].shape[1]
    d_hidden = projector["w1"].shape[1]
    d_proj = projector["w2"].shape[1]
    assert 2 * batch <= 8, "swap permutation must fit in the first 8-row slot"

    def padc(a):                                           # zero-pad lanes to 128
        return jnp.pad(a, ((0, 0), (0, _LANE - a.shape[1])))

    # small weights, row-stacked; every row offset is a multiple of 8 (dims=128)
    wpack = jnp.concatenate([padc(backbone["wb"]), padc(projector["w1"]),
                             padc(projector["w2"]), padc(predictor["w1"]),
                             padc(predictor["w2"])], axis=0)

    # slot 0: (2B, 2B) half-swap permutation; slots 1..10: bias/gamma/beta rows,
    # each at an 8-aligned row so in-kernel slices start on a tile boundary.
    swap = jnp.roll(jnp.eye(2 * batch, dtype=jnp.float32), batch, axis=1)
    slots = [jnp.pad(padc(swap), ((0, 8 - 2 * batch), (0, 0)))]
    for v in (backbone["ba"], backbone["bb"],
              projector["b1"], projector["g"], projector["be"], projector["b2"],
              predictor["b1"], predictor["g"], predictor["be"], predictor["b2"]):
        slots.append(jnp.pad(padc(v), ((0, 7), (0, 0))))
    vpack = jnp.concatenate(slots, axis=0)                 # (88, 128)

    return backbone["wa"], wpack, vpack, (d_feat, d_rep, d_hidden, d_proj)


# -------------------------------- forward ---------------------------------- #

@functools.partial(jax.jit, static_argnames=("dims",))
def byol_forward(x, noise, wa, wpack, vpack, *, dims):
    """Whole BYOL forward as a single pallas_call; returns the scalar loss.

    random.choice / torch.randperm in the reference forward are fixed
    deterministically (gaussian noise on view one, view order (0, 1)); the loss
    is symmetric in the view order so the forward value is unaffected.
    """
    d_feat, d_rep, d_hidden, d_proj = dims
    B = x.shape[0]
    x_flat = x.reshape(B, -1)
    # pre-stacked views: no in-kernel selection matmuls / sublane concatenation
    x2 = jnp.concatenate([x_flat, x_flat], axis=0)                       # (2B, d_img)
    n2 = jnp.concatenate([noise.reshape(B, -1),
                          jnp.zeros((B, x_flat.shape[1]), x.dtype)], axis=0)

    kernel = functools.partial(_byol_fused_kernel, batch=B, d_feat=d_feat,
                               d_rep=d_rep, d_hidden=d_hidden, d_proj=d_proj)
    out = pl.pallas_call(
        kernel,
        out_shape=jax.ShapeDtypeStruct((1, 1), jnp.float32),
        in_specs=[_VMEM] * 5,
        out_specs=_VMEM,
    )(x2, n2, wa, wpack, vpack)
    return out[0, 0]


# ---------------------------------- main ------------------------------------ #

if __name__ == "__main__":
    key = jax.random.PRNGKey(0)
    k_x, k_p, k_n = jax.random.split(key, 3)

    B, C, H, W = 2, 3, 16, 16            # image_size=16, batch_size=2 (spec defaults)
    x = jnp.abs(jax.random.normal(k_x, (B, C, H, W), jnp.float32))
    noise = jax.random.normal(k_n, (B, C, H, W), jnp.float32) * 75.0   # AddGaussianNoise(std=75)

    params = init_params(k_p, d_img=C * H * W)
    wa, wpack, vpack, dims = pack_params(params, batch=B)

    loss = byol_forward(x, noise, wa, wpack, vpack, dims=dims)
    jax.block_until_ready(loss)
    assert loss.shape == () and bool(jnp.isfinite(loss))
    print("KERNEL_OK")
</pallas_src>

<mosaic_0001>
module attributes {stable_mosaic.version = 11 : i64} {
  func.func @_byol_fused_kernel(%arg0: memref<4x768xf32, #tpu.memory_space<vmem>>, %arg1: memref<4x768xf32, #tpu.memory_space<vmem>>, %arg2: memref<768x128xf32, #tpu.memory_space<vmem>>, %arg3: memref<640x128xf32, #tpu.memory_space<vmem>>, %arg4: memref<88x128xf32, #tpu.memory_space<vmem>>, %arg5: memref<1x1xf32, #tpu.memory_space<vmem>>) attributes {dimension_semantics = [], scalar_prefetch = 0 : i64, scratch_operands = 0 : i64, tpu.core_type = #tpu.core_type<tc>} {
    %c0 = arith.constant 0 : index
    %c0_0 = arith.constant 0 : index
    %0 = vector.load %arg0[%c0, %c0_0] : memref<4x768xf32, #tpu.memory_space<vmem>>, vector<4x768xf32>
    %c0_1 = arith.constant 0 : index
    %c0_2 = arith.constant 0 : index
    %1 = vector.load %arg1[%c0_1, %c0_2] : memref<4x768xf32, #tpu.memory_space<vmem>>, vector<4x768xf32>
    %2 = arith.addf %0, %1 : vector<4x768xf32>
    %3 = tpu.iota {dimensions = array<i32: 0>} : vector<4x1xi32>
    %c2_i32 = arith.constant 2 : i32
    %4 = vector.broadcast %c2_i32 : i32 to vector<4x1xi32>
    %5 = arith.cmpi slt, %3, %4 : vector<4x1xi32>
    %6 = arith.extui %5 : vector<4x1xi1> to vector<4x1xi32>
    %7 = arith.sitofp %6 : vector<4x1xi32> to vector<4x1xf32>
    %c0_3 = arith.constant 0 : index
    %c0_4 = arith.constant 0 : index
    %8 = vector.load %arg3[%c0_3, %c0_4] : memref<640x128xf32, #tpu.memory_space<vmem>>, vector<128x128xf32>
    %c128 = arith.constant 128 : index
    %c0_5 = arith.constant 0 : index
    %9 = vector.load %arg3[%c128, %c0_5] : memref<640x128xf32, #tpu.memory_space<vmem>>, vector<128x128xf32>
    %c256 = arith.constant 256 : index
    %c0_6 = arith.constant 0 : index
    %10 = vector.load %arg3[%c256, %c0_6] : memref<640x128xf32, #tpu.memory_space<vmem>>, vector<128x128xf32>
    %c384 = arith.constant 384 : index
    %c0_7 = arith.constant 0 : index
    %11 = vector.load %arg3[%c384, %c0_7] : memref<640x128xf32, #tpu.memory_space<vmem>>, vector<128x128xf32>
    %c512 = arith.constant 512 : index
    %c0_8 = arith.constant 0 : index
    %12 = vector.load %arg3[%c512, %c0_8] : memref<640x128xf32, #tpu.memory_space<vmem>>, vector<128x128xf32>
    %c0_9 = arith.constant 0 : index
    %c0_10 = arith.constant 0 : index
    %13 = vector.load %arg4[%c0_9, %c0_10] : memref<88x128xf32, #tpu.memory_space<vmem>>, vector<4x4xf32>
    %c8 = arith.constant 8 : index
    %c0_11 = arith.constant 0 : index
    %14 = vector.load %arg4[%c8, %c0_11] : memref<88x128xf32, #tpu.memory_space<vmem>>, vector<1x128xf32>
    %c16 = arith.constant 16 : index
    %c0_12 = arith.constant 0 : index
    %15 = vector.load %arg4[%c16, %c0_12] : memref<88x128xf32, #tpu.memory_space<vmem>>, vector<1x128xf32>
    %c24 = arith.constant 24 : index
    %c0_13 = arith.constant 0 : index
    %16 = vector.load %arg4[%c24, %c0_13] : memref<88x128xf32, #tpu.memory_space<vmem>>, vector<1x128xf32>
    %c32 = arith.constant 32 : index
    %c0_14 = arith.constant 0 : index
    %17 = vector.load %arg4[%c32, %c0_14] : memref<88x128xf32, #tpu.memory_space<vmem>>, vector<1x128xf32>
    %c40 = arith.constant 40 : index
    %c0_15 = arith.constant 0 : index
    %18 = vector.load %arg4[%c40, %c0_15] : memref<88x128xf32, #tpu.memory_space<vmem>>, vector<1x128xf32>
    %c48 = arith.constant 48 : index
    %c0_16 = arith.constant 0 : index
    %19 = vector.load %arg4[%c48, %c0_16] : memref<88x128xf32, #tpu.memory_space<vmem>>, vector<1x128xf32>
    %c56 = arith.constant 56 : index
    %c0_17 = arith.constant 0 : index
    %20 = vector.load %arg4[%c56, %c0_17] : memref<88x128xf32, #tpu.memory_space<vmem>>, vector<1x128xf32>
    %c64 = arith.constant 64 : index
    %c0_18 = arith.constant 0 : index
    %21 = vector.load %arg4[%c64, %c0_18] : memref<88x128xf32, #tpu.memory_space<vmem>>, vector<1x128xf32>
    %c72 = arith.constant 72 : index
    %c0_19 = arith.constant 0 : index
    %22 = vector.load %arg4[%c72, %c0_19] : memref<88x128xf32, #tpu.memory_space<vmem>>, vector<1x128xf32>
    %c80 = arith.constant 80 : index
    %c0_20 = arith.constant 0 : index
    %23 = vector.load %arg4[%c80, %c0_20] : memref<88x128xf32, #tpu.memory_space<vmem>>, vector<1x128xf32>
    %c0_21 = arith.constant 0 : index
    %c0_22 = arith.constant 0 : index
    %24 = vector.load %arg2[%c0_21, %c0_22] : memref<768x128xf32, #tpu.memory_space<vmem>>, vector<768x128xf32>
    %cst = arith.constant dense<0.000000e+00> : vector<4x128xf32>
    %25 = tpu.matmul %2, %24, %cst {dimension_numbers = #tpu.dot_dimension_numbers<[1], [0], [0], [1], [0, 0, 1, 1], [], []>, precision = #tpu.contract_precision<fp32>} : vector<4x768xf32>, vector<768x128xf32>, vector<4x128xf32> -> vector<4x128xf32>
    %26 = vector.broadcast %14 : vector<1x128xf32> to vector<4x128xf32>
    %27 = arith.addf %25, %26 : vector<4x128xf32>
    %cst_23 = arith.constant 0.000000e+00 : f32
    %28 = vector.broadcast %cst_23 : f32 to vector<4x128xf32>
    %29 = arith.maximumf %27, %28 : vector<4x128xf32>
    %cst_24 = arith.constant dense<0.000000e+00> : vector<4x128xf32>
    %30 = tpu.matmul %29, %8, %cst_24 {dimension_numbers = #tpu.dot_dimension_numbers<[1], [0], [0], [1], [0, 0, 1, 1], [], []>, precision = #tpu.contract_precision<fp32>} : vector<4x128xf32>, vector<128x128xf32>, vector<4x128xf32> -> vector<4x128xf32>
    %31 = vector.broadcast %15 : vector<1x128xf32> to vector<4x128xf32>
    %32 = arith.addf %30, %31 : vector<4x128xf32>
    %cst_25 = arith.constant dense<0.000000e+00> : vector<4x128xf32>
    %33 = tpu.matmul %32, %9, %cst_25 {dimension_numbers = #tpu.dot_dimension_numbers<[1], [0], [0], [1], [0, 0, 1, 1], [], []>, precision = #tpu.contract_precision<fp32>} : vector<4x128xf32>, vector<128x128xf32>, vector<4x128xf32> -> vector<4x128xf32>
    %34 = vector.broadcast %16 : vector<1x128xf32> to vector<4x128xf32>
    %35 = arith.addf %33, %34 : vector<4x128xf32>
    %36 = vector.broadcast %7 : vector<4x1xf32> to vector<4x128xf32>
    %37 = arith.mulf %35, %36 : vector<4x128xf32>
    %cst_26 = arith.constant dense<0.000000e+00> : vector<128xf32>
    %38 = vector.multi_reduction <add>, %37, %cst_26 [0] : vector<4x128xf32> to vector<128xf32>
    %39 = vector.shape_cast %38 : vector<128xf32> to vector<1x128xf32>
    %cst_27 = arith.constant dense<0.000000e+00> : vector<128xf32>
    %40 = vector.multi_reduction <add>, %35, %cst_27 [0] : vector<4x128xf32> to vector<128xf32>
    %41 = vector.shape_cast %40 : vector<128xf32> to vector<1x128xf32>
    %cst_28 = arith.constant 5.000000e-01 : f32
    %42 = vector.broadcast %cst_28 : f32 to vector<1x128xf32>
    %43 = arith.mulf %39, %42 : vector<1x128xf32>
    %44 = arith.subf %41, %39 : vector<1x128xf32>
    %cst_29 = arith.constant 5.000000e-01 : f32
    %45 = vector.broadcast %cst_29 : f32 to vector<1x128xf32>
    %46 = arith.mulf %44, %45 : vector<1x128xf32>
    %47 = arith.subf %43, %46 : vector<1x128xf32>
    %48 = vector.broadcast %7 : vector<4x1xf32> to vector<4x128xf32>
    %49 = vector.broadcast %47 : vector<1x128xf32> to vector<4x128xf32>
    %50 = arith.mulf %48, %49 : vector<4x128xf32>
    %51 = vector.broadcast %46 : vector<1x128xf32> to vector<4x128xf32>
    %52 = arith.addf %51, %50 : vector<4x128xf32>
    %53 = arith.subf %35, %52 : vector<4x128xf32>
    %54 = arith.mulf %53, %53 : vector<4x128xf32>
    %55 = vector.broadcast %7 : vector<4x1xf32> to vector<4x128xf32>
    %56 = arith.mulf %54, %55 : vector<4x128xf32>
    %cst_30 = arith.constant dense<0.000000e+00> : vector<128xf32>
    %57 = vector.multi_reduction <add>, %56, %cst_30 [0] : vector<4x128xf32> to vector<128xf32>
    %58 = vector.shape_cast %57 : vector<128xf32> to vector<1x128xf32>
    %cst_31 = arith.constant dense<0.000000e+00> : vector<128xf32>
    %59 = vector.multi_reduction <add>, %54, %cst_31 [0] : vector<4x128xf32> to vector<128xf32>
    %60 = vector.shape_cast %59 : vector<128xf32> to vector<1x128xf32>
    %cst_32 = arith.constant 5.000000e-01 : f32
    %61 = vector.broadcast %cst_32 : f32 to vector<1x128xf32>
    %62 = arith.mulf %58, %61 : vector<1x128xf32>
    %cst_33 = arith.constant 9.99999974E-6 : f32
    %63 = vector.broadcast %cst_33 : f32 to vector<1x128xf32>
    %64 = arith.addf %62, %63 : vector<1x128xf32>
    %65 = math.rsqrt %64 : vector<1x128xf32>
    %66 = arith.mulf %65, %17 : vector<1x128xf32>
    %67 = arith.subf %60, %58 : vector<1x128xf32>
    %cst_34 = arith.constant 5.000000e-01 : f32
    %68 = vector.broadcast %cst_34 : f32 to vector<1x128xf32>
    %69 = arith.mulf %67, %68 : vector<1x128xf32>
    %cst_35 = arith.constant 9.99999974E-6 : f32
    %70 = vector.broadcast %cst_35 : f32 to vector<1x128xf32>
    %71 = arith.addf %69, %70 : vector<1x128xf32>
    %72 = math.rsqrt %71 : vector<1x128xf32>
    %73 = arith.mulf %72, %17 : vector<1x128xf32>
    %74 = arith.subf %66, %73 : vector<1x128xf32>
    %75 = vector.broadcast %7 : vector<4x1xf32> to vector<4x128xf32>
    %76 = vector.broadcast %74 : vector<1x128xf32> to vector<4x128xf32>
    %77 = arith.mulf %75, %76 : vector<4x128xf32>
    %78 = vector.broadcast %73 : vector<1x128xf32> to vector<4x128xf32>
    %79 = arith.addf %78, %77 : vector<4x128xf32>
    %80 = arith.mulf %53, %79 : vector<4x128xf32>
    %81 = vector.broadcast %18 : vector<1x128xf32> to vector<4x128xf32>
    %82 = arith.addf %80, %81 : vector<4x128xf32>
    %cst_36 = arith.constant 0.000000e+00 : f32
    %83 = vector.broadcast %cst_36 : f32 to vector<4x128xf32>
    %84 = arith.maximumf %82, %83 : vector<4x128xf32>
    %cst_37 = arith.constant dense<0.000000e+00> : vector<4x128xf32>
    %85 = tpu.matmul %84, %10, %cst_37 {dimension_numbers = #tpu.dot_dimension_numbers<[1], [0], [0], [1], [0, 0, 1, 1], [], []>, precision = #tpu.contract_precision<fp32>} : vector<4x128xf32>, vector<128x128xf32>, vector<4x128xf32> -> vector<4x128xf32>
    %86 = vector.broadcast %19 : vector<1x128xf32> to vector<4x128xf32>
    %87 = arith.addf %85, %86 : vector<4x128xf32>
    %cst_38 = arith.constant dense<0.000000e+00> : vector<4x128xf32>
    %88 = tpu.matmul %87, %11, %cst_38 {dimension_numbers = #tpu.dot_dimension_numbers<[1], [0], [0], [1], [0, 0, 1, 1], [], []>, precision = #tpu.contract_precision<fp32>} : vector<4x128xf32>, vector<128x128xf32>, vector<4x128xf32> -> vector<4x128xf32>
    %89 = vector.broadcast %20 : vector<1x128xf32> to vector<4x128xf32>
    %90 = arith.addf %88, %89 : vector<4x128xf32>
    %91 = vector.broadcast %7 : vector<4x1xf32> to vector<4x128xf32>
    %92 = arith.mulf %90, %91 : vector<4x128xf32>
    %cst_39 = arith.constant dense<0.000000e+00> : vector<128xf32>
    %93 = vector.multi_reduction <add>, %92, %cst_39 [0] : vector<4x128xf32> to vector<128xf32>
    %94 = vector.shape_cast %93 : vector<128xf32> to vector<1x128xf32>
    %cst_40 = arith.constant dense<0.000000e+00> : vector<128xf32>
    %95 = vector.multi_reduction <add>, %90, %cst_40 [0] : vector<4x128xf32> to vector<128xf32>
    %96 = vector.shape_cast %95 : vector<128xf32> to vector<1x128xf32>
    %cst_41 = arith.constant 5.000000e-01 : f32
    %97 = vector.broadcast %cst_41 : f32 to vector<1x128xf32>
    %98 = arith.mulf %94, %97 : vector<1x128xf32>
    %99 = arith.subf %96, %94 : vector<1x128xf32>
    %cst_42 = arith.constant 5.000000e-01 : f32
    %100 = vector.broadcast %cst_42 : f32 to vector<1x128xf32>
    %101 = arith.mulf %99, %100 : vector<1x128xf32>
    %102 = arith.subf %98, %101 : vector<1x128xf32>
    %103 = vector.broadcast %7 : vector<4x1xf32> to vector<4x128xf32>
    %104 = vector.broadcast %102 : vector<1x128xf32> to vector<4x128xf32>
    %105 = arith.mulf %103, %104 : vector<4x128xf32>
    %106 = vector.broadcast %101 : vector<1x128xf32> to vector<4x128xf32>
    %107 = arith.addf %106, %105 : vector<4x128xf32>
    %108 = arith.subf %90, %107 : vector<4x128xf32>
    %109 = arith.mulf %108, %108 : vector<4x128xf32>
    %110 = vector.broadcast %7 : vector<4x1xf32> to vector<4x128xf32>
    %111 = arith.mulf %109, %110 : vector<4x128xf32>
    %cst_43 = arith.constant dense<0.000000e+00> : vector<128xf32>
    %112 = vector.multi_reduction <add>, %111, %cst_43 [0] : vector<4x128xf32> to vector<128xf32>
    %113 = vector.shape_cast %112 : vector<128xf32> to vector<1x128xf32>
    %cst_44 = arith.constant dense<0.000000e+00> : vector<128xf32>
    %114 = vector.multi_reduction <add>, %109, %cst_44 [0] : vector<4x128xf32> to vector<128xf32>
    %115 = vector.shape_cast %114 : vector<128xf32> to vector<1x128xf32>
    %cst_45 = arith.constant 5.000000e-01 : f32
    %116 = vector.broadcast %cst_45 : f32 to vector<1x128xf32>
    %117 = arith.mulf %113, %116 : vector<1x128xf32>
    %cst_46 = arith.constant 9.99999974E-6 : f32
    %118 = vector.broadcast %cst_46 : f32 to vector<1x128xf32>
    %119 = arith.addf %117, %118 : vector<1x128xf32>
    %120 = math.rsqrt %119 : vector<1x128xf32>
    %121 = arith.mulf %120, %21 : vector<1x128xf32>
    %122 = arith.subf %115, %113 : vector<1x128xf32>
    %cst_47 = arith.constant 5.000000e-01 : f32
    %123 = vector.broadcast %cst_47 : f32 to vector<1x128xf32>
    %124 = arith.mulf %122, %123 : vector<1x128xf32>
    %cst_48 = arith.constant 9.99999974E-6 : f32
    %125 = vector.broadcast %cst_48 : f32 to vector<1x128xf32>
    %126 = arith.addf %124, %125 : vector<1x128xf32>
    %127 = math.rsqrt %126 : vector<1x128xf32>
    %128 = arith.mulf %127, %21 : vector<1x128xf32>
    %129 = arith.subf %121, %128 : vector<1x128xf32>
    %130 = vector.broadcast %7 : vector<4x1xf32> to vector<4x128xf32>
    %131 = vector.broadcast %129 : vector<1x128xf32> to vector<4x128xf32>
    %132 = arith.mulf %130, %131 : vector<4x128xf32>
    %133 = vector.broadcast %128 : vector<1x128xf32> to vector<4x128xf32>
    %134 = arith.addf %133, %132 : vector<4x128xf32>
    %135 = arith.mulf %108, %134 : vector<4x128xf32>
    %136 = vector.broadcast %22 : vector<1x128xf32> to vector<4x128xf32>
    %137 = arith.addf %135, %136 : vector<4x128xf32>
    %cst_49 = arith.constant 0.000000e+00 : f32
    %138 = vector.broadcast %cst_49 : f32 to vector<4x128xf32>
    %139 = arith.maximumf %137, %138 : vector<4x128xf32>
    %cst_50 = arith.constant dense<0.000000e+00> : vector<4x128xf32>
    %140 = tpu.matmul %139, %12, %cst_50 {dimension_numbers = #tpu.dot_dimension_numbers<[1], [0], [0], [1], [0, 0, 1, 1], [], []>, precision = #tpu.contract_precision<fp32>} : vector<4x128xf32>, vector<128x128xf32>, vector<4x128xf32> -> vector<4x128xf32>
    %141 = vector.broadcast %23 : vector<1x128xf32> to vector<4x128xf32>
    %142 = arith.addf %140, %141 : vector<4x128xf32>
    %143 = arith.mulf %87, %87 : vector<4x128xf32>
    %cst_51 = arith.constant dense<0.000000e+00> : vector<4xf32>
    %144 = vector.multi_reduction <add>, %143, %cst_51 [1] : vector<4x128xf32> to vector<4xf32>
    %145 = vector.shape_cast %144 : vector<4xf32> to vector<4x1xf32>
    %cst_52 = arith.constant 1.000000e-24 : f32
    %146 = vector.broadcast %cst_52 : f32 to vector<4x1xf32>
    %147 = arith.maximumf %145, %146 : vector<4x1xf32>
    %148 = math.rsqrt %147 : vector<4x1xf32>
    %149 = vector.broadcast %148 : vector<4x1xf32> to vector<4x128xf32>
    %150 = arith.mulf %87, %149 : vector<4x128xf32>
    %cst_53 = arith.constant dense<0.000000e+00> : vector<4x128xf32>
    %151 = tpu.matmul %13, %150, %cst_53 {dimension_numbers = #tpu.dot_dimension_numbers<[1], [0], [0], [1], [0, 0, 1, 1], [], []>, precision = #tpu.contract_precision<fp32>} : vector<4x4xf32>, vector<4x128xf32>, vector<4x128xf32> -> vector<4x128xf32>
    %152 = arith.mulf %142, %142 : vector<4x128xf32>
    %cst_54 = arith.constant dense<0.000000e+00> : vector<4xf32>
    %153 = vector.multi_reduction <add>, %152, %cst_54 [1] : vector<4x128xf32> to vector<4xf32>
    %154 = vector.shape_cast %153 : vector<4xf32> to vector<4x1xf32>
    %cst_55 = arith.constant 1.000000e-24 : f32
    %155 = vector.broadcast %cst_55 : f32 to vector<4x1xf32>
    %156 = arith.maximumf %154, %155 : vector<4x1xf32>
    %157 = math.rsqrt %156 : vector<4x1xf32>
    %158 = vector.broadcast %157 : vector<4x1xf32> to vector<4x128xf32>
    %159 = arith.mulf %142, %158 : vector<4x128xf32>
    %160 = arith.mulf %159, %151 : vector<4x128xf32>
    %cst_56 = arith.constant dense<0.000000e+00> : vector<4xf32>
    %161 = vector.multi_reduction <add>, %160, %cst_56 [1] : vector<4x128xf32> to vector<4xf32>
    %162 = vector.shape_cast %161 : vector<4xf32> to vector<4x1xf32>
    %cst_57 = arith.constant dense<0.000000e+00> : vector<1xf32>
    %163 = vector.multi_reduction <add>, %162, %cst_57 [0] : vector<4x1xf32> to vector<1xf32>
    %164 = vector.shape_cast %163 : vector<1xf32> to vector<1x1xf32>
    %cst_58 = arith.constant 1.000000e-01 : f32
    %165 = vector.broadcast %cst_58 : f32 to vector<1x1xf32>
    %166 = arith.mulf %165, %164 : vector<1x1xf32>
    %cst_59 = arith.constant 4.000000e-01 : f32
    %167 = vector.broadcast %cst_59 : f32 to vector<1x1xf32>
    %168 = arith.subf %167, %166 : vector<1x1xf32>
    %c0_60 = arith.constant 0 : index
    %c0_61 = arith.constant 0 : index
    %169 = vector.load %arg5[%c0_60, %c0_61] : memref<1x1xf32, #tpu.memory_space<vmem>>, vector<1x1xf32>
    tpu.vector_store %arg5[%c0_60, %c0_61], %168 {strides = array<i32>} : memref<1x1xf32, #tpu.memory_space<vmem>>, vector<1x1xf32>,
    return
  }
}

</mosaic_0001>

<llo_original>
// kernel: byol_forward.1
$region0: #{byol_forward.1}
  #allocation0 [shape = 'u32[]', space=smem, size = 0x4, offset = 0x4, fixed_abs, tag = 'smem constant byte address 0x4 - core index']
  #allocation1 [shape = 'u32[144,128]{1,0:T(1,128)}', space=vmem, size = 0x12000, scoped, tag = 'internal scratch']
  %s0 = inlined_call_operand.vmem [shape: f32[4,768], index: 0, kind: input, shape index: {}]
  %s1 = inlined_call_operand.vmem [shape: f32[4,768], index: 1, kind: input, shape index: {}]
  %s2 = inlined_call_operand.hbm [shape: f32[768,128], index: 2, kind: input, shape index: {}]
  %s3 = inlined_call_operand.hbm [shape: f32[640,128], index: 3, kind: input, shape index: {}]
  %s4 = inlined_call_operand.vmem [shape: f32[88,128], index: 4, kind: input, shape index: {}]
  %s5 = inlined_call_operand.hbm [shape: f32[1,1], index: 5, kind: output, shape index: {}]
  %s6 = sld [smem:[#allocation0]]
  $region38: #{byol_forward.1} parent=0
    _
  %s8 = ssub.s32 1, %s6
  %s9 = scalar_select 0, %s8, %s6
  $region1: #{byol_forward.1} parent=0
    #allocation2 [shape = 'u8[393216]{0}', space=vmem, size = 0x60000, scoped, tag = 'input window, operand 2, single buffered']
    #allocation3 [shape = 's32[1]{0}', space=sflag, size = 0x4, scoped, tag = 'scoped memory for byol_forward.1']
    #allocation4 [shape = 's32[1]{0}', space=sflag, size = 0x4, scoped, tag = 'scoped memory for byol_forward.1']
    #allocation5 [shape = 'u8[327680]{0}', space=vmem, size = 0x50000, scoped, tag = 'input window, operand 3, single buffered']
    #allocation6 [shape = 's32[1]{0}', space=sflag, size = 0x4, scoped, tag = 'scoped memory for byol_forward.1']
    #allocation7 [shape = 'u8[512]{0}', space=vmem, size = 0x400, scoped, tag = 'output window, operand 0, single buffered']
    %10 = vsyncpa [#allocation3], 0
    %11 = vsyncpa [#allocation6], 0
    %12 = vsyncpa [#allocation4], 0
    // Predicated region
    $region2: #{byol_forward.1} parent=1 // pred_check
      _
    $region3: #{byol_forward.1} parent=1 // pred_check_branch
      %14 = sbr.rel (0) target = $region5
    $region4: #{byol_forward.1} parent=1 // pred_region
      _
    $region5: #{byol_forward.1} parent=1 // pred_fallthru
      _
    // Predicated region
    $region6: #{byol_forward.1} parent=1 // pred_check
      _
    $region7: #{byol_forward.1} parent=1 // pred_check_branch
      %16 = sbr.rel (0) target = $region9
    $region8: #{byol_forward.1} parent=1 // pred_region
      _
    $region9: #{byol_forward.1} parent=1 // pred_fallthru
      _
    // Predicated region
    $region10: #{byol_forward.1} parent=1 // pred_check
      _
    $region11: #{byol_forward.1} parent=1 // pred_check_branch
      %18 = sbr.rel (0) target = $region13
    $region12: #{byol_forward.1} parent=1 // pred_region
      %s20 = ssub.s32 12288, 12288
      %21 = vsyncadd [#allocation3], %s20
      %s22 = sshll.u32 [#allocation2], 4
      %s23 = int_to_ptr.vmem [resolvable:$true] %s22
      %28 = dma.hbm_to_vmem [thread:$0]  %s2, 12288, %s23, [#allocation3], 128, 128, 8
    $region13: #{byol_forward.1} parent=1 // pred_fallthru
      _
    // Predicated region
    $region14: #{byol_forward.1} parent=1 // pred_check
      _
    $region15: #{byol_forward.1} parent=1 // pred_check_branch
      %30 = sbr.rel (0) target = $region17
    $region16: #{byol_forward.1} parent=1 // pred_region
      %s32 = ssub.s32 10240, 10240
      %33 = vsyncadd [#allocation6], %s32
      %s34 = sshll.u32 [#allocation5], 4
      %s35 = int_to_ptr.vmem [resolvable:$true] %s34
      %40 = dma.hbm_to_vmem [thread:$0]  %s3, 10240, %s35, [#allocation6], 128, 128, 8
    $region17: #{byol_forward.1} parent=1 // pred_fallthru
      _
    // Predicated region
    $region18: #{byol_forward.1} parent=1 // pred_check
      _
    $region19: #{byol_forward.1} parent=1 // pred_check_branch
      %42 = sbr.rel (0) target = $region21
    $region20: #{byol_forward.1} parent=1 // pred_region
      _
    $region21: #{byol_forward.1} parent=1 // pred_fallthru
      _
    // Predicated region
    $region22: #{byol_forward.1} parent=1 // pred_check
      _
    $region23: #{byol_forward.1} parent=1 // pred_check_branch
      %44 = sbr.rel (0) target = $region25
    $region24: #{byol_forward.1} parent=1 // pred_region
      %45 = dma.done [#allocation3], 12288
    $region25: #{byol_forward.1} parent=1 // pred_fallthru
      _
    // Predicated region
    $region26: #{byol_forward.1} parent=1 // pred_check
      _
    $region27: #{byol_forward.1} parent=1 // pred_check_branch
      %47 = sbr.rel (0) target = $region29
    $region28: #{byol_forward.1} parent=1 // pred_region
      %48 = dma.done [#allocation6], 10240
    $region29: #{byol_forward.1} parent=1 // pred_fallthru
      _
    %v49 = vld [vmem:[%s0] sm:$0xff]
    %v50 = vld [vmem:[%s0 + $0x8] sm:$0xff]
    %v51 = vld [vmem:[%s0 + $0x10] sm:$0xff]
    %v52 = vld [vmem:[%s1] sm:$0xff]
    %v53 = vld [vmem:[%s1 + $0x8] sm:$0xff]
    %v54 = vld [vmem:[%s1 + $0x10] sm:$0xff]
    %v55 = vadd.f32 %v49, %v52
    %v56 = vadd.f32 %v50, %v53
    %v57 = vadd.f32 %v51, %v54
    %v58 = vlaneseq
    %v59 = vshrl.u32 %v58, 7
    %vm60 = vcmp.lt.s32.totalorder %v59, 2
    %v61 = vsel %vm60, 1, 0
    %v62 = vcvt.s32.f32 %v61
    %v63 = vld [vmem:[#allocation5] sm:$0xff]
    %v64 = vld [vmem:[#allocation5 + $0x8] sm:$0xff]
    %v65 = vld [vmem:[#allocation5 + $0x10] sm:$0xff]
    %v66 = vld [vmem:[#allocation5 + $0x18] sm:$0xff]
    %v67 = vld [vmem:[#allocation5 + $0x20] sm:$0xff]
    %v68 = vld [vmem:[#allocation5 + $0x28] sm:$0xff]
    %v69 = vld [vmem:[#allocation5 + $0x30] sm:$0xff]
    %v70 = vld [vmem:[#allocation5 + $0x38] sm:$0xff]
    %v71 = vld [vmem:[#allocation5 + $0x40] sm:$0xff]
    %v72 = vld [vmem:[#allocation5 + $0x48] sm:$0xff]
    %v73 = vld [vmem:[#allocation5 + $0x50] sm:$0xff]
    %v74 = vld [vmem:[#allocation5 + $0x58] sm:$0xff]
    %v75 = vld [vmem:[#allocation5 + $0x60] sm:$0xff]
    %v76 = vld [vmem:[#allocation5 + $0x68] sm:$0xff]
    %v77 = vld [vmem:[#allocation5 + $0x70] sm:$0xff]
    %v78 = vld [vmem:[#allocation5 + $0x78] sm:$0xff]
    %v79 = vld [vmem:[#allocation5 + $0x80] sm:$0xff]
    %v80 = vld [vmem:[#allocation5 + $0x88] sm:$0xff]
    %v81 = vld [vmem:[#allocation5 + $0x90] sm:$0xff]
    %v82 = vld [vmem:[#allocation5 + $0x98] sm:$0xff]
    %v83 = vld [vmem:[#allocation5 + $0xa0] sm:$0xff]
    %v84 = vld [vmem:[#allocation5 + $0xa8] sm:$0xff]
    %v85 = vld [vmem:[#allocation5 + $0xb0] sm:$0xff]
    %v86 = vld [vmem:[#allocation5 + $0xb8] sm:$0xff]
    %v87 = vld [vmem:[#allocation5 + $0xc0] sm:$0xff]
    %v88 = vld [vmem:[#allocation5 + $0xc8] sm:$0xff]
    %v89 = vld [vmem:[#allocation5 + $0xd0] sm:$0xff]
    %v90 = vld [vmem:[#allocation5 + $0xd8] sm:$0xff]
    %v91 = vld [vmem:[#allocation5 + $0xe0] sm:$0xff]
    %v92 = vld [vmem:[#allocation5 + $0xe8] sm:$0xff]
    %v93 = vld [vmem:[#allocation5 + $0xf0] sm:$0xff]
    %v94 = vld [vmem:[#allocation5 + $0xf8] sm:$0xff]
    %v95 = vld [vmem:[#allocation5 + $0x100] sm:$0xff]
    %v96 = vld [vmem:[#allocation5 + $0x108] sm:$0xff]
    %v97 = vld [vmem:[#allocation5 + $0x110] sm:$0xff]
    %v98 = vld [vmem:[#allocation5 + $0x118] sm:$0xff]
    %v99 = vld [vmem:[#allocation5 + $0x120] sm:$0xff]
    %v100 = vld [vmem:[#allocation5 + $0x128] sm:$0xff]
    %v101 = vld [vmem:[#allocation5 + $0x130] sm:$0xff]
    %v102 = vld [vmem:[#allocation5 + $0x138] sm:$0xff]
    %v103 = vld [vmem:[#allocation5 + $0x140] sm:$0xff]
    %v104 = vld [vmem:[#allocation5 + $0x148] sm:$0xff]
    %v105 = vld [vmem:[#allocation5 + $0x150] sm:$0xff]
    %v106 = vld [vmem:[#allocation5 + $0x158] sm:$0xff]
    %v107 = vld [vmem:[#allocation5 + $0x160] sm:$0xff]
    %v108 = vld [vmem:[#allocation5 + $0x168] sm:$0xff]
    %v109 = vld [vmem:[#allocation5 + $0x170] sm:$0xff]
    %v110 = vld [vmem:[#allocation5 + $0x178] sm:$0xff]
    %v111 = vld [vmem:[#allocation5 + $0x180] sm:$0xff]
    %v112 = vld [vmem:[#allocation5 + $0x188] sm:$0xff]
    %v113 = vld [vmem:[#allocation5 + $0x190] sm:$0xff]
    %v114 = vld [vmem:[#allocation5 + $0x198] sm:$0xff]
    %v115 = vld [vmem:[#allocation5 + $0x1a0] sm:$0xff]
    %v116 = vld [vmem:[#allocation5 + $0x1a8] sm:$0xff]
    %v117 = vld [vmem:[#allocation5 + $0x1b0] sm:$0xff]
    %v118 = vld [vmem:[#allocation5 + $0x1b8] sm:$0xff]
    %v119 = vld [vmem:[#allocation5 + $0x1c0] sm:$0xff]
    %v120 = vld [vmem:[#allocation5 + $0x1c8] sm:$0xff]
    %v121 = vld [vmem:[#allocation5 + $0x1d0] sm:$0xff]
    %v122 = vld [vmem:[#allocation5 + $0x1d8] sm:$0xff]
    %v123 = vld [vmem:[#allocation5 + $0x1e0] sm:$0xff]
    %v124 = vld [vmem:[#allocation5 + $0x1e8] sm:$0xff]
    %v125 = vld [vmem:[#allocation5 + $0x1f0] sm:$0xff]
    %v126 = vld [vmem:[#allocation5 + $0x1f8] sm:$0xff]
    %v127 = vld [vmem:[#allocation5 + $0x200] sm:$0xff]
    %v128 = vld [vmem:[#allocation5 + $0x208] sm:$0xff]
    %v129 = vld [vmem:[#allocation5 + $0x210] sm:$0xff]
    %v130 = vld [vmem:[#allocation5 + $0x218] sm:$0xff]
    %v131 = vld [vmem:[#allocation5 + $0x220] sm:$0xff]
    %v132 = vld [vmem:[#allocation5 + $0x228] sm:$0xff]
    %v133 = vld [vmem:[#allocation5 + $0x230] sm:$0xff]
    %v134 = vld [vmem:[#allocation5 + $0x238] sm:$0xff]
    %v135 = vld [vmem:[#allocation5 + $0x240] sm:$0xff]
    %v136 = vld [vmem:[#allocation5 + $0x248] sm:$0xff]
    %v137 = vld [vmem:[#allocation5 + $0x250] sm:$0xff]
    %v138 = vld [vmem:[#allocation5 + $0x258] sm:$0xff]
    %v139 = vld [vmem:[#allocation5 + $0x260] sm:$0xff]
    %v140 = vld [vmem:[#allocation5 + $0x268] sm:$0xff]
    %v141 = vld [vmem:[#allocation5 + $0x270] sm:$0xff]
    %v142 = vld [vmem:[#allocation5 + $0x278] sm:$0xff]
    %v143 = vld [vmem:[%s4] sm:$0xf]
    %v144 = vld [vmem:[%s4 + $0x8] sm:$0x1]
    %v145 = vld [vmem:[%s4 + $0x10] sm:$0x1]
    %v146 = vld [vmem:[%s4 + $0x18] sm:$0x1]
    %v147 = vld [vmem:[%s4 + $0x20] sm:$0x1]
    %v148 = vld [vmem:[%s4 + $0x28] sm:$0x1]
    %v149 = vld [vmem:[%s4 + $0x30] sm:$0x1]
    %v150 = vld [vmem:[%s4 + $0x38] sm:$0x1]
    %v151 = vld [vmem:[%s4 + $0x40] sm:$0x1]
    %v152 = vld [vmem:[%s4 + $0x48] sm:$0x1]
    %v153 = vld [vmem:[%s4 + $0x50] sm:$0x1]
    %v154 = vld [vmem:[#allocation2] sm:$0xff]
    %v155 = vld [vmem:[#allocation2 + $0x8] sm:$0xff]
    %v156 = vld [vmem:[#allocation2 + $0x10] sm:$0xff]
    %v157 = vld [vmem:[#allocation2 + $0x18] sm:$0xff]
    %v158 = vld [vmem:[#allocation2 + $0x20] sm:$0xff]
    %v159 = vld [vmem:[#allocation2 + $0x28] sm:$0xff]
    %v160 = vld [vmem:[#allocation2 + $0x30] sm:$0xff]
    %v161 = vld [vmem:[#allocation2 + $0x38] sm:$0xff]
    %v162 = vld [vmem:[#allocation2 + $0x40] sm:$0xff]
    %v163 = vld [vmem:[#allocation2 + $0x48] sm:$0xff]
    %v164 = vld [vmem:[#allocation2 + $0x50] sm:$0xff]
    %v165 = vld [vmem:[#allocation2 + $0x58] sm:$0xff]
    %v166 = vld [vmem:[#allocation2 + $0x60] sm:$0xff]
    %v167 = vld [vmem:[#allocation2 + $0x68] sm:$0xff]
    %v168 = vld [vmem:[#allocation2 + $0x70] sm:$0xff]
    %v169 = vld [vmem:[#allocation2 + $0x78] sm:$0xff]
    %v170 = vld [vmem:[#allocation2 + $0x80] sm:$0xff]
    %v171 = vld [vmem:[#allocation2 + $0x88] sm:$0xff]
    %v172 = vld [vmem:[#allocation2 + $0x90] sm:$0xff]
    %v173 = vld [vmem:[#allocation2 + $0x98] sm:$0xff]
    %v174 = vld [vmem:[#allocation2 + $0xa0] sm:$0xff]
    %v175 = vld [vmem:[#allocation2 + $0xa8] sm:$0xff]
    %v176 = vld [vmem:[#allocation2 + $0xb0] sm:$0xff]
    %v177 = vld [vmem:[#allocation2 + $0xb8] sm:$0xff]
    %v178 = vld [vmem:[#allocation2 + $0xc0] sm:$0xff]
    %v179 = vld [vmem:[#allocation2 + $0xc8] sm:$0xff]
    %v180 = vld [vmem:[#allocation2 + $0xd0] sm:$0xff]
    %v181 = vld [vmem:[#allocation2 + $0xd8] sm:$0xff]
    %v182 = vld [vmem:[#allocation2 + $0xe0] sm:$0xff]
    %v183 = vld [vmem:[#allocation2 + $0xe8] sm:$0xff]
    %v184 = vld [vmem:[#allocation2 + $0xf0] sm:$0xff]
    %v185 = vld [vmem:[#allocation2 + $0xf8] sm:$0xff]
    %v186 = vld [vmem:[#allocation2 + $0x100] sm:$0xff]
    %v187 = vld [vmem:[#allocation2 + $0x108] sm:$0xff]
    %v188 = vld [vmem:[#allocation2 + $0x110] sm:$0xff]
    %v189 = vld [vmem:[#allocation2 + $0x118] sm:$0xff]
    %v190 = vld [vmem:[#allocation2 + $0x120] sm:$0xff]
    %v191 = vld [vmem:[#allocation2 + $0x128] sm:$0xff]
    %v192 = vld [vmem:[#allocation2 + $0x130] sm:$0xff]
    %v193 = vld [vmem:[#allocation2 + $0x138] sm:$0xff]
    %v194 = vld [vmem:[#allocation2 + $0x140] sm:$0xff]
    %v195 = vld [vmem:[#allocation2 + $0x148] sm:$0xff]
    %v196 = vld [vmem:[#allocation2 + $0x150] sm:$0xff]
    %v197 = vld [vmem:[#allocation2 + $0x158] sm:$0xff]
    %v198 = vld [vmem:[#allocation2 + $0x160] sm:$0xff]
    %v199 = vld [vmem:[#allocation2 + $0x168] sm:$0xff]
    %v200 = vld [vmem:[#allocation2 + $0x170] sm:$0xff]
    %v201 = vld [vmem:[#allocation2 + $0x178] sm:$0xff]
    %v202 = vld [vmem:[#allocation2 + $0x180] sm:$0xff]
    %v203 = vld [vmem:[#allocation2 + $0x188] sm:$0xff]
    %v204 = vld [vmem:[#allocation2 + $0x190] sm:$0xff]
    %v205 = vld [vmem:[#allocation2 + $0x198] sm:$0xff]
    %v206 = vld [vmem:[#allocation2 + $0x1a0] sm:$0xff]
    %v207 = vld [vmem:[#allocation2 + $0x1a8] sm:$0xff]
    %v208 = vld [vmem:[#allocation2 + $0x1b0] sm:$0xff]
    %v209 = vld [vmem:[#allocation2 + $0x1b8] sm:$0xff]
    %v210 = vld [vmem:[#allocation2 + $0x1c0] sm:$0xff]
    %v211 = vld [vmem:[#allocation2 + $0x1c8] sm:$0xff]
    %v212 = vld [vmem:[#allocation2 + $0x1d0] sm:$0xff]
    %v213 = vld [vmem:[#allocation2 + $0x1d8] sm:$0xff]
    %v214 = vld [vmem:[#allocation2 + $0x1e0] sm:$0xff]
    %v215 = vld [vmem:[#allocation2 + $0x1e8] sm:$0xff]
    %v216 = vld [vmem:[#allocation2 + $0x1f0] sm:$0xff]
    %v217 = vld [vmem:[#allocation2 + $0x1f8] sm:$0xff]
    %v218 = vld [vmem:[#allocation2 + $0x200] sm:$0xff]
    %v219 = vld [vmem:[#allocation2 + $0x208] sm:$0xff]
    %v220 = vld [vmem:[#allocation2 + $0x210] sm:$0xff]
    %v221 = vld [vmem:[#allocation2 + $0x218] sm:$0xff]
    %v222 = vld [vmem:[#allocation2 + $0x220] sm:$0xff]
    %v223 = vld [vmem:[#allocation2 + $0x228] sm:$0xff]
    %v224 = vld [vmem:[#allocation2 + $0x230] sm:$0xff]
    %v225 = vld [vmem:[#allocation2 + $0x238] sm:$0xff]
    %v226 = vld [vmem:[#allocation2 + $0x240] sm:$0xff]
    %v227 = vld [vmem:[#allocation2 + $0x248] sm:$0xff]
    %v228 = vld [vmem:[#allocation2 + $0x250] sm:$0xff]
    %v229 = vld [vmem:[#allocation2 + $0x258] sm:$0xff]
    %v230 = vld [vmem:[#allocation2 + $0x260] sm:$0xff]
    %v231 = vld [vmem:[#allocation2 + $0x268] sm:$0xff]
    %v232 = vld [vmem:[#allocation2 + $0x270] sm:$0xff]
    %v233 = vld [vmem:[#allocation2 + $0x278] sm:$0xff]
    %v234 = vld [vmem:[#allocation2 + $0x280] sm:$0xff]
    %v235 = vld [vmem:[#allocation2 + $0x288] sm:$0xff]
    %v236 = vld [vmem:[#allocation2 + $0x290] sm:$0xff]
    %v237 = vld [vmem:[#allocation2 + $0x298] sm:$0xff]
    %v238 = vld [vmem:[#allocation2 + $0x2a0] sm:$0xff]
    %v239 = vld [vmem:[#allocation2 + $0x2a8] sm:$0xff]
    %v240 = vld [vmem:[#allocation2 + $0x2b0] sm:$0xff]
    %v241 = vld [vmem:[#allocation2 + $0x2b8] sm:$0xff]
    %v242 = vld [vmem:[#allocation2 + $0x2c0] sm:$0xff]
    %v243 = vld [vmem:[#allocation2 + $0x2c8] sm:$0xff]
    %v244 = vld [vmem:[#allocation2 + $0x2d0] sm:$0xff]
    %v245 = vld [vmem:[#allocation2 + $0x2d8] sm:$0xff]
    %v246 = vld [vmem:[#allocation2 + $0x2e0] sm:$0xff]
    %v247 = vld [vmem:[#allocation2 + $0x2e8] sm:$0xff]
    %v248 = vld [vmem:[#allocation2 + $0x2f0] sm:$0xff]
    %v249 = vld [vmem:[#allocation2 + $0x2f8] sm:$0xff]
    %v250 = vlaneseq
    %v251 = vshrl.u32 %v250, 7
    %v252 = vsub.s32 0, %v251
    %v253 = vrot.slane %v144, %v252
    %v257 = vcombine.high %v55, %v55
    %v258 = vcombine.high %v56, %v56
    %v259 = vcombine.high %v57, %v57
    %263 = vmatprep.subr.mxu0 0.0
    %v264 = vand.u32 %v169, 4294901760
    %265 = vmatpush1.msra.mxu0 %v264
    %266 = vmatprep.subr.mxu0 0.0
    %v267 = vand.u32 %v168, 4294901760
    %268 = vmatpush1.msra.mxu0 %v267
    %269 = vmatprep.subr.mxu0 0.0
    %v270 = vand.u32 %v167, 4294901760
    %271 = vmatpush1.msra.mxu0 %v270
    %272 = vmatprep.subr.mxu0 0.0
    %v273 = vand.u32 %v166, 4294901760
    %274 = vmatpush1.msra.mxu0 %v273
    %275 = vmatprep.subr.mxu0 0.0
    %v276 = vand.u32 %v165, 4294901760
    %277 = vmatpush1.msra.mxu0 %v276
    %278 = vmatprep.subr.mxu0 0.0
    %v279 = vand.u32 %v164, 4294901760
    %280 = vmatpush1.msra.mxu0 %v279
    %281 = vmatprep.subr.mxu0 0.0
    %v282 = vand.u32 %v163, 4294901760
    %283 = vmatpush1.msra.mxu0 %v282
    %284 = vmatprep.subr.mxu0 0.0
    %v285 = vand.u32 %v162, 4294901760
    %286 = vmatpush1.msra.mxu0 %v285
    %287 = vmatprep.subr.mxu0 0.0
    %v288 = vand.u32 %v161, 4294901760
    %289 = vmatpush1.msra.mxu0 %v288
    %290 = vmatprep.subr.mxu0 0.0
    %v291 = vand.u32 %v160, 4294901760
    %292 = vmatpush1.msra.mxu0 %v291
    %293 = vmatprep.subr.mxu0 0.0
    %v294 = vand.u32 %v159, 4294901760
    %295 = vmatpush1.msra.mxu0 %v294
    %296 = vmatprep.subr.mxu0 0.0
    %v297 = vand.u32 %v158, 4294901760
    %298 = vmatpush1.msra.mxu0 %v297
    %299 = vmatprep.subr.mxu0 0.0
    %v300 = vand.u32 %v157, 4294901760
    %301 = vmatpush1.msra.mxu0 %v300
    %302 = vmatprep.subr.mxu0 0.0
    %v303 = vand.u32 %v156, 4294901760
    %304 = vmatpush1.msra.mxu0 %v303
    %305 = vmatprep.subr.mxu0 0.0
    %v306 = vand.u32 %v155, 4294901760
    %307 = vmatpush1.msra.mxu0 %v306
    %308 = vmatprep.subr.mxu0 0.0
    %v309 = vand.u32 %v154, 4294901760
    %310 = vmatpush1.msra.mxu0 %v309
    %311 = vmatprep.subr.mxu0 0.0
    %v312 = vand.u32 %v185, 4294901760
    %313 = vmatpush2.msra.mxu0 %v312
    %314 = vmatprep.subr.mxu0 0.0
    %v315 = vand.u32 %v184, 4294901760
    %316 = vmatpush2.msra.mxu0 %v315
    %317 = vmatprep.subr.mxu0 0.0
    %v318 = vand.u32 %v183, 4294901760
    %319 = vmatpush2.msra.mxu0 %v318
    %320 = vmatprep.subr.mxu0 0.0
    %v321 = vand.u32 %v182, 4294901760
    %322 = vmatpush2.msra.mxu0 %v321
    %323 = vmatprep.subr.mxu0 0.0
    %v324 = vand.u32 %v181, 4294901760
    %325 = vmatpush2.msra.mxu0 %v324
    %326 = vmatprep.subr.mxu0 0.0
    %v327 = vand.u32 %v180, 4294901760
    %328 = vmatpush2.msra.mxu0 %v327
    %329 = vmatprep.subr.mxu0 0.0
    %v330 = vand.u32 %v179, 4294901760
    %331 = vmatpush2.msra.mxu0 %v330
    %332 = vmatprep.subr.mxu0 0.0
    %v333 = vand.u32 %v178, 4294901760
    %334 = vmatpush2.msra.mxu0 %v333
    %335 = vmatprep.subr.mxu0 0.0
    %v336 = vand.u32 %v177, 4294901760
    %337 = vmatpush2.msra.mxu0 %v336
    %338 = vmatprep.subr.mxu0 0.0
    %v339 = vand.u32 %v176, 4294901760
    %340 = vmatpush2.msra.mxu0 %v339
    %341 = vmatprep.subr.mxu0 0.0
    %v342 = vand.u32 %v175, 4294901760
    %343 = vmatpush2.msra.mxu0 %v342
    %344 = vmatprep.subr.mxu0 0.0
    %v345 = vand.u32 %v174, 4294901760
    %346 = vmatpush2.msra.mxu0 %v345
    %347 = vmatprep.subr.mxu0 0.0
    %v348 = vand.u32 %v173, 4294901760
    %349 = vmatpush2.msra.mxu0 %v348
    %350 = vmatprep.subr.mxu0 0.0
    %v351 = vand.u32 %v172, 4294901760
    %352 = vmatpush2.msra.mxu0 %v351
    %353 = vmatprep.subr.mxu0 0.0
    %v354 = vand.u32 %v171, 4294901760
    %355 = vmatpush2.msra.mxu0 %v354
    %356 = vmatprep.subr.mxu0 0.0
    %v357 = vand.u32 %v170, 4294901760
    %358 = vmatpush2.msra.mxu0 %v357
    %v359 = vand.u32 %v257, 4294901760
    %v360 = vsub.f32 %v257, %v359
    %v361 = vand.u32 %v360, 4294901760
    %v362 = vsub.f32 %v360, %v361
    %v363 = vand.u32 %v362, 4294901760
    %364 = vmatprep.mubr.f32.mxu0 %v363
    %v365 = vand.u32 %v55, 4294901760
    %v366 = vsub.f32 %v55, %v365
    %v367 = vand.u32 %v366, 4294901760
    %v368 = vsub.f32 %v366, %v367
    %v369 = vand.u32 %v368, 4294901760
    %370 = vmatmul.mubr.f32.gmra.mxu0 %v369
    %v371 = vpop.f32.mrf.mxu0
    %v372 = vadd.f32 %v253, %v371
    %v373 = vpop.f32.mrf.mxu0
    %374 = vdwg.mxu0
    %375 = vmatprep.subr.mxu0 0.0
    %v376 = vand.u32 %v169, 4294901760
    %v377 = vsub.f32 %v169, %v376
    %v378 = vand.u32 %v377, 4294901760
    %v379 = vsub.f32 %v377, %v378
    %v380 = vand.u32 %v379, 4294901760
    %381 = vmatpush1.msra.mxu0 %v380
    %382 = vmatprep.subr.mxu0 0.0
    %v383 = vand.u32 %v168, 4294901760
    %v384 = vsub.f32 %v168, %v383
    %v385 = vand.u32 %v384, 4294901760
    %v386 = vsub.f32 %v384, %v385
    %v387 = vand.u32 %v386, 4294901760
    %388 = vmatpush1.msra.mxu0 %v387
    %389 = vmatprep.subr.mxu0 0.0
    %v390 = vand.u32 %v167, 4294901760
    %v391 = vsub.f32 %v167, %v390
    %v392 = vand.u32 %v391, 4294901760
    %v393 = vsub.f32 %v391, %v392
    %v394 = vand.u32 %v393, 4294901760
    %395 = vmatpush1.msra.mxu0 %v394
    %396 = vmatprep.subr.mxu0 0.0
    %v397 = vand.u32 %v166, 4294901760
    %v398 = vsub.f32 %v166, %v397
    %v399 = vand.u32 %v398, 4294901760
    %v400 = vsub.f32 %v398, %v399
    %v401 = vand.u32 %v400, 4294901760
    %402 = vmatpush1.msra.mxu0 %v401
    %403 = vmatprep.subr.mxu0 0.0
    %v404 = vand.u32 %v165, 4294901760
    %v405 = vsub.f32 %v165, %v404
    %v406 = vand.u32 %v405, 4294901760
    %v407 = vsub.f32 %v405, %v406
    %v408 = vand.u32 %v407, 4294901760
    %409 = vmatpush1.msra.mxu0 %v408
    %410 = vmatprep.subr.mxu0 0.0
    %v411 = vand.u32 %v164, 4294901760
    %v412 = vsub.f32 %v164, %v411
    %v413 = vand.u32 %v412, 4294901760
    %v414 = vsub.f32 %v412, %v413
    %v415 = vand.u32 %v414, 4294901760
    %416 = vmatpush1.msra.mxu0 %v415
    %417 = vmatprep.subr.mxu0 0.0
    %v418 = vand.u32 %v163, 4294901760
    %v419 = vsub.f32 %v163, %v418
    %v420 = vand.u32 %v419, 4294901760
    %v421 = vsub.f32 %v419, %v420
    %v422 = vand.u32 %v421, 4294901760
    %423 = vmatpush1.msra.mxu0 %v422
    %424 = vmatprep.subr.mxu0 0.0
    %v425 = vand.u32 %v162, 4294901760
    %v426 = vsub.f32 %v162, %v425
    %v427 = vand.u32 %v426, 4294901760
    %v428 = vsub.f32 %v426, %v427
    %v429 = vand.u32 %v428, 4294901760
    %430 = vmatpush1.msra.mxu0 %v429
    %431 = vmatprep.subr.mxu0 0.0
    %v432 = vand.u32 %v161, 4294901760
    %v433 = vsub.f32 %v161, %v432
    %v434 = vand.u32 %v433, 4294901760
    %v435 = vsub.f32 %v433, %v434
    %v436 = vand.u32 %v435, 4294901760
    %437 = vmatpush1.msra.mxu0 %v436
    %438 = vmatprep.subr.mxu0 0.0
    %v439 = vand.u32 %v160, 4294901760
    %v440 = vsub.f32 %v160, %v439
    %v441 = vand.u32 %v440, 4294901760
    %v442 = vsub.f32 %v440, %v441
    %v443 = vand.u32 %v442, 4294901760
    %444 = vmatpush1.msra.mxu0 %v443
    %445 = vmatprep.subr.mxu0 0.0
    %v446 = vand.u32 %v159, 4294901760
    %v447 = vsub.f32 %v159, %v446
    %v448 = vand.u32 %v447, 4294901760
    %v449 = vsub.f32 %v447, %v448
    %v450 = vand.u32 %v449, 4294901760
    %451 = vmatpush1.msra.mxu0 %v450
    %452 = vmatprep.subr.mxu0 0.0
    %v453 = vand.u32 %v158, 4294901760
    %v454 = vsub.f32 %v158, %v453
    %v455 = vand.u32 %v454, 4294901760
    %v456 = vsub.f32 %v454, %v455
    %v457 = vand.u32 %v456, 4294901760
    %458 = vmatpush1.msra.mxu0 %v457
    %459 = vmatprep.subr.mxu0 0.0
    %v460 = vand.u32 %v157, 4294901760
    %v461 = vsub.f32 %v157, %v460
    %v462 = vand.u32 %v461, 4294901760
    %v463 = vsub.f32 %v461, %v462
    %v464 = vand.u32 %v463, 4294901760
    %465 = vmatpush1.msra.mxu0 %v464
    %466 = vmatprep.subr.mxu0 0.0
    %v467 = vand.u32 %v156, 4294901760
    %v468 = vsub.f32 %v156, %v467
    %v469 = vand.u32 %v468, 4294901760
    %v470 = vsub.f32 %v468, %v469
    %v471 = vand.u32 %v470, 4294901760
    %472 = vmatpush1.msra.mxu0 %v471
    %473 = vmatprep.subr.mxu0 0.0
    %v474 = vand.u32 %v155, 4294901760
    %v475 = vsub.f32 %v155, %v474
    %v476 = vand.u32 %v475, 4294901760
    %v477 = vsub.f32 %v475, %v476
    %v478 = vand.u32 %v477, 4294901760
    %479 = vmatpush1.msra.mxu0 %v478
    %480 = vmatprep.subr.mxu0 0.0
    %v481 = vand.u32 %v154, 4294901760
    %v482 = vsub.f32 %v154, %v481
    %v483 = vand.u32 %v482, 4294901760
    %v484 = vsub.f32 %v482, %v483
    %v485 = vand.u32 %v484, 4294901760
    %486 = vmatpush1.msra.mxu0 %v485
    %487 = vmatprep.subr.mxu0 0.0
    %v488 = vand.u32 %v185, 4294901760
    %v489 = vsub.f32 %v185, %v488
    %v490 = vand.u32 %v489, 4294901760
    %v491 = vsub.f32 %v489, %v490
    %v492 = vand.u32 %v491, 4294901760
    %493 = vmatpush2.msra.mxu0 %v492
    %494 = vmatprep.subr.mxu0 0.0
    %v495 = vand.u32 %v184, 4294901760
    %v496 = vsub.f32 %v184, %v495
    %v497 = vand.u32 %v496, 4294901760
    %v498 = vsub.f32 %v496, %v497
    %v499 = vand.u32 %v498, 4294901760
    %500 = vmatpush2.msra.mxu0 %v499
    %501 = vmatprep.subr.mxu0 0.0
    %v502 = vand.u32 %v183, 4294901760
    %v503 = vsub.f32 %v183, %v502
    %v504 = vand.u32 %v503, 4294901760
    %v505 = vsub.f32 %v503, %v504
    %v506 = vand.u32 %v505, 4294901760
    %507 = vmatpush2.msra.mxu0 %v506
    %508 = vmatprep.subr.mxu0 0.0
    %v509 = vand.u32 %v182, 4294901760
    %v510 = vsub.f32 %v182, %v509
    %v511 = vand.u32 %v510, 4294901760
    %v512 = vsub.f32 %v510, %v511
    %v513 = vand.u32 %v512, 4294901760
    %514 = vmatpush2.msra.mxu0 %v513
    %515 = vmatprep.subr.mxu0 0.0
    %v516 = vand.u32 %v181, 4294901760
    %v517 = vsub.f32 %v181, %v516
    %v518 = vand.u32 %v517, 4294901760
    %v519 = vsub.f32 %v517, %v518
    %v520 = vand.u32 %v519, 4294901760
    %521 = vmatpush2.msra.mxu0 %v520
    %522 = vmatprep.subr.mxu0 0.0
    %v523 = vand.u32 %v180, 4294901760
    %v524 = vsub.f32 %v180, %v523
    %v525 = vand.u32 %v524, 4294901760
    %v526 = vsub.f32 %v524, %v525
    %v527 = vand.u32 %v526, 4294901760
    %528 = vmatpush2.msra.mxu0 %v527
    %529 = vmatprep.subr.mxu0 0.0
    %v530 = vand.u32 %v179, 4294901760
    %v531 = vsub.f32 %v179, %v530
    %v532 = vand.u32 %v531, 4294901760
    %v533 = vsub.f32 %v531, %v532
    %v534 = vand.u32 %v533, 4294901760
    %535 = vmatpush2.msra.mxu0 %v534
    %536 = vmatprep.subr.mxu0 0.0
    %v537 = vand.u32 %v178, 4294901760
    %v538 = vsub.f32 %v178, %v537
    %v539 = vand.u32 %v538, 4294901760
    %v540 = vsub.f32 %v538, %v539
    %v541 = vand.u32 %v540, 4294901760
    %542 = vmatpush2.msra.mxu0 %v541
    %543 = vmatprep.subr.mxu0 0.0
    %v544 = vand.u32 %v177, 4294901760
    %v545 = vsub.f32 %v177, %v544
    %v546 = vand.u32 %v545, 4294901760
    %v547 = vsub.f32 %v545, %v546
    %v548 = vand.u32 %v547, 4294901760
    %549 = vmatpush2.msra.mxu0 %v548
    %550 = vmatprep.subr.mxu0 0.0
    %v551 = vand.u32 %v176, 4294901760
    %v552 = vsub.f32 %v176, %v551
    %v553 = vand.u32 %v552, 4294901760
    %v554 = vsub.f32 %v552, %v553
    %v555 = vand.u32 %v554, 4294901760
    %556 = vmatpush2.msra.mxu0 %v555
    %557 = vmatprep.subr.mxu0 0.0
    %v558 = vand.u32 %v175, 4294901760
    %v559 = vsub.f32 %v175, %v558
    %v560 = vand.u32 %v559, 4294901760
    %v561 = vsub.f32 %v559, %v560
    %v562 = vand.u32 %v561, 4294901760
    %563 = vmatpush2.msra.mxu0 %v562
    %564 = vmatprep.subr.mxu0 0.0
    %v565 = vand.u32 %v174, 4294901760
    %v566 = vsub.f32 %v174, %v565
    %v567 = vand.u32 %v566, 4294901760
    %v568 = vsub.f32 %v566, %v567
    %v569 = vand.u32 %v568, 4294901760
    %570 = vmatpush2.msra.mxu0 %v569
    %571 = vmatprep.subr.mxu0 0.0
    %v572 = vand.u32 %v173, 4294901760
    %v573 = vsub.f32 %v173, %v572
    %v574 = vand.u32 %v573, 4294901760
    %v575 = vsub.f32 %v573, %v574
    %v576 = vand.u32 %v575, 4294901760
    %577 = vmatpush2.msra.mxu0 %v576
    %578 = vmatprep.subr.mxu0 0.0
    %v579 = vand.u32 %v172, 4294901760
    %v580 = vsub.f32 %v172, %v579
    %v581 = vand.u32 %v580, 4294901760
    %v582 = vsub.f32 %v580, %v581
    %v583 = vand.u32 %v582, 4294901760
    %584 = vmatpush2.msra.mxu0 %v583
    %585 = vmatprep.subr.mxu0 0.0
    %v586 = vand.u32 %v171, 4294901760
    %v587 = vsub.f32 %v171, %v586
    %v588 = vand.u32 %v587, 4294901760
    %v589 = vsub.f32 %v587, %v588
    %v590 = vand.u32 %v589, 4294901760
    %591 = vmatpush2.msra.mxu0 %v590
    %592 = vmatprep.subr.mxu0 0.0
    %v593 = vand.u32 %v170, 4294901760
    %v594 = vsub.f32 %v170, %v593
    %v595 = vand.u32 %v594, 4294901760
    %v596 = vsub.f32 %v594, %v595
    %v597 = vand.u32 %v596, 4294901760
    %598 = vmatpush2.msra.mxu0 %v597
    %v599 = vand.u32 %v257, 4294901760
    %600 = vmatprep.mubr.f32.mxu0 %v599
    %v601 = vand.u32 %v55, 4294901760
    %602 = vmatmul.mubr.f32.gmra.mxu0 %v601
    %v603 = vpop.f32.mrf.mxu0
    %v604 = vadd.f32 %v372, %v603
    %v605 = vpop.f32.mrf.mxu0
    %606 = vdwg.mxu0
    %607 = vmatprep.subr.mxu0 0.0
    %v608 = vand.u32 %v169, 4294901760
    %v609 = vsub.f32 %v169, %v608
    %610 = vmatpush1.msra.mxu0 %v609
    %611 = vmatprep.subr.mxu0 0.0
    %v612 = vand.u32 %v168, 4294901760
    %v613 = vsub.f32 %v168, %v612
    %614 = vmatpush1.msra.mxu0 %v613
    %615 = vmatprep.subr.mxu0 0.0
    %v616 = vand.u32 %v167, 4294901760
    %v617 = vsub.f32 %v167, %v616
    %618 = vmatpush1.msra.mxu0 %v617
    %619 = vmatprep.subr.mxu0 0.0
    %v620 = vand.u32 %v166, 4294901760
    %v621 = vsub.f32 %v166, %v620
    %622 = vmatpush1.msra.mxu0 %v621
    %623 = vmatprep.subr.mxu0 0.0
    %v624 = vand.u32 %v165, 4294901760
    %v625 = vsub.f32 %v165, %v624
    %626 = vmatpush1.msra.mxu0 %v625
    %627 = vmatprep.subr.mxu0 0.0
    %v628 = vand.u32 %v164, 4294901760
    %v629 = vsub.f32 %v164, %v628
    %630 = vmatpush1.msra.mxu0 %v629
    %631 = vmatprep.subr.mxu0 0.0
    %v632 = vand.u32 %v163, 4294901760
    %v633 = vsub.f32 %v163, %v632
    %634 = vmatpush1.msra.mxu0 %v633
    %635 = vmatprep.subr.mxu0 0.0
    %v636 = vand.u32 %v162, 4294901760
    %v637 = vsub.f32 %v162, %v636
    %638 = vmatpush1.msra.mxu0 %v637
    %639 = vmatprep.subr.mxu0 0.0
    %v640 = vand.u32 %v161, 4294901760
    %v641 = vsub.f32 %v161, %v640
    %642 = vmatpush1.msra.mxu0 %v641
    %643 = vmatprep.subr.mxu0 0.0
    %v644 = vand.u32 %v160, 4294901760
    %v645 = vsub.f32 %v160, %v644
    %646 = vmatpush1.msra.mxu0 %v645
    %647 = vmatprep.subr.mxu0 0.0
    %v648 = vand.u32 %v159, 4294901760
    %v649 = vsub.f32 %v159, %v648
    %650 = vmatpush1.msra.mxu0 %v649
    %651 = vmatprep.subr.mxu0 0.0
    %v652 = vand.u32 %v158, 4294901760
    %v653 = vsub.f32 %v158, %v652
    %654 = vmatpush1.msra.mxu0 %v653
    %655 = vmatprep.subr.mxu0 0.0
    %v656 = vand.u32 %v157, 4294901760
    %v657 = vsub.f32 %v157, %v656
    %658 = vmatpush1.msra.mxu0 %v657
    %659 = vmatprep.subr.mxu0 0.0
    %v660 = vand.u32 %v156, 4294901760
    %v661 = vsub.f32 %v156, %v660
    %662 = vmatpush1.msra.mxu0 %v661
    %663 = vmatprep.subr.mxu0 0.0
    %v664 = vand.u32 %v155, 4294901760
    %v665 = vsub.f32 %v155, %v664
    %666 = vmatpush1.msra.mxu0 %v665
    %667 = vmatprep.subr.mxu0 0.0
    %v668 = vand.u32 %v154, 4294901760
    %v669 = vsub.f32 %v154, %v668
    %670 = vmatpush1.msra.mxu0 %v669
    %671 = vmatprep.subr.mxu0 0.0
    %v672 = vand.u32 %v185, 4294901760
    %v673 = vsub.f32 %v185, %v672
    %674 = vmatpush2.msra.mxu0 %v673
    %675 = vmatprep.subr.mxu0 0.0
    %v676 = vand.u32 %v184, 4294901760
    %v677 = vsub.f32 %v184, %v676
    %678 = vmatpush2.msra.mxu0 %v677
    %679 = vmatprep.subr.mxu0 0.0
    %v680 = vand.u32 %v183, 4294901760
    %v681 = vsub.f32 %v183, %v680
    %682 = vmatpush2.msra.mxu0 %v681
    %683 = vmatprep.subr.mxu0 0.0
    %v684 = vand.u32 %v182, 4294901760
    %v685 = vsub.f32 %v182, %v684
    %686 = vmatpush2.msra.mxu0 %v685
    %687 = vmatprep.subr.mxu0 0.0
    %v688 = vand.u32 %v181, 4294901760
    %v689 = vsub.f32 %v181, %v688
    %690 = vmatpush2.msra.mxu0 %v689
    %691 = vmatprep.subr.mxu0 0.0
    %v692 = vand.u32 %v180, 4294901760
    %v693 = vsub.f32 %v180, %v692
    %694 = vmatpush2.msra.mxu0 %v693
    %695 = vmatprep.subr.mxu0 0.0
    %v696 = vand.u32 %v179, 4294901760
    %v697 = vsub.f32 %v179, %v696
    %698 = vmatpush2.msra.mxu0 %v697
    %699 = vmatprep.subr.mxu0 0.0
    %v700 = vand.u32 %v178, 4294901760
    %v701 = vsub.f32 %v178, %v700
    %702 = vmatpush2.msra.mxu0 %v701
    %703 = vmatprep.subr.mxu0 0.0
    %v704 = vand.u32 %v177, 4294901760
    %v705 = vsub.f32 %v177, %v704
    %706 = vmatpush2.msra.mxu0 %v705
    %707 = vmatprep.subr.mxu0 0.0
    %v708 = vand.u32 %v176, 4294901760
    %v709 = vsub.f32 %v176, %v708
    %710 = vmatpush2.msra.mxu0 %v709
    %711 = vmatprep.subr.mxu0 0.0
    %v712 = vand.u32 %v175, 4294901760
    %v713 = vsub.f32 %v175, %v712
    %714 = vmatpush2.msra.mxu0 %v713
    %715 = vmatprep.subr.mxu0 0.0
    %v716 = vand.u32 %v174, 4294901760
    %v717 = vsub.f32 %v174, %v716
    %718 = vmatpush2.msra.mxu0 %v717
    %719 = vmatprep.subr.mxu0 0.0
    %v720 = vand.u32 %v173, 4294901760
    %v721 = vsub.f32 %v173, %v720
    %722 = vmatpush2.msra.mxu0 %v721
    %723 = vmatprep.subr.mxu0 0.0
    %v724 = vand.u32 %v172, 4294901760
    %v725 = vsub.f32 %v172, %v724
    %726 = vmatpush2.msra.mxu0 %v725
    %727 = vmatprep.subr.mxu0 0.0
    %v728 = vand.u32 %v171, 4294901760
    %v729 = vsub.f32 %v171, %v728
    %730 = vmatpush2.msra.mxu0 %v729
    %731 = vmatprep.subr.mxu0 0.0
    %v732 = vand.u32 %v170, 4294901760
    %v733 = vsub.f32 %v170, %v732
    %734 = vmatpush2.msra.mxu0 %v733
    %v735 = vand.u32 %v257, 4294901760
    %v736 = vsub.f32 %v257, %v735
    %737 = vmatprep.mubr.f32.mxu0 %v736
    %v738 = vand.u32 %v55, 4294901760
    %v739 = vsub.f32 %v55, %v738
    %740 = vmatmul.mubr.f32.gmra.mxu0 %v739
    %v741 = vpop.f32.mrf.mxu0
    %v742 = vadd.f32 %v604, %v741
    %v743 = vpop.f32.mrf.mxu0
    %744 = vdwg.mxu0
    %745 = vmatprep.subr.mxu0 0.0
    %v746 = vand.u32 %v169, 4294901760
    %747 = vmatpush1.msra.mxu0 %v746
    %748 = vmatprep.subr.mxu0 0.0
    %v749 = vand.u32 %v168, 4294901760
    %750 = vmatpush1.msra.mxu0 %v749
    %751 = vmatprep.subr.mxu0 0.0
    %v752 = vand.u32 %v167, 4294901760
    %753 = vmatpush1.msra.mxu0 %v752
    %754 = vmatprep.subr.mxu0 0.0
    %v755 = vand.u32 %v166, 4294901760
    %756 = vmatpush1.msra.mxu0 %v755
    %757 = vmatprep.subr.mxu0 0.0
    %v758 = vand.u32 %v165, 4294901760
    %759 = vmatpush1.msra.mxu0 %v758
    %760 = vmatprep.subr.mxu0 0.0
    %v761 = vand.u32 %v164, 4294901760
    %762 = vmatpush1.msra.mxu0 %v761
    %763 = vmatprep.subr.mxu0 0.0
    %v764 = vand.u32 %v163, 4294901760
    %765 = vmatpush1.msra.mxu0 %v764
    %766 = vmatprep.subr.mxu0 0.0
    %v767 = vand.u32 %v162, 4294901760
    %768 = vmatpush1.msra.mxu0 %v767
    %769 = vmatprep.subr.mxu0 0.0
    %v770 = vand.u32 %v161, 4294901760
    %771 = vmatpush1.msra.mxu0 %v770
    %772 = vmatprep.subr.mxu0 0.0
    %v773 = vand.u32 %v160, 4294901760
    %774 = vmatpush1.msra.mxu0 %v773
    %775 = vmatprep.subr.mxu0 0.0
    %v776 = vand.u32 %v159, 4294901760
    %777 = vmatpush1.msra.mxu0 %v776
    %778 = vmatprep.subr.mxu0 0.0
    %v779 = vand.u32 %v158, 4294901760
    %780 = vmatpush1.msra.mxu0 %v779
    %781 = vmatprep.subr.mxu0 0.0
    %v782 = vand.u32 %v157, 4294901760
    %783 = vmatpush1.msra.mxu0 %v782
    %784 = vmatprep.subr.mxu0 0.0
    %v785 = vand.u32 %v156, 4294901760
    %786 = vmatpush1.msra.mxu0 %v785
    %787 = vmatprep.subr.mxu0 0.0
    %v788 = vand.u32 %v155, 4294901760
    %789 = vmatpush1.msra.mxu0 %v788
    %790 = vmatprep.subr.mxu0 0.0
    %v791 = vand.u32 %v154, 4294901760
    %792 = vmatpush1.msra.mxu0 %v791
    %793 = vmatprep.subr.mxu0 0.0
    %v794 = vand.u32 %v185, 4294901760
    %795 = vmatpush2.msra.mxu0 %v794
    %796 = vmatprep.subr.mxu0 0.0
    %v797 = vand.u32 %v184, 4294901760
    %798 = vmatpush2.msra.mxu0 %v797
    %799 = vmatprep.subr.mxu0 0.0
    %v800 = vand.u32 %v183, 4294901760
    %801 = vmatpush2.msra.mxu0 %v800
    %802 = vmatprep.subr.mxu0 0.0
    %v803 = vand.u32 %v182, 4294901760
    %804 = vmatpush2.msra.mxu0 %v803
    %805 = vmatprep.subr.mxu0 0.0
    %v806 = vand.u32 %v181, 4294901760
    %807 = vmatpush2.msra.mxu0 %v806
    %808 = vmatprep.subr.mxu0 0.0
    %v809 = vand.u32 %v180, 4294901760
    %810 = vmatpush2.msra.mxu0 %v809
    %811 = vmatprep.subr.mxu0 0.0
    %v812 = vand.u32 %v179, 4294901760
    %813 = vmatpush2.msra.mxu0 %v812
    %814 = vmatprep.subr.mxu0 0.0
    %v815 = vand.u32 %v178, 4294901760
    %816 = vmatpush2.msra.mxu0 %v815
    %817 = vmatprep.subr.mxu0 0.0
    %v818 = vand.u32 %v177, 4294901760
    %819 = vmatpush2.msra.mxu0 %v818
    %820 = vmatprep.subr.mxu0 0.0
    %v821 = vand.u32 %v176, 4294901760
    %822 = vmatpush2.msra.mxu0 %v821
    %823 = vmatprep.subr.mxu0 0.0
    %v824 = vand.u32 %v175, 4294901760
    %825 = vmatpush2.msra.mxu0 %v824
    %826 = vmatprep.subr.mxu0 0.0
    %v827 = vand.u32 %v174, 4294901760
    %828 = vmatpush2.msra.mxu0 %v827
    %829 = vmatprep.subr.mxu0 0.0
    %v830 = vand.u32 %v173, 4294901760
    %831 = vmatpush2.msra.mxu0 %v830
    %832 = vmatprep.subr.mxu0 0.0
    %v833 = vand.u32 %v172, 4294901760
    %834 = vmatpush2.msra.mxu0 %v833
    %835 = vmatprep.subr.mxu0 0.0
    %v836 = vand.u32 %v171, 4294901760
    %837 = vmatpush2.msra.mxu0 %v836
    %838 = vmatprep.subr.mxu0 0.0
    %v839 = vand.u32 %v170, 4294901760
    %840 = vmatpush2.msra.mxu0 %v839
    %v841 = vand.u32 %v257, 4294901760
    %v842 = vsub.f32 %v257, %v841
    %v843 = vand.u32 %v842, 4294901760
    %844 = vmatprep.mubr.f32.mxu0 %v843
    %v845 = vand.u32 %v55, 4294901760
    %v846 = vsub.f32 %v55, %v845
    %v847 = vand.u32 %v846, 4294901760
    %848 = vmatmul.mubr.f32.gmra.mxu0 %v847
    %v849 = vpop.f32.mrf.mxu0
    %v850 = vadd.f32 %v742, %v849
    %v851 = vpop.f32.mrf.mxu0
    %852 = vdwg.mxu0
    %853 = vmatprep.subr.mxu0 0.0
    %v854 = vand.u32 %v169, 4294901760
    %v855 = vsub.f32 %v169, %v854
    %v856 = vand.u32 %v855, 4294901760
    %857 = vmatpush1.msra.mxu0 %v856
    %858 = vmatprep.subr.mxu0 0.0
    %v859 = vand.u32 %v168, 4294901760
    %v860 = vsub.f32 %v168, %v859
    %v861 = vand.u32 %v860, 4294901760
    %862 = vmatpush1.msra.mxu0 %v861
    %863 = vmatprep.subr.mxu0 0.0
    %v864 = vand.u32 %v167, 4294901760
    %v865 = vsub.f32 %v167, %v864
    %v866 = vand.u32 %v865, 4294901760
    %867 = vmatpush1.msra.mxu0 %v866
    %868 = vmatprep.subr.mxu0 0.0
    %v869 = vand.u32 %v166, 4294901760
    %v870 = vsub.f32 %v166, %v869
    %v871 = vand.u32 %v870, 4294901760
    %872 = vmatpush1.msra.mxu0 %v871
    %873 = vmatprep.subr.mxu0 0.0
    %v874 = vand.u32 %v165, 4294901760
    %v875 = vsub.f32 %v165, %v874
    %v876 = vand.u32 %v875, 4294901760
    %877 = vmatpush1.msra.mxu0 %v876
    %878 = vmatprep.subr.mxu0 0.0
    %v879 = vand.u32 %v164, 4294901760
    %v880 = vsub.f32 %v164, %v879
    %v881 = vand.u32 %v880, 4294901760
    %882 = vmatpush1.msra.mxu0 %v881
    %883 = vmatprep.subr.mxu0 0.0
    %v884 = vand.u32 %v163, 4294901760
    %v885 = vsub.f32 %v163, %v884
    %v886 = vand.u32 %v885, 4294901760
    %887 = vmatpush1.msra.mxu0 %v886
    %888 = vmatprep.subr.mxu0 0.0
    %v889 = vand.u32 %v162, 4294901760
    %v890 = vsub.f32 %v162, %v889
    %v891 = vand.u32 %v890, 4294901760
    %892 = vmatpush1.msra.mxu0 %v891
    %893 = vmatprep.subr.mxu0 0.0
    %v894 = vand.u32 %v161, 4294901760
    %v895 = vsub.f32 %v161, %v894
    %v896 = vand.u32 %v895, 4294901760
    %897 = vmatpush1.msra.mxu0 %v896
    %898 = vmatprep.subr.mxu0 0.0
    %v899 = vand.u32 %v160, 4294901760
    %v900 = vsub.f32 %v160, %v899
    %v901 = vand.u32 %v900, 4294901760
    %902 = vmatpush1.msra.mxu0 %v901
    %903 = vmatprep.subr.mxu0 0.0
    %v904 = vand.u32 %v159, 4294901760
    %v905 = vsub.f32 %v159, %v904
    %v906 = vand.u32 %v905, 4294901760
    %907 = vmatpush1.msra.mxu0 %v906
    %908 = vmatprep.subr.mxu0 0.0
    %v909 = vand.u32 %v158, 4294901760
    %v910 = vsub.f32 %v158, %v909
    %v911 = vand.u32 %v910, 4294901760
    %912 = vmatpush1.msra.mxu0 %v911
    %913 = vmatprep.subr.mxu0 0.0
    %v914 = vand.u32 %v157, 4294901760
    %v915 = vsub.f32 %v157, %v914
    %v916 = vand.u32 %v915, 4294901760
    %917 = vmatpush1.msra.mxu0 %v916
    %918 = vmatprep.subr.mxu0 0.0
    %v919 = vand.u32 %v156, 4294901760
    %v920 = vsub.f32 %v156, %v919
    %v921 = vand.u32 %v920, 4294901760
    %922 = vmatpush1.msra.mxu0 %v921
    %923 = vmatprep.subr.mxu0 0.0
    %v924 = vand.u32 %v155, 4294901760
    %v925 = vsub.f32 %v155, %v924
    %v926 = vand.u32 %v925, 4294901760
    %927 = vmatpush1.msra.mxu0 %v926
    %928 = vmatprep.subr.mxu0 0.0
    %v929 = vand.u32 %v154, 4294901760
    %v930 = vsub.f32 %v154, %v929
    %v931 = vand.u32 %v930, 4294901760
    %932 = vmatpush1.msra.mxu0 %v931
    %933 = vmatprep.subr.mxu0 0.0
    %v934 = vand.u32 %v185, 4294901760
    %v935 = vsub.f32 %v185, %v934
    %v936 = vand.u32 %v935, 4294901760
    %937 = vmatpush2.msra.mxu0 %v936
    %938 = vmatprep.subr.mxu0 0.0
    %v939 = vand.u32 %v184, 4294901760
    %v940 = vsub.f32 %v184, %v939
    %v941 = vand.u32 %v940, 4294901760
    %942 = vmatpush2.msra.mxu0 %v941
    %943 = vmatprep.subr.mxu0 0.0
    %v944 = vand.u32 %v183, 4294901760
    %v945 = vsub.f32 %v183, %v944
    %v946 = vand.u32 %v945, 4294901760
    %947 = vmatpush2.msra.mxu0 %v946
    %948 = vmatprep.subr.mxu0 0.0
    %v949 = vand.u32 %v182, 4294901760
    %v950 = vsub.f32 %v182, %v949
    %v951 = vand.u32 %v950, 4294901760
    %952 = vmatpush2.msra.mxu0 %v951
    %953 = vmatprep.subr.mxu0 0.0
    %v954 = vand.u32 %v181, 4294901760
    %v955 = vsub.f32 %v181, %v954
    %v956 = vand.u32 %v955, 4294901760
    %957 = vmatpush2.msra.mxu0 %v956
    %958 = vmatprep.subr.mxu0 0.0
    %v959 = vand.u32 %v180, 4294901760
    %v960 = vsub.f32 %v180, %v959
    %v961 = vand.u32 %v960, 4294901760
    %962 = vmatpush2.msra.mxu0 %v961
    %963 = vmatprep.subr.mxu0 0.0
    %v964 = vand.u32 %v179, 4294901760
    %v965 = vsub.f32 %v179, %v964
    %v966 = vand.u32 %v965, 4294901760
    %967 = vmatpush2.msra.mxu0 %v966
    %968 = vmatprep.subr.mxu0 0.0
    %v969 = vand.u32 %v178, 4294901760
    %v970 = vsub.f32 %v178, %v969
    %v971 = vand.u32 %v970, 4294901760
    %972 = vmatpush2.msra.mxu0 %v971
    %973 = vmatprep.subr.mxu0 0.0
    %v974 = vand.u32 %v177, 4294901760
    %v975 = vsub.f32 %v177, %v974
    %v976 = vand.u32 %v975, 4294901760
    %977 = vmatpush2.msra.mxu0 %v976
    %978 = vmatprep.subr.mxu0 0.0
    %v979 = vand.u32 %v176, 4294901760
    %v980 = vsub.f32 %v176, %v979
    %v981 = vand.u32 %v980, 4294901760
    %982 = vmatpush2.msra.mxu0 %v981
    %983 = vmatprep.subr.mxu0 0.0
    %v984 = vand.u32 %v175, 4294901760
    %v985 = vsub.f32 %v175, %v984
    %v986 = vand.u32 %v985, 4294901760
    %987 = vmatpush2.msra.mxu0 %v986
    %988 = vmatprep.subr.mxu0 0.0
    %v989 = vand.u32 %v174, 4294901760
    %v990 = vsub.f32 %v174, %v989
    %v991 = vand.u32 %v990, 4294901760
    %992 = vmatpush2.msra.mxu0 %v991
    %993 = vmatprep.subr.mxu0 0.0
    %v994 = vand.u32 %v173, 4294901760
    %v995 = vsub.f32 %v173, %v994
    %v996 = vand.u32 %v995, 4294901760
    %997 = vmatpush2.msra.mxu0 %v996
    %998 = vmatprep.subr.mxu0 0.0
    %v999 = vand.u32 %v172, 4294901760
    %v1000 = vsub.f32 %v172, %v999
    %v1001 = vand.u32 %v1000, 4294901760
    %1002 = vmatpush2.msra.mxu0 %v1001
    %1003 = vmatprep.subr.mxu0 0.0
    %v1004 = vand.u32 %v171, 4294901760
    %v1005 = vsub.f32 %v171, %v1004
    %v1006 = vand.u32 %v1005, 4294901760
    %1007 = vmatpush2.msra.mxu0 %v1006
    %1008 = vmatprep.subr.mxu0 0.0
    %v1009 = vand.u32 %v170, 4294901760
    %v1010 = vsub.f32 %v170, %v1009
    %v1011 = vand.u32 %v1010, 4294901760
    %1012 = vmatpush2.msra.mxu0 %v1011
    %v1013 = vand.u32 %v257, 4294901760
    %1014 = vmatprep.mubr.f32.mxu0 %v1013
    %v1015 = vand.u32 %v55, 4294901760
    %1016 = vmatmul.mubr.f32.gmra.mxu0 %v1015
    %v1017 = vpop.f32.mrf.mxu0
    %v1018 = vadd.f32 %v850, %v1017
    %v1019 = vpop.f32.mrf.mxu0
    %1020 = vdwg.mxu0
    %1021 = vmatprep.subr.mxu0 0.0
    %v1022 = vand.u32 %v169, 4294901760
    %1023 = vmatpush1.msra.mxu0 %v1022
    %1024 = vmatprep.subr.mxu0 0.0
    %v1025 = vand.u32 %v168, 4294901760
    %1026 = vmatpush1.msra.mxu0 %v1025
    %1027 = vmatprep.subr.mxu0 0.0
    %v1028 = vand.u32 %v167, 4294901760
    %1029 = vmatpush1.msra.mxu0 %v1028
    %1030 = vmatprep.subr.mxu0 0.0
    %v1031 = vand.u32 %v166, 4294901760
    %1032 = vmatpush1.msra.mxu0 %v1031
    %1033 = vmatprep.subr.mxu0 0.0
    %v1034 = vand.u32 %v165, 4294901760
    %1035 = vmatpush1.msra.mxu0 %v1034
    %1036 = vmatprep.subr.mxu0 0.0
    %v1037 = vand.u32 %v164, 4294901760
    %1038 = vmatpush1.msra.mxu0 %v1037
    %1039 = vmatprep.subr.mxu0 0.0
    %v1040 = vand.u32 %v163, 4294901760
    %1041 = vmatpush1.msra.mxu0 %v1040
    %1042 = vmatprep.subr.mxu0 0.0
    %v1043 = vand.u32 %v162, 4294901760
    %1044 = vmatpush1.msra.mxu0 %v1043
    %1045 = vmatprep.subr.mxu0 0.0
    %v1046 = vand.u32 %v161, 4294901760
    %1047 = vmatpush1.msra.mxu0 %v1046
    %1048 = vmatprep.subr.mxu0 0.0
    %v1049 = vand.u32 %v160, 4294901760
    %1050 = vmatpush1.msra.mxu0 %v1049
    %1051 = vmatprep.subr.mxu0 0.0
    %v1052 = vand.u32 %v159, 4294901760
    %1053 = vmatpush1.msra.mxu0 %v1052
    %1054 = vmatprep.subr.mxu0 0.0
    %v1055 = vand.u32 %v158, 4294901760
    %1056 = vmatpush1.msra.mxu0 %v1055
    %1057 = vmatprep.subr.mxu0 0.0
    %v1058 = vand.u32 %v157, 4294901760
    %1059 = vmatpush1.msra.mxu0 %v1058
    %1060 = vmatprep.subr.mxu0 0.0
    %v1061 = vand.u32 %v156, 4294901760
    %1062 = vmatpush1.msra.mxu0 %v1061
    %1063 = vmatprep.subr.mxu0 0.0
    %v1064 = vand.u32 %v155, 4294901760
    %1065 = vmatpush1.msra.mxu0 %v1064
    %1066 = vmatprep.subr.mxu0 0.0
    %v1067 = vand.u32 %v154, 4294901760
    %1068 = vmatpush1.msra.mxu0 %v1067
    %1069 = vmatprep.subr.mxu0 0.0
    %v1070 = vand.u32 %v185, 4294901760
    %1071 = vmatpush2.msra.mxu0 %v1070
    %1072 = vmatprep.subr.mxu0 0.0
    %v1073 = vand.u32 %v184, 4294901760
    %1074 = vmatpush2.msra.mxu0 %v1073
    %1075 = vmatprep.subr.mxu0 0.0
    %v1076 = vand.u32 %v183, 4294901760
    %1077 = vmatpush2.msra.mxu0 %v1076
    %1078 = vmatprep.subr.mxu0 0.0
    %v1079 = vand.u32 %v182, 4294901760
    %1080 = vmatpush2.msra.mxu0 %v1079
    %1081 = vmatprep.subr.mxu0 0.0
    %v1082 = vand.u32 %v181, 4294901760
    %1083 = vmatpush2.msra.mxu0 %v1082
    %1084 = vmatprep.subr.mxu0 0.0
    %v1085 = vand.u32 %v180, 4294901760
    %1086 = vmatpush2.msra.mxu0 %v1085
    %1087 = vmatprep.subr.mxu0 0.0
    %v1088 = vand.u32 %v179, 4294901760
    %1089 = vmatpush2.msra.mxu0 %v1088
    %1090 = vmatprep.subr.mxu0 0.0
    %v1091 = vand.u32 %v178, 4294901760
    %1092 = vmatpush2.msra.mxu0 %v1091
    %1093 = vmatprep.subr.mxu0 0.0
    %v1094 = vand.u32 %v177, 4294901760
    %1095 = vmatpush2.msra.mxu0 %v1094
    %1096 = vmatprep.subr.mxu0 0.0
    %v1097 = vand.u32 %v176, 4294901760
    %1098 = vmatpush2.msra.mxu0 %v1097
    %1099 = vmatprep.subr.mxu0 0.0
    %v1100 = vand.u32 %v175, 4294901760
    %1101 = vmatpush2.msra.mxu0 %v1100
    %1102 = vmatprep.subr.mxu0 0.0
    %v1103 = vand.u32 %v174, 4294901760
    %1104 = vmatpush2.msra.mxu0 %v1103
    %1105 = vmatprep.subr.mxu0 0.0
    %v1106 = vand.u32 %v173, 4294901760
    %1107 = vmatpush2.msra.mxu0 %v1106
    %1108 = vmatprep.subr.mxu0 0.0
    %v1109 = vand.u32 %v172, 4294901760
    %1110 = vmatpush2.msra.mxu0 %v1109
    %1111 = vmatprep.subr.mxu0 0.0
    %v1112 = vand.u32 %v171, 4294901760
    %1113 = vmatpush2.msra.mxu0 %v1112
    %1114 = vmatprep.subr.mxu0 0.0
    %v1115 = vand.u32 %v170, 4294901760
    %1116 = vmatpush2.msra.mxu0 %v1115
    %v1117 = vand.u32 %v257, 4294901760
    %1118 = vmatprep.mubr.f32.mxu0 %v1117
    %v1119 = vand.u32 %v55, 4294901760
    %1120 = vmatmul.mubr.f32.gmra.mxu0 %v1119
    %v1121 = vpop.f32.mrf.mxu0
    %v1122 = vadd.f32 %v1018, %v1121
    %v1123 = vpop.f32.mrf.mxu0
    %1124 = vdwg.mxu0
    %1125 = vmatprep.subr.mxu0 0.0
    %v1126 = vand.u32 %v201, 4294901760
    %1127 = vmatpush1.msra.mxu0 %v1126
    %1128 = vmatprep.subr.mxu0 0.0
    %v1129 = vand.u32 %v200, 4294901760
    %1130 = vmatpush1.msra.mxu0 %v1129
    %1131 = vmatprep.subr.mxu0 0.0
    %v1132 = vand.u32 %v199, 4294901760
    %1133 = vmatpush1.msra.mxu0 %v1132
    %1134 = vmatprep.subr.mxu0 0.0
    %v1135 = vand.u32 %v198, 4294901760
    %1136 = vmatpush1.msra.mxu0 %v1135
    %1137 = vmatprep.subr.mxu0 0.0
    %v1138 = vand.u32 %v197, 4294901760
    %1139 = vmatpush1.msra.mxu0 %v1138
    %1140 = vmatprep.subr.mxu0 0.0
    %v1141 = vand.u32 %v196, 4294901760
    %1142 = vmatpush1.msra.mxu0 %v1141
    %1143 = vmatprep.subr.mxu0 0.0
    %v1144 = vand.u32 %v195, 4294901760
    %1145 = vmatpush1.msra.mxu0 %v1144
    %1146 = vmatprep.subr.mxu0 0.0
    %v1147 = vand.u32 %v194, 4294901760
    %1148 = vmatpush1.msra.mxu0 %v1147
    %1149 = vmatprep.subr.mxu0 0.0
    %v1150 = vand.u32 %v193, 4294901760
    %1151 = vmatpush1.msra.mxu0 %v1150
    %1152 = vmatprep.subr.mxu0 0.0
    %v1153 = vand.u32 %v192, 4294901760
    %1154 = vmatpush1.msra.mxu0 %v1153
    %1155 = vmatprep.subr.mxu0 0.0
    %v1156 = vand.u32 %v191, 4294901760
    %1157 = vmatpush1.msra.mxu0 %v1156
    %1158 = vmatprep.subr.mxu0 0.0
    %v1159 = vand.u32 %v190, 4294901760
    %1160 = vmatpush1.msra.mxu0 %v1159
    %1161 = vmatprep.subr.mxu0 0.0
    %v1162 = vand.u32 %v189, 4294901760
    %1163 = vmatpush1.msra.mxu0 %v1162
    %1164 = vmatprep.subr.mxu0 0.0
    %v1165 = vand.u32 %v188, 4294901760
    %1166 = vmatpush1.msra.mxu0 %v1165
    %1167 = vmatprep.subr.mxu0 0.0
    %v1168 = vand.u32 %v187, 4294901760
    %1169 = vmatpush1.msra.mxu0 %v1168
    %1170 = vmatprep.subr.mxu0 0.0
    %v1171 = vand.u32 %v186, 4294901760
    %1172 = vmatpush1.msra.mxu0 %v1171
    %1173 = vmatprep.subr.mxu0 0.0
    %v1174 = vand.u32 %v217, 4294901760
    %1175 = vmatpush2.msra.mxu0 %v1174
    %1176 = vmatprep.subr.mxu0 0.0
    %v1177 = vand.u32 %v216, 4294901760
    %1178 = vmatpush2.msra.mxu0 %v1177
    %1179 = vmatprep.subr.mxu0 0.0
    %v1180 = vand.u32 %v215, 4294901760
    %1181 = vmatpush2.msra.mxu0 %v1180
    %1182 = vmatprep.subr.mxu0 0.0
    %v1183 = vand.u32 %v214, 4294901760
    %1184 = vmatpush2.msra.mxu0 %v1183
    %1185 = vmatprep.subr.mxu0 0.0
    %v1186 = vand.u32 %v213, 4294901760
    %1187 = vmatpush2.msra.mxu0 %v1186
    %1188 = vmatprep.subr.mxu0 0.0
    %v1189 = vand.u32 %v212, 4294901760
    %1190 = vmatpush2.msra.mxu0 %v1189
    %1191 = vmatprep.subr.mxu0 0.0
    %v1192 = vand.u32 %v211, 4294901760
    %1193 = vmatpush2.msra.mxu0 %v1192
    %1194 = vmatprep.subr.mxu0 0.0
    %v1195 = vand.u32 %v210, 4294901760
    %1196 = vmatpush2.msra.mxu0 %v1195
    %1197 = vmatprep.subr.mxu0 0.0
    %v1198 = vand.u32 %v209, 4294901760
    %1199 = vmatpush2.msra.mxu0 %v1198
    %1200 = vmatprep.subr.mxu0 0.0
    %v1201 = vand.u32 %v208, 4294901760
    %1202 = vmatpush2.msra.mxu0 %v1201
    %1203 = vmatprep.subr.mxu0 0.0
    %v1204 = vand.u32 %v207, 4294901760
    %1205 = vmatpush2.msra.mxu0 %v1204
    %1206 = vmatprep.subr.mxu0 0.0
    %v1207 = vand.u32 %v206, 4294901760
    %1208 = vmatpush2.msra.mxu0 %v1207
    %1209 = vmatprep.subr.mxu0 0.0
    %v1210 = vand.u32 %v205, 4294901760
    %1211 = vmatpush2.msra.mxu0 %v1210
    %1212 = vmatprep.subr.mxu0 0.0
    %v1213 = vand.u32 %v204, 4294901760
    %1214 = vmatpush2.msra.mxu0 %v1213
    %1215 = vmatprep.subr.mxu0 0.0
    %v1216 = vand.u32 %v203, 4294901760
    %1217 = vmatpush2.msra.mxu0 %v1216
    %1218 = vmatprep.subr.mxu0 0.0
    %v1219 = vand.u32 %v202, 4294901760
    %1220 = vmatpush2.msra.mxu0 %v1219
    %v1221 = vand.u32 %v258, 4294901760
    %v1222 = vsub.f32 %v258, %v1221
    %v1223 = vand.u32 %v1222, 4294901760
    %v1224 = vsub.f32 %v1222, %v1223
    %v1225 = vand.u32 %v1224, 4294901760
    %1226 = vmatprep.mubr.f32.mxu0 %v1225
    %v1227 = vand.u32 %v56, 4294901760
    %v1228 = vsub.f32 %v56, %v1227
    %v1229 = vand.u32 %v1228, 4294901760
    %v1230 = vsub.f32 %v1228, %v1229
    %v1231 = vand.u32 %v1230, 4294901760
    %1232 = vmatmul.mubr.f32.gmra.mxu0 %v1231
    %v1233 = vpop.f32.mrf.mxu0
    %v1234 = vadd.f32 %v1122, %v1233
    %v1235 = vpop.f32.mrf.mxu0
    %1236 = vdwg.mxu0
    %1237 = vmatprep.subr.mxu0 0.0
    %v1238 = vand.u32 %v201, 4294901760
    %v1239 = vsub.f32 %v201, %v1238
    %v1240 = vand.u32 %v1239, 4294901760
    %v1241 = vsub.f32 %v1239, %v1240
    %v1242 = vand.u32 %v1241, 4294901760
    %1243 = vmatpush1.msra.mxu0 %v1242
    %1244 = vmatprep.subr.mxu0 0.0
    %v1245 = vand.u32 %v200, 4294901760
    %v1246 = vsub.f32 %v200, %v1245
    %v1247 = vand.u32 %v1246, 4294901760
    %v1248 = vsub.f32 %v1246, %v1247
    %v1249 = vand.u32 %v1248, 4294901760
    %1250 = vmatpush1.msra.mxu0 %v1249
    %1251 = vmatprep.subr.mxu0 0.0
    %v1252 = vand.u32 %v199, 4294901760
    %v1253 = vsub.f32 %v199, %v1252
    %v1254 = vand.u32 %v1253, 4294901760
    %v1255 = vsub.f32 %v1253, %v1254
    %v1256 = vand.u32 %v1255, 4294901760
    %1257 = vmatpush1.msra.mxu0 %v1256
    %1258 = vmatprep.subr.mxu0 0.0
    %v1259 = vand.u32 %v198, 4294901760
    %v1260 = vsub.f32 %v198, %v1259
    %v1261 = vand.u32 %v1260, 4294901760
    %v1262 = vsub.f32 %v1260, %v1261
    %v1263 = vand.u32 %v1262, 4294901760
    %1264 = vmatpush1.msra.mxu0 %v1263
    %1265 = vmatprep.subr.mxu0 0.0
    %v1266 = vand.u32 %v197, 4294901760
    %v1267 = vsub.f32 %v197, %v1266
    %v1268 = vand.u32 %v1267, 4294901760
    %v1269 = vsub.f32 %v1267, %v1268
    %v1270 = vand.u32 %v1269, 4294901760
    %1271 = vmatpush1.msra.mxu0 %v1270
    %1272 = vmatprep.subr.mxu0 0.0
    %v1273 = vand.u32 %v196, 4294901760
    %v1274 = vsub.f32 %v196, %v1273
    %v1275 = vand.u32 %v1274, 4294901760
    %v1276 = vsub.f32 %v1274, %v1275
    %v1277 = vand.u32 %v1276, 4294901760
    %1278 = vmatpush1.msra.mxu0 %v1277
    %1279 = vmatprep.subr.mxu0 0.0
    %v1280 = vand.u32 %v195, 4294901760
    %v1281 = vsub.f32 %v195, %v1280
    %v1282 = vand.u32 %v1281, 4294901760
    %v1283 = vsub.f32 %v1281, %v1282
    %v1284 = vand.u32 %v1283, 4294901760
    %1285 = vmatpush1.msra.mxu0 %v1284
    %1286 = vmatprep.subr.mxu0 0.0
    %v1287 = vand.u32 %v194, 4294901760
    %v1288 = vsub.f32 %v194, %v1287
    %v1289 = vand.u32 %v1288, 4294901760
    %v1290 = vsub.f32 %v1288, %v1289
    %v1291 = vand.u32 %v1290, 4294901760
    %1292 = vmatpush1.msra.mxu0 %v1291
    %1293 = vmatprep.subr.mxu0 0.0
    %v1294 = vand.u32 %v193, 4294901760
    %v1295 = vsub.f32 %v193, %v1294
    %v1296 = vand.u32 %v1295, 4294901760
    %v1297 = vsub.f32 %v1295, %v1296
    %v1298 = vand.u32 %v1297, 4294901760
    %1299 = vmatpush1.msra.mxu0 %v1298
    %1300 = vmatprep.subr.mxu0 0.0
    %v1301 = vand.u32 %v192, 4294901760
    %v1302 = vsub.f32 %v192, %v1301
    %v1303 = vand.u32 %v1302, 4294901760
    %v1304 = vsub.f32 %v1302, %v1303
    %v1305 = vand.u32 %v1304, 4294901760
    %1306 = vmatpush1.msra.mxu0 %v1305
    %1307 = vmatprep.subr.mxu0 0.0
    %v1308 = vand.u32 %v191, 4294901760
    %v1309 = vsub.f32 %v191, %v1308
    %v1310 = vand.u32 %v1309, 4294901760
    %v1311 = vsub.f32 %v1309, %v1310
    %v1312 = vand.u32 %v1311, 4294901760
    %1313 = vmatpush1.msra.mxu0 %v1312
    %1314 = vmatprep.subr.mxu0 0.0
    %v1315 = vand.u32 %v190, 4294901760
    %v1316 = vsub.f32 %v190, %v1315
    %v1317 = vand.u32 %v1316, 4294901760
    %v1318 = vsub.f32 %v1316, %v1317
    %v1319 = vand.u32 %v1318, 4294901760
    %1320 = vmatpush1.msra.mxu0 %v1319
    %1321 = vmatprep.subr.mxu0 0.0
    %v1322 = vand.u32 %v189, 4294901760
    %v1323 = vsub.f32 %v189, %v1322
    %v1324 = vand.u32 %v1323, 4294901760
    %v1325 = vsub.f32 %v1323, %v1324
    %v1326 = vand.u32 %v1325, 4294901760
    %1327 = vmatpush1.msra.mxu0 %v1326
    %1328 = vmatprep.subr.mxu0 0.0
    %v1329 = vand.u32 %v188, 4294901760
    %v1330 = vsub.f32 %v188, %v1329
    %v1331 = vand.u32 %v1330, 4294901760
    %v1332 = vsub.f32 %v1330, %v1331
    %v1333 = vand.u32 %v1332, 4294901760
    %1334 = vmatpush1.msra.mxu0 %v1333
    %1335 = vmatprep.subr.mxu0 0.0
    %v1336 = vand.u32 %v187, 4294901760
    %v1337 = vsub.f32 %v187, %v1336
    %v1338 = vand.u32 %v1337, 4294901760
    %v1339 = vsub.f32 %v1337, %v1338
    %v1340 = vand.u32 %v1339, 4294901760
    %1341 = vmatpush1.msra.mxu0 %v1340
    %1342 = vmatprep.subr.mxu0 0.0
    %v1343 = vand.u32 %v186, 4294901760
    %v1344 = vsub.f32 %v186, %v1343
    %v1345 = vand.u32 %v1344, 4294901760
    %v1346 = vsub.f32 %v1344, %v1345
    %v1347 = vand.u32 %v1346, 4294901760
    %1348 = vmatpush1.msra.mxu0 %v1347
    %1349 = vmatprep.subr.mxu0 0.0
    %v1350 = vand.u32 %v217, 4294901760
    %v1351 = vsub.f32 %v217, %v1350
    %v1352 = vand.u32 %v1351, 4294901760
    %v1353 = vsub.f32 %v1351, %v1352
    %v1354 = vand.u32 %v1353, 4294901760
    %1355 = vmatpush2.msra.mxu0 %v1354
    %1356 = vmatprep.subr.mxu0 0.0
    %v1357 = vand.u32 %v216, 4294901760
    %v1358 = vsub.f32 %v216, %v1357
    %v1359 = vand.u32 %v1358, 4294901760
    %v1360 = vsub.f32 %v1358, %v1359
    %v1361 = vand.u32 %v1360, 4294901760
    %1362 = vmatpush2.msra.mxu0 %v1361
    %1363 = vmatprep.subr.mxu0 0.0
    %v1364 = vand.u32 %v215, 4294901760
    %v1365 = vsub.f32 %v215, %v1364
    %v1366 = vand.u32 %v1365, 4294901760
    %v1367 = vsub.f32 %v1365, %v1366
    %v1368 = vand.u32 %v1367, 4294901760
    %1369 = vmatpush2.msra.mxu0 %v1368
    %1370 = vmatprep.subr.mxu0 0.0
    %v1371 = vand.u32 %v214, 4294901760
    %v1372 = vsub.f32 %v214, %v1371
    %v1373 = vand.u32 %v1372, 4294901760
    %v1374 = vsub.f32 %v1372, %v1373
    %v1375 = vand.u32 %v1374, 4294901760
    %1376 = vmatpush2.msra.mxu0 %v1375
    %1377 = vmatprep.subr.mxu0 0.0
    %v1378 = vand.u32 %v213, 4294901760
    %v1379 = vsub.f32 %v213, %v1378
    %v1380 = vand.u32 %v1379, 4294901760
    %v1381 = vsub.f32 %v1379, %v1380
    %v1382 = vand.u32 %v1381, 4294901760
    %1383 = vmatpush2.msra.mxu0 %v1382
    %1384 = vmatprep.subr.mxu0 0.0
    %v1385 = vand.u32 %v212, 4294901760
    %v1386 = vsub.f32 %v212, %v1385
    %v1387 = vand.u32 %v1386, 4294901760
    %v1388 = vsub.f32 %v1386, %v1387
    %v1389 = vand.u32 %v1388, 4294901760
    %1390 = vmatpush2.msra.mxu0 %v1389
    %1391 = vmatprep.subr.mxu0 0.0
    %v1392 = vand.u32 %v211, 4294901760
    %v1393 = vsub.f32 %v211, %v1392
    %v1394 = vand.u32 %v1393, 4294901760
    %v1395 = vsub.f32 %v1393, %v1394
    %v1396 = vand.u32 %v1395, 4294901760
    %1397 = vmatpush2.msra.mxu0 %v1396
    %1398 = vmatprep.subr.mxu0 0.0
    %v1399 = vand.u32 %v210, 4294901760
    %v1400 = vsub.f32 %v210, %v1399
    %v1401 = vand.u32 %v1400, 4294901760
    %v1402 = vsub.f32 %v1400, %v1401
    %v1403 = vand.u32 %v1402, 4294901760
    %1404 = vmatpush2.msra.mxu0 %v1403
    %1405 = vmatprep.subr.mxu0 0.0
    %v1406 = vand.u32 %v209, 4294901760
    %v1407 = vsub.f32 %v209, %v1406
    %v1408 = vand.u32 %v1407, 4294901760
    %v1409 = vsub.f32 %v1407, %v1408
    %v1410 = vand.u32 %v1409, 4294901760
    %1411 = vmatpush2.msra.mxu0 %v1410
    %1412 = vmatprep.subr.mxu0 0.0
    %v1413 = vand.u32 %v208, 4294901760
    %v1414 = vsub.f32 %v208, %v1413
    %v1415 = vand.u32 %v1414, 4294901760
    %v1416 = vsub.f32 %v1414, %v1415
    %v1417 = vand.u32 %v1416, 4294901760
    %1418 = vmatpush2.msra.mxu0 %v1417
    %1419 = vmatprep.subr.mxu0 0.0
    %v1420 = vand.u32 %v207, 4294901760
    %v1421 = vsub.f32 %v207, %v1420
    %v1422 = vand.u32 %v1421, 4294901760
    %v1423 = vsub.f32 %v1421, %v1422
    %v1424 = vand.u32 %v1423, 4294901760
    %1425 = vmatpush2.msra.mxu0 %v1424
    %1426 = vmatprep.subr.mxu0 0.0
    %v1427 = vand.u32 %v206, 4294901760
    %v1428 = vsub.f32 %v206, %v1427
    %v1429 = vand.u32 %v1428, 4294901760
    %v1430 = vsub.f32 %v1428, %v1429
    %v1431 = vand.u32 %v1430, 4294901760
    %1432 = vmatpush2.msra.mxu0 %v1431
    %1433 = vmatprep.subr.mxu0 0.0
    %v1434 = vand.u32 %v205, 4294901760
    %v1435 = vsub.f32 %v205, %v1434
    %v1436 = vand.u32 %v1435, 4294901760
    %v1437 = vsub.f32 %v1435, %v1436
    %v1438 = vand.u32 %v1437, 4294901760
    %1439 = vmatpush2.msra.mxu0 %v1438
    %1440 = vmatprep.subr.mxu0 0.0
    %v1441 = vand.u32 %v204, 4294901760
    %v1442 = vsub.f32 %v204, %v1441
    %v1443 = vand.u32 %v1442, 4294901760
    %v1444 = vsub.f32 %v1442, %v1443
    %v1445 = vand.u32 %v1444, 4294901760
    %1446 = vmatpush2.msra.mxu0 %v1445
    %1447 = vmatprep.subr.mxu0 0.0
    %v1448 = vand.u32 %v203, 4294901760
    %v1449 = vsub.f32 %v203, %v1448
    %v1450 = vand.u32 %v1449, 4294901760
    %v1451 = vsub.f32 %v1449, %v1450
    %v1452 = vand.u32 %v1451, 4294901760
    %1453 = vmatpush2.msra.mxu0 %v1452
    %1454 = vmatprep.subr.mxu0 0.0
    %v1455 = vand.u32 %v202, 4294901760
    %v1456 = vsub.f32 %v202, %v1455
    %v1457 = vand.u32 %v1456, 4294901760
    %v1458 = vsub.f32 %v1456, %v1457
    %v1459 = vand.u32 %v1458, 4294901760
    %1460 = vmatpush2.msra.mxu0 %v1459
    %v1461 = vand.u32 %v258, 4294901760
    %1462 = vmatprep.mubr.f32.mxu0 %v1461
    %v1463 = vand.u32 %v56, 4294901760
    %1464 = vmatmul.mubr.f32.gmra.mxu0 %v1463
    %v1465 = vpop.f32.mrf.mxu0
    %v1466 = vadd.f32 %v1234, %v1465
    %v1467 = vpop.f32.mrf.mxu0
    %1468 = vdwg.mxu0
    %1469 = vmatprep.subr.mxu0 0.0
    %v1470 = vand.u32 %v201, 4294901760
    %v1471 = vsub.f32 %v201, %v1470
    %1472 = vmatpush1.msra.mxu0 %v1471
    %1473 = vmatprep.subr.mxu0 0.0
    %v1474 = vand.u32 %v200, 4294901760
    %v1475 = vsub.f32 %v200, %v1474
    %1476 = vmatpush1.msra.mxu0 %v1475
    %1477 = vmatprep.subr.mxu0 0.0
    %v1478 = vand.u32 %v199, 4294901760
    %v1479 = vsub.f32 %v199, %v1478
    %1480 = vmatpush1.msra.mxu0 %v1479
    %1481 = vmatprep.subr.mxu0 0.0
    %v1482 = vand.u32 %v198, 4294901760
    %v1483 = vsub.f32 %v198, %v1482
    %1484 = vmatpush1.msra.mxu0 %v1483
    %1485 = vmatprep.subr.mxu0 0.0
    %v1486 = vand.u32 %v197, 4294901760
    %v1487 = vsub.f32 %v197, %v1486
    %1488 = vmatpush1.msra.mxu0 %v1487
    %1489 = vmatprep.subr.mxu0 0.0
    %v1490 = vand.u32 %v196, 4294901760
    %v1491 = vsub.f32 %v196, %v1490
    %1492 = vmatpush1.msra.mxu0 %v1491
    %1493 = vmatprep.subr.mxu0 0.0
    %v1494 = vand.u32 %v195, 4294901760
    %v1495 = vsub.f32 %v195, %v1494
    %1496 = vmatpush1.msra.mxu0 %v1495
    %1497 = vmatprep.subr.mxu0 0.0
    %v1498 = vand.u32 %v194, 4294901760
    %v1499 = vsub.f32 %v194, %v1498
    %1500 = vmatpush1.msra.mxu0 %v1499
    %1501 = vmatprep.subr.mxu0 0.0
    %v1502 = vand.u32 %v193, 4294901760
    %v1503 = vsub.f32 %v193, %v1502
    %1504 = vmatpush1.msra.mxu0 %v1503
    %1505 = vmatprep.subr.mxu0 0.0
    %v1506 = vand.u32 %v192, 4294901760
    %v1507 = vsub.f32 %v192, %v1506
    %1508 = vmatpush1.msra.mxu0 %v1507
    %1509 = vmatprep.subr.mxu0 0.0
    %v1510 = vand.u32 %v191, 4294901760
    %v1511 = vsub.f32 %v191, %v1510
    %1512 = vmatpush1.msra.mxu0 %v1511
    %1513 = vmatprep.subr.mxu0 0.0
    %v1514 = vand.u32 %v190, 4294901760
    %v1515 = vsub.f32 %v190, %v1514
    %1516 = vmatpush1.msra.mxu0 %v1515
    %1517 = vmatprep.subr.mxu0 0.0
    %v1518 = vand.u32 %v189, 4294901760
    %v1519 = vsub.f32 %v189, %v1518
    %1520 = vmatpush1.msra.mxu0 %v1519
    %1521 = vmatprep.subr.mxu0 0.0
    %v1522 = vand.u32 %v188, 4294901760
    %v1523 = vsub.f32 %v188, %v1522
    %1524 = vmatpush1.msra.mxu0 %v1523
    %1525 = vmatprep.subr.mxu0 0.0
    %v1526 = vand.u32 %v187, 4294901760
    %v1527 = vsub.f32 %v187, %v1526
    %1528 = vmatpush1.msra.mxu0 %v1527
    %1529 = vmatprep.subr.mxu0 0.0
    %v1530 = vand.u32 %v186, 4294901760
    %v1531 = vsub.f32 %v186, %v1530
    %1532 = vmatpush1.msra.mxu0 %v1531
    %1533 = vmatprep.subr.mxu0 0.0
    %v1534 = vand.u32 %v217, 4294901760
    %v1535 = vsub.f32 %v217, %v1534
    %1536 = vmatpush2.msra.mxu0 %v1535
    %1537 = vmatprep.subr.mxu0 0.0
    %v1538 = vand.u32 %v216, 4294901760
    %v1539 = vsub.f32 %v216, %v1538
    %1540 = vmatpush2.msra.mxu0 %v1539
    %1541 = vmatprep.subr.mxu0 0.0
    %v1542 = vand.u32 %v215, 4294901760
    %v1543 = vsub.f32 %v215, %v1542
    %1544 = vmatpush2.msra.mxu0 %v1543
    %1545 = vmatprep.subr.mxu0 0.0
    %v1546 = vand.u32 %v214, 4294901760
    %v1547 = vsub.f32 %v214, %v1546
    %1548 = vmatpush2.msra.mxu0 %v1547
    %1549 = vmatprep.subr.mxu0 0.0
    %v1550 = vand.u32 %v213, 4294901760
    %v1551 = vsub.f32 %v213, %v1550
    %1552 = vmatpush2.msra.mxu0 %v1551
    %1553 = vmatprep.subr.mxu0 0.0
    %v1554 = vand.u32 %v212, 4294901760
    %v1555 = vsub.f32 %v212, %v1554
    %1556 = vmatpush2.msra.mxu0 %v1555
    %1557 = vmatprep.subr.mxu0 0.0
    %v1558 = vand.u32 %v211, 4294901760
    %v1559 = vsub.f32 %v211, %v1558
    %1560 = vmatpush2.msra.mxu0 %v1559
    %1561 = vmatprep.subr.mxu0 0.0
    %v1562 = vand.u32 %v210, 4294901760
    %v1563 = vsub.f32 %v210, %v1562
    %1564 = vmatpush2.msra.mxu0 %v1563
    %1565 = vmatprep.subr.mxu0 0.0
    %v1566 = vand.u32 %v209, 4294901760
    %v1567 = vsub.f32 %v209, %v1566
    %1568 = vmatpush2.msra.mxu0 %v1567
    %1569 = vmatprep.subr.mxu0 0.0
    %v1570 = vand.u32 %v208, 4294901760
    %v1571 = vsub.f32 %v208, %v1570
    %1572 = vmatpush2.msra.mxu0 %v1571
    %1573 = vmatprep.subr.mxu0 0.0
    %v1574 = vand.u32 %v207, 4294901760
    %v1575 = vsub.f32 %v207, %v1574
    %1576 = vmatpush2.msra.mxu0 %v1575
    %1577 = vmatprep.subr.mxu0 0.0
    %v1578 = vand.u32 %v206, 4294901760
    %v1579 = vsub.f32 %v206, %v1578
    %1580 = vmatpush2.msra.mxu0 %v1579
    %1581 = vmatprep.subr.mxu0 0.0
    %v1582 = vand.u32 %v205, 4294901760
    %v1583 = vsub.f32 %v205, %v1582
    %1584 = vmatpush2.msra.mxu0 %v1583
    %1585 = vmatprep.subr.mxu0 0.0
    %v1586 = vand.u32 %v204, 4294901760
    %v1587 = vsub.f32 %v204, %v1586
    %1588 = vmatpush2.msra.mxu0 %v1587
    %1589 = vmatprep.subr.mxu0 0.0
    %v1590 = vand.u32 %v203, 4294901760
    %v1591 = vsub.f32 %v203, %v1590
    %1592 = vmatpush2.msra.mxu0 %v1591
    %1593 = vmatprep.subr.mxu0 0.0
    %v1594 = vand.u32 %v202, 4294901760
    %v1595 = vsub.f32 %v202, %v1594
    %1596 = vmatpush2.msra.mxu0 %v1595
    %v1597 = vand.u32 %v258, 4294901760
    %v1598 = vsub.f32 %v258, %v1597
    %1599 = vmatprep.mubr.f32.mxu0 %v1598
    %v1600 = vand.u32 %v56, 4294901760
    %v1601 = vsub.f32 %v56, %v1600
    %1602 = vmatmul.mubr.f32.gmra.mxu0 %v1601
    %v1603 = vpop.f32.mrf.mxu0
    %v1604 = vadd.f32 %v1466, %v1603
    %v1605 = vpop.f32.mrf.mxu0
    %1606 = vdwg.mxu0
    %1607 = vmatprep.subr.mxu0 0.0
    %v1608 = vand.u32 %v201, 4294901760
    %1609 = vmatpush1.msra.mxu0 %v1608
    %1610 = vmatprep.subr.mxu0 0.0
    %v1611 = vand.u32 %v200, 4294901760
    %1612 = vmatpush1.msra.mxu0 %v1611
    %1613 = vmatprep.subr.mxu0 0.0
    %v1614 = vand.u32 %v199, 4294901760
    %1615 = vmatpush1.msra.mxu0 %v1614
    %1616 = vmatprep.subr.mxu0 0.0
    %v1617 = vand.u32 %v198, 4294901760
    %1618 = vmatpush1.msra.mxu0 %v1617
    %1619 = vmatprep.subr.mxu0 0.0
    %v1620 = vand.u32 %v197, 4294901760
    %1621 = vmatpush1.msra.mxu0 %v1620
    %1622 = vmatprep.subr.mxu0 0.0
    %v1623 = vand.u32 %v196, 4294901760
    %1624 = vmatpush1.msra.mxu0 %v1623
    %1625 = vmatprep.subr.mxu0 0.0
    %v1626 = vand.u32 %v195, 4294901760
    %1627 = vmatpush1.msra.mxu0 %v1626
    %1628 = vmatprep.subr.mxu0 0.0
    %v1629 = vand.u32 %v194, 4294901760
    %1630 = vmatpush1.msra.mxu0 %v1629
    %1631 = vmatprep.subr.mxu0 0.0
    %v1632 = vand.u32 %v193, 4294901760
    %1633 = vmatpush1.msra.mxu0 %v1632
    %1634 = vmatprep.subr.mxu0 0.0
    %v1635 = vand.u32 %v192, 4294901760
    %1636 = vmatpush1.msra.mxu0 %v1635
    %1637 = vmatprep.subr.mxu0 0.0
    %v1638 = vand.u32 %v191, 4294901760
    %1639 = vmatpush1.msra.mxu0 %v1638
    %1640 = vmatprep.subr.mxu0 0.0
    %v1641 = vand.u32 %v190, 4294901760
    %1642 = vmatpush1.msra.mxu0 %v1641
    %1643 = vmatprep.subr.mxu0 0.0
    %v1644 = vand.u32 %v189, 4294901760
    %1645 = vmatpush1.msra.mxu0 %v1644
    %1646 = vmatprep.subr.mxu0 0.0
    %v1647 = vand.u32 %v188, 4294901760
    %1648 = vmatpush1.msra.mxu0 %v1647
    %1649 = vmatprep.subr.mxu0 0.0
    %v1650 = vand.u32 %v187, 4294901760
    %1651 = vmatpush1.msra.mxu0 %v1650
    %1652 = vmatprep.subr.mxu0 0.0
    %v1653 = vand.u32 %v186, 4294901760
    %1654 = vmatpush1.msra.mxu0 %v1653
    %1655 = vmatprep.subr.mxu0 0.0
    %v1656 = vand.u32 %v217, 4294901760
    %1657 = vmatpush2.msra.mxu0 %v1656
    %1658 = vmatprep.subr.mxu0 0.0
    %v1659 = vand.u32 %v216, 4294901760
    %1660 = vmatpush2.msra.mxu0 %v1659
    %1661 = vmatprep.subr.mxu0 0.0
    %v1662 = vand.u32 %v215, 4294901760
    %1663 = vmatpush2.msra.mxu0 %v1662
    %1664 = vmatprep.subr.mxu0 0.0
    %v1665 = vand.u32 %v214, 4294901760
    %1666 = vmatpush2.msra.mxu0 %v1665
    %1667 = vmatprep.subr.mxu0 0.0
    %v1668 = vand.u32 %v213, 4294901760
    %1669 = vmatpush2.msra.mxu0 %v1668
    %1670 = vmatprep.subr.mxu0 0.0
    %v1671 = vand.u32 %v212, 4294901760
    %1672 = vmatpush2.msra.mxu0 %v1671
    %1673 = vmatprep.subr.mxu0 0.0
    %v1674 = vand.u32 %v211, 4294901760
    %1675 = vmatpush2.msra.mxu0 %v1674
    %1676 = vmatprep.subr.mxu0 0.0
    %v1677 = vand.u32 %v210, 4294901760
    %1678 = vmatpush2.msra.mxu0 %v1677
    %1679 = vmatprep.subr.mxu0 0.0
    %v1680 = vand.u32 %v209, 4294901760
    %1681 = vmatpush2.msra.mxu0 %v1680
    %1682 = vmatprep.subr.mxu0 0.0
    %v1683 = vand.u32 %v208, 4294901760
    %1684 = vmatpush2.msra.mxu0 %v1683
    %1685 = vmatprep.subr.mxu0 0.0
    %v1686 = vand.u32 %v207, 4294901760
    %1687 = vmatpush2.msra.mxu0 %v1686
    %1688 = vmatprep.subr.mxu0 0.0
    %v1689 = vand.u32 %v206, 4294901760
    %1690 = vmatpush2.msra.mxu0 %v1689
    %1691 = vmatprep.subr.mxu0 0.0
    %v1692 = vand.u32 %v205, 4294901760
    %1693 = vmatpush2.msra.mxu0 %v1692
    %1694 = vmatprep.subr.mxu0 0.0
    %v1695 = vand.u32 %v204, 4294901760
    %1696 = vmatpush2.msra.mxu0 %v1695
    %1697 = vmatprep.subr.mxu0 0.0
    %v1698 = vand.u32 %v203, 4294901760
    %1699 = vmatpush2.msra.mxu0 %v1698
    %1700 = vmatprep.subr.mxu0 0.0
    %v1701 = vand.u32 %v202, 4294901760
    %1702 = vmatpush2.msra.mxu0 %v1701
    %v1703 = vand.u32 %v258, 4294901760
    %v1704 = vsub.f32 %v258, %v1703
    %v1705 = vand.u32 %v1704, 4294901760
    %1706 = vmatprep.mubr.f32.mxu0 %v1705
    %v1707 = vand.u32 %v56, 4294901760
    %v1708 = vsub.f32 %v56, %v1707
    %v1709 = vand.u32 %v1708, 4294901760
    %1710 = vmatmul.mubr.f32.gmra.mxu0 %v1709
    %v1711 = vpop.f32.mrf.mxu0
    %v1712 = vadd.f32 %v1604, %v1711
    %v1713 = vpop.f32.mrf.mxu0
    %1714 = vdwg.mxu0
    %1715 = vmatprep.subr.mxu0 0.0
    %v1716 = vand.u32 %v201, 4294901760
    %v1717 = vsub.f32 %v201, %v1716
    %v1718 = vand.u32 %v1717, 4294901760
    %1719 = vmatpush1.msra.mxu0 %v1718
    %1720 = vmatprep.subr.mxu0 0.0
    %v1721 = vand.u32 %v200, 4294901760
    %v1722 = vsub.f32 %v200, %v1721
    %v1723 = vand.u32 %v1722, 4294901760
    %1724 = vmatpush1.msra.mxu0 %v1723
    %1725 = vmatprep.subr.mxu0 0.0
    %v1726 = vand.u32 %v199, 4294901760
    %v1727 = vsub.f32 %v199, %v1726
    %v1728 = vand.u32 %v1727, 4294901760
    %1729 = vmatpush1.msra.mxu0 %v1728
    %1730 = vmatprep.subr.mxu0 0.0
    %v1731 = vand.u32 %v198, 4294901760
    %v1732 = vsub.f32 %v198, %v1731
    %v1733 = vand.u32 %v1732, 4294901760
    %1734 = vmatpush1.msra.mxu0 %v1733
    %1735 = vmatprep.subr.mxu0 0.0
    %v1736 = vand.u32 %v197, 4294901760
    %v1737 = vsub.f32 %v197, %v1736
    %v1738 = vand.u32 %v1737, 4294901760
    %1739 = vmatpush1.msra.mxu0 %v1738
    %1740 = vmatprep.subr.mxu0 0.0
    %v1741 = vand.u32 %v196, 4294901760
    %v1742 = vsub.f32 %v196, %v1741
    %v1743 = vand.u32 %v1742, 4294901760
    %1744 = vmatpush1.msra.mxu0 %v1743
    %1745 = vmatprep.subr.mxu0 0.0
    %v1746 = vand.u32 %v195, 4294901760
    %v1747 = vsub.f32 %v195, %v1746
    %v1748 = vand.u32 %v1747, 4294901760
    %1749 = vmatpush1.msra.mxu0 %v1748
    %1750 = vmatprep.subr.mxu0 0.0
    %v1751 = vand.u32 %v194, 4294901760
    %v1752 = vsub.f32 %v194, %v1751
    %v1753 = vand.u32 %v1752, 4294901760
    %1754 = vmatpush1.msra.mxu0 %v1753
    %1755 = vmatprep.subr.mxu0 0.0
    %v1756 = vand.u32 %v193, 4294901760
    %v1757 = vsub.f32 %v193, %v1756
    %v1758 = vand.u32 %v1757, 4294901760
    %1759 = vmatpush1.msra.mxu0 %v1758
    %1760 = vmatprep.subr.mxu0 0.0
    %v1761 = vand.u32 %v192, 4294901760
    %v1762 = vsub.f32 %v192, %v1761
    %v1763 = vand.u32 %v1762, 4294901760
    %1764 = vmatpush1.msra.mxu0 %v1763
    %1765 = vmatprep.subr.mxu0 0.0
    %v1766 = vand.u32 %v191, 4294901760
    %v1767 = vsub.f32 %v191, %v1766
    %v1768 = vand.u32 %v1767, 4294901760
    %1769 = vmatpush1.msra.mxu0 %v1768
    %1770 = vmatprep.subr.mxu0 0.0
    %v1771 = vand.u32 %v190, 4294901760
    %v1772 = vsub.f32 %v190, %v1771
    %v1773 = vand.u32 %v1772, 4294901760
    %1774 = vmatpush1.msra.mxu0 %v1773
    %1775 = vmatprep.subr.mxu0 0.0
    %v1776 = vand.u32 %v189, 4294901760
    %v1777 = vsub.f32 %v189, %v1776
    %v1778 = vand.u32 %v1777, 4294901760
    %1779 = vmatpush1.msra.mxu0 %v1778
    %1780 = vmatprep.subr.mxu0 0.0
    %v1781 = vand.u32 %v188, 4294901760
    %v1782 = vsub.f32 %v188, %v1781
    %v1783 = vand.u32 %v1782, 4294901760
    %1784 = vmatpush1.msra.mxu0 %v1783
    %1785 = vmatprep.subr.mxu0 0.0
    %v1786 = vand.u32 %v187, 4294901760
    %v1787 = vsub.f32 %v187, %v1786
    %v1788 = vand.u32 %v1787, 4294901760
    %1789 = vmatpush1.msra.mxu0 %v1788
    %1790 = vmatprep.subr.mxu0 0.0
    %v1791 = vand.u32 %v186, 4294901760
    %v1792 = vsub.f32 %v186, %v1791
    %v1793 = vand.u32 %v1792, 4294901760
    %1794 = vmatpush1.msra.mxu0 %v1793
    %1795 = vmatprep.subr.mxu0 0.0
    %v1796 = vand.u32 %v217, 4294901760
    %v1797 = vsub.f32 %v217, %v1796
    %v1798 = vand.u32 %v1797, 4294901760
    %1799 = vmatpush2.msra.mxu0 %v1798
    %1800 = vmatprep.subr.mxu0 0.0
    %v1801 = vand.u32 %v216, 4294901760
    %v1802 = vsub.f32 %v216, %v1801
    %v1803 = vand.u32 %v1802, 4294901760
    %1804 = vmatpush2.msra.mxu0 %v1803
    %1805 = vmatprep.subr.mxu0 0.0
    %v1806 = vand.u32 %v215, 4294901760
    %v1807 = vsub.f32 %v215, %v1806
    %v1808 = vand.u32 %v1807, 4294901760
    %1809 = vmatpush2.msra.mxu0 %v1808
    %1810 = vmatprep.subr.mxu0 0.0
    %v1811 = vand.u32 %v214, 4294901760
    %v1812 = vsub.f32 %v214, %v1811
    %v1813 = vand.u32 %v1812, 4294901760
    %1814 = vmatpush2.msra.mxu0 %v1813
    %1815 = vmatprep.subr.mxu0 0.0
    %v1816 = vand.u32 %v213, 4294901760
    %v1817 = vsub.f32 %v213, %v1816
    %v1818 = vand.u32 %v1817, 4294901760
    %1819 = vmatpush2.msra.mxu0 %v1818
    %1820 = vmatprep.subr.mxu0 0.0
    %v1821 = vand.u32 %v212, 4294901760
    %v1822 = vsub.f32 %v212, %v1821
    %v1823 = vand.u32 %v1822, 4294901760
    %1824 = vmatpush2.msra.mxu0 %v1823
    %1825 = vmatprep.subr.mxu0 0.0
    %v1826 = vand.u32 %v211, 4294901760
    %v1827 = vsub.f32 %v211, %v1826
    %v1828 = vand.u32 %v1827, 4294901760
    %1829 = vmatpush2.msra.mxu0 %v1828
    %1830 = vmatprep.subr.mxu0 0.0
    %v1831 = vand.u32 %v210, 4294901760
    %v1832 = vsub.f32 %v210, %v1831
    %v1833 = vand.u32 %v1832, 4294901760
    %1834 = vmatpush2.msra.mxu0 %v1833
    %1835 = vmatprep.subr.mxu0 0.0
    %v1836 = vand.u32 %v209, 4294901760
    %v1837 = vsub.f32 %v209, %v1836
    %v1838 = vand.u32 %v1837, 4294901760
    %1839 = vmatpush2.msra.mxu0 %v1838
    %1840 = vmatprep.subr.mxu0 0.0
    %v1841 = vand.u32 %v208, 4294901760
    %v1842 = vsub.f32 %v208, %v1841
    %v1843 = vand.u32 %v1842, 4294901760
    %1844 = vmatpush2.msra.mxu0 %v1843
    %1845 = vmatprep.subr.mxu0 0.0
    %v1846 = vand.u32 %v207, 4294901760
    %v1847 = vsub.f32 %v207, %v1846
    %v1848 = vand.u32 %v1847, 4294901760
    %1849 = vmatpush2.msra.mxu0 %v1848
    %1850 = vmatprep.subr.mxu0 0.0
    %v1851 = vand.u32 %v206, 4294901760
    %v1852 = vsub.f32 %v206, %v1851
    %v1853 = vand.u32 %v1852, 4294901760
    %1854 = vmatpush2.msra.mxu0 %v1853
    %1855 = vmatprep.subr.mxu0 0.0
    %v1856 = vand.u32 %v205, 4294901760
    %v1857 = vsub.f32 %v205, %v1856
    %v1858 = vand.u32 %v1857, 4294901760
    %1859 = vmatpush2.msra.mxu0 %v1858
    %1860 = vmatprep.subr.mxu0 0.0
    %v1861 = vand.u32 %v204, 4294901760
    %v1862 = vsub.f32 %v204, %v1861
    %v1863 = vand.u32 %v1862, 4294901760
    %1864 = vmatpush2.msra.mxu0 %v1863
    %1865 = vmatprep.subr.mxu0 0.0
    %v1866 = vand.u32 %v203, 4294901760
    %v1867 = vsub.f32 %v203, %v1866
    %v1868 = vand.u32 %v1867, 4294901760
    %1869 = vmatpush2.msra.mxu0 %v1868
    %1870 = vmatprep.subr.mxu0 0.0
    %v1871 = vand.u32 %v202, 4294901760
    %v1872 = vsub.f32 %v202, %v1871
    %v1873 = vand.u32 %v1872, 4294901760
    %1874 = vmatpush2.msra.mxu0 %v1873
    %v1875 = vand.u32 %v258, 4294901760
    %1876 = vmatprep.mubr.f32.mxu0 %v1875
    %v1877 = vand.u32 %v56, 4294901760
    %1878 = vmatmul.mubr.f32.gmra.mxu0 %v1877
    %v1879 = vpop.f32.mrf.mxu0
    %v1880 = vadd.f32 %v1712, %v1879
    %v1881 = vpop.f32.mrf.mxu0
    %1882 = vdwg.mxu0
    %1883 = vmatprep.subr.mxu0 0.0
    %v1884 = vand.u32 %v201, 4294901760
    %1885 = vmatpush1.msra.mxu0 %v1884
    %1886 = vmatprep.subr.mxu0 0.0
    %v1887 = vand.u32 %v200, 4294901760
    %1888 = vmatpush1.msra.mxu0 %v1887
    %1889 = vmatprep.subr.mxu0 0.0
    %v1890 = vand.u32 %v199, 4294901760
    %1891 = vmatpush1.msra.mxu0 %v1890
    %1892 = vmatprep.subr.mxu0 0.0
    %v1893 = vand.u32 %v198, 4294901760
    %1894 = vmatpush1.msra.mxu0 %v1893
    %1895 = vmatprep.subr.mxu0 0.0
    %v1896 = vand.u32 %v197, 4294901760
    %1897 = vmatpush1.msra.mxu0 %v1896
    %1898 = vmatprep.subr.mxu0 0.0
    %v1899 = vand.u32 %v196, 4294901760
    %1900 = vmatpush1.msra.mxu0 %v1899
    %1901 = vmatprep.subr.mxu0 0.0
    %v1902 = vand.u32 %v195, 4294901760
    %1903 = vmatpush1.msra.mxu0 %v1902
    %1904 = vmatprep.subr.mxu0 0.0
    %v1905 = vand.u32 %v194, 4294901760
    %1906 = vmatpush1.msra.mxu0 %v1905
    %1907 = vmatprep.subr.mxu0 0.0
    %v1908 = vand.u32 %v193, 4294901760
    %1909 = vmatpush1.msra.mxu0 %v1908
    %1910 = vmatprep.subr.mxu0 0.0
    %v1911 = vand.u32 %v192, 4294901760
    %1912 = vmatpush1.msra.mxu0 %v1911
    %1913 = vmatprep.subr.mxu0 0.0
    %v1914 = vand.u32 %v191, 4294901760
    %1915 = vmatpush1.msra.mxu0 %v1914
    %1916 = vmatprep.subr.mxu0 0.0
    %v1917 = vand.u32 %v190, 4294901760
    %1918 = vmatpush1.msra.mxu0 %v1917
    %1919 = vmatprep.subr.mxu0 0.0
    %v1920 = vand.u32 %v189, 4294901760
    %1921 = vmatpush1.msra.mxu0 %v1920
    %1922 = vmatprep.subr.mxu0 0.0
    %v1923 = vand.u32 %v188, 4294901760
    %1924 = vmatpush1.msra.mxu0 %v1923
    %1925 = vmatprep.subr.mxu0 0.0
    %v1926 = vand.u32 %v187, 4294901760
    %1927 = vmatpush1.msra.mxu0 %v1926
    %1928 = vmatprep.subr.mxu0 0.0
    %v1929 = vand.u32 %v186, 4294901760
    %1930 = vmatpush1.msra.mxu0 %v1929
    %1931 = vmatprep.subr.mxu0 0.0
    %v1932 = vand.u32 %v217, 4294901760
    %1933 = vmatpush2.msra.mxu0 %v1932
    %1934 = vmatprep.subr.mxu0 0.0
    %v1935 = vand.u32 %v216, 4294901760
    %1936 = vmatpush2.msra.mxu0 %v1935
    %1937 = vmatprep.subr.mxu0 0.0
    %v1938 = vand.u32 %v215, 4294901760
    %1939 = vmatpush2.msra.mxu0 %v1938
    %1940 = vmatprep.subr.mxu0 0.0
    %v1941 = vand.u32 %v214, 4294901760
    %1942 = vmatpush2.msra.mxu0 %v1941
    %1943 = vmatprep.subr.mxu0 0.0
    %v1944 = vand.u32 %v213, 4294901760
    %1945 = vmatpush2.msra.mxu0 %v1944
    %1946 = vmatprep.subr.mxu0 0.0
    %v1947 = vand.u32 %v212, 4294901760
    %1948 = vmatpush2.msra.mxu0 %v1947
    %1949 = vmatprep.subr.mxu0 0.0
    %v1950 = vand.u32 %v211, 4294901760
    %1951 = vmatpush2.msra.mxu0 %v1950
    %1952 = vmatprep.subr.mxu0 0.0
    %v1953 = vand.u32 %v210, 4294901760
    %1954 = vmatpush2.msra.mxu0 %v1953
    %1955 = vmatprep.subr.mxu0 0.0
    %v1956 = vand.u32 %v209, 4294901760
    %1957 = vmatpush2.msra.mxu0 %v1956
    %1958 = vmatprep.subr.mxu0 0.0
    %v1959 = vand.u32 %v208, 4294901760
    %1960 = vmatpush2.msra.mxu0 %v1959
    %1961 = vmatprep.subr.mxu0 0.0
    %v1962 = vand.u32 %v207, 4294901760
    %1963 = vmatpush2.msra.mxu0 %v1962
    %1964 = vmatprep.subr.mxu0 0.0
    %v1965 = vand.u32 %v206, 4294901760
    %1966 = vmatpush2.msra.mxu0 %v1965
    %1967 = vmatprep.subr.mxu0 0.0
    %v1968 = vand.u32 %v205, 4294901760
    %1969 = vmatpush2.msra.mxu0 %v1968
    %1970 = vmatprep.subr.mxu0 0.0
    %v1971 = vand.u32 %v204, 4294901760
    %1972 = vmatpush2.msra.mxu0 %v1971
    %1973 = vmatprep.subr.mxu0 0.0
    %v1974 = vand.u32 %v203, 4294901760
    %1975 = vmatpush2.msra.mxu0 %v1974
    %1976 = vmatprep.subr.mxu0 0.0
    %v1977 = vand.u32 %v202, 4294901760
    %1978 = vmatpush2.msra.mxu0 %v1977
    %v1979 = vand.u32 %v258, 4294901760
    %1980 = vmatprep.mubr.f32.mxu0 %v1979
    %v1981 = vand.u32 %v56, 4294901760
    %1982 = vmatmul.mubr.f32.gmra.mxu0 %v1981
    %v1983 = vpop.f32.mrf.mxu0
    %v1984 = vadd.f32 %v1880, %v1983
    %v1985 = vpop.f32.mrf.mxu0
    %1986 = vdwg.mxu0
    %1987 = vmatprep.subr.mxu0 0.0
    %v1988 = vand.u32 %v233, 4294901760
    %1989 = vmatpush1.msra.mxu0 %v1988
    %1990 = vmatprep.subr.mxu0 0.0
    %v1991 = vand.u32 %v232, 4294901760
    %1992 = vmatpush1.msra.mxu0 %v1991
    %1993 = vmatprep.subr.mxu0 0.0
    %v1994 = vand.u32 %v231, 4294901760
    %1995 = vmatpush1.msra.mxu0 %v1994
    %1996 = vmatprep.subr.mxu0 0.0
    %v1997 = vand.u32 %v230, 4294901760
    %1998 = vmatpush1.msra.mxu0 %v1997
    %1999 = vmatprep.subr.mxu0 0.0
    %v2000 = vand.u32 %v229, 4294901760
    %2001 = vmatpush1.msra.mxu0 %v2000
    %2002 = vmatprep.subr.mxu0 0.0
    %v2003 = vand.u32 %v228, 4294901760
    %2004 = vmatpush1.msra.mxu0 %v2003
    %2005 = vmatprep.subr.mxu0 0.0
    %v2006 = vand.u32 %v227, 4294901760
    %2007 = vmatpush1.msra.mxu0 %v2006
    %2008 = vmatprep.subr.mxu0 0.0
    %v2009 = vand.u32 %v226, 4294901760
    %2010 = vmatpush1.msra.mxu0 %v2009
    %2011 = vmatprep.subr.mxu0 0.0
    %v2012 = vand.u32 %v225, 4294901760
    %2013 = vmatpush1.msra.mxu0 %v2012
    %2014 = vmatprep.subr.mxu0 0.0
    %v2015 = vand.u32 %v224, 4294901760
    %2016 = vmatpush1.msra.mxu0 %v2015
    %2017 = vmatprep.subr.mxu0 0.0
    %v2018 = vand.u32 %v223, 4294901760
    %2019 = vmatpush1.msra.mxu0 %v2018
    %2020 = vmatprep.subr.mxu0 0.0
    %v2021 = vand.u32 %v222, 4294901760
    %2022 = vmatpush1.msra.mxu0 %v2021
    %2023 = vmatprep.subr.mxu0 0.0
    %v2024 = vand.u32 %v221, 4294901760
    %2025 = vmatpush1.msra.mxu0 %v2024
    %2026 = vmatprep.subr.mxu0 0.0
    %v2027 = vand.u32 %v220, 4294901760
    %2028 = vmatpush1.msra.mxu0 %v2027
    %2029 = vmatprep.subr.mxu0 0.0
    %v2030 = vand.u32 %v219, 4294901760
    %2031 = vmatpush1.msra.mxu0 %v2030
    %2032 = vmatprep.subr.mxu0 0.0
    %v2033 = vand.u32 %v218, 4294901760
    %2034 = vmatpush1.msra.mxu0 %v2033
    %2035 = vmatprep.subr.mxu0 0.0
    %v2036 = vand.u32 %v249, 4294901760
    %2037 = vmatpush2.msra.mxu0 %v2036
    %2038 = vmatprep.subr.mxu0 0.0
    %v2039 = vand.u32 %v248, 4294901760
    %2040 = vmatpush2.msra.mxu0 %v2039
    %2041 = vmatprep.subr.mxu0 0.0
    %v2042 = vand.u32 %v247, 4294901760
    %2043 = vmatpush2.msra.mxu0 %v2042
    %2044 = vmatprep.subr.mxu0 0.0
    %v2045 = vand.u32 %v246, 4294901760
    %2046 = vmatpush2.msra.mxu0 %v2045
    %2047 = vmatprep.subr.mxu0 0.0
    %v2048 = vand.u32 %v245, 4294901760
    %2049 = vmatpush2.msra.mxu0 %v2048
    %2050 = vmatprep.subr.mxu0 0.0
    %v2051 = vand.u32 %v244, 4294901760
    %2052 = vmatpush2.msra.mxu0 %v2051
    %2053 = vmatprep.subr.mxu0 0.0
    %v2054 = vand.u32 %v243, 4294901760
    %2055 = vmatpush2.msra.mxu0 %v2054
    %2056 = vmatprep.subr.mxu0 0.0
    %v2057 = vand.u32 %v242, 4294901760
    %2058 = vmatpush2.msra.mxu0 %v2057
    %2059 = vmatprep.subr.mxu0 0.0
    %v2060 = vand.u32 %v241, 4294901760
    %2061 = vmatpush2.msra.mxu0 %v2060
    %2062 = vmatprep.subr.mxu0 0.0
    %v2063 = vand.u32 %v240, 4294901760
    %2064 = vmatpush2.msra.mxu0 %v2063
    %2065 = vmatprep.subr.mxu0 0.0
    %v2066 = vand.u32 %v239, 4294901760
    %2067 = vmatpush2.msra.mxu0 %v2066
    %2068 = vmatprep.subr.mxu0 0.0
    %v2069 = vand.u32 %v238, 4294901760
    %2070 = vmatpush2.msra.mxu0 %v2069
    %2071 = vmatprep.subr.mxu0 0.0
    %v2072 = vand.u32 %v237, 4294901760
    %2073 = vmatpush2.msra.mxu0 %v2072
    %2074 = vmatprep.subr.mxu0 0.0
    %v2075 = vand.u32 %v236, 4294901760
    %2076 = vmatpush2.msra.mxu0 %v2075
    %2077 = vmatprep.subr.mxu0 0.0
    %v2078 = vand.u32 %v235, 4294901760
    %2079 = vmatpush2.msra.mxu0 %v2078
    %2080 = vmatprep.subr.mxu0 0.0
    %v2081 = vand.u32 %v234, 4294901760
    %2082 = vmatpush2.msra.mxu0 %v2081
    %v2083 = vand.u32 %v259, 4294901760
    %v2084 = vsub.f32 %v259, %v2083
    %v2085 = vand.u32 %v2084, 4294901760
    %v2086 = vsub.f32 %v2084, %v2085
    %v2087 = vand.u32 %v2086, 4294901760
    %2088 = vmatprep.mubr.f32.mxu0 %v2087
    %v2089 = vand.u32 %v57, 4294901760
    %v2090 = vsub.f32 %v57, %v2089
    %v2091 = vand.u32 %v2090, 4294901760
    %v2092 = vsub.f32 %v2090, %v2091
    %v2093 = vand.u32 %v2092, 4294901760
    %2094 = vmatmul.mubr.f32.gmra.mxu0 %v2093
    %v2095 = vpop.f32.mrf.mxu0
    %v2096 = vadd.f32 %v1984, %v2095
    %v2097 = vpop.f32.mrf.mxu0
    %2098 = vdwg.mxu0
    %2099 = vmatprep.subr.mxu0 0.0
    %v2100 = vand.u32 %v233, 4294901760
    %v2101 = vsub.f32 %v233, %v2100
    %v2102 = vand.u32 %v2101, 4294901760
    %v2103 = vsub.f32 %v2101, %v2102
    %v2104 = vand.u32 %v2103, 4294901760
    %2105 = vmatpush1.msra.mxu0 %v2104
    %2106 = vmatprep.subr.mxu0 0.0
    %v2107 = vand.u32 %v232, 4294901760
    %v2108 = vsub.f32 %v232, %v2107
    %v2109 = vand.u32 %v2108, 4294901760
    %v2110 = vsub.f32 %v2108, %v2109
    %v2111 = vand.u32 %v2110, 4294901760
    %2112 = vmatpush1.msra.mxu0 %v2111
    %2113 = vmatprep.subr.mxu0 0.0
    %v2114 = vand.u32 %v231, 4294901760
    %v2115 = vsub.f32 %v231, %v2114
    %v2116 = vand.u32 %v2115, 4294901760
    %v2117 = vsub.f32 %v2115, %v2116
    %v2118 = vand.u32 %v2117, 4294901760
    %2119 = vmatpush1.msra.mxu0 %v2118
    %2120 = vmatprep.subr.mxu0 0.0
    %v2121 = vand.u32 %v230, 4294901760
    %v2122 = vsub.f32 %v230, %v2121
    %v2123 = vand.u32 %v2122, 4294901760
    %v2124 = vsub.f32 %v2122, %v2123
    %v2125 = vand.u32 %v2124, 4294901760
    %2126 = vmatpush1.msra.mxu0 %v2125
    %2127 = vmatprep.subr.mxu0 0.0
    %v2128 = vand.u32 %v229, 4294901760
    %v2129 = vsub.f32 %v229, %v2128
    %v2130 = vand.u32 %v2129, 4294901760
    %v2131 = vsub.f32 %v2129, %v2130
    %v2132 = vand.u32 %v2131, 4294901760
    %2133 = vmatpush1.msra.mxu0 %v2132
    %2134 = vmatprep.subr.mxu0 0.0
    %v2135 = vand.u32 %v228, 4294901760
    %v2136 = vsub.f32 %v228, %v2135
    %v2137 = vand.u32 %v2136, 4294901760
    %v2138 = vsub.f32 %v2136, %v2137
    %v2139 = vand.u32 %v2138, 4294901760
    %2140 = vmatpush1.msra.mxu0 %v2139
    %2141 = vmatprep.subr.mxu0 0.0
    %v2142 = vand.u32 %v227, 4294901760
    %v2143 = vsub.f32 %v227, %v2142
    %v2144 = vand.u32 %v2143, 4294901760
    %v2145 = vsub.f32 %v2143, %v2144
    %v2146 = vand.u32 %v2145, 4294901760
    %2147 = vmatpush1.msra.mxu0 %v2146
    %2148 = vmatprep.subr.mxu0 0.0
    %v2149 = vand.u32 %v226, 4294901760
    %v2150 = vsub.f32 %v226, %v2149
    %v2151 = vand.u32 %v2150, 4294901760
    %v2152 = vsub.f32 %v2150, %v2151
    %v2153 = vand.u32 %v2152, 4294901760
    %2154 = vmatpush1.msra.mxu0 %v2153
    %2155 = vmatprep.subr.mxu0 0.0
    %v2156 = vand.u32 %v225, 4294901760
    %v2157 = vsub.f32 %v225, %v2156
    %v2158 = vand.u32 %v2157, 4294901760
    %v2159 = vsub.f32 %v2157, %v2158
    %v2160 = vand.u32 %v2159, 4294901760
    %2161 = vmatpush1.msra.mxu0 %v2160
    %2162 = vmatprep.subr.mxu0 0.0
    %v2163 = vand.u32 %v224, 4294901760
    %v2164 = vsub.f32 %v224, %v2163
    %v2165 = vand.u32 %v2164, 4294901760
    %v2166 = vsub.f32 %v2164, %v2165
    %v2167 = vand.u32 %v2166, 4294901760
    %2168 = vmatpush1.msra.mxu0 %v2167
    %2169 = vmatprep.subr.mxu0 0.0
    %v2170 = vand.u32 %v223, 4294901760
    %v2171 = vsub.f32 %v223, %v2170
    %v2172 = vand.u32 %v2171, 4294901760
    %v2173 = vsub.f32 %v2171, %v2172
    %v2174 = vand.u32 %v2173, 4294901760
    %2175 = vmatpush1.msra.mxu0 %v2174
    %2176 = vmatprep.subr.mxu0 0.0
    %v2177 = vand.u32 %v222, 4294901760
    %v2178 = vsub.f32 %v222, %v2177
    %v2179 = vand.u32 %v2178, 4294901760
    %v2180 = vsub.f32 %v2178, %v2179
    %v2181 = vand.u32 %v2180, 4294901760
    %2182 = vmatpush1.msra.mxu0 %v2181
    %2183 = vmatprep.subr.mxu0 0.0
    %v2184 = vand.u32 %v221, 4294901760
    %v2185 = vsub.f32 %v221, %v2184
    %v2186 = vand.u32 %v2185, 4294901760
    %v2187 = vsub.f32 %v2185, %v2186
    %v2188 = vand.u32 %v2187, 4294901760
    %2189 = vmatpush1.msra.mxu0 %v2188
    %2190 = vmatprep.subr.mxu0 0.0
    %v2191 = vand.u32 %v220, 4294901760
    %v2192 = vsub.f32 %v220, %v2191
    %v2193 = vand.u32 %v2192, 4294901760
    %v2194 = vsub.f32 %v2192, %v2193
    %v2195 = vand.u32 %v2194, 4294901760
    %2196 = vmatpush1.msra.mxu0 %v2195
    %2197 = vmatprep.subr.mxu0 0.0
    %v2198 = vand.u32 %v219, 4294901760
    %v2199 = vsub.f32 %v219, %v2198
    %v2200 = vand.u32 %v2199, 4294901760
    %v2201 = vsub.f32 %v2199, %v2200
    %v2202 = vand.u32 %v2201, 4294901760
    %2203 = vmatpush1.msra.mxu0 %v2202
    %2204 = vmatprep.subr.mxu0 0.0
    %v2205 = vand.u32 %v218, 4294901760
    %v2206 = vsub.f32 %v218, %v2205
    %v2207 = vand.u32 %v2206, 4294901760
    %v2208 = vsub.f32 %v2206, %v2207
    %v2209 = vand.u32 %v2208, 4294901760
    %2210 = vmatpush1.msra.mxu0 %v2209
    %2211 = vmatprep.subr.mxu0 0.0
    %v2212 = vand.u32 %v249, 4294901760
    %v2213 = vsub.f32 %v249, %v2212
    %v2214 = vand.u32 %v2213, 4294901760
    %v2215 = vsub.f32 %v2213, %v2214
    %v2216 = vand.u32 %v2215, 4294901760
    %2217 = vmatpush2.msra.mxu0 %v2216
    %2218 = vmatprep.subr.mxu0 0.0
    %v2219 = vand.u32 %v248, 4294901760
    %v2220 = vsub.f32 %v248, %v2219
    %v2221 = vand.u32 %v2220, 4294901760
    %v2222 = vsub.f32 %v2220, %v2221
    %v2223 = vand.u32 %v2222, 4294901760
    %2224 = vmatpush2.msra.mxu0 %v2223
    %2225 = vmatprep.subr.mxu0 0.0
    %v2226 = vand.u32 %v247, 4294901760
    %v2227 = vsub.f32 %v247, %v2226
    %v2228 = vand.u32 %v2227, 4294901760
    %v2229 = vsub.f32 %v2227, %v2228
    %v2230 = vand.u32 %v2229, 4294901760
    %2231 = vmatpush2.msra.mxu0 %v2230
    %2232 = vmatprep.subr.mxu0 0.0
    %v2233 = vand.u32 %v246, 4294901760
    %v2234 = vsub.f32 %v246, %v2233
    %v2235 = vand.u32 %v2234, 4294901760
    %v2236 = vsub.f32 %v2234, %v2235
    %v2237 = vand.u32 %v2236, 4294901760
    %2238 = vmatpush2.msra.mxu0 %v2237
    %2239 = vmatprep.subr.mxu0 0.0
    %v2240 = vand.u32 %v245, 4294901760
    %v2241 = vsub.f32 %v245, %v2240
    %v2242 = vand.u32 %v2241, 4294901760
    %v2243 = vsub.f32 %v2241, %v2242
    %v2244 = vand.u32 %v2243, 4294901760
    %2245 = vmatpush2.msra.mxu0 %v2244
    %2246 = vmatprep.subr.mxu0 0.0
    %v2247 = vand.u32 %v244, 4294901760
    %v2248 = vsub.f32 %v244, %v2247
    %v2249 = vand.u32 %v2248, 4294901760
    %v2250 = vsub.f32 %v2248, %v2249
    %v2251 = vand.u32 %v2250, 4294901760
    %2252 = vmatpush2.msra.mxu0 %v2251
    %2253 = vmatprep.subr.mxu0 0.0
    %v2254 = vand.u32 %v243, 4294901760
    %v2255 = vsub.f32 %v243, %v2254
    %v2256 = vand.u32 %v2255, 4294901760
    %v2257 = vsub.f32 %v2255, %v2256
    %v2258 = vand.u32 %v2257, 4294901760
    %2259 = vmatpush2.msra.mxu0 %v2258
    %2260 = vmatprep.subr.mxu0 0.0
    %v2261 = vand.u32 %v242, 4294901760
    %v2262 = vsub.f32 %v242, %v2261
    %v2263 = vand.u32 %v2262, 4294901760
    %v2264 = vsub.f32 %v2262, %v2263
    %v2265 = vand.u32 %v2264, 4294901760
    %2266 = vmatpush2.msra.mxu0 %v2265
    %2267 = vmatprep.subr.mxu0 0.0
    %v2268 = vand.u32 %v241, 4294901760
    %v2269 = vsub.f32 %v241, %v2268
    %v2270 = vand.u32 %v2269, 4294901760
    %v2271 = vsub.f32 %v2269, %v2270
    %v2272 = vand.u32 %v2271, 4294901760
    %2273 = vmatpush2.msra.mxu0 %v2272
    %2274 = vmatprep.subr.mxu0 0.0
    %v2275 = vand.u32 %v240, 4294901760
    %v2276 = vsub.f32 %v240, %v2275
    %v2277 = vand.u32 %v2276, 4294901760
    %v2278 = vsub.f32 %v2276, %v2277
    %v2279 = vand.u32 %v2278, 4294901760
    %2280 = vmatpush2.msra.mxu0 %v2279
    %2281 = vmatprep.subr.mxu0 0.0
    %v2282 = vand.u32 %v239, 4294901760
    %v2283 = vsub.f32 %v239, %v2282
    %v2284 = vand.u32 %v2283, 4294901760
    %v2285 = vsub.f32 %v2283, %v2284
    %v2286 = vand.u32 %v2285, 4294901760
    %2287 = vmatpush2.msra.mxu0 %v2286
    %2288 = vmatprep.subr.mxu0 0.0
    %v2289 = vand.u32 %v238, 4294901760
    %v2290 = vsub.f32 %v238, %v2289
    %v2291 = vand.u32 %v2290, 4294901760
    %v2292 = vsub.f32 %v2290, %v2291
    %v2293 = vand.u32 %v2292, 4294901760
    %2294 = vmatpush2.msra.mxu0 %v2293
    %2295 = vmatprep.subr.mxu0 0.0
    %v2296 = vand.u32 %v237, 4294901760
    %v2297 = vsub.f32 %v237, %v2296
    %v2298 = vand.u32 %v2297, 4294901760
    %v2299 = vsub.f32 %v2297, %v2298
    %v2300 = vand.u32 %v2299, 4294901760
    %2301 = vmatpush2.msra.mxu0 %v2300
    %2302 = vmatprep.subr.mxu0 0.0
    %v2303 = vand.u32 %v236, 4294901760
    %v2304 = vsub.f32 %v236, %v2303
    %v2305 = vand.u32 %v2304, 4294901760
    %v2306 = vsub.f32 %v2304, %v2305
    %v2307 = vand.u32 %v2306, 4294901760
    %2308 = vmatpush2.msra.mxu0 %v2307
    %2309 = vmatprep.subr.mxu0 0.0
    %v2310 = vand.u32 %v235, 4294901760
    %v2311 = vsub.f32 %v235, %v2310
    %v2312 = vand.u32 %v2311, 4294901760
    %v2313 = vsub.f32 %v2311, %v2312
    %v2314 = vand.u32 %v2313, 4294901760
    %2315 = vmatpush2.msra.mxu0 %v2314
    %2316 = vmatprep.subr.mxu0 0.0
    %v2317 = vand.u32 %v234, 4294901760
    %v2318 = vsub.f32 %v234, %v2317
    %v2319 = vand.u32 %v2318, 4294901760
    %v2320 = vsub.f32 %v2318, %v2319
    %v2321 = vand.u32 %v2320, 4294901760
    %2322 = vmatpush2.msra.mxu0 %v2321
    %v2323 = vand.u32 %v259, 4294901760
    %2324 = vmatprep.mubr.f32.mxu0 %v2323
    %v2325 = vand.u32 %v57, 4294901760
    %2326 = vmatmul.mubr.f32.gmra.mxu0 %v2325
    %v2327 = vpop.f32.mrf.mxu0
    %v2328 = vadd.f32 %v2096, %v2327
    %v2329 = vpop.f32.mrf.mxu0
    %2330 = vdwg.mxu0
    %2331 = vmatprep.subr.mxu0 0.0
    %v2332 = vand.u32 %v233, 4294901760
    %v2333 = vsub.f32 %v233, %v2332
    %2334 = vmatpush1.msra.mxu0 %v2333
    %2335 = vmatprep.subr.mxu0 0.0
    %v2336 = vand.u32 %v232, 4294901760
    %v2337 = vsub.f32 %v232, %v2336
    %2338 = vmatpush1.msra.mxu0 %v2337
    %2339 = vmatprep.subr.mxu0 0.0
    %v2340 = vand.u32 %v231, 4294901760
    %v2341 = vsub.f32 %v231, %v2340
    %2342 = vmatpush1.msra.mxu0 %v2341
    %2343 = vmatprep.subr.mxu0 0.0
    %v2344 = vand.u32 %v230, 4294901760
    %v2345 = vsub.f32 %v230, %v2344
    %2346 = vmatpush1.msra.mxu0 %v2345
    %2347 = vmatprep.subr.mxu0 0.0
    %v2348 = vand.u32 %v229, 4294901760
    %v2349 = vsub.f32 %v229, %v2348
    %2350 = vmatpush1.msra.mxu0 %v2349
    %2351 = vmatprep.subr.mxu0 0.0
    %v2352 = vand.u32 %v228, 4294901760
    %v2353 = vsub.f32 %v228, %v2352
    %2354 = vmatpush1.msra.mxu0 %v2353
    %2355 = vmatprep.subr.mxu0 0.0
    %v2356 = vand.u32 %v227, 4294901760
    %v2357 = vsub.f32 %v227, %v2356
    %2358 = vmatpush1.msra.mxu0 %v2357
    %2359 = vmatprep.subr.mxu0 0.0
    %v2360 = vand.u32 %v226, 4294901760
    %v2361 = vsub.f32 %v226, %v2360
    %2362 = vmatpush1.msra.mxu0 %v2361
    %2363 = vmatprep.subr.mxu0 0.0
    %v2364 = vand.u32 %v225, 4294901760
    %v2365 = vsub.f32 %v225, %v2364
    %2366 = vmatpush1.msra.mxu0 %v2365
    %2367 = vmatprep.subr.mxu0 0.0
    %v2368 = vand.u32 %v224, 4294901760
    %v2369 = vsub.f32 %v224, %v2368
    %2370 = vmatpush1.msra.mxu0 %v2369
    %2371 = vmatprep.subr.mxu0 0.0
    %v2372 = vand.u32 %v223, 4294901760
    %v2373 = vsub.f32 %v223, %v2372
    %2374 = vmatpush1.msra.mxu0 %v2373
    %2375 = vmatprep.subr.mxu0 0.0
    %v2376 = vand.u32 %v222, 4294901760
    %v2377 = vsub.f32 %v222, %v2376
    %2378 = vmatpush1.msra.mxu0 %v2377
    %2379 = vmatprep.subr.mxu0 0.0
    %v2380 = vand.u32 %v221, 4294901760
    %v2381 = vsub.f32 %v221, %v2380
    %2382 = vmatpush1.msra.mxu0 %v2381
    %2383 = vmatprep.subr.mxu0 0.0
    %v2384 = vand.u32 %v220, 4294901760
    %v2385 = vsub.f32 %v220, %v2384
    %2386 = vmatpush1.msra.mxu0 %v2385
    %2387 = vmatprep.subr.mxu0 0.0
    %v2388 = vand.u32 %v219, 4294901760
    %v2389 = vsub.f32 %v219, %v2388
    %2390 = vmatpush1.msra.mxu0 %v2389
    %2391 = vmatprep.subr.mxu0 0.0
    %v2392 = vand.u32 %v218, 4294901760
    %v2393 = vsub.f32 %v218, %v2392
    %2394 = vmatpush1.msra.mxu0 %v2393
    %2395 = vmatprep.subr.mxu0 0.0
    %v2396 = vand.u32 %v249, 4294901760
    %v2397 = vsub.f32 %v249, %v2396
    %2398 = vmatpush2.msra.mxu0 %v2397
    %2399 = vmatprep.subr.mxu0 0.0
    %v2400 = vand.u32 %v248, 4294901760
    %v2401 = vsub.f32 %v248, %v2400
    %2402 = vmatpush2.msra.mxu0 %v2401
    %2403 = vmatprep.subr.mxu0 0.0
    %v2404 = vand.u32 %v247, 4294901760
    %v2405 = vsub.f32 %v247, %v2404
    %2406 = vmatpush2.msra.mxu0 %v2405
    %2407 = vmatprep.subr.mxu0 0.0
    %v2408 = vand.u32 %v246, 4294901760
    %v2409 = vsub.f32 %v246, %v2408
    %2410 = vmatpush2.msra.mxu0 %v2409
    %2411 = vmatprep.subr.mxu0 0.0
    %v2412 = vand.u32 %v245, 4294901760
    %v2413 = vsub.f32 %v245, %v2412
    %2414 = vmatpush2.msra.mxu0 %v2413
    %2415 = vmatprep.subr.mxu0 0.0
    %v2416 = vand.u32 %v244, 4294901760
    %v2417 = vsub.f32 %v244, %v2416
    %2418 = vmatpush2.msra.mxu0 %v2417
    %2419 = vmatprep.subr.mxu0 0.0
    %v2420 = vand.u32 %v243, 4294901760
    %v2421 = vsub.f32 %v243, %v2420
    %2422 = vmatpush2.msra.mxu0 %v2421
    %2423 = vmatprep.subr.mxu0 0.0
    %v2424 = vand.u32 %v242, 4294901760
    %v2425 = vsub.f32 %v242, %v2424
    %2426 = vmatpush2.msra.mxu0 %v2425
    %2427 = vmatprep.subr.mxu0 0.0
    %v2428 = vand.u32 %v241, 4294901760
    %v2429 = vsub.f32 %v241, %v2428
    %2430 = vmatpush2.msra.mxu0 %v2429
    %2431 = vmatprep.subr.mxu0 0.0
    %v2432 = vand.u32 %v240, 4294901760
    %v2433 = vsub.f32 %v240, %v2432
    %2434 = vmatpush2.msra.mxu0 %v2433
    %2435 = vmatprep.subr.mxu0 0.0
    %v2436 = vand.u32 %v239, 4294901760
    %v2437 = vsub.f32 %v239, %v2436
    %2438 = vmatpush2.msra.mxu0 %v2437
    %2439 = vmatprep.subr.mxu0 0.0
    %v2440 = vand.u32 %v238, 4294901760
    %v2441 = vsub.f32 %v238, %v2440
    %2442 = vmatpush2.msra.mxu0 %v2441
    %2443 = vmatprep.subr.mxu0 0.0
    %v2444 = vand.u32 %v237, 4294901760
    %v2445 = vsub.f32 %v237, %v2444
    %2446 = vmatpush2.msra.mxu0 %v2445
    %2447 = vmatprep.subr.mxu0 0.0
    %v2448 = vand.u32 %v236, 4294901760
    %v2449 = vsub.f32 %v236, %v2448
    %2450 = vmatpush2.msra.mxu0 %v2449
    %2451 = vmatprep.subr.mxu0 0.0
    %v2452 = vand.u32 %v235, 4294901760
    %v2453 = vsub.f32 %v235, %v2452
    %2454 = vmatpush2.msra.mxu0 %v2453
    %2455 = vmatprep.subr.mxu0 0.0
    %v2456 = vand.u32 %v234, 4294901760
    %v2457 = vsub.f32 %v234, %v2456
    %2458 = vmatpush2.msra.mxu0 %v2457
    %v2459 = vand.u32 %v259, 4294901760
    %v2460 = vsub.f32 %v259, %v2459
    %2461 = vmatprep.mubr.f32.mxu0 %v2460
    %v2462 = vand.u32 %v57, 4294901760
    %v2463 = vsub.f32 %v57, %v2462
    %2464 = vmatmul.mubr.f32.gmra.mxu0 %v2463
    %v2465 = vpop.f32.mrf.mxu0
    %v2466 = vadd.f32 %v2328, %v2465
    %v2467 = vpop.f32.mrf.mxu0
    %2468 = vdwg.mxu0
    %2469 = vmatprep.subr.mxu0 0.0
    %v2470 = vand.u32 %v233, 4294901760
    %2471 = vmatpush1.msra.mxu0 %v2470
    %2472 = vmatprep.subr.mxu0 0.0
    %v2473 = vand.u32 %v232, 4294901760
    %2474 = vmatpush1.msra.mxu0 %v2473
    %2475 = vmatprep.subr.mxu0 0.0
    %v2476 = vand.u32 %v231, 4294901760
    %2477 = vmatpush1.msra.mxu0 %v2476
    %2478 = vmatprep.subr.mxu0 0.0
    %v2479 = vand.u32 %v230, 4294901760
    %2480 = vmatpush1.msra.mxu0 %v2479
    %2481 = vmatprep.subr.mxu0 0.0
    %v2482 = vand.u32 %v229, 4294901760
    %2483 = vmatpush1.msra.mxu0 %v2482
    %2484 = vmatprep.subr.mxu0 0.0
    %v2485 = vand.u32 %v228, 4294901760
    %2486 = vmatpush1.msra.mxu0 %v2485
    %2487 = vmatprep.subr.mxu0 0.0
    %v2488 = vand.u32 %v227, 4294901760
    %2489 = vmatpush1.msra.mxu0 %v2488
    %2490 = vmatprep.subr.mxu0 0.0
    %v2491 = vand.u32 %v226, 4294901760
    %2492 = vmatpush1.msra.mxu0 %v2491
    %2493 = vmatprep.subr.mxu0 0.0
    %v2494 = vand.u32 %v225, 4294901760
    %2495 = vmatpush1.msra.mxu0 %v2494
    %2496 = vmatprep.subr.mxu0 0.0
    %v2497 = vand.u32 %v224, 4294901760
    %2498 = vmatpush1.msra.mxu0 %v2497
    %2499 = vmatprep.subr.mxu0 0.0
    %v2500 = vand.u32 %v223, 4294901760
    %2501 = vmatpush1.msra.mxu0 %v2500
    %2502 = vmatprep.subr.mxu0 0.0
    %v2503 = vand.u32 %v222, 4294901760
    %2504 = vmatpush1.msra.mxu0 %v2503
    %2505 = vmatprep.subr.mxu0 0.0
    %v2506 = vand.u32 %v221, 4294901760
    %2507 = vmatpush1.msra.mxu0 %v2506
    %2508 = vmatprep.subr.mxu0 0.0
    %v2509 = vand.u32 %v220, 4294901760
    %2510 = vmatpush1.msra.mxu0 %v2509
    %2511 = vmatprep.subr.mxu0 0.0
    %v2512 = vand.u32 %v219, 4294901760
    %2513 = vmatpush1.msra.mxu0 %v2512
    %2514 = vmatprep.subr.mxu0 0.0
    %v2515 = vand.u32 %v218, 4294901760
    %2516 = vmatpush1.msra.mxu0 %v2515
    %2517 = vmatprep.subr.mxu0 0.0
    %v2518 = vand.u32 %v249, 4294901760
    %2519 = vmatpush2.msra.mxu0 %v2518
    %2520 = vmatprep.subr.mxu0 0.0
    %v2521 = vand.u32 %v248, 4294901760
    %2522 = vmatpush2.msra.mxu0 %v2521
    %2523 = vmatprep.subr.mxu0 0.0
    %v2524 = vand.u32 %v247, 4294901760
    %2525 = vmatpush2.msra.mxu0 %v2524
    %2526 = vmatprep.subr.mxu0 0.0
    %v2527 = vand.u32 %v246, 4294901760
    %2528 = vmatpush2.msra.mxu0 %v2527
    %2529 = vmatprep.subr.mxu0 0.0
    %v2530 = vand.u32 %v245, 4294901760
    %2531 = vmatpush2.msra.mxu0 %v2530
    %2532 = vmatprep.subr.mxu0 0.0
    %v2533 = vand.u32 %v244, 4294901760
    %2534 = vmatpush2.msra.mxu0 %v2533
    %2535 = vmatprep.subr.mxu0 0.0
    %v2536 = vand.u32 %v243, 4294901760
    %2537 = vmatpush2.msra.mxu0 %v2536
    %2538 = vmatprep.subr.mxu0 0.0
    %v2539 = vand.u32 %v242, 4294901760
    %2540 = vmatpush2.msra.mxu0 %v2539
    %2541 = vmatprep.subr.mxu0 0.0
    %v2542 = vand.u32 %v241, 4294901760
    %2543 = vmatpush2.msra.mxu0 %v2542
    %2544 = vmatprep.subr.mxu0 0.0
    %v2545 = vand.u32 %v240, 4294901760
    %2546 = vmatpush2.msra.mxu0 %v2545
    %2547 = vmatprep.subr.mxu0 0.0
    %v2548 = vand.u32 %v239, 4294901760
    %2549 = vmatpush2.msra.mxu0 %v2548
    %2550 = vmatprep.subr.mxu0 0.0
    %v2551 = vand.u32 %v238, 4294901760
    %2552 = vmatpush2.msra.mxu0 %v2551
    %2553 = vmatprep.subr.mxu0 0.0
    %v2554 = vand.u32 %v237, 4294901760
    %2555 = vmatpush2.msra.mxu0 %v2554
    %2556 = vmatprep.subr.mxu0 0.0
    %v2557 = vand.u32 %v236, 4294901760
    %2558 = vmatpush2.msra.mxu0 %v2557
    %2559 = vmatprep.subr.mxu0 0.0
    %v2560 = vand.u32 %v235, 4294901760
    %2561 = vmatpush2.msra.mxu0 %v2560
    %2562 = vmatprep.subr.mxu0 0.0
    %v2563 = vand.u32 %v234, 4294901760
    %2564 = vmatpush2.msra.mxu0 %v2563
    %v2565 = vand.u32 %v259, 4294901760
    %v2566 = vsub.f32 %v259, %v2565
    %v2567 = vand.u32 %v2566, 4294901760
    %2568 = vmatprep.mubr.f32.mxu0 %v2567
    %v2569 = vand.u32 %v57, 4294901760
    %v2570 = vsub.f32 %v57, %v2569
    %v2571 = vand.u32 %v2570, 4294901760
    %2572 = vmatmul.mubr.f32.gmra.mxu0 %v2571
    %v2573 = vpop.f32.mrf.mxu0
    %v2574 = vadd.f32 %v2466, %v2573
    %v2575 = vpop.f32.mrf.mxu0
    %2576 = vdwg.mxu0
    %2577 = vmatprep.subr.mxu0 0.0
    %v2578 = vand.u32 %v233, 4294901760
    %v2579 = vsub.f32 %v233, %v2578
    %v2580 = vand.u32 %v2579, 4294901760
    %2581 = vmatpush1.msra.mxu0 %v2580
    %2582 = vmatprep.subr.mxu0 0.0
    %v2583 = vand.u32 %v232, 4294901760
    %v2584 = vsub.f32 %v232, %v2583
    %v2585 = vand.u32 %v2584, 4294901760
    %2586 = vmatpush1.msra.mxu0 %v2585
    %2587 = vmatprep.subr.mxu0 0.0
    %v2588 = vand.u32 %v231, 4294901760
    %v2589 = vsub.f32 %v231, %v2588
    %v2590 = vand.u32 %v2589, 4294901760
    %2591 = vmatpush1.msra.mxu0 %v2590
    %2592 = vmatprep.subr.mxu0 0.0
    %v2593 = vand.u32 %v230, 4294901760
    %v2594 = vsub.f32 %v230, %v2593
    %v2595 = vand.u32 %v2594, 4294901760
    %2596 = vmatpush1.msra.mxu0 %v2595
    %2597 = vmatprep.subr.mxu0 0.0
    %v2598 = vand.u32 %v229, 4294901760
    %v2599 = vsub.f32 %v229, %v2598
    %v2600 = vand.u32 %v2599, 4294901760
    %2601 = vmatpush1.msra.mxu0 %v2600
    %2602 = vmatprep.subr.mxu0 0.0
    %v2603 = vand.u32 %v228, 4294901760
    %v2604 = vsub.f32 %v228, %v2603
    %v2605 = vand.u32 %v2604, 4294901760
    %2606 = vmatpush1.msra.mxu0 %v2605
    %2607 = vmatprep.subr.mxu0 0.0
    %v2608 = vand.u32 %v227, 4294901760
    %v2609 = vsub.f32 %v227, %v2608
    %v2610 = vand.u32 %v2609, 4294901760
    %2611 = vmatpush1.msra.mxu0 %v2610
    %2612 = vmatprep.subr.mxu0 0.0
    %v2613 = vand.u32 %v226, 4294901760
    %v2614 = vsub.f32 %v226, %v2613
    %v2615 = vand.u32 %v2614, 4294901760
    %2616 = vmatpush1.msra.mxu0 %v2615
    %2617 = vmatprep.subr.mxu0 0.0
    %v2618 = vand.u32 %v225, 4294901760
    %v2619 = vsub.f32 %v225, %v2618
    %v2620 = vand.u32 %v2619, 4294901760
    %2621 = vmatpush1.msra.mxu0 %v2620
    %2622 = vmatprep.subr.mxu0 0.0
    %v2623 = vand.u32 %v224, 4294901760
    %v2624 = vsub.f32 %v224, %v2623
    %v2625 = vand.u32 %v2624, 4294901760
    %2626 = vmatpush1.msra.mxu0 %v2625
    %2627 = vmatprep.subr.mxu0 0.0
    %v2628 = vand.u32 %v223, 4294901760
    %v2629 = vsub.f32 %v223, %v2628
    %v2630 = vand.u32 %v2629, 4294901760
    %2631 = vmatpush1.msra.mxu0 %v2630
    %2632 = vmatprep.subr.mxu0 0.0
    %v2633 = vand.u32 %v222, 4294901760
    %v2634 = vsub.f32 %v222, %v2633
    %v2635 = vand.u32 %v2634, 4294901760
    %2636 = vmatpush1.msra.mxu0 %v2635
    %2637 = vmatprep.subr.mxu0 0.0
    %v2638 = vand.u32 %v221, 4294901760
    %v2639 = vsub.f32 %v221, %v2638
    %v2640 = vand.u32 %v2639, 4294901760
    %2641 = vmatpush1.msra.mxu0 %v2640
    %2642 = vmatprep.subr.mxu0 0.0
    %v2643 = vand.u32 %v220, 4294901760
    %v2644 = vsub.f32 %v220, %v2643
    %v2645 = vand.u32 %v2644, 4294901760
    %2646 = vmatpush1.msra.mxu0 %v2645
    %2647 = vmatprep.subr.mxu0 0.0
    %v2648 = vand.u32 %v219, 4294901760
    %v2649 = vsub.f32 %v219, %v2648
    %v2650 = vand.u32 %v2649, 4294901760
    %2651 = vmatpush1.msra.mxu0 %v2650
    %2652 = vmatprep.subr.mxu0 0.0
    %v2653 = vand.u32 %v218, 4294901760
    %v2654 = vsub.f32 %v218, %v2653
    %v2655 = vand.u32 %v2654, 4294901760
    %2656 = vmatpush1.msra.mxu0 %v2655
    %2657 = vmatprep.subr.mxu0 0.0
    %v2658 = vand.u32 %v249, 4294901760
    %v2659 = vsub.f32 %v249, %v2658
    %v2660 = vand.u32 %v2659, 4294901760
    %2661 = vmatpush2.msra.mxu0 %v2660
    %2662 = vmatprep.subr.mxu0 0.0
    %v2663 = vand.u32 %v248, 4294901760
    %v2664 = vsub.f32 %v248, %v2663
    %v2665 = vand.u32 %v2664, 4294901760
    %2666 = vmatpush2.msra.mxu0 %v2665
    %2667 = vmatprep.subr.mxu0 0.0
    %v2668 = vand.u32 %v247, 4294901760
    %v2669 = vsub.f32 %v247, %v2668
    %v2670 = vand.u32 %v2669, 4294901760
    %2671 = vmatpush2.msra.mxu0 %v2670
    %2672 = vmatprep.subr.mxu0 0.0
    %v2673 = vand.u32 %v246, 4294901760
    %v2674 = vsub.f32 %v246, %v2673
    %v2675 = vand.u32 %v2674, 4294901760
    %2676 = vmatpush2.msra.mxu0 %v2675
    %2677 = vmatprep.subr.mxu0 0.0
    %v2678 = vand.u32 %v245, 4294901760
    %v2679 = vsub.f32 %v245, %v2678
    %v2680 = vand.u32 %v2679, 4294901760
    %2681 = vmatpush2.msra.mxu0 %v2680
    %2682 = vmatprep.subr.mxu0 0.0
    %v2683 = vand.u32 %v244, 4294901760
    %v2684 = vsub.f32 %v244, %v2683
    %v2685 = vand.u32 %v2684, 4294901760
    %2686 = vmatpush2.msra.mxu0 %v2685
    %2687 = vmatprep.subr.mxu0 0.0
    %v2688 = vand.u32 %v243, 4294901760
    %v2689 = vsub.f32 %v243, %v2688
    %v2690 = vand.u32 %v2689, 4294901760
    %2691 = vmatpush2.msra.mxu0 %v2690
    %2692 = vmatprep.subr.mxu0 0.0
    %v2693 = vand.u32 %v242, 4294901760
    %v2694 = vsub.f32 %v242, %v2693
    %v2695 = vand.u32 %v2694, 4294901760
    %2696 = vmatpush2.msra.mxu0 %v2695
    %2697 = vmatprep.subr.mxu0 0.0
    %v2698 = vand.u32 %v241, 4294901760
    %v2699 = vsub.f32 %v241, %v2698
    %v2700 = vand.u32 %v2699, 4294901760
    %2701 = vmatpush2.msra.mxu0 %v2700
    %2702 = vmatprep.subr.mxu0 0.0
    %v2703 = vand.u32 %v240, 4294901760
    %v2704 = vsub.f32 %v240, %v2703
    %v2705 = vand.u32 %v2704, 4294901760
    %2706 = vmatpush2.msra.mxu0 %v2705
    %2707 = vmatprep.subr.mxu0 0.0
    %v2708 = vand.u32 %v239, 4294901760
    %v2709 = vsub.f32 %v239, %v2708
    %v2710 = vand.u32 %v2709, 4294901760
    %2711 = vmatpush2.msra.mxu0 %v2710
    %2712 = vmatprep.subr.mxu0 0.0
    %v2713 = vand.u32 %v238, 4294901760
    %v2714 = vsub.f32 %v238, %v2713
    %v2715 = vand.u32 %v2714, 4294901760
    %2716 = vmatpush2.msra.mxu0 %v2715
    %2717 = vmatprep.subr.mxu0 0.0
    %v2718 = vand.u32 %v237, 4294901760
    %v2719 = vsub.f32 %v237, %v2718
    %v2720 = vand.u32 %v2719, 4294901760
    %2721 = vmatpush2.msra.mxu0 %v2720
    %2722 = vmatprep.subr.mxu0 0.0
    %v2723 = vand.u32 %v236, 4294901760
    %v2724 = vsub.f32 %v236, %v2723
    %v2725 = vand.u32 %v2724, 4294901760
    %2726 = vmatpush2.msra.mxu0 %v2725
    %2727 = vmatprep.subr.mxu0 0.0
    %v2728 = vand.u32 %v235, 4294901760
    %v2729 = vsub.f32 %v235, %v2728
    %v2730 = vand.u32 %v2729, 4294901760
    %2731 = vmatpush2.msra.mxu0 %v2730
    %2732 = vmatprep.subr.mxu0 0.0
    %v2733 = vand.u32 %v234, 4294901760
    %v2734 = vsub.f32 %v234, %v2733
    %v2735 = vand.u32 %v2734, 4294901760
    %2736 = vmatpush2.msra.mxu0 %v2735
    %v2737 = vand.u32 %v259, 4294901760
    %2738 = vmatprep.mubr.f32.mxu0 %v2737
    %v2739 = vand.u32 %v57, 4294901760
    %2740 = vmatmul.mubr.f32.gmra.mxu0 %v2739
    %v2741 = vpop.f32.mrf.mxu0
    %v2742 = vadd.f32 %v2574, %v2741
    %v2743 = vpop.f32.mrf.mxu0
    %2744 = vdwg.mxu0
    %2745 = vmatprep.subr.mxu0 0.0
    %v2746 = vand.u32 %v233, 4294901760
    %2747 = vmatpush1.msra.mxu0 %v2746
    %2748 = vmatprep.subr.mxu0 0.0
    %v2749 = vand.u32 %v232, 4294901760
    %2750 = vmatpush1.msra.mxu0 %v2749
    %2751 = vmatprep.subr.mxu0 0.0
    %v2752 = vand.u32 %v231, 4294901760
    %2753 = vmatpush1.msra.mxu0 %v2752
    %2754 = vmatprep.subr.mxu0 0.0
    %v2755 = vand.u32 %v230, 4294901760
    %2756 = vmatpush1.msra.mxu0 %v2755
    %2757 = vmatprep.subr.mxu0 0.0
    %v2758 = vand.u32 %v229, 4294901760
    %2759 = vmatpush1.msra.mxu0 %v2758
    %2760 = vmatprep.subr.mxu0 0.0
    %v2761 = vand.u32 %v228, 4294901760
    %2762 = vmatpush1.msra.mxu0 %v2761
    %2763 = vmatprep.subr.mxu0 0.0
    %v2764 = vand.u32 %v227, 4294901760
    %2765 = vmatpush1.msra.mxu0 %v2764
    %2766 = vmatprep.subr.mxu0 0.0
    %v2767 = vand.u32 %v226, 4294901760
    %2768 = vmatpush1.msra.mxu0 %v2767
    %2769 = vmatprep.subr.mxu0 0.0
    %v2770 = vand.u32 %v225, 4294901760
    %2771 = vmatpush1.msra.mxu0 %v2770
    %2772 = vmatprep.subr.mxu0 0.0
    %v2773 = vand.u32 %v224, 4294901760
    %2774 = vmatpush1.msra.mxu0 %v2773
    %2775 = vmatprep.subr.mxu0 0.0
    %v2776 = vand.u32 %v223, 4294901760
    %2777 = vmatpush1.msra.mxu0 %v2776
    %2778 = vmatprep.subr.mxu0 0.0
    %v2779 = vand.u32 %v222, 4294901760
    %2780 = vmatpush1.msra.mxu0 %v2779
    %2781 = vmatprep.subr.mxu0 0.0
    %v2782 = vand.u32 %v221, 4294901760
    %2783 = vmatpush1.msra.mxu0 %v2782
    %2784 = vmatprep.subr.mxu0 0.0
    %v2785 = vand.u32 %v220, 4294901760
    %2786 = vmatpush1.msra.mxu0 %v2785
    %2787 = vmatprep.subr.mxu0 0.0
    %v2788 = vand.u32 %v219, 4294901760
    %2789 = vmatpush1.msra.mxu0 %v2788
    %2790 = vmatprep.subr.mxu0 0.0
    %v2791 = vand.u32 %v218, 4294901760
    %2792 = vmatpush1.msra.mxu0 %v2791
    %2793 = vmatprep.subr.mxu0 0.0
    %v2794 = vand.u32 %v249, 4294901760
    %2795 = vmatpush2.msra.mxu0 %v2794
    %2796 = vmatprep.subr.mxu0 0.0
    %v2797 = vand.u32 %v248, 4294901760
    %2798 = vmatpush2.msra.mxu0 %v2797
    %2799 = vmatprep.subr.mxu0 0.0
    %v2800 = vand.u32 %v247, 4294901760
    %2801 = vmatpush2.msra.mxu0 %v2800
    %2802 = vmatprep.subr.mxu0 0.0
    %v2803 = vand.u32 %v246, 4294901760
    %2804 = vmatpush2.msra.mxu0 %v2803
    %2805 = vmatprep.subr.mxu0 0.0
    %v2806 = vand.u32 %v245, 4294901760
    %2807 = vmatpush2.msra.mxu0 %v2806
    %2808 = vmatprep.subr.mxu0 0.0
    %v2809 = vand.u32 %v244, 4294901760
    %2810 = vmatpush2.msra.mxu0 %v2809
    %2811 = vmatprep.subr.mxu0 0.0
    %v2812 = vand.u32 %v243, 4294901760
    %2813 = vmatpush2.msra.mxu0 %v2812
    %2814 = vmatprep.subr.mxu0 0.0
    %v2815 = vand.u32 %v242, 4294901760
    %2816 = vmatpush2.msra.mxu0 %v2815
    %2817 = vmatprep.subr.mxu0 0.0
    %v2818 = vand.u32 %v241, 4294901760
    %2819 = vmatpush2.msra.mxu0 %v2818
    %2820 = vmatprep.subr.mxu0 0.0
    %v2821 = vand.u32 %v240, 4294901760
    %2822 = vmatpush2.msra.mxu0 %v2821
    %2823 = vmatprep.subr.mxu0 0.0
    %v2824 = vand.u32 %v239, 4294901760
    %2825 = vmatpush2.msra.mxu0 %v2824
    %2826 = vmatprep.subr.mxu0 0.0
    %v2827 = vand.u32 %v238, 4294901760
    %2828 = vmatpush2.msra.mxu0 %v2827
    %2829 = vmatprep.subr.mxu0 0.0
    %v2830 = vand.u32 %v237, 4294901760
    %2831 = vmatpush2.msra.mxu0 %v2830
    %2832 = vmatprep.subr.mxu0 0.0
    %v2833 = vand.u32 %v236, 4294901760
    %2834 = vmatpush2.msra.mxu0 %v2833
    %2835 = vmatprep.subr.mxu0 0.0
    %v2836 = vand.u32 %v235, 4294901760
    %2837 = vmatpush2.msra.mxu0 %v2836
    %2838 = vmatprep.subr.mxu0 0.0
    %v2839 = vand.u32 %v234, 4294901760
    %2840 = vmatpush2.msra.mxu0 %v2839
    %v2841 = vand.u32 %v259, 4294901760
    %2842 = vmatprep.mubr.f32.mxu0 %v2841
    %v2843 = vand.u32 %v57, 4294901760
    %2844 = vmatmul.mubr.f32.gmra.mxu0 %v2843
    %v2845 = vpop.f32.mrf.mxu0
    %v2846 = vadd.f32 %v2742, %v2845
    %v2847 = vpop.f32.mrf.mxu0
    %2848 = vdwg.mxu0
    %v2849 = vmax.f32 %v2846, 0.0
    %v2850 = vlaneseq
    %v2851 = vshrl.u32 %v2850, 7
    %v2852 = vsub.s32 0, %v2851
    %v2853 = vrot.slane %v145, %v2852
    %2854 = vmatprep.subr.mxu0 0.0
    %v2855 = vand.u32 %v78, 4294901760
    %2856 = vmatpush1.msra.mxu0 %v2855
    %2857 = vmatprep.subr.mxu0 0.0
    %v2858 = vand.u32 %v77, 4294901760
    %2859 = vmatpush1.msra.mxu0 %v2858
    %2860 = vmatprep.subr.mxu0 0.0
    %v2861 = vand.u32 %v76, 4294901760
    %2862 = vmatpush1.msra.mxu0 %v2861
    %2863 = vmatprep.subr.mxu0 0.0
    %v2864 = vand.u32 %v75, 4294901760
    %2865 = vmatpush1.msra.mxu0 %v2864
    %2866 = vmatprep.subr.mxu0 0.0
    %v2867 = vand.u32 %v74, 4294901760
    %2868 = vmatpush1.msra.mxu0 %v2867
    %2869 = vmatprep.subr.mxu0 0.0
    %v2870 = vand.u32 %v73, 4294901760
    %2871 = vmatpush1.msra.mxu0 %v2870
    %2872 = vmatprep.subr.mxu0 0.0
    %v2873 = vand.u32 %v72, 4294901760
    %2874 = vmatpush1.msra.mxu0 %v2873
    %2875 = vmatprep.subr.mxu0 0.0
    %v2876 = vand.u32 %v71, 4294901760
    %2877 = vmatpush1.msra.mxu0 %v2876
    %2878 = vmatprep.subr.mxu0 0.0
    %v2879 = vand.u32 %v70, 4294901760
    %2880 = vmatpush1.msra.mxu0 %v2879
    %2881 = vmatprep.subr.mxu0 0.0
    %v2882 = vand.u32 %v69, 4294901760
    %2883 = vmatpush1.msra.mxu0 %v2882
    %2884 = vmatprep.subr.mxu0 0.0
    %v2885 = vand.u32 %v68, 4294901760
    %2886 = vmatpush1.msra.mxu0 %v2885
    %2887 = vmatprep.subr.mxu0 0.0
    %v2888 = vand.u32 %v67, 4294901760
    %2889 = vmatpush1.msra.mxu0 %v2888
    %2890 = vmatprep.subr.mxu0 0.0
    %v2891 = vand.u32 %v66, 4294901760
    %2892 = vmatpush1.msra.mxu0 %v2891
    %2893 = vmatprep.subr.mxu0 0.0
    %v2894 = vand.u32 %v65, 4294901760
    %2895 = vmatpush1.msra.mxu0 %v2894
    %2896 = vmatprep.subr.mxu0 0.0
    %v2897 = vand.u32 %v64, 4294901760
    %2898 = vmatpush1.msra.mxu0 %v2897
    %2899 = vmatprep.subr.mxu0 0.0
    %v2900 = vand.u32 %v63, 4294901760
    %2901 = vmatpush1.msra.mxu0 %v2900
    %2902 = vmatprep.subr.mxu0 0.0
    %2903 = vmatpush2.msra.mxu0 0.0
    %2904 = vmatprep.subr.mxu0 0.0
    %2905 = vmatpush2.msra.mxu0 0.0
    %2906 = vmatprep.subr.mxu0 0.0
    %2907 = vmatpush2.msra.mxu0 0.0
    %2908 = vmatprep.subr.mxu0 0.0
    %2909 = vmatpush2.msra.mxu0 0.0
    %2910 = vmatprep.subr.mxu0 0.0
    %2911 = vmatpush2.msra.mxu0 0.0
    %2912 = vmatprep.subr.mxu0 0.0
    %2913 = vmatpush2.msra.mxu0 0.0
    %2914 = vmatprep.subr.mxu0 0.0
    %2915 = vmatpush2.msra.mxu0 0.0
    %2916 = vmatprep.subr.mxu0 0.0
    %2917 = vmatpush2.msra.mxu0 0.0
    %2918 = vmatprep.subr.mxu0 0.0
    %2919 = vmatpush2.msra.mxu0 0.0
    %2920 = vmatprep.subr.mxu0 0.0
    %2921 = vmatpush2.msra.mxu0 0.0
    %2922 = vmatprep.subr.mxu0 0.0
    %2923 = vmatpush2.msra.mxu0 0.0
    %2924 = vmatprep.subr.mxu0 0.0
    %2925 = vmatpush2.msra.mxu0 0.0
    %2926 = vmatprep.subr.mxu0 0.0
    %2927 = vmatpush2.msra.mxu0 0.0
    %2928 = vmatprep.subr.mxu0 0.0
    %2929 = vmatpush2.msra.mxu0 0.0
    %2930 = vmatprep.subr.mxu0 0.0
    %2931 = vmatpush2.msra.mxu0 0.0
    %2932 = vmatprep.subr.mxu0 0.0
    %2933 = vmatpush2.msra.mxu0 0.0
    %2934 = vmatprep.mubr.f32.mxu0 0.0
    %v2935 = vand.u32 %v2849, 4294901760
    %v2936 = vsub.f32 %v2849, %v2935
    %v2937 = vand.u32 %v2936, 4294901760
    %v2938 = vsub.f32 %v2936, %v2937
    %v2939 = vand.u32 %v2938, 4294901760
    %2940 = vmatmul.mubr.f32.gmra.mxu0 %v2939
    %v2941 = vpop.f32.mrf.mxu0
    %v2942 = vadd.f32 %v2853, %v2941
    %v2943 = vpop.f32.mrf.mxu0
    %2944 = vdwg.mxu0
    %2945 = vmatprep.subr.mxu0 0.0
    %v2946 = vand.u32 %v78, 4294901760
    %v2947 = vsub.f32 %v78, %v2946
    %v2948 = vand.u32 %v2947, 4294901760
    %v2949 = vsub.f32 %v2947, %v2948
    %v2950 = vand.u32 %v2949, 4294901760
    %2951 = vmatpush1.msra.mxu0 %v2950
    %2952 = vmatprep.subr.mxu0 0.0
    %v2953 = vand.u32 %v77, 4294901760
    %v2954 = vsub.f32 %v77, %v2953
    %v2955 = vand.u32 %v2954, 4294901760
    %v2956 = vsub.f32 %v2954, %v2955
    %v2957 = vand.u32 %v2956, 4294901760
    %2958 = vmatpush1.msra.mxu0 %v2957
    %2959 = vmatprep.subr.mxu0 0.0
    %v2960 = vand.u32 %v76, 4294901760
    %v2961 = vsub.f32 %v76, %v2960
    %v2962 = vand.u32 %v2961, 4294901760
    %v2963 = vsub.f32 %v2961, %v2962
    %v2964 = vand.u32 %v2963, 4294901760
    %2965 = vmatpush1.msra.mxu0 %v2964
    %2966 = vmatprep.subr.mxu0 0.0
    %v2967 = vand.u32 %v75, 4294901760
    %v2968 = vsub.f32 %v75, %v2967
    %v2969 = vand.u32 %v2968, 4294901760
    %v2970 = vsub.f32 %v2968, %v2969
    %v2971 = vand.u32 %v2970, 4294901760
    %2972 = vmatpush1.msra.mxu0 %v2971
    %2973 = vmatprep.subr.mxu0 0.0
    %v2974 = vand.u32 %v74, 4294901760
    %v2975 = vsub.f32 %v74, %v2974
    %v2976 = vand.u32 %v2975, 4294901760
    %v2977 = vsub.f32 %v2975, %v2976
    %v2978 = vand.u32 %v2977, 4294901760
    %2979 = vmatpush1.msra.mxu0 %v2978
    %2980 = vmatprep.subr.mxu0 0.0
    %v2981 = vand.u32 %v73, 4294901760
    %v2982 = vsub.f32 %v73, %v2981
    %v2983 = vand.u32 %v2982, 4294901760
    %v2984 = vsub.f32 %v2982, %v2983
    %v2985 = vand.u32 %v2984, 4294901760
    %2986 = vmatpush1.msra.mxu0 %v2985
    %2987 = vmatprep.subr.mxu0 0.0
    %v2988 = vand.u32 %v72, 4294901760
    %v2989 = vsub.f32 %v72, %v2988
    %v2990 = vand.u32 %v2989, 4294901760
    %v2991 = vsub.f32 %v2989, %v2990
    %v2992 = vand.u32 %v2991, 4294901760
    %2993 = vmatpush1.msra.mxu0 %v2992
    %2994 = vmatprep.subr.mxu0 0.0
    %v2995 = vand.u32 %v71, 4294901760
    %v2996 = vsub.f32 %v71, %v2995
    %v2997 = vand.u32 %v2996, 4294901760
    %v2998 = vsub.f32 %v2996, %v2997
    %v2999 = vand.u32 %v2998, 4294901760
    %3000 = vmatpush1.msra.mxu0 %v2999
    %3001 = vmatprep.subr.mxu0 0.0
    %v3002 = vand.u32 %v70, 4294901760
    %v3003 = vsub.f32 %v70, %v3002
    %v3004 = vand.u32 %v3003, 4294901760
    %v3005 = vsub.f32 %v3003, %v3004
    %v3006 = vand.u32 %v3005, 4294901760
    %3007 = vmatpush1.msra.mxu0 %v3006
    %3008 = vmatprep.subr.mxu0 0.0
    %v3009 = vand.u32 %v69, 4294901760
    %v3010 = vsub.f32 %v69, %v3009
    %v3011 = vand.u32 %v3010, 4294901760
    %v3012 = vsub.f32 %v3010, %v3011
    %v3013 = vand.u32 %v3012, 4294901760
    %3014 = vmatpush1.msra.mxu0 %v3013
    %3015 = vmatprep.subr.mxu0 0.0
    %v3016 = vand.u32 %v68, 4294901760
    %v3017 = vsub.f32 %v68, %v3016
    %v3018 = vand.u32 %v3017, 4294901760
    %v3019 = vsub.f32 %v3017, %v3018
    %v3020 = vand.u32 %v3019, 4294901760
    %3021 = vmatpush1.msra.mxu0 %v3020
    %3022 = vmatprep.subr.mxu0 0.0
    %v3023 = vand.u32 %v67, 4294901760
    %v3024 = vsub.f32 %v67, %v3023
    %v3025 = vand.u32 %v3024, 4294901760
    %v3026 = vsub.f32 %v3024, %v3025
    %v3027 = vand.u32 %v3026, 4294901760
    %3028 = vmatpush1.msra.mxu0 %v3027
    %3029 = vmatprep.subr.mxu0 0.0
    %v3030 = vand.u32 %v66, 4294901760
    %v3031 = vsub.f32 %v66, %v3030
    %v3032 = vand.u32 %v3031, 4294901760
    %v3033 = vsub.f32 %v3031, %v3032
    %v3034 = vand.u32 %v3033, 4294901760
    %3035 = vmatpush1.msra.mxu0 %v3034
    %3036 = vmatprep.subr.mxu0 0.0
    %v3037 = vand.u32 %v65, 4294901760
    %v3038 = vsub.f32 %v65, %v3037
    %v3039 = vand.u32 %v3038, 4294901760
    %v3040 = vsub.f32 %v3038, %v3039
    %v3041 = vand.u32 %v3040, 4294901760
    %3042 = vmatpush1.msra.mxu0 %v3041
    %3043 = vmatprep.subr.mxu0 0.0
    %v3044 = vand.u32 %v64, 4294901760
    %v3045 = vsub.f32 %v64, %v3044
    %v3046 = vand.u32 %v3045, 4294901760
    %v3047 = vsub.f32 %v3045, %v3046
    %v3048 = vand.u32 %v3047, 4294901760
    %3049 = vmatpush1.msra.mxu0 %v3048
    %3050 = vmatprep.subr.mxu0 0.0
    %v3051 = vand.u32 %v63, 4294901760
    %v3052 = vsub.f32 %v63, %v3051
    %v3053 = vand.u32 %v3052, 4294901760
    %v3054 = vsub.f32 %v3052, %v3053
    %v3055 = vand.u32 %v3054, 4294901760
    %3056 = vmatpush1.msra.mxu0 %v3055
    %3057 = vmatprep.subr.mxu0 0.0
    %3058 = vmatpush2.msra.mxu0 0.0
    %3059 = vmatprep.subr.mxu0 0.0
    %3060 = vmatpush2.msra.mxu0 0.0
    %3061 = vmatprep.subr.mxu0 0.0
    %3062 = vmatpush2.msra.mxu0 0.0
    %3063 = vmatprep.subr.mxu0 0.0
    %3064 = vmatpush2.msra.mxu0 0.0
    %3065 = vmatprep.subr.mxu0 0.0
    %3066 = vmatpush2.msra.mxu0 0.0
    %3067 = vmatprep.subr.mxu0 0.0
    %3068 = vmatpush2.msra.mxu0 0.0
    %3069 = vmatprep.subr.mxu0 0.0
    %3070 = vmatpush2.msra.mxu0 0.0
    %3071 = vmatprep.subr.mxu0 0.0
    %3072 = vmatpush2.msra.mxu0 0.0
    %3073 = vmatprep.subr.mxu0 0.0
    %3074 = vmatpush2.msra.mxu0 0.0
    %3075 = vmatprep.subr.mxu0 0.0
    %3076 = vmatpush2.msra.mxu0 0.0
    %3077 = vmatprep.subr.mxu0 0.0
    %3078 = vmatpush2.msra.mxu0 0.0
    %3079 = vmatprep.subr.mxu0 0.0
    %3080 = vmatpush2.msra.mxu0 0.0
    %3081 = vmatprep.subr.mxu0 0.0
    %3082 = vmatpush2.msra.mxu0 0.0
    %3083 = vmatprep.subr.mxu0 0.0
    %3084 = vmatpush2.msra.mxu0 0.0
    %3085 = vmatprep.subr.mxu0 0.0
    %3086 = vmatpush2.msra.mxu0 0.0
    %3087 = vmatprep.subr.mxu0 0.0
    %3088 = vmatpush2.msra.mxu0 0.0
    %3089 = vmatprep.mubr.f32.mxu0 0.0
    %v3090 = vand.u32 %v2849, 4294901760
    %3091 = vmatmul.mubr.f32.gmra.mxu0 %v3090
    %v3092 = vpop.f32.mrf.mxu0
    %v3093 = vadd.f32 %v2942, %v3092
    %v3094 = vpop.f32.mrf.mxu0
    %3095 = vdwg.mxu0
    %3096 = vmatprep.subr.mxu0 0.0
    %v3097 = vand.u32 %v78, 4294901760
    %v3098 = vsub.f32 %v78, %v3097
    %3099 = vmatpush1.msra.mxu0 %v3098
    %3100 = vmatprep.subr.mxu0 0.0
    %v3101 = vand.u32 %v77, 4294901760
    %v3102 = vsub.f32 %v77, %v3101
    %3103 = vmatpush1.msra.mxu0 %v3102
    %3104 = vmatprep.subr.mxu0 0.0
    %v3105 = vand.u32 %v76, 4294901760
    %v3106 = vsub.f32 %v76, %v3105
    %3107 = vmatpush1.msra.mxu0 %v3106
    %3108 = vmatprep.subr.mxu0 0.0
    %v3109 = vand.u32 %v75, 4294901760
    %v3110 = vsub.f32 %v75, %v3109
    %3111 = vmatpush1.msra.mxu0 %v3110
    %3112 = vmatprep.subr.mxu0 0.0
    %v3113 = vand.u32 %v74, 4294901760
    %v3114 = vsub.f32 %v74, %v3113
    %3115 = vmatpush1.msra.mxu0 %v3114
    %3116 = vmatprep.subr.mxu0 0.0
    %v3117 = vand.u32 %v73, 4294901760
    %v3118 = vsub.f32 %v73, %v3117
    %3119 = vmatpush1.msra.mxu0 %v3118
    %3120 = vmatprep.subr.mxu0 0.0
    %v3121 = vand.u32 %v72, 4294901760
    %v3122 = vsub.f32 %v72, %v3121
    %3123 = vmatpush1.msra.mxu0 %v3122
    %3124 = vmatprep.subr.mxu0 0.0
    %v3125 = vand.u32 %v71, 4294901760
    %v3126 = vsub.f32 %v71, %v3125
    %3127 = vmatpush1.msra.mxu0 %v3126
    %3128 = vmatprep.subr.mxu0 0.0
    %v3129 = vand.u32 %v70, 4294901760
    %v3130 = vsub.f32 %v70, %v3129
    %3131 = vmatpush1.msra.mxu0 %v3130
    %3132 = vmatprep.subr.mxu0 0.0
    %v3133 = vand.u32 %v69, 4294901760
    %v3134 = vsub.f32 %v69, %v3133
    %3135 = vmatpush1.msra.mxu0 %v3134
    %3136 = vmatprep.subr.mxu0 0.0
    %v3137 = vand.u32 %v68, 4294901760
    %v3138 = vsub.f32 %v68, %v3137
    %3139 = vmatpush1.msra.mxu0 %v3138
    %3140 = vmatprep.subr.mxu0 0.0
    %v3141 = vand.u32 %v67, 4294901760
    %v3142 = vsub.f32 %v67, %v3141
    %3143 = vmatpush1.msra.mxu0 %v3142
    %3144 = vmatprep.subr.mxu0 0.0
    %v3145 = vand.u32 %v66, 4294901760
    %v3146 = vsub.f32 %v66, %v3145
    %3147 = vmatpush1.msra.mxu0 %v3146
    %3148 = vmatprep.subr.mxu0 0.0
    %v3149 = vand.u32 %v65, 4294901760
    %v3150 = vsub.f32 %v65, %v3149
    %3151 = vmatpush1.msra.mxu0 %v3150
    %3152 = vmatprep.subr.mxu0 0.0
    %v3153 = vand.u32 %v64, 4294901760
    %v3154 = vsub.f32 %v64, %v3153
    %3155 = vmatpush1.msra.mxu0 %v3154
    %3156 = vmatprep.subr.mxu0 0.0
    %v3157 = vand.u32 %v63, 4294901760
    %v3158 = vsub.f32 %v63, %v3157
    %3159 = vmatpush1.msra.mxu0 %v3158
    %3160 = vmatprep.subr.mxu0 0.0
    %3161 = vmatpush2.msra.mxu0 0.0
    %3162 = vmatprep.subr.mxu0 0.0
    %3163 = vmatpush2.msra.mxu0 0.0
    %3164 = vmatprep.subr.mxu0 0.0
    %3165 = vmatpush2.msra.mxu0 0.0
    %3166 = vmatprep.subr.mxu0 0.0
    %3167 = vmatpush2.msra.mxu0 0.0
    %3168 = vmatprep.subr.mxu0 0.0
    %3169 = vmatpush2.msra.mxu0 0.0
    %3170 = vmatprep.subr.mxu0 0.0
    %3171 = vmatpush2.msra.mxu0 0.0
    %3172 = vmatprep.subr.mxu0 0.0
    %3173 = vmatpush2.msra.mxu0 0.0
    %3174 = vmatprep.subr.mxu0 0.0
    %3175 = vmatpush2.msra.mxu0 0.0
    %3176 = vmatprep.subr.mxu0 0.0
    %3177 = vmatpush2.msra.mxu0 0.0
    %3178 = vmatprep.subr.mxu0 0.0
    %3179 = vmatpush2.msra.mxu0 0.0
    %3180 = vmatprep.subr.mxu0 0.0
    %3181 = vmatpush2.msra.mxu0 0.0
    %3182 = vmatprep.subr.mxu0 0.0
    %3183 = vmatpush2.msra.mxu0 0.0
    %3184 = vmatprep.subr.mxu0 0.0
    %3185 = vmatpush2.msra.mxu0 0.0
    %3186 = vmatprep.subr.mxu0 0.0
    %3187 = vmatpush2.msra.mxu0 0.0
    %3188 = vmatprep.subr.mxu0 0.0
    %3189 = vmatpush2.msra.mxu0 0.0
    %3190 = vmatprep.subr.mxu0 0.0
    %3191 = vmatpush2.msra.mxu0 0.0
    %3192 = vmatprep.mubr.f32.mxu0 0.0
    %v3193 = vand.u32 %v2849, 4294901760
    %v3194 = vsub.f32 %v2849, %v3193
    %3195 = vmatmul.mubr.f32.gmra.mxu0 %v3194
    %v3196 = vpop.f32.mrf.mxu0
    %v3197 = vadd.f32 %v3093, %v3196
    %v3198 = vpop.f32.mrf.mxu0
    %3199 = vdwg.mxu0
    %3200 = vmatprep.subr.mxu0 0.0
    %v3201 = vand.u32 %v78, 4294901760
    %3202 = vmatpush1.msra.mxu0 %v3201
    %3203 = vmatprep.subr.mxu0 0.0
    %v3204 = vand.u32 %v77, 4294901760
    %3205 = vmatpush1.msra.mxu0 %v3204
    %3206 = vmatprep.subr.mxu0 0.0
    %v3207 = vand.u32 %v76, 4294901760
    %3208 = vmatpush1.msra.mxu0 %v3207
    %3209 = vmatprep.subr.mxu0 0.0
    %v3210 = vand.u32 %v75, 4294901760
    %3211 = vmatpush1.msra.mxu0 %v3210
    %3212 = vmatprep.subr.mxu0 0.0
    %v3213 = vand.u32 %v74, 4294901760
    %3214 = vmatpush1.msra.mxu0 %v3213
    %3215 = vmatprep.subr.mxu0 0.0
    %v3216 = vand.u32 %v73, 4294901760
    %3217 = vmatpush1.msra.mxu0 %v3216
    %3218 = vmatprep.subr.mxu0 0.0
    %v3219 = vand.u32 %v72, 4294901760
    %3220 = vmatpush1.msra.mxu0 %v3219
    %3221 = vmatprep.subr.mxu0 0.0
    %v3222 = vand.u32 %v71, 4294901760
    %3223 = vmatpush1.msra.mxu0 %v3222
    %3224 = vmatprep.subr.mxu0 0.0
    %v3225 = vand.u32 %v70, 4294901760
    %3226 = vmatpush1.msra.mxu0 %v3225
    %3227 = vmatprep.subr.mxu0 0.0
    %v3228 = vand.u32 %v69, 4294901760
    %3229 = vmatpush1.msra.mxu0 %v3228
    %3230 = vmatprep.subr.mxu0 0.0
    %v3231 = vand.u32 %v68, 4294901760
    %3232 = vmatpush1.msra.mxu0 %v3231
    %3233 = vmatprep.subr.mxu0 0.0
    %v3234 = vand.u32 %v67, 4294901760
    %3235 = vmatpush1.msra.mxu0 %v3234
    %3236 = vmatprep.subr.mxu0 0.0
    %v3237 = vand.u32 %v66, 4294901760
    %3238 = vmatpush1.msra.mxu0 %v3237
    %3239 = vmatprep.subr.mxu0 0.0
    %v3240 = vand.u32 %v65, 4294901760
    %3241 = vmatpush1.msra.mxu0 %v3240
    %3242 = vmatprep.subr.mxu0 0.0
    %v3243 = vand.u32 %v64, 4294901760
    %3244 = vmatpush1.msra.mxu0 %v3243
    %3245 = vmatprep.subr.mxu0 0.0
    %v3246 = vand.u32 %v63, 4294901760
    %3247 = vmatpush1.msra.mxu0 %v3246
    %3248 = vmatprep.subr.mxu0 0.0
    %3249 = vmatpush2.msra.mxu0 0.0
    %3250 = vmatprep.subr.mxu0 0.0
    %3251 = vmatpush2.msra.mxu0 0.0
    %3252 = vmatprep.subr.mxu0 0.0
    %3253 = vmatpush2.msra.mxu0 0.0
    %3254 = vmatprep.subr.mxu0 0.0
    %3255 = vmatpush2.msra.mxu0 0.0
    %3256 = vmatprep.subr.mxu0 0.0
    %3257 = vmatpush2.msra.mxu0 0.0
    %3258 = vmatprep.subr.mxu0 0.0
    %3259 = vmatpush2.msra.mxu0 0.0
    %3260 = vmatprep.subr.mxu0 0.0
    %3261 = vmatpush2.msra.mxu0 0.0
    %3262 = vmatprep.subr.mxu0 0.0
    %3263 = vmatpush2.msra.mxu0 0.0
    %3264 = vmatprep.subr.mxu0 0.0
    %3265 = vmatpush2.msra.mxu0 0.0
    %3266 = vmatprep.subr.mxu0 0.0
    %3267 = vmatpush2.msra.mxu0 0.0
    %3268 = vmatprep.subr.mxu0 0.0
    %3269 = vmatpush2.msra.mxu0 0.0
    %3270 = vmatprep.subr.mxu0 0.0
    %3271 = vmatpush2.msra.mxu0 0.0
    %3272 = vmatprep.subr.mxu0 0.0
    %3273 = vmatpush2.msra.mxu0 0.0
    %3274 = vmatprep.subr.mxu0 0.0
    %3275 = vmatpush2.msra.mxu0 0.0
    %3276 = vmatprep.subr.mxu0 0.0
    %3277 = vmatpush2.msra.mxu0 0.0
    %3278 = vmatprep.subr.mxu0 0.0
    %3279 = vmatpush2.msra.mxu0 0.0
    %3280 = vmatprep.mubr.f32.mxu0 0.0
    %v3281 = vand.u32 %v2849, 4294901760
    %v3282 = vsub.f32 %v2849, %v3281
    %v3283 = vand.u32 %v3282, 4294901760
    %3284 = vmatmul.mubr.f32.gmra.mxu0 %v3283
    %v3285 = vpop.f32.mrf.mxu0
    %v3286 = vadd.f32 %v3197, %v3285
    %v3287 = vpop.f32.mrf.mxu0
    %3288 = vdwg.mxu0
    %3289 = vmatprep.subr.mxu0 0.0
    %v3290 = vand.u32 %v78, 4294901760
    %v3291 = vsub.f32 %v78, %v3290
    %v3292 = vand.u32 %v3291, 4294901760
    %3293 = vmatpush1.msra.mxu0 %v3292
    %3294 = vmatprep.subr.mxu0 0.0
    %v3295 = vand.u32 %v77, 4294901760
    %v3296 = vsub.f32 %v77, %v3295
    %v3297 = vand.u32 %v3296, 4294901760
    %3298 = vmatpush1.msra.mxu0 %v3297
    %3299 = vmatprep.subr.mxu0 0.0
    %v3300 = vand.u32 %v76, 4294901760
    %v3301 = vsub.f32 %v76, %v3300
    %v3302 = vand.u32 %v3301, 4294901760
    %3303 = vmatpush1.msra.mxu0 %v3302
    %3304 = vmatprep.subr.mxu0 0.0
    %v3305 = vand.u32 %v75, 4294901760
    %v3306 = vsub.f32 %v75, %v3305
    %v3307 = vand.u32 %v3306, 4294901760
    %3308 = vmatpush1.msra.mxu0 %v3307
    %3309 = vmatprep.subr.mxu0 0.0
    %v3310 = vand.u32 %v74, 4294901760
    %v3311 = vsub.f32 %v74, %v3310
    %v3312 = vand.u32 %v3311, 4294901760
    %3313 = vmatpush1.msra.mxu0 %v3312
    %3314 = vmatprep.subr.mxu0 0.0
    %v3315 = vand.u32 %v73, 4294901760
    %v3316 = vsub.f32 %v73, %v3315
    %v3317 = vand.u32 %v3316, 4294901760
    %3318 = vmatpush1.msra.mxu0 %v3317
    %3319 = vmatprep.subr.mxu0 0.0
    %v3320 = vand.u32 %v72, 4294901760
    %v3321 = vsub.f32 %v72, %v3320
    %v3322 = vand.u32 %v3321, 4294901760
    %3323 = vmatpush1.msra.mxu0 %v3322
    %3324 = vmatprep.subr.mxu0 0.0
    %v3325 = vand.u32 %v71, 4294901760
    %v3326 = vsub.f32 %v71, %v3325
    %v3327 = vand.u32 %v3326, 4294901760
    %3328 = vmatpush1.msra.mxu0 %v3327
    %3329 = vmatprep.subr.mxu0 0.0
    %v3330 = vand.u32 %v70, 4294901760
    %v3331 = vsub.f32 %v70, %v3330
    %v3332 = vand.u32 %v3331, 4294901760
    %3333 = vmatpush1.msra.mxu0 %v3332
    %3334 = vmatprep.subr.mxu0 0.0
    %v3335 = vand.u32 %v69, 4294901760
    %v3336 = vsub.f32 %v69, %v3335
    %v3337 = vand.u32 %v3336, 4294901760
    %3338 = vmatpush1.msra.mxu0 %v3337
    %3339 = vmatprep.subr.mxu0 0.0
    %v3340 = vand.u32 %v68, 4294901760
    %v3341 = vsub.f32 %v68, %v3340
    %v3342 = vand.u32 %v3341, 4294901760
    %3343 = vmatpush1.msra.mxu0 %v3342
    %3344 = vmatprep.subr.mxu0 0.0
    %v3345 = vand.u32 %v67, 4294901760
    %v3346 = vsub.f32 %v67, %v3345
    %v3347 = vand.u32 %v3346, 4294901760
    %3348 = vmatpush1.msra.mxu0 %v3347
    %3349 = vmatprep.subr.mxu0 0.0
    %v3350 = vand.u32 %v66, 4294901760
    %v3351 = vsub.f32 %v66, %v3350
    %v3352 = vand.u32 %v3351, 4294901760
    %3353 = vmatpush1.msra.mxu0 %v3352
    %3354 = vmatprep.subr.mxu0 0.0
    %v3355 = vand.u32 %v65, 4294901760
    %v3356 = vsub.f32 %v65, %v3355
    %v3357 = vand.u32 %v3356, 4294901760
    %3358 = vmatpush1.msra.mxu0 %v3357
    %3359 = vmatprep.subr.mxu0 0.0
    %v3360 = vand.u32 %v64, 4294901760
    %v3361 = vsub.f32 %v64, %v3360
    %v3362 = vand.u32 %v3361, 4294901760
    %3363 = vmatpush1.msra.mxu0 %v3362
    %3364 = vmatprep.subr.mxu0 0.0
    %v3365 = vand.u32 %v63, 4294901760
    %v3366 = vsub.f32 %v63, %v3365
    %v3367 = vand.u32 %v3366, 4294901760
    %3368 = vmatpush1.msra.mxu0 %v3367
    %3369 = vmatprep.subr.mxu0 0.0
    %3370 = vmatpush2.msra.mxu0 0.0
    %3371 = vmatprep.subr.mxu0 0.0
    %3372 = vmatpush2.msra.mxu0 0.0
    %3373 = vmatprep.subr.mxu0 0.0
    %3374 = vmatpush2.msra.mxu0 0.0
    %3375 = vmatprep.subr.mxu0 0.0
    %3376 = vmatpush2.msra.mxu0 0.0
    %3377 = vmatprep.subr.mxu0 0.0
    %3378 = vmatpush2.msra.mxu0 0.0
    %3379 = vmatprep.subr.mxu0 0.0
    %3380 = vmatpush2.msra.mxu0 0.0
    %3381 = vmatprep.subr.mxu0 0.0
    %3382 = vmatpush2.msra.mxu0 0.0
    %3383 = vmatprep.subr.mxu0 0.0
    %3384 = vmatpush2.msra.mxu0 0.0
    %3385 = vmatprep.subr.mxu0 0.0
    %3386 = vmatpush2.msra.mxu0 0.0
    %3387 = vmatprep.subr.mxu0 0.0
    %3388 = vmatpush2.msra.mxu0 0.0
    %3389 = vmatprep.subr.mxu0 0.0
    %3390 = vmatpush2.msra.mxu0 0.0
    %3391 = vmatprep.subr.mxu0 0.0
    %3392 = vmatpush2.msra.mxu0 0.0
    %3393 = vmatprep.subr.mxu0 0.0
    %3394 = vmatpush2.msra.mxu0 0.0
    %3395 = vmatprep.subr.mxu0 0.0
    %3396 = vmatpush2.msra.mxu0 0.0
    %3397 = vmatprep.subr.mxu0 0.0
    %3398 = vmatpush2.msra.mxu0 0.0
    %3399 = vmatprep.subr.mxu0 0.0
    %3400 = vmatpush2.msra.mxu0 0.0
    %3401 = vmatprep.mubr.f32.mxu0 0.0
    %v3402 = vand.u32 %v2849, 4294901760
    %3403 = vmatmul.mubr.f32.gmra.mxu0 %v3402
    %v3404 = vpop.f32.mrf.mxu0
    %v3405 = vadd.f32 %v3286, %v3404
    %v3406 = vpop.f32.mrf.mxu0
    %3407 = vdwg.mxu0
    %3408 = vmatprep.subr.mxu0 0.0
    %v3409 = vand.u32 %v78, 4294901760
    %3410 = vmatpush1.msra.mxu0 %v3409
    %3411 = vmatprep.subr.mxu0 0.0
    %v3412 = vand.u32 %v77, 4294901760
    %3413 = vmatpush1.msra.mxu0 %v3412
    %3414 = vmatprep.subr.mxu0 0.0
    %v3415 = vand.u32 %v76, 4294901760
    %3416 = vmatpush1.msra.mxu0 %v3415
    %3417 = vmatprep.subr.mxu0 0.0
    %v3418 = vand.u32 %v75, 4294901760
    %3419 = vmatpush1.msra.mxu0 %v3418
    %3420 = vmatprep.subr.mxu0 0.0
    %v3421 = vand.u32 %v74, 4294901760
    %3422 = vmatpush1.msra.mxu0 %v3421
    %3423 = vmatprep.subr.mxu0 0.0
    %v3424 = vand.u32 %v73, 4294901760
    %3425 = vmatpush1.msra.mxu0 %v3424
    %3426 = vmatprep.subr.mxu0 0.0
    %v3427 = vand.u32 %v72, 4294901760
    %3428 = vmatpush1.msra.mxu0 %v3427
    %3429 = vmatprep.subr.mxu0 0.0
    %v3430 = vand.u32 %v71, 4294901760
    %3431 = vmatpush1.msra.mxu0 %v3430
    %3432 = vmatprep.subr.mxu0 0.0
    %v3433 = vand.u32 %v70, 4294901760
    %3434 = vmatpush1.msra.mxu0 %v3433
    %3435 = vmatprep.subr.mxu0 0.0
    %v3436 = vand.u32 %v69, 4294901760
    %3437 = vmatpush1.msra.mxu0 %v3436
    %3438 = vmatprep.subr.mxu0 0.0
    %v3439 = vand.u32 %v68, 4294901760
    %3440 = vmatpush1.msra.mxu0 %v3439
    %3441 = vmatprep.subr.mxu0 0.0
    %v3442 = vand.u32 %v67, 4294901760
    %3443 = vmatpush1.msra.mxu0 %v3442
    %3444 = vmatprep.subr.mxu0 0.0
    %v3445 = vand.u32 %v66, 4294901760
    %3446 = vmatpush1.msra.mxu0 %v3445
    %3447 = vmatprep.subr.mxu0 0.0
    %v3448 = vand.u32 %v65, 4294901760
    %3449 = vmatpush1.msra.mxu0 %v3448
    %3450 = vmatprep.subr.mxu0 0.0
    %v3451 = vand.u32 %v64, 4294901760
    %3452 = vmatpush1.msra.mxu0 %v3451
    %3453 = vmatprep.subr.mxu0 0.0
    %v3454 = vand.u32 %v63, 4294901760
    %3455 = vmatpush1.msra.mxu0 %v3454
    %3456 = vmatprep.subr.mxu0 0.0
    %3457 = vmatpush2.msra.mxu0 0.0
    %3458 = vmatprep.subr.mxu0 0.0
    %3459 = vmatpush2.msra.mxu0 0.0
    %3460 = vmatprep.subr.mxu0 0.0
    %3461 = vmatpush2.msra.mxu0 0.0
    %3462 = vmatprep.subr.mxu0 0.0
    %3463 = vmatpush2.msra.mxu0 0.0
    %3464 = vmatprep.subr.mxu0 0.0
    %3465 = vmatpush2.msra.mxu0 0.0
    %3466 = vmatprep.subr.mxu0 0.0
    %3467 = vmatpush2.msra.mxu0 0.0
    %3468 = vmatprep.subr.mxu0 0.0
    %3469 = vmatpush2.msra.mxu0 0.0
    %3470 = vmatprep.subr.mxu0 0.0
    %3471 = vmatpush2.msra.mxu0 0.0
    %3472 = vmatprep.subr.mxu0 0.0
    %3473 = vmatpush2.msra.mxu0 0.0
    %3474 = vmatprep.subr.mxu0 0.0
    %3475 = vmatpush2.msra.mxu0 0.0
    %3476 = vmatprep.subr.mxu0 0.0
    %3477 = vmatpush2.msra.mxu0 0.0
    %3478 = vmatprep.subr.mxu0 0.0
    %3479 = vmatpush2.msra.mxu0 0.0
    %3480 = vmatprep.subr.mxu0 0.0
    %3481 = vmatpush2.msra.mxu0 0.0
    %3482 = vmatprep.subr.mxu0 0.0
    %3483 = vmatpush2.msra.mxu0 0.0
    %3484 = vmatprep.subr.mxu0 0.0
    %3485 = vmatpush2.msra.mxu0 0.0
    %3486 = vmatprep.subr.mxu0 0.0
    %3487 = vmatpush2.msra.mxu0 0.0
    %3488 = vmatprep.mubr.f32.mxu0 0.0
    %v3489 = vand.u32 %v2849, 4294901760
    %3490 = vmatmul.mubr.f32.gmra.mxu0 %v3489
    %v3491 = vpop.f32.mrf.mxu0
    %v3492 = vadd.f32 %v3405, %v3491
    %v3493 = vpop.f32.mrf.mxu0
    %3494 = vdwg.mxu0
    %v3495 = vlaneseq
    %v3496 = vshrl.u32 %v3495, 7
    %v3497 = vsub.s32 0, %v3496
    %v3498 = vrot.slane %v146, %v3497
    %3499 = vmatprep.subr.mxu0 0.0
    %v3500 = vand.u32 %v94, 4294901760
    %3501 = vmatpush1.msra.mxu0 %v3500
    %3502 = vmatprep.subr.mxu0 0.0
    %v3503 = vand.u32 %v93, 4294901760
    %3504 = vmatpush1.msra.mxu0 %v3503
    %3505 = vmatprep.subr.mxu0 0.0
    %v3506 = vand.u32 %v92, 4294901760
    %3507 = vmatpush1.msra.mxu0 %v3506
    %3508 = vmatprep.subr.mxu0 0.0
    %v3509 = vand.u32 %v91, 4294901760
    %3510 = vmatpush1.msra.mxu0 %v3509
    %3511 = vmatprep.subr.mxu0 0.0
    %v3512 = vand.u32 %v90, 4294901760
    %3513 = vmatpush1.msra.mxu0 %v3512
    %3514 = vmatprep.subr.mxu0 0.0
    %v3515 = vand.u32 %v89, 4294901760
    %3516 = vmatpush1.msra.mxu0 %v3515
    %3517 = vmatprep.subr.mxu0 0.0
    %v3518 = vand.u32 %v88, 4294901760
    %3519 = vmatpush1.msra.mxu0 %v3518
    %3520 = vmatprep.subr.mxu0 0.0
    %v3521 = vand.u32 %v87, 4294901760
    %3522 = vmatpush1.msra.mxu0 %v3521
    %3523 = vmatprep.subr.mxu0 0.0
    %v3524 = vand.u32 %v86, 4294901760
    %3525 = vmatpush1.msra.mxu0 %v3524
    %3526 = vmatprep.subr.mxu0 0.0
    %v3527 = vand.u32 %v85, 4294901760
    %3528 = vmatpush1.msra.mxu0 %v3527
    %3529 = vmatprep.subr.mxu0 0.0
    %v3530 = vand.u32 %v84, 4294901760
    %3531 = vmatpush1.msra.mxu0 %v3530
    %3532 = vmatprep.subr.mxu0 0.0
    %v3533 = vand.u32 %v83, 4294901760
    %3534 = vmatpush1.msra.mxu0 %v3533
    %3535 = vmatprep.subr.mxu0 0.0
    %v3536 = vand.u32 %v82, 4294901760
    %3537 = vmatpush1.msra.mxu0 %v3536
    %3538 = vmatprep.subr.mxu0 0.0
    %v3539 = vand.u32 %v81, 4294901760
    %3540 = vmatpush1.msra.mxu0 %v3539
    %3541 = vmatprep.subr.mxu0 0.0
    %v3542 = vand.u32 %v80, 4294901760
    %3543 = vmatpush1.msra.mxu0 %v3542
    %3544 = vmatprep.subr.mxu0 0.0
    %v3545 = vand.u32 %v79, 4294901760
    %3546 = vmatpush1.msra.mxu0 %v3545
    %3547 = vmatprep.subr.mxu0 0.0
    %3548 = vmatpush2.msra.mxu0 0.0
    %3549 = vmatprep.subr.mxu0 0.0
    %3550 = vmatpush2.msra.mxu0 0.0
    %3551 = vmatprep.subr.mxu0 0.0
    %3552 = vmatpush2.msra.mxu0 0.0
    %3553 = vmatprep.subr.mxu0 0.0
    %3554 = vmatpush2.msra.mxu0 0.0
    %3555 = vmatprep.subr.mxu0 0.0
    %3556 = vmatpush2.msra.mxu0 0.0
    %3557 = vmatprep.subr.mxu0 0.0
    %3558 = vmatpush2.msra.mxu0 0.0
    %3559 = vmatprep.subr.mxu0 0.0
    %3560 = vmatpush2.msra.mxu0 0.0
    %3561 = vmatprep.subr.mxu0 0.0
    %3562 = vmatpush2.msra.mxu0 0.0
    %3563 = vmatprep.subr.mxu0 0.0
    %3564 = vmatpush2.msra.mxu0 0.0
    %3565 = vmatprep.subr.mxu0 0.0
    %3566 = vmatpush2.msra.mxu0 0.0
    %3567 = vmatprep.subr.mxu0 0.0
    %3568 = vmatpush2.msra.mxu0 0.0
    %3569 = vmatprep.subr.mxu0 0.0
    %3570 = vmatpush2.msra.mxu0 0.0
    %3571 = vmatprep.subr.mxu0 0.0
    %3572 = vmatpush2.msra.mxu0 0.0
    %3573 = vmatprep.subr.mxu0 0.0
    %3574 = vmatpush2.msra.mxu0 0.0
    %3575 = vmatprep.subr.mxu0 0.0
    %3576 = vmatpush2.msra.mxu0 0.0
    %3577 = vmatprep.subr.mxu0 0.0
    %3578 = vmatpush2.msra.mxu0 0.0
    %3579 = vmatprep.mubr.f32.mxu0 0.0
    %v3580 = vand.u32 %v3492, 4294901760
    %v3581 = vsub.f32 %v3492, %v3580
    %v3582 = vand.u32 %v3581, 4294901760
    %v3583 = vsub.f32 %v3581, %v3582
    %v3584 = vand.u32 %v3583, 4294901760
    %3585 = vmatmul.mubr.f32.gmra.mxu0 %v3584
    %v3586 = vpop.f32.mrf.mxu0
    %v3587 = vadd.f32 %v3498, %v3586
    %v3588 = vpop.f32.mrf.mxu0
    %3589 = vdwg.mxu0
    %3590 = vmatprep.subr.mxu0 0.0
    %v3591 = vand.u32 %v94, 4294901760
    %v3592 = vsub.f32 %v94, %v3591
    %v3593 = vand.u32 %v3592, 4294901760
    %v3594 = vsub.f32 %v3592, %v3593
    %v3595 = vand.u32 %v3594, 4294901760
    %3596 = vmatpush1.msra.mxu0 %v3595
    %3597 = vmatprep.subr.mxu0 0.0
    %v3598 = vand.u32 %v93, 4294901760
    %v3599 = vsub.f32 %v93, %v3598
    %v3600 = vand.u32 %v3599, 4294901760
    %v3601 = vsub.f32 %v3599, %v3600
    %v3602 = vand.u32 %v3601, 4294901760
    %3603 = vmatpush1.msra.mxu0 %v3602
    %3604 = vmatprep.subr.mxu0 0.0
    %v3605 = vand.u32 %v92, 4294901760
    %v3606 = vsub.f32 %v92, %v3605
    %v3607 = vand.u32 %v3606, 4294901760
    %v3608 = vsub.f32 %v3606, %v3607
    %v3609 = vand.u32 %v3608, 4294901760
    %3610 = vmatpush1.msra.mxu0 %v3609
    %3611 = vmatprep.subr.mxu0 0.0
    %v3612 = vand.u32 %v91, 4294901760
    %v3613 = vsub.f32 %v91, %v3612
    %v3614 = vand.u32 %v3613, 4294901760
    %v3615 = vsub.f32 %v3613, %v3614
    %v3616 = vand.u32 %v3615, 4294901760
    %3617 = vmatpush1.msra.mxu0 %v3616
    %3618 = vmatprep.subr.mxu0 0.0
    %v3619 = vand.u32 %v90, 4294901760
    %v3620 = vsub.f32 %v90, %v3619
    %v3621 = vand.u32 %v3620, 4294901760
    %v3622 = vsub.f32 %v3620, %v3621
    %v3623 = vand.u32 %v3622, 4294901760
    %3624 = vmatpush1.msra.mxu0 %v3623
    %3625 = vmatprep.subr.mxu0 0.0
    %v3626 = vand.u32 %v89, 4294901760
    %v3627 = vsub.f32 %v89, %v3626
    %v3628 = vand.u32 %v3627, 4294901760
    %v3629 = vsub.f32 %v3627, %v3628
    %v3630 = vand.u32 %v3629, 4294901760
    %3631 = vmatpush1.msra.mxu0 %v3630
    %3632 = vmatprep.subr.mxu0 0.0
    %v3633 = vand.u32 %v88, 4294901760
    %v3634 = vsub.f32 %v88, %v3633
    %v3635 = vand.u32 %v3634, 4294901760
    %v3636 = vsub.f32 %v3634, %v3635
    %v3637 = vand.u32 %v3636, 4294901760
    %3638 = vmatpush1.msra.mxu0 %v3637
    %3639 = vmatprep.subr.mxu0 0.0
    %v3640 = vand.u32 %v87, 4294901760
    %v3641 = vsub.f32 %v87, %v3640
    %v3642 = vand.u32 %v3641, 4294901760
    %v3643 = vsub.f32 %v3641, %v3642
    %v3644 = vand.u32 %v3643, 4294901760
    %3645 = vmatpush1.msra.mxu0 %v3644
    %3646 = vmatprep.subr.mxu0 0.0
    %v3647 = vand.u32 %v86, 4294901760
    %v3648 = vsub.f32 %v86, %v3647
    %v3649 = vand.u32 %v3648, 4294901760
    %v3650 = vsub.f32 %v3648, %v3649
    %v3651 = vand.u32 %v3650, 4294901760
    %3652 = vmatpush1.msra.mxu0 %v3651
    %3653 = vmatprep.subr.mxu0 0.0
    %v3654 = vand.u32 %v85, 4294901760
    %v3655 = vsub.f32 %v85, %v3654
    %v3656 = vand.u32 %v3655, 4294901760
    %v3657 = vsub.f32 %v3655, %v3656
    %v3658 = vand.u32 %v3657, 4294901760
    %3659 = vmatpush1.msra.mxu0 %v3658
    %3660 = vmatprep.subr.mxu0 0.0
    %v3661 = vand.u32 %v84, 4294901760
    %v3662 = vsub.f32 %v84, %v3661
    %v3663 = vand.u32 %v3662, 4294901760
    %v3664 = vsub.f32 %v3662, %v3663
    %v3665 = vand.u32 %v3664, 4294901760
    %3666 = vmatpush1.msra.mxu0 %v3665
    %3667 = vmatprep.subr.mxu0 0.0
    %v3668 = vand.u32 %v83, 4294901760
    %v3669 = vsub.f32 %v83, %v3668
    %v3670 = vand.u32 %v3669, 4294901760
    %v3671 = vsub.f32 %v3669, %v3670
    %v3672 = vand.u32 %v3671, 4294901760
    %3673 = vmatpush1.msra.mxu0 %v3672
    %3674 = vmatprep.subr.mxu0 0.0
    %v3675 = vand.u32 %v82, 4294901760
    %v3676 = vsub.f32 %v82, %v3675
    %v3677 = vand.u32 %v3676, 4294901760
    %v3678 = vsub.f32 %v3676, %v3677
    %v3679 = vand.u32 %v3678, 4294901760
    %3680 = vmatpush1.msra.mxu0 %v3679
    %3681 = vmatprep.subr.mxu0 0.0
    %v3682 = vand.u32 %v81, 4294901760
    %v3683 = vsub.f32 %v81, %v3682
    %v3684 = vand.u32 %v3683, 4294901760
    %v3685 = vsub.f32 %v3683, %v3684
    %v3686 = vand.u32 %v3685, 4294901760
    %3687 = vmatpush1.msra.mxu0 %v3686
    %3688 = vmatprep.subr.mxu0 0.0
    %v3689 = vand.u32 %v80, 4294901760
    %v3690 = vsub.f32 %v80, %v3689
    %v3691 = vand.u32 %v3690, 4294901760
    %v3692 = vsub.f32 %v3690, %v3691
    %v3693 = vand.u32 %v3692, 4294901760
    %3694 = vmatpush1.msra.mxu0 %v3693
    %3695 = vmatprep.subr.mxu0 0.0
    %v3696 = vand.u32 %v79, 4294901760
    %v3697 = vsub.f32 %v79, %v3696
    %v3698 = vand.u32 %v3697, 4294901760
    %v3699 = vsub.f32 %v3697, %v3698
    %v3700 = vand.u32 %v3699, 4294901760
    %3701 = vmatpush1.msra.mxu0 %v3700
    %3702 = vmatprep.subr.mxu0 0.0
    %3703 = vmatpush2.msra.mxu0 0.0
    %3704 = vmatprep.subr.mxu0 0.0
    %3705 = vmatpush2.msra.mxu0 0.0
    %3706 = vmatprep.subr.mxu0 0.0
    %3707 = vmatpush2.msra.mxu0 0.0
    %3708 = vmatprep.subr.mxu0 0.0
    %3709 = vmatpush2.msra.mxu0 0.0
    %3710 = vmatprep.subr.mxu0 0.0
    %3711 = vmatpush2.msra.mxu0 0.0
    %3712 = vmatprep.subr.mxu0 0.0
    %3713 = vmatpush2.msra.mxu0 0.0
    %3714 = vmatprep.subr.mxu0 0.0
    %3715 = vmatpush2.msra.mxu0 0.0
    %3716 = vmatprep.subr.mxu0 0.0
    %3717 = vmatpush2.msra.mxu0 0.0
    %3718 = vmatprep.subr.mxu0 0.0
    %3719 = vmatpush2.msra.mxu0 0.0
    %3720 = vmatprep.subr.mxu0 0.0
    %3721 = vmatpush2.msra.mxu0 0.0
    %3722 = vmatprep.subr.mxu0 0.0
    %3723 = vmatpush2.msra.mxu0 0.0
    %3724 = vmatprep.subr.mxu0 0.0
    %3725 = vmatpush2.msra.mxu0 0.0
    %3726 = vmatprep.subr.mxu0 0.0
    %3727 = vmatpush2.msra.mxu0 0.0
    %3728 = vmatprep.subr.mxu0 0.0
    %3729 = vmatpush2.msra.mxu0 0.0
    %3730 = vmatprep.subr.mxu0 0.0
    %3731 = vmatpush2.msra.mxu0 0.0
    %3732 = vmatprep.subr.mxu0 0.0
    %3733 = vmatpush2.msra.mxu0 0.0
    %3734 = vmatprep.mubr.f32.mxu0 0.0
    %v3735 = vand.u32 %v3492, 4294901760
    %3736 = vmatmul.mubr.f32.gmra.mxu0 %v3735
    %v3737 = vpop.f32.mrf.mxu0
    %v3738 = vadd.f32 %v3587, %v3737
    %v3739 = vpop.f32.mrf.mxu0
    %3740 = vdwg.mxu0
    %3741 = vmatprep.subr.mxu0 0.0
    %v3742 = vand.u32 %v94, 4294901760
    %v3743 = vsub.f32 %v94, %v3742
    %3744 = vmatpush1.msra.mxu0 %v3743
    %3745 = vmatprep.subr.mxu0 0.0
    %v3746 = vand.u32 %v93, 4294901760
    %v3747 = vsub.f32 %v93, %v3746
    %3748 = vmatpush1.msra.mxu0 %v3747
    %3749 = vmatprep.subr.mxu0 0.0
    %v3750 = vand.u32 %v92, 4294901760
    %v3751 = vsub.f32 %v92, %v3750
    %3752 = vmatpush1.msra.mxu0 %v3751
    %3753 = vmatprep.subr.mxu0 0.0
    %v3754 = vand.u32 %v91, 4294901760
    %v3755 = vsub.f32 %v91, %v3754
    %3756 = vmatpush1.msra.mxu0 %v3755
    %3757 = vmatprep.subr.mxu0 0.0
    %v3758 = vand.u32 %v90, 4294901760
    %v3759 = vsub.f32 %v90, %v3758
    %3760 = vmatpush1.msra.mxu0 %v3759
    %3761 = vmatprep.subr.mxu0 0.0
    %v3762 = vand.u32 %v89, 4294901760
    %v3763 = vsub.f32 %v89, %v3762
    %3764 = vmatpush1.msra.mxu0 %v3763
    %3765 = vmatprep.subr.mxu0 0.0
    %v3766 = vand.u32 %v88, 4294901760
    %v3767 = vsub.f32 %v88, %v3766
    %3768 = vmatpush1.msra.mxu0 %v3767
    %3769 = vmatprep.subr.mxu0 0.0
    %v3770 = vand.u32 %v87, 4294901760
    %v3771 = vsub.f32 %v87, %v3770
    %3772 = vmatpush1.msra.mxu0 %v3771
    %3773 = vmatprep.subr.mxu0 0.0
    %v3774 = vand.u32 %v86, 4294901760
    %v3775 = vsub.f32 %v86, %v3774
    %3776 = vmatpush1.msra.mxu0 %v3775
    %3777 = vmatprep.subr.mxu0 0.0
    %v3778 = vand.u32 %v85, 4294901760
    %v3779 = vsub.f32 %v85, %v3778
    %3780 = vmatpush1.msra.mxu0 %v3779
    %3781 = vmatprep.subr.mxu0 0.0
    %v3782 = vand.u32 %v84, 4294901760
    %v3783 = vsub.f32 %v84, %v3782
    %3784 = vmatpush1.msra.mxu0 %v3783
    %3785 = vmatprep.subr.mxu0 0.0
    %v3786 = vand.u32 %v83, 4294901760
    %v3787 = vsub.f32 %v83, %v3786
    %3788 = vmatpush1.msra.mxu0 %v3787
    %3789 = vmatprep.subr.mxu0 0.0
    %v3790 = vand.u32 %v82, 4294901760
    %v3791 = vsub.f32 %v82, %v3790
    %3792 = vmatpush1.msra.mxu0 %v3791
    %3793 = vmatprep.subr.mxu0 0.0
    %v3794 = vand.u32 %v81, 4294901760
    %v3795 = vsub.f32 %v81, %v3794
    %3796 = vmatpush1.msra.mxu0 %v3795
    %3797 = vmatprep.subr.mxu0 0.0
    %v3798 = vand.u32 %v80, 4294901760
    %v3799 = vsub.f32 %v80, %v3798
    %3800 = vmatpush1.msra.mxu0 %v3799
    %3801 = vmatprep.subr.mxu0 0.0
    %v3802 = vand.u32 %v79, 4294901760
    %v3803 = vsub.f32 %v79, %v3802
    %3804 = vmatpush1.msra.mxu0 %v3803
    %3805 = vmatprep.subr.mxu0 0.0
    %3806 = vmatpush2.msra.mxu0 0.0
    %3807 = vmatprep.subr.mxu0 0.0
    %3808 = vmatpush2.msra.mxu0 0.0
    %3809 = vmatprep.subr.mxu0 0.0
    %3810 = vmatpush2.msra.mxu0 0.0
    %3811 = vmatprep.subr.mxu0 0.0
    %3812 = vmatpush2.msra.mxu0 0.0
    %3813 = vmatprep.subr.mxu0 0.0
    %3814 = vmatpush2.msra.mxu0 0.0
    %3815 = vmatprep.subr.mxu0 0.0
    %3816 = vmatpush2.msra.mxu0 0.0
    %3817 = vmatprep.subr.mxu0 0.0
    %3818 = vmatpush2.msra.mxu0 0.0
    %3819 = vmatprep.subr.mxu0 0.0
    %3820 = vmatpush2.msra.mxu0 0.0
    %3821 = vmatprep.subr.mxu0 0.0
    %3822 = vmatpush2.msra.mxu0 0.0
    %3823 = vmatprep.subr.mxu0 0.0
    %3824 = vmatpush2.msra.mxu0 0.0
    %3825 = vmatprep.subr.mxu0 0.0
    %3826 = vmatpush2.msra.mxu0 0.0
    %3827 = vmatprep.subr.mxu0 0.0
    %3828 = vmatpush2.msra.mxu0 0.0
    %3829 = vmatprep.subr.mxu0 0.0
    %3830 = vmatpush2.msra.mxu0 0.0
    %3831 = vmatprep.subr.mxu0 0.0
    %3832 = vmatpush2.msra.mxu0 0.0
    %3833 = vmatprep.subr.mxu0 0.0
    %3834 = vmatpush2.msra.mxu0 0.0
    %3835 = vmatprep.subr.mxu0 0.0
    %3836 = vmatpush2.msra.mxu0 0.0
    %3837 = vmatprep.mubr.f32.mxu0 0.0
    %v3838 = vand.u32 %v3492, 4294901760
    %v3839 = vsub.f32 %v3492, %v3838
    %3840 = vmatmul.mubr.f32.gmra.mxu0 %v3839
    %v3841 = vpop.f32.mrf.mxu0
    %v3842 = vadd.f32 %v3738, %v3841
    %v3843 = vpop.f32.mrf.mxu0
    %3844 = vdwg.mxu0
    %3845 = vmatprep.subr.mxu0 0.0
    %v3846 = vand.u32 %v94, 4294901760
    %3847 = vmatpush1.msra.mxu0 %v3846
    %3848 = vmatprep.subr.mxu0 0.0
    %v3849 = vand.u32 %v93, 4294901760
    %3850 = vmatpush1.msra.mxu0 %v3849
    %3851 = vmatprep.subr.mxu0 0.0
    %v3852 = vand.u32 %v92, 4294901760
    %3853 = vmatpush1.msra.mxu0 %v3852
    %3854 = vmatprep.subr.mxu0 0.0
    %v3855 = vand.u32 %v91, 4294901760
    %3856 = vmatpush1.msra.mxu0 %v3855
    %3857 = vmatprep.subr.mxu0 0.0
    %v3858 = vand.u32 %v90, 4294901760
    %3859 = vmatpush1.msra.mxu0 %v3858
    %3860 = vmatprep.subr.mxu0 0.0
    %v3861 = vand.u32 %v89, 4294901760
    %3862 = vmatpush1.msra.mxu0 %v3861
    %3863 = vmatprep.subr.mxu0 0.0
    %v3864 = vand.u32 %v88, 4294901760
    %3865 = vmatpush1.msra.mxu0 %v3864
    %3866 = vmatprep.subr.mxu0 0.0
    %v3867 = vand.u32 %v87, 4294901760
    %3868 = vmatpush1.msra.mxu0 %v3867
    %3869 = vmatprep.subr.mxu0 0.0
    %v3870 = vand.u32 %v86, 4294901760
    %3871 = vmatpush1.msra.mxu0 %v3870
    %3872 = vmatprep.subr.mxu0 0.0
    %v3873 = vand.u32 %v85, 4294901760
    %3874 = vmatpush1.msra.mxu0 %v3873
    %3875 = vmatprep.subr.mxu0 0.0
    %v3876 = vand.u32 %v84, 4294901760
    %3877 = vmatpush1.msra.mxu0 %v3876
    %3878 = vmatprep.subr.mxu0 0.0
    %v3879 = vand.u32 %v83, 4294901760
    %3880 = vmatpush1.msra.mxu0 %v3879
    %3881 = vmatprep.subr.mxu0 0.0
    %v3882 = vand.u32 %v82, 4294901760
    %3883 = vmatpush1.msra.mxu0 %v3882
    %3884 = vmatprep.subr.mxu0 0.0
    %v3885 = vand.u32 %v81, 4294901760
    %3886 = vmatpush1.msra.mxu0 %v3885
    %3887 = vmatprep.subr.mxu0 0.0
    %v3888 = vand.u32 %v80, 4294901760
    %3889 = vmatpush1.msra.mxu0 %v3888
    %3890 = vmatprep.subr.mxu0 0.0
    %v3891 = vand.u32 %v79, 4294901760
    %3892 = vmatpush1.msra.mxu0 %v3891
    %3893 = vmatprep.subr.mxu0 0.0
    %3894 = vmatpush2.msra.mxu0 0.0
    %3895 = vmatprep.subr.mxu0 0.0
    %3896 = vmatpush2.msra.mxu0 0.0
    %3897 = vmatprep.subr.mxu0 0.0
    %3898 = vmatpush2.msra.mxu0 0.0
    %3899 = vmatprep.subr.mxu0 0.0
    %3900 = vmatpush2.msra.mxu0 0.0
    %3901 = vmatprep.subr.mxu0 0.0
    %3902 = vmatpush2.msra.mxu0 0.0
    %3903 = vmatprep.subr.mxu0 0.0
    %3904 = vmatpush2.msra.mxu0 0.0
    %3905 = vmatprep.subr.mxu0 0.0
    %3906 = vmatpush2.msra.mxu0 0.0
    %3907 = vmatprep.subr.mxu0 0.0
    %3908 = vmatpush2.msra.mxu0 0.0
    %3909 = vmatprep.subr.mxu0 0.0
    %3910 = vmatpush2.msra.mxu0 0.0
    %3911 = vmatprep.subr.mxu0 0.0
    %3912 = vmatpush2.msra.mxu0 0.0
    %3913 = vmatprep.subr.mxu0 0.0
    %3914 = vmatpush2.msra.mxu0 0.0
    %3915 = vmatprep.subr.mxu0 0.0
    %3916 = vmatpush2.msra.mxu0 0.0
    %3917 = vmatprep.subr.mxu0 0.0
    %3918 = vmatpush2.msra.mxu0 0.0
    %3919 = vmatprep.subr.mxu0 0.0
    %3920 = vmatpush2.msra.mxu0 0.0
    %3921 = vmatprep.subr.mxu0 0.0
    %3922 = vmatpush2.msra.mxu0 0.0
    %3923 = vmatprep.subr.mxu0 0.0
    %3924 = vmatpush2.msra.mxu0 0.0
    %3925 = vmatprep.mubr.f32.mxu0 0.0
    %v3926 = vand.u32 %v3492, 4294901760
    %v3927 = vsub.f32 %v3492, %v3926
    %v3928 = vand.u32 %v3927, 4294901760
    %3929 = vmatmul.mubr.f32.gmra.mxu0 %v3928
    %v3930 = vpop.f32.mrf.mxu0
    %v3931 = vadd.f32 %v3842, %v3930
    %v3932 = vpop.f32.mrf.mxu0
    %3933 = vdwg.mxu0
    %3934 = vmatprep.subr.mxu0 0.0
    %v3935 = vand.u32 %v94, 4294901760
    %v3936 = vsub.f32 %v94, %v3935
    %v3937 = vand.u32 %v3936, 4294901760
    %3938 = vmatpush1.msra.mxu0 %v3937
    %3939 = vmatprep.subr.mxu0 0.0
    %v3940 = vand.u32 %v93, 4294901760
    %v3941 = vsub.f32 %v93, %v3940
    %v3942 = vand.u32 %v3941, 4294901760
    %3943 = vmatpush1.msra.mxu0 %v3942
    %3944 = vmatprep.subr.mxu0 0.0
    %v3945 = vand.u32 %v92, 4294901760
    %v3946 = vsub.f32 %v92, %v3945
    %v3947 = vand.u32 %v3946, 4294901760
    %3948 = vmatpush1.msra.mxu0 %v3947
    %3949 = vmatprep.subr.mxu0 0.0
    %v3950 = vand.u32 %v91, 4294901760
    %v3951 = vsub.f32 %v91, %v3950
    %v3952 = vand.u32 %v3951, 4294901760
    %3953 = vmatpush1.msra.mxu0 %v3952
    %3954 = vmatprep.subr.mxu0 0.0
    %v3955 = vand.u32 %v90, 4294901760
    %v3956 = vsub.f32 %v90, %v3955
    %v3957 = vand.u32 %v3956, 4294901760
    %3958 = vmatpush1.msra.mxu0 %v3957
    %3959 = vmatprep.subr.mxu0 0.0
    %v3960 = vand.u32 %v89, 4294901760
    %v3961 = vsub.f32 %v89, %v3960
    %v3962 = vand.u32 %v3961, 4294901760
    %3963 = vmatpush1.msra.mxu0 %v3962
    %3964 = vmatprep.subr.mxu0 0.0
    %v3965 = vand.u32 %v88, 4294901760
    %v3966 = vsub.f32 %v88, %v3965
    %v3967 = vand.u32 %v3966, 4294901760
    %3968 = vmatpush1.msra.mxu0 %v3967
    %3969 = vmatprep.subr.mxu0 0.0
    %v3970 = vand.u32 %v87, 4294901760
    %v3971 = vsub.f32 %v87, %v3970
    %v3972 = vand.u32 %v3971, 4294901760
    %3973 = vmatpush1.msra.mxu0 %v3972
    %3974 = vmatprep.subr.mxu0 0.0
    %v3975 = vand.u32 %v86, 4294901760
    %v3976 = vsub.f32 %v86, %v3975
    %v3977 = vand.u32 %v3976, 4294901760
    %3978 = vmatpush1.msra.mxu0 %v3977
    %3979 = vmatprep.subr.mxu0 0.0
    %v3980 = vand.u32 %v85, 4294901760
    %v3981 = vsub.f32 %v85, %v3980
    %v3982 = vand.u32 %v3981, 4294901760
    %3983 = vmatpush1.msra.mxu0 %v3982
    %3984 = vmatprep.subr.mxu0 0.0
    %v3985 = vand.u32 %v84, 4294901760
    %v3986 = vsub.f32 %v84, %v3985
    %v3987 = vand.u32 %v3986, 4294901760
    %3988 = vmatpush1.msra.mxu0 %v3987
    %3989 = vmatprep.subr.mxu0 0.0
    %v3990 = vand.u32 %v83, 4294901760
    %v3991 = vsub.f32 %v83, %v3990
    %v3992 = vand.u32 %v3991, 4294901760
    %3993 = vmatpush1.msra.mxu0 %v3992
    %3994 = vmatprep.subr.mxu0 0.0
    %v3995 = vand.u32 %v82, 4294901760
    %v3996 = vsub.f32 %v82, %v3995
    %v3997 = vand.u32 %v3996, 4294901760
    %3998 = vmatpush1.msra.mxu0 %v3997
    %3999 = vmatprep.subr.mxu0 0.0
    %v4000 = vand.u32 %v81, 4294901760
    %v4001 = vsub.f32 %v81, %v4000
    %v4002 = vand.u32 %v4001, 4294901760
    %4003 = vmatpush1.msra.mxu0 %v4002
    %4004 = vmatprep.subr.mxu0 0.0
    %v4005 = vand.u32 %v80, 4294901760
    %v4006 = vsub.f32 %v80, %v4005
    %v4007 = vand.u32 %v4006, 4294901760
    %4008 = vmatpush1.msra.mxu0 %v4007
    %4009 = vmatprep.subr.mxu0 0.0
    %v4010 = vand.u32 %v79, 4294901760
    %v4011 = vsub.f32 %v79, %v4010
    %v4012 = vand.u32 %v4011, 4294901760
    %4013 = vmatpush1.msra.mxu0 %v4012
    %4014 = vmatprep.subr.mxu0 0.0
    %4015 = vmatpush2.msra.mxu0 0.0
    %4016 = vmatprep.subr.mxu0 0.0
    %4017 = vmatpush2.msra.mxu0 0.0
    %4018 = vmatprep.subr.mxu0 0.0
    %4019 = vmatpush2.msra.mxu0 0.0
    %4020 = vmatprep.subr.mxu0 0.0
    %4021 = vmatpush2.msra.mxu0 0.0
    %4022 = vmatprep.subr.mxu0 0.0
    %4023 = vmatpush2.msra.mxu0 0.0
    %4024 = vmatprep.subr.mxu0 0.0
    %4025 = vmatpush2.msra.mxu0 0.0
    %4026 = vmatprep.subr.mxu0 0.0
    %4027 = vmatpush2.msra.mxu0 0.0
    %4028 = vmatprep.subr.mxu0 0.0
    %4029 = vmatpush2.msra.mxu0 0.0
    %4030 = vmatprep.subr.mxu0 0.0
    %4031 = vmatpush2.msra.mxu0 0.0
    %4032 = vmatprep.subr.mxu0 0.0
    %4033 = vmatpush2.msra.mxu0 0.0
    %4034 = vmatprep.subr.mxu0 0.0
    %4035 = vmatpush2.msra.mxu0 0.0
    %4036 = vmatprep.subr.mxu0 0.0
    %4037 = vmatpush2.msra.mxu0 0.0
    %4038 = vmatprep.subr.mxu0 0.0
    %4039 = vmatpush2.msra.mxu0 0.0
    %4040 = vmatprep.subr.mxu0 0.0
    %4041 = vmatpush2.msra.mxu0 0.0
    %4042 = vmatprep.subr.mxu0 0.0
    %4043 = vmatpush2.msra.mxu0 0.0
    %4044 = vmatprep.subr.mxu0 0.0
    %4045 = vmatpush2.msra.mxu0 0.0
    %4046 = vmatprep.mubr.f32.mxu0 0.0
    %v4047 = vand.u32 %v3492, 4294901760
    %4048 = vmatmul.mubr.f32.gmra.mxu0 %v4047
    %v4049 = vpop.f32.mrf.mxu0
    %v4050 = vadd.f32 %v3931, %v4049
    %v4051 = vpop.f32.mrf.mxu0
    %4052 = vdwg.mxu0
    %4053 = vmatprep.subr.mxu0 0.0
    %v4054 = vand.u32 %v94, 4294901760
    %4055 = vmatpush1.msra.mxu0 %v4054
    %4056 = vmatprep.subr.mxu0 0.0
    %v4057 = vand.u32 %v93, 4294901760
    %4058 = vmatpush1.msra.mxu0 %v4057
    %4059 = vmatprep.subr.mxu0 0.0
    %v4060 = vand.u32 %v92, 4294901760
    %4061 = vmatpush1.msra.mxu0 %v4060
    %4062 = vmatprep.subr.mxu0 0.0
    %v4063 = vand.u32 %v91, 4294901760
    %4064 = vmatpush1.msra.mxu0 %v4063
    %4065 = vmatprep.subr.mxu0 0.0
    %v4066 = vand.u32 %v90, 4294901760
    %4067 = vmatpush1.msra.mxu0 %v4066
    %4068 = vmatprep.subr.mxu0 0.0
    %v4069 = vand.u32 %v89, 4294901760
    %4070 = vmatpush1.msra.mxu0 %v4069
    %4071 = vmatprep.subr.mxu0 0.0
    %v4072 = vand.u32 %v88, 4294901760
    %4073 = vmatpush1.msra.mxu0 %v4072
    %4074 = vmatprep.subr.mxu0 0.0
    %v4075 = vand.u32 %v87, 4294901760
    %4076 = vmatpush1.msra.mxu0 %v4075
    %4077 = vmatprep.subr.mxu0 0.0
    %v4078 = vand.u32 %v86, 4294901760
    %4079 = vmatpush1.msra.mxu0 %v4078
    %4080 = vmatprep.subr.mxu0 0.0
    %v4081 = vand.u32 %v85, 4294901760
    %4082 = vmatpush1.msra.mxu0 %v4081
    %4083 = vmatprep.subr.mxu0 0.0
    %v4084 = vand.u32 %v84, 4294901760
    %4085 = vmatpush1.msra.mxu0 %v4084
    %4086 = vmatprep.subr.mxu0 0.0
    %v4087 = vand.u32 %v83, 4294901760
    %4088 = vmatpush1.msra.mxu0 %v4087
    %4089 = vmatprep.subr.mxu0 0.0
    %v4090 = vand.u32 %v82, 4294901760
    %4091 = vmatpush1.msra.mxu0 %v4090
    %4092 = vmatprep.subr.mxu0 0.0
    %v4093 = vand.u32 %v81, 4294901760
    %4094 = vmatpush1.msra.mxu0 %v4093
    %4095 = vmatprep.subr.mxu0 0.0
    %v4096 = vand.u32 %v80, 4294901760
    %4097 = vmatpush1.msra.mxu0 %v4096
    %4098 = vmatprep.subr.mxu0 0.0
    %v4099 = vand.u32 %v79, 4294901760
    %4100 = vmatpush1.msra.mxu0 %v4099
    %4101 = vmatprep.subr.mxu0 0.0
    %4102 = vmatpush2.msra.mxu0 0.0
    %4103 = vmatprep.subr.mxu0 0.0
    %4104 = vmatpush2.msra.mxu0 0.0
    %4105 = vmatprep.subr.mxu0 0.0
    %4106 = vmatpush2.msra.mxu0 0.0
    %4107 = vmatprep.subr.mxu0 0.0
    %4108 = vmatpush2.msra.mxu0 0.0
    %4109 = vmatprep.subr.mxu0 0.0
    %4110 = vmatpush2.msra.mxu0 0.0
    %4111 = vmatprep.subr.mxu0 0.0
    %4112 = vmatpush2.msra.mxu0 0.0
    %4113 = vmatprep.subr.mxu0 0.0
    %4114 = vmatpush2.msra.mxu0 0.0
    %4115 = vmatprep.subr.mxu0 0.0
    %4116 = vmatpush2.msra.mxu0 0.0
    %4117 = vmatprep.subr.mxu0 0.0
    %4118 = vmatpush2.msra.mxu0 0.0
    %4119 = vmatprep.subr.mxu0 0.0
    %4120 = vmatpush2.msra.mxu0 0.0
    %4121 = vmatprep.subr.mxu0 0.0
    %4122 = vmatpush2.msra.mxu0 0.0
    %4123 = vmatprep.subr.mxu0 0.0
    %4124 = vmatpush2.msra.mxu0 0.0
    %4125 = vmatprep.subr.mxu0 0.0
    %4126 = vmatpush2.msra.mxu0 0.0
    %4127 = vmatprep.subr.mxu0 0.0
    %4128 = vmatpush2.msra.mxu0 0.0
    %4129 = vmatprep.subr.mxu0 0.0
    %4130 = vmatpush2.msra.mxu0 0.0
    %4131 = vmatprep.subr.mxu0 0.0
    %4132 = vmatpush2.msra.mxu0 0.0
    %4133 = vmatprep.mubr.f32.mxu0 0.0
    %v4134 = vand.u32 %v3492, 4294901760
    %4135 = vmatmul.mubr.f32.gmra.mxu0 %v4134
    %v4136 = vpop.f32.mrf.mxu0
    %v4137 = vadd.f32 %v4050, %v4136
    %v4138 = vpop.f32.mrf.mxu0
    %4139 = vdwg.mxu0
    %v4140 = vmul.f32 %v4137, %v62
    %vm4141 = vcmask 1043456
    %v4142 = vsel %vm4141, %v4140, 0.0
    %v4143 = vrot.slane %v4142, 4
    %v4144 = vadd.f32 %v4142, %v4143
    %v4145 = vrot.slane %v4144, 2
    %v4146 = vadd.f32 %v4144, %v4145
    %v4147 = vrot.slane %v4146, 1
    %v4148 = vadd.f32 %v4146, %v4147
    %v4149 = vsel %vm4141, %v4137, 0.0
    %v4150 = vrot.slane %v4149, 4
    %v4151 = vadd.f32 %v4149, %v4150
    %v4152 = vrot.slane %v4151, 2
    %v4153 = vadd.f32 %v4151, %v4152
    %v4154 = vrot.slane %v4153, 1
    %v4155 = vadd.f32 %v4153, %v4154
    %v4156 = vmul.f32 %v4148, 0.5
    %v4157 = vsub.f32 %v4155, %v4148
    %v4158 = vmul.f32 %v4157, 0.5
    %v4159 = vsub.f32 %v4156, %v4158
    %v4160 = vmul.f32 %v62, %v4159
    %v4161 = vadd.f32 %v4158, %v4160
    %v4162 = vsub.f32 %v4137, %v4161
    %v4163 = vmul.f32 %v4162, %v4162
    %v4164 = vmul.f32 %v4163, %v62
    %v4165 = vsel %vm4141, %v4164, 0.0
    %v4166 = vrot.slane %v4165, 4
    %v4167 = vadd.f32 %v4165, %v4166
    %v4168 = vrot.slane %v4167, 2
    %v4169 = vadd.f32 %v4167, %v4168
    %v4170 = vrot.slane %v4169, 1
    %v4171 = vadd.f32 %v4169, %v4170
    %v4172 = vsel %vm4141, %v4163, 0.0
    %v4173 = vrot.slane %v4172, 4
    %v4174 = vadd.f32 %v4172, %v4173
    %v4175 = vrot.slane %v4174, 2
    %v4176 = vadd.f32 %v4174, %v4175
    %v4177 = vrot.slane %v4176, 1
    %v4178 = vadd.f32 %v4176, %v4177
    %v4179 = vmul.f32 %v4171, 0.5
    %v4180 = vadd.f32 %v4179, 1e-05
    %v4181 = vrsqrt.pop %v4180
    %v4182 = vmul.f32 %v4181, %v147
    %v4183 = vsub.f32 %v4178, %v4171
    %v4184 = vmul.f32 %v4183, 0.5
    %v4185 = vadd.f32 %v4184, 1e-05
    %v4186 = vrsqrt.pop %v4185
    %v4187 = vmul.f32 %v4186, %v147
    %v4188 = vsub.f32 %v4182, %v4187
    %v4189 = vlaneseq
    %v4190 = vshrl.u32 %v4189, 7
    %v4191 = vsub.s32 0, %v4190
    %v4192 = vrot.slane %v4188, %v4191
    %v4193 = vmul.f32 %v62, %v4192
    %v4194 = vlaneseq
    %v4195 = vshrl.u32 %v4194, 7
    %v4196 = vsub.s32 0, %v4195
    %v4197 = vrot.slane %v4187, %v4196
    %v4198 = vadd.f32 %v4197, %v4193
    %v4199 = vmul.f32 %v4162, %v4198
    %v4200 = vlaneseq
    %v4201 = vshrl.u32 %v4200, 7
    %v4202 = vsub.s32 0, %v4201
    %v4203 = vrot.slane %v148, %v4202
    %v4204 = vadd.f32 %v4199, %v4203
    %v4205 = vmax.f32 %v4204, 0.0
    %v4206 = vlaneseq
    %v4207 = vshrl.u32 %v4206, 7
    %v4208 = vsub.s32 0, %v4207
    %v4209 = vrot.slane %v149, %v4208
    %4210 = vmatprep.subr.mxu0 0.0
    %v4211 = vand.u32 %v110, 4294901760
    %4212 = vmatpush1.msra.mxu0 %v4211
    %4213 = vmatprep.subr.mxu0 0.0
    %v4214 = vand.u32 %v109, 4294901760
    %4215 = vmatpush1.msra.mxu0 %v4214
    %4216 = vmatprep.subr.mxu0 0.0
    %v4217 = vand.u32 %v108, 4294901760
    %4218 = vmatpush1.msra.mxu0 %v4217
    %4219 = vmatprep.subr.mxu0 0.0
    %v4220 = vand.u32 %v107, 4294901760
    %4221 = vmatpush1.msra.mxu0 %v4220
    %4222 = vmatprep.subr.mxu0 0.0
    %v4223 = vand.u32 %v106, 4294901760
    %4224 = vmatpush1.msra.mxu0 %v4223
    %4225 = vmatprep.subr.mxu0 0.0
    %v4226 = vand.u32 %v105, 4294901760
    %4227 = vmatpush1.msra.mxu0 %v4226
    %4228 = vmatprep.subr.mxu0 0.0
    %v4229 = vand.u32 %v104, 4294901760
    %4230 = vmatpush1.msra.mxu0 %v4229
    %4231 = vmatprep.subr.mxu0 0.0
    %v4232 = vand.u32 %v103, 4294901760
    %4233 = vmatpush1.msra.mxu0 %v4232
    %4234 = vmatprep.subr.mxu0 0.0
    %v4235 = vand.u32 %v102, 4294901760
    %4236 = vmatpush1.msra.mxu0 %v4235
    %4237 = vmatprep.subr.mxu0 0.0
    %v4238 = vand.u32 %v101, 4294901760
    %4239 = vmatpush1.msra.mxu0 %v4238
    %4240 = vmatprep.subr.mxu0 0.0
    %v4241 = vand.u32 %v100, 4294901760
    %4242 = vmatpush1.msra.mxu0 %v4241
    %4243 = vmatprep.subr.mxu0 0.0
    %v4244 = vand.u32 %v99, 4294901760
    %4245 = vmatpush1.msra.mxu0 %v4244
    %4246 = vmatprep.subr.mxu0 0.0
    %v4247 = vand.u32 %v98, 4294901760
    %4248 = vmatpush1.msra.mxu0 %v4247
    %4249 = vmatprep.subr.mxu0 0.0
    %v4250 = vand.u32 %v97, 4294901760
    %4251 = vmatpush1.msra.mxu0 %v4250
    %4252 = vmatprep.subr.mxu0 0.0
    %v4253 = vand.u32 %v96, 4294901760
    %4254 = vmatpush1.msra.mxu0 %v4253
    %4255 = vmatprep.subr.mxu0 0.0
    %v4256 = vand.u32 %v95, 4294901760
    %4257 = vmatpush1.msra.mxu0 %v4256
    %4258 = vmatprep.subr.mxu0 0.0
    %4259 = vmatpush2.msra.mxu0 0.0
    %4260 = vmatprep.subr.mxu0 0.0
    %4261 = vmatpush2.msra.mxu0 0.0
    %4262 = vmatprep.subr.mxu0 0.0
    %4263 = vmatpush2.msra.mxu0 0.0
    %4264 = vmatprep.subr.mxu0 0.0
    %4265 = vmatpush2.msra.mxu0 0.0
    %4266 = vmatprep.subr.mxu0 0.0
    %4267 = vmatpush2.msra.mxu0 0.0
    %4268 = vmatprep.subr.mxu0 0.0
    %4269 = vmatpush2.msra.mxu0 0.0
    %4270 = vmatprep.subr.mxu0 0.0
    %4271 = vmatpush2.msra.mxu0 0.0
    %4272 = vmatprep.subr.mxu0 0.0
    %4273 = vmatpush2.msra.mxu0 0.0
    %4274 = vmatprep.subr.mxu0 0.0
    %4275 = vmatpush2.msra.mxu0 0.0
    %4276 = vmatprep.subr.mxu0 0.0
    %4277 = vmatpush2.msra.mxu0 0.0
    %4278 = vmatprep.subr.mxu0 0.0
    %4279 = vmatpush2.msra.mxu0 0.0
    %4280 = vmatprep.subr.mxu0 0.0
    %4281 = vmatpush2.msra.mxu0 0.0
    %4282 = vmatprep.subr.mxu0 0.0
    %4283 = vmatpush2.msra.mxu0 0.0
    %4284 = vmatprep.subr.mxu0 0.0
    %4285 = vmatpush2.msra.mxu0 0.0
    %4286 = vmatprep.subr.mxu0 0.0
    %4287 = vmatpush2.msra.mxu0 0.0
    %4288 = vmatprep.subr.mxu0 0.0
    %4289 = vmatpush2.msra.mxu0 0.0
    %4290 = vmatprep.mubr.f32.mxu0 0.0
    %v4291 = vand.u32 %v4205, 4294901760
    %v4292 = vsub.f32 %v4205, %v4291
    %v4293 = vand.u32 %v4292, 4294901760
    %v4294 = vsub.f32 %v4292, %v4293
    %v4295 = vand.u32 %v4294, 4294901760
    %4296 = vmatmul.mubr.f32.gmra.mxu0 %v4295
    %v4297 = vpop.f32.mrf.mxu0
    %v4298 = vadd.f32 %v4209, %v4297
    %v4299 = vpop.f32.mrf.mxu0
    %4300 = vdwg.mxu0
    %4301 = vmatprep.subr.mxu0 0.0
    %v4302 = vand.u32 %v110, 4294901760
    %v4303 = vsub.f32 %v110, %v4302
    %v4304 = vand.u32 %v4303, 4294901760
    %v4305 = vsub.f32 %v4303, %v4304
    %v4306 = vand.u32 %v4305, 4294901760
    %4307 = vmatpush1.msra.mxu0 %v4306
    %4308 = vmatprep.subr.mxu0 0.0
    %v4309 = vand.u32 %v109, 4294901760
    %v4310 = vsub.f32 %v109, %v4309
    %v4311 = vand.u32 %v4310, 4294901760
    %v4312 = vsub.f32 %v4310, %v4311
    %v4313 = vand.u32 %v4312, 4294901760
    %4314 = vmatpush1.msra.mxu0 %v4313
    %4315 = vmatprep.subr.mxu0 0.0
    %v4316 = vand.u32 %v108, 4294901760
    %v4317 = vsub.f32 %v108, %v4316
    %v4318 = vand.u32 %v4317, 4294901760
    %v4319 = vsub.f32 %v4317, %v4318
    %v4320 = vand.u32 %v4319, 4294901760
    %4321 = vmatpush1.msra.mxu0 %v4320
    %4322 = vmatprep.subr.mxu0 0.0
    %v4323 = vand.u32 %v107, 4294901760
    %v4324 = vsub.f32 %v107, %v4323
    %v4325 = vand.u32 %v4324, 4294901760
    %v4326 = vsub.f32 %v4324, %v4325
    %v4327 = vand.u32 %v4326, 4294901760
    %4328 = vmatpush1.msra.mxu0 %v4327
    %4329 = vmatprep.subr.mxu0 0.0
    %v4330 = vand.u32 %v106, 4294901760
    %v4331 = vsub.f32 %v106, %v4330
    %v4332 = vand.u32 %v4331, 4294901760
    %v4333 = vsub.f32 %v4331, %v4332
    %v4334 = vand.u32 %v4333, 4294901760
    %4335 = vmatpush1.msra.mxu0 %v4334
    %4336 = vmatprep.subr.mxu0 0.0
    %v4337 = vand.u32 %v105, 4294901760
    %v4338 = vsub.f32 %v105, %v4337
    %v4339 = vand.u32 %v4338, 4294901760
    %v4340 = vsub.f32 %v4338, %v4339
    %v4341 = vand.u32 %v4340, 4294901760
    %4342 = vmatpush1.msra.mxu0 %v4341
    %4343 = vmatprep.subr.mxu0 0.0
    %v4344 = vand.u32 %v104, 4294901760
    %v4345 = vsub.f32 %v104, %v4344
    %v4346 = vand.u32 %v4345, 4294901760
    %v4347 = vsub.f32 %v4345, %v4346
    %v4348 = vand.u32 %v4347, 4294901760
    %4349 = vmatpush1.msra.mxu0 %v4348
    %4350 = vmatprep.subr.mxu0 0.0
    %v4351 = vand.u32 %v103, 4294901760
    %v4352 = vsub.f32 %v103, %v4351
    %v4353 = vand.u32 %v4352, 4294901760
    %v4354 = vsub.f32 %v4352, %v4353
    %v4355 = vand.u32 %v4354, 4294901760
    %4356 = vmatpush1.msra.mxu0 %v4355
    %4357 = vmatprep.subr.mxu0 0.0
    %v4358 = vand.u32 %v102, 4294901760
    %v4359 = vsub.f32 %v102, %v4358
    %v4360 = vand.u32 %v4359, 4294901760
    %v4361 = vsub.f32 %v4359, %v4360
    %v4362 = vand.u32 %v4361, 4294901760
    %4363 = vmatpush1.msra.mxu0 %v4362
    %4364 = vmatprep.subr.mxu0 0.0
    %v4365 = vand.u32 %v101, 4294901760
    %v4366 = vsub.f32 %v101, %v4365
    %v4367 = vand.u32 %v4366, 4294901760
    %v4368 = vsub.f32 %v4366, %v4367
    %v4369 = vand.u32 %v4368, 4294901760
    %4370 = vmatpush1.msra.mxu0 %v4369
    %4371 = vmatprep.subr.mxu0 0.0
    %v4372 = vand.u32 %v100, 4294901760
    %v4373 = vsub.f32 %v100, %v4372
    %v4374 = vand.u32 %v4373, 4294901760
    %v4375 = vsub.f32 %v4373, %v4374
    %v4376 = vand.u32 %v4375, 4294901760
    %4377 = vmatpush1.msra.mxu0 %v4376
    %4378 = vmatprep.subr.mxu0 0.0
    %v4379 = vand.u32 %v99, 4294901760
    %v4380 = vsub.f32 %v99, %v4379
    %v4381 = vand.u32 %v4380, 4294901760
    %v4382 = vsub.f32 %v4380, %v4381
    %v4383 = vand.u32 %v4382, 4294901760
    %4384 = vmatpush1.msra.mxu0 %v4383
    %4385 = vmatprep.subr.mxu0 0.0
    %v4386 = vand.u32 %v98, 4294901760
    %v4387 = vsub.f32 %v98, %v4386
    %v4388 = vand.u32 %v4387, 4294901760
    %v4389 = vsub.f32 %v4387, %v4388
    %v4390 = vand.u32 %v4389, 4294901760
    %4391 = vmatpush1.msra.mxu0 %v4390
    %4392 = vmatprep.subr.mxu0 0.0
    %v4393 = vand.u32 %v97, 4294901760
    %v4394 = vsub.f32 %v97, %v4393
    %v4395 = vand.u32 %v4394, 4294901760
    %v4396 = vsub.f32 %v4394, %v4395
    %v4397 = vand.u32 %v4396, 4294901760
    %4398 = vmatpush1.msra.mxu0 %v4397
    %4399 = vmatprep.subr.mxu0 0.0
    %v4400 = vand.u32 %v96, 4294901760
    %v4401 = vsub.f32 %v96, %v4400
    %v4402 = vand.u32 %v4401, 4294901760
    %v4403 = vsub.f32 %v4401, %v4402
    %v4404 = vand.u32 %v4403, 4294901760
    %4405 = vmatpush1.msra.mxu0 %v4404
    %4406 = vmatprep.subr.mxu0 0.0
    %v4407 = vand.u32 %v95, 4294901760
    %v4408 = vsub.f32 %v95, %v4407
    %v4409 = vand.u32 %v4408, 4294901760
    %v4410 = vsub.f32 %v4408, %v4409
    %v4411 = vand.u32 %v4410, 4294901760
    %4412 = vmatpush1.msra.mxu0 %v4411
    %4413 = vmatprep.subr.mxu0 0.0
    %4414 = vmatpush2.msra.mxu0 0.0
    %4415 = vmatprep.subr.mxu0 0.0
    %4416 = vmatpush2.msra.mxu0 0.0
    %4417 = vmatprep.subr.mxu0 0.0
    %4418 = vmatpush2.msra.mxu0 0.0
    %4419 = vmatprep.subr.mxu0 0.0
    %4420 = vmatpush2.msra.mxu0 0.0
    %4421 = vmatprep.subr.mxu0 0.0
    %4422 = vmatpush2.msra.mxu0 0.0
    %4423 = vmatprep.subr.mxu0 0.0
    %4424 = vmatpush2.msra.mxu0 0.0
    %4425 = vmatprep.subr.mxu0 0.0
    %4426 = vmatpush2.msra.mxu0 0.0
    %4427 = vmatprep.subr.mxu0 0.0
    %4428 = vmatpush2.msra.mxu0 0.0
    %4429 = vmatprep.subr.mxu0 0.0
    %4430 = vmatpush2.msra.mxu0 0.0
    %4431 = vmatprep.subr.mxu0 0.0
    %4432 = vmatpush2.msra.mxu0 0.0
    %4433 = vmatprep.subr.mxu0 0.0
    %4434 = vmatpush2.msra.mxu0 0.0
    %4435 = vmatprep.subr.mxu0 0.0
    %4436 = vmatpush2.msra.mxu0 0.0
    %4437 = vmatprep.subr.mxu0 0.0
    %4438 = vmatpush2.msra.mxu0 0.0
    %4439 = vmatprep.subr.mxu0 0.0
    %4440 = vmatpush2.msra.mxu0 0.0
    %4441 = vmatprep.subr.mxu0 0.0
    %4442 = vmatpush2.msra.mxu0 0.0
    %4443 = vmatprep.subr.mxu0 0.0
    %4444 = vmatpush2.msra.mxu0 0.0
    %4445 = vmatprep.mubr.f32.mxu0 0.0
    %v4446 = vand.u32 %v4205, 4294901760
    %4447 = vmatmul.mubr.f32.gmra.mxu0 %v4446
    %v4448 = vpop.f32.mrf.mxu0
    %v4449 = vadd.f32 %v4298, %v4448
    %v4450 = vpop.f32.mrf.mxu0
    %4451 = vdwg.mxu0
    %4452 = vmatprep.subr.mxu0 0.0
    %v4453 = vand.u32 %v110, 4294901760
    %v4454 = vsub.f32 %v110, %v4453
    %4455 = vmatpush1.msra.mxu0 %v4454
    %4456 = vmatprep.subr.mxu0 0.0
    %v4457 = vand.u32 %v109, 4294901760
    %v4458 = vsub.f32 %v109, %v4457
    %4459 = vmatpush1.msra.mxu0 %v4458
    %4460 = vmatprep.subr.mxu0 0.0
    %v4461 = vand.u32 %v108, 4294901760
    %v4462 = vsub.f32 %v108, %v4461
    %4463 = vmatpush1.msra.mxu0 %v4462
    %4464 = vmatprep.subr.mxu0 0.0
    %v4465 = vand.u32 %v107, 4294901760
    %v4466 = vsub.f32 %v107, %v4465
    %4467 = vmatpush1.msra.mxu0 %v4466
    %4468 = vmatprep.subr.mxu0 0.0
    %v4469 = vand.u32 %v106, 4294901760
    %v4470 = vsub.f32 %v106, %v4469
    %4471 = vmatpush1.msra.mxu0 %v4470
    %4472 = vmatprep.subr.mxu0 0.0
    %v4473 = vand.u32 %v105, 4294901760
    %v4474 = vsub.f32 %v105, %v4473
    %4475 = vmatpush1.msra.mxu0 %v4474
    %4476 = vmatprep.subr.mxu0 0.0
    %v4477 = vand.u32 %v104, 4294901760
    %v4478 = vsub.f32 %v104, %v4477
    %4479 = vmatpush1.msra.mxu0 %v4478
    %4480 = vmatprep.subr.mxu0 0.0
    %v4481 = vand.u32 %v103, 4294901760
    %v4482 = vsub.f32 %v103, %v4481
    %4483 = vmatpush1.msra.mxu0 %v4482
    %4484 = vmatprep.subr.mxu0 0.0
    %v4485 = vand.u32 %v102, 4294901760
    %v4486 = vsub.f32 %v102, %v4485
    %4487 = vmatpush1.msra.mxu0 %v4486
    %4488 = vmatprep.subr.mxu0 0.0
    %v4489 = vand.u32 %v101, 4294901760
    %v4490 = vsub.f32 %v101, %v4489
    %4491 = vmatpush1.msra.mxu0 %v4490
    %4492 = vmatprep.subr.mxu0 0.0
    %v4493 = vand.u32 %v100, 4294901760
    %v4494 = vsub.f32 %v100, %v4493
    %4495 = vmatpush1.msra.mxu0 %v4494
    %4496 = vmatprep.subr.mxu0 0.0
    %v4497 = vand.u32 %v99, 4294901760
    %v4498 = vsub.f32 %v99, %v4497
    %4499 = vmatpush1.msra.mxu0 %v4498
    %4500 = vmatprep.subr.mxu0 0.0
    %v4501 = vand.u32 %v98, 4294901760
    %v4502 = vsub.f32 %v98, %v4501
    %4503 = vmatpush1.msra.mxu0 %v4502
    %4504 = vmatprep.subr.mxu0 0.0
    %v4505 = vand.u32 %v97, 4294901760
    %v4506 = vsub.f32 %v97, %v4505
    %4507 = vmatpush1.msra.mxu0 %v4506
    %4508 = vmatprep.subr.mxu0 0.0
    %v4509 = vand.u32 %v96, 4294901760
    %v4510 = vsub.f32 %v96, %v4509
    %4511 = vmatpush1.msra.mxu0 %v4510
    %4512 = vmatprep.subr.mxu0 0.0
    %v4513 = vand.u32 %v95, 4294901760
    %v4514 = vsub.f32 %v95, %v4513
    %4515 = vmatpush1.msra.mxu0 %v4514
    %4516 = vmatprep.subr.mxu0 0.0
    %4517 = vmatpush2.msra.mxu0 0.0
    %4518 = vmatprep.subr.mxu0 0.0
    %4519 = vmatpush2.msra.mxu0 0.0
    %4520 = vmatprep.subr.mxu0 0.0
    %4521 = vmatpush2.msra.mxu0 0.0
    %4522 = vmatprep.subr.mxu0 0.0
    %4523 = vmatpush2.msra.mxu0 0.0
    %4524 = vmatprep.subr.mxu0 0.0
    %4525 = vmatpush2.msra.mxu0 0.0
    %4526 = vmatprep.subr.mxu0 0.0
    %4527 = vmatpush2.msra.mxu0 0.0
    %4528 = vmatprep.subr.mxu0 0.0
    %4529 = vmatpush2.msra.mxu0 0.0
    %4530 = vmatprep.subr.mxu0 0.0
    %4531 = vmatpush2.msra.mxu0 0.0
    %4532 = vmatprep.subr.mxu0 0.0
    %4533 = vmatpush2.msra.mxu0 0.0
    %4534 = vmatprep.subr.mxu0 0.0
    %4535 = vmatpush2.msra.mxu0 0.0
    %4536 = vmatprep.subr.mxu0 0.0
    %4537 = vmatpush2.msra.mxu0 0.0
    %4538 = vmatprep.subr.mxu0 0.0
    %4539 = vmatpush2.msra.mxu0 0.0
    %4540 = vmatprep.subr.mxu0 0.0
    %4541 = vmatpush2.msra.mxu0 0.0
    %4542 = vmatprep.subr.mxu0 0.0
    %4543 = vmatpush2.msra.mxu0 0.0
    %4544 = vmatprep.subr.mxu0 0.0
    %4545 = vmatpush2.msra.mxu0 0.0
    %4546 = vmatprep.subr.mxu0 0.0
    %4547 = vmatpush2.msra.mxu0 0.0
    %4548 = vmatprep.mubr.f32.mxu0 0.0
    %v4549 = vand.u32 %v4205, 4294901760
    %v4550 = vsub.f32 %v4205, %v4549
    %4551 = vmatmul.mubr.f32.gmra.mxu0 %v4550
    %v4552 = vpop.f32.mrf.mxu0
    %v4553 = vadd.f32 %v4449, %v4552
    %v4554 = vpop.f32.mrf.mxu0
    %4555 = vdwg.mxu0
    %4556 = vmatprep.subr.mxu0 0.0
    %v4557 = vand.u32 %v110, 4294901760
    %4558 = vmatpush1.msra.mxu0 %v4557
    %4559 = vmatprep.subr.mxu0 0.0
    %v4560 = vand.u32 %v109, 4294901760
    %4561 = vmatpush1.msra.mxu0 %v4560
    %4562 = vmatprep.subr.mxu0 0.0
    %v4563 = vand.u32 %v108, 4294901760
    %4564 = vmatpush1.msra.mxu0 %v4563
    %4565 = vmatprep.subr.mxu0 0.0
    %v4566 = vand.u32 %v107, 4294901760
    %4567 = vmatpush1.msra.mxu0 %v4566
    %4568 = vmatprep.subr.mxu0 0.0
    %v4569 = vand.u32 %v106, 4294901760
    %4570 = vmatpush1.msra.mxu0 %v4569
    %4571 = vmatprep.subr.mxu0 0.0
    %v4572 = vand.u32 %v105, 4294901760
    %4573 = vmatpush1.msra.mxu0 %v4572
    %4574 = vmatprep.subr.mxu0 0.0
    %v4575 = vand.u32 %v104, 4294901760
    %4576 = vmatpush1.msra.mxu0 %v4575
    %4577 = vmatprep.subr.mxu0 0.0
    %v4578 = vand.u32 %v103, 4294901760
    %4579 = vmatpush1.msra.mxu0 %v4578
    %4580 = vmatprep.subr.mxu0 0.0
    %v4581 = vand.u32 %v102, 4294901760
    %4582 = vmatpush1.msra.mxu0 %v4581
    %4583 = vmatprep.subr.mxu0 0.0
    %v4584 = vand.u32 %v101, 4294901760
    %4585 = vmatpush1.msra.mxu0 %v4584
    %4586 = vmatprep.subr.mxu0 0.0
    %v4587 = vand.u32 %v100, 4294901760
    %4588 = vmatpush1.msra.mxu0 %v4587
    %4589 = vmatprep.subr.mxu0 0.0
    %v4590 = vand.u32 %v99, 4294901760
    %4591 = vmatpush1.msra.mxu0 %v4590
    %4592 = vmatprep.subr.mxu0 0.0
    %v4593 = vand.u32 %v98, 4294901760
    %4594 = vmatpush1.msra.mxu0 %v4593
    %4595 = vmatprep.subr.mxu0 0.0
    %v4596 = vand.u32 %v97, 4294901760
    %4597 = vmatpush1.msra.mxu0 %v4596
    %4598 = vmatprep.subr.mxu0 0.0
    %v4599 = vand.u32 %v96, 4294901760
    %4600 = vmatpush1.msra.mxu0 %v4599
    %4601 = vmatprep.subr.mxu0 0.0
    %v4602 = vand.u32 %v95, 4294901760
    %4603 = vmatpush1.msra.mxu0 %v4602
    %4604 = vmatprep.subr.mxu0 0.0
    %4605 = vmatpush2.msra.mxu0 0.0
    %4606 = vmatprep.subr.mxu0 0.0
    %4607 = vmatpush2.msra.mxu0 0.0
    %4608 = vmatprep.subr.mxu0 0.0
    %4609 = vmatpush2.msra.mxu0 0.0
    %4610 = vmatprep.subr.mxu0 0.0
    %4611 = vmatpush2.msra.mxu0 0.0
    %4612 = vmatprep.subr.mxu0 0.0
    %4613 = vmatpush2.msra.mxu0 0.0
    %4614 = vmatprep.subr.mxu0 0.0
    %4615 = vmatpush2.msra.mxu0 0.0
    %4616 = vmatprep.subr.mxu0 0.0
    %4617 = vmatpush2.msra.mxu0 0.0
    %4618 = vmatprep.subr.mxu0 0.0
    %4619 = vmatpush2.msra.mxu0 0.0
    %4620 = vmatprep.subr.mxu0 0.0
    %4621 = vmatpush2.msra.mxu0 0.0
    %4622 = vmatprep.subr.mxu0 0.0
    %4623 = vmatpush2.msra.mxu0 0.0
    %4624 = vmatprep.subr.mxu0 0.0
    %4625 = vmatpush2.msra.mxu0 0.0
    %4626 = vmatprep.subr.mxu0 0.0
    %4627 = vmatpush2.msra.mxu0 0.0
    %4628 = vmatprep.subr.mxu0 0.0
    %4629 = vmatpush2.msra.mxu0 0.0
    %4630 = vmatprep.subr.mxu0 0.0
    %4631 = vmatpush2.msra.mxu0 0.0
    %4632 = vmatprep.subr.mxu0 0.0
    %4633 = vmatpush2.msra.mxu0 0.0
    %4634 = vmatprep.subr.mxu0 0.0
    %4635 = vmatpush2.msra.mxu0 0.0
    %4636 = vmatprep.mubr.f32.mxu0 0.0
    %v4637 = vand.u32 %v4205, 4294901760
    %v4638 = vsub.f32 %v4205, %v4637
    %v4639 = vand.u32 %v4638, 4294901760
    %4640 = vmatmul.mubr.f32.gmra.mxu0 %v4639
    %v4641 = vpop.f32.mrf.mxu0
    %v4642 = vadd.f32 %v4553, %v4641
    %v4643 = vpop.f32.mrf.mxu0
    %4644 = vdwg.mxu0
    %4645 = vmatprep.subr.mxu0 0.0
    %v4646 = vand.u32 %v110, 4294901760
    %v4647 = vsub.f32 %v110, %v4646
    %v4648 = vand.u32 %v4647, 4294901760
    %4649 = vmatpush1.msra.mxu0 %v4648
    %4650 = vmatprep.subr.mxu0 0.0
    %v4651 = vand.u32 %v109, 4294901760
    %v4652 = vsub.f32 %v109, %v4651
    %v4653 = vand.u32 %v4652, 4294901760
    %4654 = vmatpush1.msra.mxu0 %v4653
    %4655 = vmatprep.subr.mxu0 0.0
    %v4656 = vand.u32 %v108, 4294901760
    %v4657 = vsub.f32 %v108, %v4656
    %v4658 = vand.u32 %v4657, 4294901760
    %4659 = vmatpush1.msra.mxu0 %v4658
    %4660 = vmatprep.subr.mxu0 0.0
    %v4661 = vand.u32 %v107, 4294901760
    %v4662 = vsub.f32 %v107, %v4661
    %v4663 = vand.u32 %v4662, 4294901760
    %4664 = vmatpush1.msra.mxu0 %v4663
    %4665 = vmatprep.subr.mxu0 0.0
    %v4666 = vand.u32 %v106, 4294901760
    %v4667 = vsub.f32 %v106, %v4666
    %v4668 = vand.u32 %v4667, 4294901760
    %4669 = vmatpush1.msra.mxu0 %v4668
    %4670 = vmatprep.subr.mxu0 0.0
    %v4671 = vand.u32 %v105, 4294901760
    %v4672 = vsub.f32 %v105, %v4671
    %v4673 = vand.u32 %v4672, 4294901760
    %4674 = vmatpush1.msra.mxu0 %v4673
    %4675 = vmatprep.subr.mxu0 0.0
    %v4676 = vand.u32 %v104, 4294901760
    %v4677 = vsub.f32 %v104, %v4676
    %v4678 = vand.u32 %v4677, 4294901760
    %4679 = vmatpush1.msra.mxu0 %v4678
    %4680 = vmatprep.subr.mxu0 0.0
    %v4681 = vand.u32 %v103, 4294901760
    %v4682 = vsub.f32 %v103, %v4681
    %v4683 = vand.u32 %v4682, 4294901760
    %4684 = vmatpush1.msra.mxu0 %v4683
    %4685 = vmatprep.subr.mxu0 0.0
    %v4686 = vand.u32 %v102, 4294901760
    %v4687 = vsub.f32 %v102, %v4686
    %v4688 = vand.u32 %v4687, 4294901760
    %4689 = vmatpush1.msra.mxu0 %v4688
    %4690 = vmatprep.subr.mxu0 0.0
    %v4691 = vand.u32 %v101, 4294901760
    %v4692 = vsub.f32 %v101, %v4691
    %v4693 = vand.u32 %v4692, 4294901760
    %4694 = vmatpush1.msra.mxu0 %v4693
    %4695 = vmatprep.subr.mxu0 0.0
    %v4696 = vand.u32 %v100, 4294901760
    %v4697 = vsub.f32 %v100, %v4696
    %v4698 = vand.u32 %v4697, 4294901760
    %4699 = vmatpush1.msra.mxu0 %v4698
    %4700 = vmatprep.subr.mxu0 0.0
    %v4701 = vand.u32 %v99, 4294901760
    %v4702 = vsub.f32 %v99, %v4701
    %v4703 = vand.u32 %v4702, 4294901760
    %4704 = vmatpush1.msra.mxu0 %v4703
    %4705 = vmatprep.subr.mxu0 0.0
    %v4706 = vand.u32 %v98, 4294901760
    %v4707 = vsub.f32 %v98, %v4706
    %v4708 = vand.u32 %v4707, 4294901760
    %4709 = vmatpush1.msra.mxu0 %v4708
    %4710 = vmatprep.subr.mxu0 0.0
    %v4711 = vand.u32 %v97, 4294901760
    %v4712 = vsub.f32 %v97, %v4711
    %v4713 = vand.u32 %v4712, 4294901760
    %4714 = vmatpush1.msra.mxu0 %v4713
    %4715 = vmatprep.subr.mxu0 0.0
    %v4716 = vand.u32 %v96, 4294901760
    %v4717 = vsub.f32 %v96, %v4716
    %v4718 = vand.u32 %v4717, 4294901760
    %4719 = vmatpush1.msra.mxu0 %v4718
    %4720 = vmatprep.subr.mxu0 0.0
    %v4721 = vand.u32 %v95, 4294901760
    %v4722 = vsub.f32 %v95, %v4721
    %v4723 = vand.u32 %v4722, 4294901760
    %4724 = vmatpush1.msra.mxu0 %v4723
    %4725 = vmatprep.subr.mxu0 0.0
    %4726 = vmatpush2.msra.mxu0 0.0
    %4727 = vmatprep.subr.mxu0 0.0
    %4728 = vmatpush2.msra.mxu0 0.0
    %4729 = vmatprep.subr.mxu0 0.0
    %4730 = vmatpush2.msra.mxu0 0.0
    %4731 = vmatprep.subr.mxu0 0.0
    %4732 = vmatpush2.msra.mxu0 0.0
    %4733 = vmatprep.subr.mxu0 0.0
    %4734 = vmatpush2.msra.mxu0 0.0
    %4735 = vmatprep.subr.mxu0 0.0
    %4736 = vmatpush2.msra.mxu0 0.0
    %4737 = vmatprep.subr.mxu0 0.0
    %4738 = vmatpush2.msra.mxu0 0.0
    %4739 = vmatprep.subr.mxu0 0.0
    %4740 = vmatpush2.msra.mxu0 0.0
    %4741 = vmatprep.subr.mxu0 0.0
    %4742 = vmatpush2.msra.mxu0 0.0
    %4743 = vmatprep.subr.mxu0 0.0
    %4744 = vmatpush2.msra.mxu0 0.0
    %4745 = vmatprep.subr.mxu0 0.0
    %4746 = vmatpush2.msra.mxu0 0.0
    %4747 = vmatprep.subr.mxu0 0.0
    %4748 = vmatpush2.msra.mxu0 0.0
    %4749 = vmatprep.subr.mxu0 0.0
    %4750 = vmatpush2.msra.mxu0 0.0
    %4751 = vmatprep.subr.mxu0 0.0
    %4752 = vmatpush2.msra.mxu0 0.0
    %4753 = vmatprep.subr.mxu0 0.0
    %4754 = vmatpush2.msra.mxu0 0.0
    %4755 = vmatprep.subr.mxu0 0.0
    %4756 = vmatpush2.msra.mxu0 0.0
    %4757 = vmatprep.mubr.f32.mxu0 0.0
    %v4758 = vand.u32 %v4205, 4294901760
    %4759 = vmatmul.mubr.f32.gmra.mxu0 %v4758
    %v4760 = vpop.f32.mrf.mxu0
    %v4761 = vadd.f32 %v4642, %v4760
    %v4762 = vpop.f32.mrf.mxu0
    %4763 = vdwg.mxu0
    %4764 = vmatprep.subr.mxu0 0.0
    %v4765 = vand.u32 %v110, 4294901760
    %4766 = vmatpush1.msra.mxu0 %v4765
    %4767 = vmatprep.subr.mxu0 0.0
    %v4768 = vand.u32 %v109, 4294901760
    %4769 = vmatpush1.msra.mxu0 %v4768
    %4770 = vmatprep.subr.mxu0 0.0
    %v4771 = vand.u32 %v108, 4294901760
    %4772 = vmatpush1.msra.mxu0 %v4771
    %4773 = vmatprep.subr.mxu0 0.0
    %v4774 = vand.u32 %v107, 4294901760
    %4775 = vmatpush1.msra.mxu0 %v4774
    %4776 = vmatprep.subr.mxu0 0.0
    %v4777 = vand.u32 %v106, 4294901760
    %4778 = vmatpush1.msra.mxu0 %v4777
    %4779 = vmatprep.subr.mxu0 0.0
    %v4780 = vand.u32 %v105, 4294901760
    %4781 = vmatpush1.msra.mxu0 %v4780
    %4782 = vmatprep.subr.mxu0 0.0
    %v4783 = vand.u32 %v104, 4294901760
    %4784 = vmatpush1.msra.mxu0 %v4783
    %4785 = vmatprep.subr.mxu0 0.0
    %v4786 = vand.u32 %v103, 4294901760
    %4787 = vmatpush1.msra.mxu0 %v4786
    %4788 = vmatprep.subr.mxu0 0.0
    %v4789 = vand.u32 %v102, 4294901760
    %4790 = vmatpush1.msra.mxu0 %v4789
    %4791 = vmatprep.subr.mxu0 0.0
    %v4792 = vand.u32 %v101, 4294901760
    %4793 = vmatpush1.msra.mxu0 %v4792
    %4794 = vmatprep.subr.mxu0 0.0
    %v4795 = vand.u32 %v100, 4294901760
    %4796 = vmatpush1.msra.mxu0 %v4795
    %4797 = vmatprep.subr.mxu0 0.0
    %v4798 = vand.u32 %v99, 4294901760
    %4799 = vmatpush1.msra.mxu0 %v4798
    %4800 = vmatprep.subr.mxu0 0.0
    %v4801 = vand.u32 %v98, 4294901760
    %4802 = vmatpush1.msra.mxu0 %v4801
    %4803 = vmatprep.subr.mxu0 0.0
    %v4804 = vand.u32 %v97, 4294901760
    %4805 = vmatpush1.msra.mxu0 %v4804
    %4806 = vmatprep.subr.mxu0 0.0
    %v4807 = vand.u32 %v96, 4294901760
    %4808 = vmatpush1.msra.mxu0 %v4807
    %4809 = vmatprep.subr.mxu0 0.0
    %v4810 = vand.u32 %v95, 4294901760
    %4811 = vmatpush1.msra.mxu0 %v4810
    %4812 = vmatprep.subr.mxu0 0.0
    %4813 = vmatpush2.msra.mxu0 0.0
    %4814 = vmatprep.subr.mxu0 0.0
    %4815 = vmatpush2.msra.mxu0 0.0
    %4816 = vmatprep.subr.mxu0 0.0
    %4817 = vmatpush2.msra.mxu0 0.0
    %4818 = vmatprep.subr.mxu0 0.0
    %4819 = vmatpush2.msra.mxu0 0.0
    %4820 = vmatprep.subr.mxu0 0.0
    %4821 = vmatpush2.msra.mxu0 0.0
    %4822 = vmatprep.subr.mxu0 0.0
    %4823 = vmatpush2.msra.mxu0 0.0
    %4824 = vmatprep.subr.mxu0 0.0
    %4825 = vmatpush2.msra.mxu0 0.0
    %4826 = vmatprep.subr.mxu0 0.0
    %4827 = vmatpush2.msra.mxu0 0.0
    %4828 = vmatprep.subr.mxu0 0.0
    %4829 = vmatpush2.msra.mxu0 0.0
    %4830 = vmatprep.subr.mxu0 0.0
    %4831 = vmatpush2.msra.mxu0 0.0
    %4832 = vmatprep.subr.mxu0 0.0
    %4833 = vmatpush2.msra.mxu0 0.0
    %4834 = vmatprep.subr.mxu0 0.0
    %4835 = vmatpush2.msra.mxu0 0.0
    %4836 = vmatprep.subr.mxu0 0.0
    %4837 = vmatpush2.msra.mxu0 0.0
    %4838 = vmatprep.subr.mxu0 0.0
    %4839 = vmatpush2.msra.mxu0 0.0
    %4840 = vmatprep.subr.mxu0 0.0
    %4841 = vmatpush2.msra.mxu0 0.0
    %4842 = vmatprep.subr.mxu0 0.0
    %4843 = vmatpush2.msra.mxu0 0.0
    %4844 = vmatprep.mubr.f32.mxu0 0.0
    %v4845 = vand.u32 %v4205, 4294901760
    %4846 = vmatmul.mubr.f32.gmra.mxu0 %v4845
    %v4847 = vpop.f32.mrf.mxu0
    %v4848 = vadd.f32 %v4761, %v4847
    %v4849 = vpop.f32.mrf.mxu0
    %4850 = vdwg.mxu0
    %v4851 = vlaneseq
    %v4852 = vshrl.u32 %v4851, 7
    %v4853 = vsub.s32 0, %v4852
    %v4854 = vrot.slane %v150, %v4853
    %4855 = vmatprep.subr.mxu0 0.0
    %v4856 = vand.u32 %v126, 4294901760
    %4857 = vmatpush1.msra.mxu0 %v4856
    %4858 = vmatprep.subr.mxu0 0.0
    %v4859 = vand.u32 %v125, 4294901760
    %4860 = vmatpush1.msra.mxu0 %v4859
    %4861 = vmatprep.subr.mxu0 0.0
    %v4862 = vand.u32 %v124, 4294901760
    %4863 = vmatpush1.msra.mxu0 %v4862
    %4864 = vmatprep.subr.mxu0 0.0
    %v4865 = vand.u32 %v123, 4294901760
    %4866 = vmatpush1.msra.mxu0 %v4865
    %4867 = vmatprep.subr.mxu0 0.0
    %v4868 = vand.u32 %v122, 4294901760
    %4869 = vmatpush1.msra.mxu0 %v4868
    %4870 = vmatprep.subr.mxu0 0.0
    %v4871 = vand.u32 %v121, 4294901760
    %4872 = vmatpush1.msra.mxu0 %v4871
    %4873 = vmatprep.subr.mxu0 0.0
    %v4874 = vand.u32 %v120, 4294901760
    %4875 = vmatpush1.msra.mxu0 %v4874
    %4876 = vmatprep.subr.mxu0 0.0
    %v4877 = vand.u32 %v119, 4294901760
    %4878 = vmatpush1.msra.mxu0 %v4877
    %4879 = vmatprep.subr.mxu0 0.0
    %v4880 = vand.u32 %v118, 4294901760
    %4881 = vmatpush1.msra.mxu0 %v4880
    %4882 = vmatprep.subr.mxu0 0.0
    %v4883 = vand.u32 %v117, 4294901760
    %4884 = vmatpush1.msra.mxu0 %v4883
    %4885 = vmatprep.subr.mxu0 0.0
    %v4886 = vand.u32 %v116, 4294901760
    %4887 = vmatpush1.msra.mxu0 %v4886
    %4888 = vmatprep.subr.mxu0 0.0
    %v4889 = vand.u32 %v115, 4294901760
    %4890 = vmatpush1.msra.mxu0 %v4889
    %4891 = vmatprep.subr.mxu0 0.0
    %v4892 = vand.u32 %v114, 4294901760
    %4893 = vmatpush1.msra.mxu0 %v4892
    %4894 = vmatprep.subr.mxu0 0.0
    %v4895 = vand.u32 %v113, 4294901760
    %4896 = vmatpush1.msra.mxu0 %v4895
    %4897 = vmatprep.subr.mxu0 0.0
    %v4898 = vand.u32 %v112, 4294901760
    %4899 = vmatpush1.msra.mxu0 %v4898
    %4900 = vmatprep.subr.mxu0 0.0
    %v4901 = vand.u32 %v111, 4294901760
    %4902 = vmatpush1.msra.mxu0 %v4901
    %4903 = vmatprep.subr.mxu0 0.0
    %4904 = vmatpush2.msra.mxu0 0.0
    %4905 = vmatprep.subr.mxu0 0.0
    %4906 = vmatpush2.msra.mxu0 0.0
    %4907 = vmatprep.subr.mxu0 0.0
    %4908 = vmatpush2.msra.mxu0 0.0
    %4909 = vmatprep.subr.mxu0 0.0
    %4910 = vmatpush2.msra.mxu0 0.0
    %4911 = vmatprep.subr.mxu0 0.0
    %4912 = vmatpush2.msra.mxu0 0.0
    %4913 = vmatprep.subr.mxu0 0.0
    %4914 = vmatpush2.msra.mxu0 0.0
    %4915 = vmatprep.subr.mxu0 0.0
    %4916 = vmatpush2.msra.mxu0 0.0
    %4917 = vmatprep.subr.mxu0 0.0
    %4918 = vmatpush2.msra.mxu0 0.0
    %4919 = vmatprep.subr.mxu0 0.0
    %4920 = vmatpush2.msra.mxu0 0.0
    %4921 = vmatprep.subr.mxu0 0.0
    %4922 = vmatpush2.msra.mxu0 0.0
    %4923 = vmatprep.subr.mxu0 0.0
    %4924 = vmatpush2.msra.mxu0 0.0
    %4925 = vmatprep.subr.mxu0 0.0
    %4926 = vmatpush2.msra.mxu0 0.0
    %4927 = vmatprep.subr.mxu0 0.0
    %4928 = vmatpush2.msra.mxu0 0.0
    %4929 = vmatprep.subr.mxu0 0.0
    %4930 = vmatpush2.msra.mxu0 0.0
    %4931 = vmatprep.subr.mxu0 0.0
    %4932 = vmatpush2.msra.mxu0 0.0
    %4933 = vmatprep.subr.mxu0 0.0
    %4934 = vmatpush2.msra.mxu0 0.0
    %4935 = vmatprep.mubr.f32.mxu0 0.0
    %v4936 = vand.u32 %v4848, 4294901760
    %v4937 = vsub.f32 %v4848, %v4936
    %v4938 = vand.u32 %v4937, 4294901760
    %v4939 = vsub.f32 %v4937, %v4938
    %v4940 = vand.u32 %v4939, 4294901760
    %4941 = vmatmul.mubr.f32.gmra.mxu0 %v4940
    %v4942 = vpop.f32.mrf.mxu0
    %v4943 = vadd.f32 %v4854, %v4942
    %v4944 = vpop.f32.mrf.mxu0
    %4945 = vdwg.mxu0
    %4946 = vmatprep.subr.mxu0 0.0
    %v4947 = vand.u32 %v126, 4294901760
    %v4948 = vsub.f32 %v126, %v4947
    %v4949 = vand.u32 %v4948, 4294901760
    %v4950 = vsub.f32 %v4948, %v4949
    %v4951 = vand.u32 %v4950, 4294901760
    %4952 = vmatpush1.msra.mxu0 %v4951
    %4953 = vmatprep.subr.mxu0 0.0
    %v4954 = vand.u32 %v125, 4294901760
    %v4955 = vsub.f32 %v125, %v4954
    %v4956 = vand.u32 %v4955, 4294901760
    %v4957 = vsub.f32 %v4955, %v4956
    %v4958 = vand.u32 %v4957, 4294901760
    %4959 = vmatpush1.msra.mxu0 %v4958
    %4960 = vmatprep.subr.mxu0 0.0
    %v4961 = vand.u32 %v124, 4294901760
    %v4962 = vsub.f32 %v124, %v4961
    %v4963 = vand.u32 %v4962, 4294901760
    %v4964 = vsub.f32 %v4962, %v4963
    %v4965 = vand.u32 %v4964, 4294901760
    %4966 = vmatpush1.msra.mxu0 %v4965
    %4967 = vmatprep.subr.mxu0 0.0
    %v4968 = vand.u32 %v123, 4294901760
    %v4969 = vsub.f32 %v123, %v4968
    %v4970 = vand.u32 %v4969, 4294901760
    %v4971 = vsub.f32 %v4969, %v4970
    %v4972 = vand.u32 %v4971, 4294901760
    %4973 = vmatpush1.msra.mxu0 %v4972
    %4974 = vmatprep.subr.mxu0 0.0
    %v4975 = vand.u32 %v122, 4294901760
    %v4976 = vsub.f32 %v122, %v4975
    %v4977 = vand.u32 %v4976, 4294901760
    %v4978 = vsub.f32 %v4976, %v4977
    %v4979 = vand.u32 %v4978, 4294901760
    %4980 = vmatpush1.msra.mxu0 %v4979
    %4981 = vmatprep.subr.mxu0 0.0
    %v4982 = vand.u32 %v121, 4294901760
    %v4983 = vsub.f32 %v121, %v4982
    %v4984 = vand.u32 %v4983, 4294901760
    %v4985 = vsub.f32 %v4983, %v4984
    %v4986 = vand.u32 %v4985, 4294901760
    %4987 = vmatpush1.msra.mxu0 %v4986
    %4988 = vmatprep.subr.mxu0 0.0
    %v4989 = vand.u32 %v120, 4294901760
    %v4990 = vsub.f32 %v120, %v4989
    %v4991 = vand.u32 %v4990, 4294901760
    %v4992 = vsub.f32 %v4990, %v4991
    %v4993 = vand.u32 %v4992, 4294901760
    %4994 = vmatpush1.msra.mxu0 %v4993
    %4995 = vmatprep.subr.mxu0 0.0
    %v4996 = vand.u32 %v119, 4294901760
    %v4997 = vsub.f32 %v119, %v4996
    %v4998 = vand.u32 %v4997, 4294901760
    %v4999 = vsub.f32 %v4997, %v4998
    %v5000 = vand.u32 %v4999, 4294901760
    %5001 = vmatpush1.msra.mxu0 %v5000
    %5002 = vmatprep.subr.mxu0 0.0
    %v5003 = vand.u32 %v118, 4294901760
    %v5004 = vsub.f32 %v118, %v5003
    %v5005 = vand.u32 %v5004, 4294901760
    %v5006 = vsub.f32 %v5004, %v5005
    %v5007 = vand.u32 %v5006, 4294901760
    %5008 = vmatpush1.msra.mxu0 %v5007
    %5009 = vmatprep.subr.mxu0 0.0
    %v5010 = vand.u32 %v117, 4294901760
    %v5011 = vsub.f32 %v117, %v5010
    %v5012 = vand.u32 %v5011, 4294901760
    %v5013 = vsub.f32 %v5011, %v5012
    %v5014 = vand.u32 %v5013, 4294901760
    %5015 = vmatpush1.msra.mxu0 %v5014
    %5016 = vmatprep.subr.mxu0 0.0
    %v5017 = vand.u32 %v116, 4294901760
    %v5018 = vsub.f32 %v116, %v5017
    %v5019 = vand.u32 %v5018, 4294901760
    %v5020 = vsub.f32 %v5018, %v5019
    %v5021 = vand.u32 %v5020, 4294901760
    %5022 = vmatpush1.msra.mxu0 %v5021
    %5023 = vmatprep.subr.mxu0 0.0
    %v5024 = vand.u32 %v115, 4294901760
    %v5025 = vsub.f32 %v115, %v5024
    %v5026 = vand.u32 %v5025, 4294901760
    %v5027 = vsub.f32 %v5025, %v5026
    %v5028 = vand.u32 %v5027, 4294901760
    %5029 = vmatpush1.msra.mxu0 %v5028
    %5030 = vmatprep.subr.mxu0 0.0
    %v5031 = vand.u32 %v114, 4294901760
    %v5032 = vsub.f32 %v114, %v5031
    %v5033 = vand.u32 %v5032, 4294901760
    %v5034 = vsub.f32 %v5032, %v5033
    %v5035 = vand.u32 %v5034, 4294901760
    %5036 = vmatpush1.msra.mxu0 %v5035
    %5037 = vmatprep.subr.mxu0 0.0
    %v5038 = vand.u32 %v113, 4294901760
    %v5039 = vsub.f32 %v113, %v5038
    %v5040 = vand.u32 %v5039, 4294901760
    %v5041 = vsub.f32 %v5039, %v5040
    %v5042 = vand.u32 %v5041, 4294901760
    %5043 = vmatpush1.msra.mxu0 %v5042
    %5044 = vmatprep.subr.mxu0 0.0
    %v5045 = vand.u32 %v112, 4294901760
    %v5046 = vsub.f32 %v112, %v5045
    %v5047 = vand.u32 %v5046, 4294901760
    %v5048 = vsub.f32 %v5046, %v5047
    %v5049 = vand.u32 %v5048, 4294901760
    %5050 = vmatpush1.msra.mxu0 %v5049
    %5051 = vmatprep.subr.mxu0 0.0
    %v5052 = vand.u32 %v111, 4294901760
    %v5053 = vsub.f32 %v111, %v5052
    %v5054 = vand.u32 %v5053, 4294901760
    %v5055 = vsub.f32 %v5053, %v5054
    %v5056 = vand.u32 %v5055, 4294901760
    %5057 = vmatpush1.msra.mxu0 %v5056
    %5058 = vmatprep.subr.mxu0 0.0
    %5059 = vmatpush2.msra.mxu0 0.0
    %5060 = vmatprep.subr.mxu0 0.0
    %5061 = vmatpush2.msra.mxu0 0.0
    %5062 = vmatprep.subr.mxu0 0.0
    %5063 = vmatpush2.msra.mxu0 0.0
    %5064 = vmatprep.subr.mxu0 0.0
    %5065 = vmatpush2.msra.mxu0 0.0
    %5066 = vmatprep.subr.mxu0 0.0
    %5067 = vmatpush2.msra.mxu0 0.0
    %5068 = vmatprep.subr.mxu0 0.0
    %5069 = vmatpush2.msra.mxu0 0.0
    %5070 = vmatprep.subr.mxu0 0.0
    %5071 = vmatpush2.msra.mxu0 0.0
    %5072 = vmatprep.subr.mxu0 0.0
    %5073 = vmatpush2.msra.mxu0 0.0
    %5074 = vmatprep.subr.mxu0 0.0
    %5075 = vmatpush2.msra.mxu0 0.0
    %5076 = vmatprep.subr.mxu0 0.0
    %5077 = vmatpush2.msra.mxu0 0.0
    %5078 = vmatprep.subr.mxu0 0.0
    %5079 = vmatpush2.msra.mxu0 0.0
    %5080 = vmatprep.subr.mxu0 0.0
    %5081 = vmatpush2.msra.mxu0 0.0
    %5082 = vmatprep.subr.mxu0 0.0
    %5083 = vmatpush2.msra.mxu0 0.0
    %5084 = vmatprep.subr.mxu0 0.0
    %5085 = vmatpush2.msra.mxu0 0.0
    %5086 = vmatprep.subr.mxu0 0.0
    %5087 = vmatpush2.msra.mxu0 0.0
    %5088 = vmatprep.subr.mxu0 0.0
    %5089 = vmatpush2.msra.mxu0 0.0
    %5090 = vmatprep.mubr.f32.mxu0 0.0
    %v5091 = vand.u32 %v4848, 4294901760
    %5092 = vmatmul.mubr.f32.gmra.mxu0 %v5091
    %v5093 = vpop.f32.mrf.mxu0
    %v5094 = vadd.f32 %v4943, %v5093
    %v5095 = vpop.f32.mrf.mxu0
    %5096 = vdwg.mxu0
    %5097 = vmatprep.subr.mxu0 0.0
    %v5098 = vand.u32 %v126, 4294901760
    %v5099 = vsub.f32 %v126, %v5098
    %5100 = vmatpush1.msra.mxu0 %v5099
    %5101 = vmatprep.subr.mxu0 0.0
    %v5102 = vand.u32 %v125, 4294901760
    %v5103 = vsub.f32 %v125, %v5102
    %5104 = vmatpush1.msra.mxu0 %v5103
    %5105 = vmatprep.subr.mxu0 0.0
    %v5106 = vand.u32 %v124, 4294901760
    %v5107 = vsub.f32 %v124, %v5106
    %5108 = vmatpush1.msra.mxu0 %v5107
    %5109 = vmatprep.subr.mxu0 0.0
    %v5110 = vand.u32 %v123, 4294901760
    %v5111 = vsub.f32 %v123, %v5110
    %5112 = vmatpush1.msra.mxu0 %v5111
    %5113 = vmatprep.subr.mxu0 0.0
    %v5114 = vand.u32 %v122, 4294901760
    %v5115 = vsub.f32 %v122, %v5114
    %5116 = vmatpush1.msra.mxu0 %v5115
    %5117 = vmatprep.subr.mxu0 0.0
    %v5118 = vand.u32 %v121, 4294901760
    %v5119 = vsub.f32 %v121, %v5118
    %5120 = vmatpush1.msra.mxu0 %v5119
    %5121 = vmatprep.subr.mxu0 0.0
    %v5122 = vand.u32 %v120, 4294901760
    %v5123 = vsub.f32 %v120, %v5122
    %5124 = vmatpush1.msra.mxu0 %v5123
    %5125 = vmatprep.subr.mxu0 0.0
    %v5126 = vand.u32 %v119, 4294901760
    %v5127 = vsub.f32 %v119, %v5126
    %5128 = vmatpush1.msra.mxu0 %v5127
    %5129 = vmatprep.subr.mxu0 0.0
    %v5130 = vand.u32 %v118, 4294901760
    %v5131 = vsub.f32 %v118, %v5130
    %5132 = vmatpush1.msra.mxu0 %v5131
    %5133 = vmatprep.subr.mxu0 0.0
    %v5134 = vand.u32 %v117, 4294901760
    %v5135 = vsub.f32 %v117, %v5134
    %5136 = vmatpush1.msra.mxu0 %v5135
    %5137 = vmatprep.subr.mxu0 0.0
    %v5138 = vand.u32 %v116, 4294901760
    %v5139 = vsub.f32 %v116, %v5138
    %5140 = vmatpush1.msra.mxu0 %v5139
    %5141 = vmatprep.subr.mxu0 0.0
    %v5142 = vand.u32 %v115, 4294901760
    %v5143 = vsub.f32 %v115, %v5142
    %5144 = vmatpush1.msra.mxu0 %v5143
    %5145 = vmatprep.subr.mxu0 0.0
    %v5146 = vand.u32 %v114, 4294901760
    %v5147 = vsub.f32 %v114, %v5146
    %5148 = vmatpush1.msra.mxu0 %v5147
    %5149 = vmatprep.subr.mxu0 0.0
    %v5150 = vand.u32 %v113, 4294901760
    %v5151 = vsub.f32 %v113, %v5150
    %5152 = vmatpush1.msra.mxu0 %v5151
    %5153 = vmatprep.subr.mxu0 0.0
    %v5154 = vand.u32 %v112, 4294901760
    %v5155 = vsub.f32 %v112, %v5154
    %5156 = vmatpush1.msra.mxu0 %v5155
    %5157 = vmatprep.subr.mxu0 0.0
    %v5158 = vand.u32 %v111, 4294901760
    %v5159 = vsub.f32 %v111, %v5158
    %5160 = vmatpush1.msra.mxu0 %v5159
    %5161 = vmatprep.subr.mxu0 0.0
    %5162 = vmatpush2.msra.mxu0 0.0
    %5163 = vmatprep.subr.mxu0 0.0
    %5164 = vmatpush2.msra.mxu0 0.0
    %5165 = vmatprep.subr.mxu0 0.0
    %5166 = vmatpush2.msra.mxu0 0.0
    %5167 = vmatprep.subr.mxu0 0.0
    %5168 = vmatpush2.msra.mxu0 0.0
    %5169 = vmatprep.subr.mxu0 0.0
    %5170 = vmatpush2.msra.mxu0 0.0
    %5171 = vmatprep.subr.mxu0 0.0
    %5172 = vmatpush2.msra.mxu0 0.0
    %5173 = vmatprep.subr.mxu0 0.0
    %5174 = vmatpush2.msra.mxu0 0.0
    %5175 = vmatprep.subr.mxu0 0.0
    %5176 = vmatpush2.msra.mxu0 0.0
    %5177 = vmatprep.subr.mxu0 0.0
    %5178 = vmatpush2.msra.mxu0 0.0
    %5179 = vmatprep.subr.mxu0 0.0
    %5180 = vmatpush2.msra.mxu0 0.0
    %5181 = vmatprep.subr.mxu0 0.0
    %5182 = vmatpush2.msra.mxu0 0.0
    %5183 = vmatprep.subr.mxu0 0.0
    %5184 = vmatpush2.msra.mxu0 0.0
    %5185 = vmatprep.subr.mxu0 0.0
    %5186 = vmatpush2.msra.mxu0 0.0
    %5187 = vmatprep.subr.mxu0 0.0
    %5188 = vmatpush2.msra.mxu0 0.0
    %5189 = vmatprep.subr.mxu0 0.0
    %5190 = vmatpush2.msra.mxu0 0.0
    %5191 = vmatprep.subr.mxu0 0.0
    %5192 = vmatpush2.msra.mxu0 0.0
    %5193 = vmatprep.mubr.f32.mxu0 0.0
    %v5194 = vand.u32 %v4848, 4294901760
    %v5195 = vsub.f32 %v4848, %v5194
    %5196 = vmatmul.mubr.f32.gmra.mxu0 %v5195
    %v5197 = vpop.f32.mrf.mxu0
    %v5198 = vadd.f32 %v5094, %v5197
    %v5199 = vpop.f32.mrf.mxu0
    %5200 = vdwg.mxu0
    %5201 = vmatprep.subr.mxu0 0.0
    %v5202 = vand.u32 %v126, 4294901760
    %5203 = vmatpush1.msra.mxu0 %v5202
    %5204 = vmatprep.subr.mxu0 0.0
    %v5205 = vand.u32 %v125, 4294901760
    %5206 = vmatpush1.msra.mxu0 %v5205
    %5207 = vmatprep.subr.mxu0 0.0
    %v5208 = vand.u32 %v124, 4294901760
    %5209 = vmatpush1.msra.mxu0 %v5208
    %5210 = vmatprep.subr.mxu0 0.0
    %v5211 = vand.u32 %v123, 4294901760
    %5212 = vmatpush1.msra.mxu0 %v5211
    %5213 = vmatprep.subr.mxu0 0.0
    %v5214 = vand.u32 %v122, 4294901760
    %5215 = vmatpush1.msra.mxu0 %v5214
    %5216 = vmatprep.subr.mxu0 0.0
    %v5217 = vand.u32 %v121, 4294901760
    %5218 = vmatpush1.msra.mxu0 %v5217
    %5219 = vmatprep.subr.mxu0 0.0
    %v5220 = vand.u32 %v120, 4294901760
    %5221 = vmatpush1.msra.mxu0 %v5220
    %5222 = vmatprep.subr.mxu0 0.0
    %v5223 = vand.u32 %v119, 4294901760
    %5224 = vmatpush1.msra.mxu0 %v5223
    %5225 = vmatprep.subr.mxu0 0.0
    %v5226 = vand.u32 %v118, 4294901760
    %5227 = vmatpush1.msra.mxu0 %v5226
    %5228 = vmatprep.subr.mxu0 0.0
    %v5229 = vand.u32 %v117, 4294901760
    %5230 = vmatpush1.msra.mxu0 %v5229
    %5231 = vmatprep.subr.mxu0 0.0
    %v5232 = vand.u32 %v116, 4294901760
    %5233 = vmatpush1.msra.mxu0 %v5232
    %5234 = vmatprep.subr.mxu0 0.0
    %v5235 = vand.u32 %v115, 4294901760
    %5236 = vmatpush1.msra.mxu0 %v5235
    %5237 = vmatprep.subr.mxu0 0.0
    %v5238 = vand.u32 %v114, 4294901760
    %5239 = vmatpush1.msra.mxu0 %v5238
    %5240 = vmatprep.subr.mxu0 0.0
    %v5241 = vand.u32 %v113, 4294901760
    %5242 = vmatpush1.msra.mxu0 %v5241
    %5243 = vmatprep.subr.mxu0 0.0
    %v5244 = vand.u32 %v112, 4294901760
    %5245 = vmatpush1.msra.mxu0 %v5244
    %5246 = vmatprep.subr.mxu0 0.0
    %v5247 = vand.u32 %v111, 4294901760
    %5248 = vmatpush1.msra.mxu0 %v5247
    %5249 = vmatprep.subr.mxu0 0.0
    %5250 = vmatpush2.msra.mxu0 0.0
    %5251 = vmatprep.subr.mxu0 0.0
    %5252 = vmatpush2.msra.mxu0 0.0
    %5253 = vmatprep.subr.mxu0 0.0
    %5254 = vmatpush2.msra.mxu0 0.0
    %5255 = vmatprep.subr.mxu0 0.0
    %5256 = vmatpush2.msra.mxu0 0.0
    %5257 = vmatprep.subr.mxu0 0.0
    %5258 = vmatpush2.msra.mxu0 0.0
    %5259 = vmatprep.subr.mxu0 0.0
    %5260 = vmatpush2.msra.mxu0 0.0
    %5261 = vmatprep.subr.mxu0 0.0
    %5262 = vmatpush2.msra.mxu0 0.0
    %5263 = vmatprep.subr.mxu0 0.0
    %5264 = vmatpush2.msra.mxu0 0.0
    %5265 = vmatprep.subr.mxu0 0.0
    %5266 = vmatpush2.msra.mxu0 0.0
    %5267 = vmatprep.subr.mxu0 0.0
    %5268 = vmatpush2.msra.mxu0 0.0
    %5269 = vmatprep.subr.mxu0 0.0
    %5270 = vmatpush2.msra.mxu0 0.0
    %5271 = vmatprep.subr.mxu0 0.0
    %5272 = vmatpush2.msra.mxu0 0.0
    %5273 = vmatprep.subr.mxu0 0.0
    %5274 = vmatpush2.msra.mxu0 0.0
    %5275 = vmatprep.subr.mxu0 0.0
    %5276 = vmatpush2.msra.mxu0 0.0
    %5277 = vmatprep.subr.mxu0 0.0
    %5278 = vmatpush2.msra.mxu0 0.0
    %5279 = vmatprep.subr.mxu0 0.0
    %5280 = vmatpush2.msra.mxu0 0.0
    %5281 = vmatprep.mubr.f32.mxu0 0.0
    %v5282 = vand.u32 %v4848, 4294901760
    %v5283 = vsub.f32 %v4848, %v5282
    %v5284 = vand.u32 %v5283, 4294901760
    %5285 = vmatmul.mubr.f32.gmra.mxu0 %v5284
    %v5286 = vpop.f32.mrf.mxu0
    %v5287 = vadd.f32 %v5198, %v5286
    %v5288 = vpop.f32.mrf.mxu0
    %5289 = vdwg.mxu0
    %5290 = vmatprep.subr.mxu0 0.0
    %v5291 = vand.u32 %v126, 4294901760
    %v5292 = vsub.f32 %v126, %v5291
    %v5293 = vand.u32 %v5292, 4294901760
    %5294 = vmatpush1.msra.mxu0 %v5293
    %5295 = vmatprep.subr.mxu0 0.0
    %v5296 = vand.u32 %v125, 4294901760
    %v5297 = vsub.f32 %v125, %v5296
    %v5298 = vand.u32 %v5297, 4294901760
    %5299 = vmatpush1.msra.mxu0 %v5298
    %5300 = vmatprep.subr.mxu0 0.0
    %v5301 = vand.u32 %v124, 4294901760
    %v5302 = vsub.f32 %v124, %v5301
    %v5303 = vand.u32 %v5302, 4294901760
    %5304 = vmatpush1.msra.mxu0 %v5303
    %5305 = vmatprep.subr.mxu0 0.0
    %v5306 = vand.u32 %v123, 4294901760
    %v5307 = vsub.f32 %v123, %v5306
    %v5308 = vand.u32 %v5307, 4294901760
    %5309 = vmatpush1.msra.mxu0 %v5308
    %5310 = vmatprep.subr.mxu0 0.0
    %v5311 = vand.u32 %v122, 4294901760
    %v5312 = vsub.f32 %v122, %v5311
    %v5313 = vand.u32 %v5312, 4294901760
    %5314 = vmatpush1.msra.mxu0 %v5313
    %5315 = vmatprep.subr.mxu0 0.0
    %v5316 = vand.u32 %v121, 4294901760
    %v5317 = vsub.f32 %v121, %v5316
    %v5318 = vand.u32 %v5317, 4294901760
    %5319 = vmatpush1.msra.mxu0 %v5318
    %5320 = vmatprep.subr.mxu0 0.0
    %v5321 = vand.u32 %v120, 4294901760
    %v5322 = vsub.f32 %v120, %v5321
    %v5323 = vand.u32 %v5322, 4294901760
    %5324 = vmatpush1.msra.mxu0 %v5323
    %5325 = vmatprep.subr.mxu0 0.0
    %v5326 = vand.u32 %v119, 4294901760
    %v5327 = vsub.f32 %v119, %v5326
    %v5328 = vand.u32 %v5327, 4294901760
    %5329 = vmatpush1.msra.mxu0 %v5328
    %5330 = vmatprep.subr.mxu0 0.0
    %v5331 = vand.u32 %v118, 4294901760
    %v5332 = vsub.f32 %v118, %v5331
    %v5333 = vand.u32 %v5332, 4294901760
    %5334 = vmatpush1.msra.mxu0 %v5333
    %5335 = vmatprep.subr.mxu0 0.0
    %v5336 = vand.u32 %v117, 4294901760
    %v5337 = vsub.f32 %v117, %v5336
    %v5338 = vand.u32 %v5337, 4294901760
    %5339 = vmatpush1.msra.mxu0 %v5338
    %5340 = vmatprep.subr.mxu0 0.0
    %v5341 = vand.u32 %v116, 4294901760
    %v5342 = vsub.f32 %v116, %v5341
    %v5343 = vand.u32 %v5342, 4294901760
    %5344 = vmatpush1.msra.mxu0 %v5343
    %5345 = vmatprep.subr.mxu0 0.0
    %v5346 = vand.u32 %v115, 4294901760
    %v5347 = vsub.f32 %v115, %v5346
    %v5348 = vand.u32 %v5347, 4294901760
    %5349 = vmatpush1.msra.mxu0 %v5348
    %5350 = vmatprep.subr.mxu0 0.0
    %v5351 = vand.u32 %v114, 4294901760
    %v5352 = vsub.f32 %v114, %v5351
    %v5353 = vand.u32 %v5352, 4294901760
    %5354 = vmatpush1.msra.mxu0 %v5353
    %5355 = vmatprep.subr.mxu0 0.0
    %v5356 = vand.u32 %v113, 4294901760
    %v5357 = vsub.f32 %v113, %v5356
    %v5358 = vand.u32 %v5357, 4294901760
    %5359 = vmatpush1.msra.mxu0 %v5358
    %5360 = vmatprep.subr.mxu0 0.0
    %v5361 = vand.u32 %v112, 4294901760
    %v5362 = vsub.f32 %v112, %v5361
    %v5363 = vand.u32 %v5362, 4294901760
    %5364 = vmatpush1.msra.mxu0 %v5363
    %5365 = vmatprep.subr.mxu0 0.0
    %v5366 = vand.u32 %v111, 4294901760
    %v5367 = vsub.f32 %v111, %v5366
    %v5368 = vand.u32 %v5367, 4294901760
    %5369 = vmatpush1.msra.mxu0 %v5368
    %5370 = vmatprep.subr.mxu0 0.0
    %5371 = vmatpush2.msra.mxu0 0.0
    %5372 = vmatprep.subr.mxu0 0.0
    %5373 = vmatpush2.msra.mxu0 0.0
    %5374 = vmatprep.subr.mxu0 0.0
    %5375 = vmatpush2.msra.mxu0 0.0
    %5376 = vmatprep.subr.mxu0 0.0
    %5377 = vmatpush2.msra.mxu0 0.0
    %5378 = vmatprep.subr.mxu0 0.0
    %5379 = vmatpush2.msra.mxu0 0.0
    %5380 = vmatprep.subr.mxu0 0.0
    %5381 = vmatpush2.msra.mxu0 0.0
    %5382 = vmatprep.subr.mxu0 0.0
    %5383 = vmatpush2.msra.mxu0 0.0
    %5384 = vmatprep.subr.mxu0 0.0
    %5385 = vmatpush2.msra.mxu0 0.0
    %5386 = vmatprep.subr.mxu0 0.0
    %5387 = vmatpush2.msra.mxu0 0.0
    %5388 = vmatprep.subr.mxu0 0.0
    %5389 = vmatpush2.msra.mxu0 0.0
    %5390 = vmatprep.subr.mxu0 0.0
    %5391 = vmatpush2.msra.mxu0 0.0
    %5392 = vmatprep.subr.mxu0 0.0
    %5393 = vmatpush2.msra.mxu0 0.0
    %5394 = vmatprep.subr.mxu0 0.0
    %5395 = vmatpush2.msra.mxu0 0.0
    %5396 = vmatprep.subr.mxu0 0.0
    %5397 = vmatpush2.msra.mxu0 0.0
    %5398 = vmatprep.subr.mxu0 0.0
    %5399 = vmatpush2.msra.mxu0 0.0
    %5400 = vmatprep.subr.mxu0 0.0
    %5401 = vmatpush2.msra.mxu0 0.0
    %5402 = vmatprep.mubr.f32.mxu0 0.0
    %v5403 = vand.u32 %v4848, 4294901760
    %5404 = vmatmul.mubr.f32.gmra.mxu0 %v5403
    %v5405 = vpop.f32.mrf.mxu0
    %v5406 = vadd.f32 %v5287, %v5405
    %v5407 = vpop.f32.mrf.mxu0
    %5408 = vdwg.mxu0
    %5409 = vmatprep.subr.mxu0 0.0
    %v5410 = vand.u32 %v126, 4294901760
    %5411 = vmatpush1.msra.mxu0 %v5410
    %5412 = vmatprep.subr.mxu0 0.0
    %v5413 = vand.u32 %v125, 4294901760
    %5414 = vmatpush1.msra.mxu0 %v5413
    %5415 = vmatprep.subr.mxu0 0.0
    %v5416 = vand.u32 %v124, 4294901760
    %5417 = vmatpush1.msra.mxu0 %v5416
    %5418 = vmatprep.subr.mxu0 0.0
    %v5419 = vand.u32 %v123, 4294901760
    %5420 = vmatpush1.msra.mxu0 %v5419
    %5421 = vmatprep.subr.mxu0 0.0
    %v5422 = vand.u32 %v122, 4294901760
    %5423 = vmatpush1.msra.mxu0 %v5422
    %5424 = vmatprep.subr.mxu0 0.0
    %v5425 = vand.u32 %v121, 4294901760
    %5426 = vmatpush1.msra.mxu0 %v5425
    %5427 = vmatprep.subr.mxu0 0.0
    %v5428 = vand.u32 %v120, 4294901760
    %5429 = vmatpush1.msra.mxu0 %v5428
    %5430 = vmatprep.subr.mxu0 0.0
    %v5431 = vand.u32 %v119, 4294901760
    %5432 = vmatpush1.msra.mxu0 %v5431
    %5433 = vmatprep.subr.mxu0 0.0
    %v5434 = vand.u32 %v118, 4294901760
    %5435 = vmatpush1.msra.mxu0 %v5434
    %5436 = vmatprep.subr.mxu0 0.0
    %v5437 = vand.u32 %v117, 4294901760
    %5438 = vmatpush1.msra.mxu0 %v5437
    %5439 = vmatprep.subr.mxu0 0.0
    %v5440 = vand.u32 %v116, 4294901760
    %5441 = vmatpush1.msra.mxu0 %v5440
    %5442 = vmatprep.subr.mxu0 0.0
    %v5443 = vand.u32 %v115, 4294901760
    %5444 = vmatpush1.msra.mxu0 %v5443
    %5445 = vmatprep.subr.mxu0 0.0
    %v5446 = vand.u32 %v114, 4294901760
    %5447 = vmatpush1.msra.mxu0 %v5446
    %5448 = vmatprep.subr.mxu0 0.0
    %v5449 = vand.u32 %v113, 4294901760
    %5450 = vmatpush1.msra.mxu0 %v5449
    %5451 = vmatprep.subr.mxu0 0.0
    %v5452 = vand.u32 %v112, 4294901760
    %5453 = vmatpush1.msra.mxu0 %v5452
    %5454 = vmatprep.subr.mxu0 0.0
    %v5455 = vand.u32 %v111, 4294901760
    %5456 = vmatpush1.msra.mxu0 %v5455
    %5457 = vmatprep.subr.mxu0 0.0
    %5458 = vmatpush2.msra.mxu0 0.0
    %5459 = vmatprep.subr.mxu0 0.0
    %5460 = vmatpush2.msra.mxu0 0.0
    %5461 = vmatprep.subr.mxu0 0.0
    %5462 = vmatpush2.msra.mxu0 0.0
    %5463 = vmatprep.subr.mxu0 0.0
    %5464 = vmatpush2.msra.mxu0 0.0
    %5465 = vmatprep.subr.mxu0 0.0
    %5466 = vmatpush2.msra.mxu0 0.0
    %5467 = vmatprep.subr.mxu0 0.0
    %5468 = vmatpush2.msra.mxu0 0.0
    %5469 = vmatprep.subr.mxu0 0.0
    %5470 = vmatpush2.msra.mxu0 0.0
    %5471 = vmatprep.subr.mxu0 0.0
    %5472 = vmatpush2.msra.mxu0 0.0
    %5473 = vmatprep.subr.mxu0 0.0
    %5474 = vmatpush2.msra.mxu0 0.0
    %5475 = vmatprep.subr.mxu0 0.0
    %5476 = vmatpush2.msra.mxu0 0.0
    %5477 = vmatprep.subr.mxu0 0.0
    %5478 = vmatpush2.msra.mxu0 0.0
    %5479 = vmatprep.subr.mxu0 0.0
    %5480 = vmatpush2.msra.mxu0 0.0
    %5481 = vmatprep.subr.mxu0 0.0
    %5482 = vmatpush2.msra.mxu0 0.0
    %5483 = vmatprep.subr.mxu0 0.0
    %5484 = vmatpush2.msra.mxu0 0.0
    %5485 = vmatprep.subr.mxu0 0.0
    %5486 = vmatpush2.msra.mxu0 0.0
    %5487 = vmatprep.subr.mxu0 0.0
    %5488 = vmatpush2.msra.mxu0 0.0
    %5489 = vmatprep.mubr.f32.mxu0 0.0
    %v5490 = vand.u32 %v4848, 4294901760
    %5491 = vmatmul.mubr.f32.gmra.mxu0 %v5490
    %v5492 = vpop.f32.mrf.mxu0
    %v5493 = vadd.f32 %v5406, %v5492
    %v5494 = vpop.f32.mrf.mxu0
    %5495 = vdwg.mxu0
    %v5496 = vmul.f32 %v5493, %v62
    %v5497 = vsel %vm4141, %v5496, 0.0
    %v5498 = vrot.slane %v5497, 4
    %v5499 = vadd.f32 %v5497, %v5498
    %v5500 = vrot.slane %v5499, 2
    %v5501 = vadd.f32 %v5499, %v5500
    %v5502 = vrot.slane %v5501, 1
    %v5503 = vadd.f32 %v5501, %v5502
    %v5504 = vsel %vm4141, %v5493, 0.0
    %v5505 = vrot.slane %v5504, 4
    %v5506 = vadd.f32 %v5504, %v5505
    %v5507 = vrot.slane %v5506, 2
    %v5508 = vadd.f32 %v5506, %v5507
    %v5509 = vrot.slane %v5508, 1
    %v5510 = vadd.f32 %v5508, %v5509
    %v5511 = vmul.f32 %v5503, 0.5
    %v5512 = vsub.f32 %v5510, %v5503
    %v5513 = vmul.f32 %v5512, 0.5
    %v5514 = vsub.f32 %v5511, %v5513
    %v5515 = vmul.f32 %v62, %v5514
    %v5516 = vadd.f32 %v5513, %v5515
    %v5517 = vsub.f32 %v5493, %v5516
    %v5518 = vmul.f32 %v5517, %v5517
    %v5519 = vmul.f32 %v5518, %v62
    %v5520 = vsel %vm4141, %v5519, 0.0
    %v5521 = vrot.slane %v5520, 4
    %v5522 = vadd.f32 %v5520, %v5521
    %v5523 = vrot.slane %v5522, 2
    %v5524 = vadd.f32 %v5522, %v5523
    %v5525 = vrot.slane %v5524, 1
    %v5526 = vadd.f32 %v5524, %v5525
    %v5527 = vsel %vm4141, %v5518, 0.0
    %v5528 = vrot.slane %v5527, 4
    %v5529 = vadd.f32 %v5527, %v5528
    %v5530 = vrot.slane %v5529, 2
    %v5531 = vadd.f32 %v5529, %v5530
    %v5532 = vrot.slane %v5531, 1
    %v5533 = vadd.f32 %v5531, %v5532
    %v5534 = vmul.f32 %v5526, 0.5
    %v5535 = vadd.f32 %v5534, 1e-05
    %v5536 = vrsqrt.pop %v5535
    %v5537 = vmul.f32 %v5536, %v151
    %v5538 = vsub.f32 %v5533, %v5526
    %v5539 = vmul.f32 %v5538, 0.5
    %v5540 = vadd.f32 %v5539, 1e-05
    %v5541 = vrsqrt.pop %v5540
    %v5542 = vmul.f32 %v5541, %v151
    %v5543 = vsub.f32 %v5537, %v5542
    %v5544 = vlaneseq
    %v5545 = vshrl.u32 %v5544, 7
    %v5546 = vsub.s32 0, %v5545
    %v5547 = vrot.slane %v5543, %v5546
    %v5548 = vmul.f32 %v62, %v5547
    %v5549 = vlaneseq
    %v5550 = vshrl.u32 %v5549, 7
    %v5551 = vsub.s32 0, %v5550
    %v5552 = vrot.slane %v5542, %v5551
    %v5553 = vadd.f32 %v5552, %v5548
    %v5554 = vmul.f32 %v5517, %v5553
    %v5555 = vlaneseq
    %v5556 = vshrl.u32 %v5555, 7
    %v5557 = vsub.s32 0, %v5556
    %v5558 = vrot.slane %v152, %v5557
    %v5559 = vadd.f32 %v5554, %v5558
    %v5560 = vmax.f32 %v5559, 0.0
    %v5561 = vlaneseq
    %v5562 = vshrl.u32 %v5561, 7
    %v5563 = vsub.s32 0, %v5562
    %v5564 = vrot.slane %v153, %v5563
    %5565 = vmatprep.subr.mxu0 0.0
    %v5566 = vand.u32 %v142, 4294901760
    %5567 = vmatpush1.msra.mxu0 %v5566
    %5568 = vmatprep.subr.mxu0 0.0
    %v5569 = vand.u32 %v141, 4294901760
    %5570 = vmatpush1.msra.mxu0 %v5569
    %5571 = vmatprep.subr.mxu0 0.0
    %v5572 = vand.u32 %v140, 4294901760
    %5573 = vmatpush1.msra.mxu0 %v5572
    %5574 = vmatprep.subr.mxu0 0.0
    %v5575 = vand.u32 %v139, 4294901760
    %5576 = vmatpush1.msra.mxu0 %v5575
    %5577 = vmatprep.subr.mxu0 0.0
    %v5578 = vand.u32 %v138, 4294901760
    %5579 = vmatpush1.msra.mxu0 %v5578
    %5580 = vmatprep.subr.mxu0 0.0
    %v5581 = vand.u32 %v137, 4294901760
    %5582 = vmatpush1.msra.mxu0 %v5581
    %5583 = vmatprep.subr.mxu0 0.0
    %v5584 = vand.u32 %v136, 4294901760
    %5585 = vmatpush1.msra.mxu0 %v5584
    %5586 = vmatprep.subr.mxu0 0.0
    %v5587 = vand.u32 %v135, 4294901760
    %5588 = vmatpush1.msra.mxu0 %v5587
    %5589 = vmatprep.subr.mxu0 0.0
    %v5590 = vand.u32 %v134, 4294901760
    %5591 = vmatpush1.msra.mxu0 %v5590
    %5592 = vmatprep.subr.mxu0 0.0
    %v5593 = vand.u32 %v133, 4294901760
    %5594 = vmatpush1.msra.mxu0 %v5593
    %5595 = vmatprep.subr.mxu0 0.0
    %v5596 = vand.u32 %v132, 4294901760
    %5597 = vmatpush1.msra.mxu0 %v5596
    %5598 = vmatprep.subr.mxu0 0.0
    %v5599 = vand.u32 %v131, 4294901760
    %5600 = vmatpush1.msra.mxu0 %v5599
    %5601 = vmatprep.subr.mxu0 0.0
    %v5602 = vand.u32 %v130, 4294901760
    %5603 = vmatpush1.msra.mxu0 %v5602
    %5604 = vmatprep.subr.mxu0 0.0
    %v5605 = vand.u32 %v129, 4294901760
    %5606 = vmatpush1.msra.mxu0 %v5605
    %5607 = vmatprep.subr.mxu0 0.0
    %v5608 = vand.u32 %v128, 4294901760
    %5609 = vmatpush1.msra.mxu0 %v5608
    %5610 = vmatprep.subr.mxu0 0.0
    %v5611 = vand.u32 %v127, 4294901760
    %5612 = vmatpush1.msra.mxu0 %v5611
    %5613 = vmatprep.subr.mxu0 0.0
    %5614 = vmatpush2.msra.mxu0 0.0
    %5615 = vmatprep.subr.mxu0 0.0
    %5616 = vmatpush2.msra.mxu0 0.0
    %5617 = vmatprep.subr.mxu0 0.0
    %5618 = vmatpush2.msra.mxu0 0.0
    %5619 = vmatprep.subr.mxu0 0.0
    %5620 = vmatpush2.msra.mxu0 0.0
    %5621 = vmatprep.subr.mxu0 0.0
    %5622 = vmatpush2.msra.mxu0 0.0
    %5623 = vmatprep.subr.mxu0 0.0
    %5624 = vmatpush2.msra.mxu0 0.0
    %5625 = vmatprep.subr.mxu0 0.0
    %5626 = vmatpush2.msra.mxu0 0.0
    %5627 = vmatprep.subr.mxu0 0.0
    %5628 = vmatpush2.msra.mxu0 0.0
    %5629 = vmatprep.subr.mxu0 0.0
    %5630 = vmatpush2.msra.mxu0 0.0
    %5631 = vmatprep.subr.mxu0 0.0
    %5632 = vmatpush2.msra.mxu0 0.0
    %5633 = vmatprep.subr.mxu0 0.0
    %5634 = vmatpush2.msra.mxu0 0.0
    %5635 = vmatprep.subr.mxu0 0.0
    %5636 = vmatpush2.msra.mxu0 0.0
    %5637 = vmatprep.subr.mxu0 0.0
    %5638 = vmatpush2.msra.mxu0 0.0
    %5639 = vmatprep.subr.mxu0 0.0
    %5640 = vmatpush2.msra.mxu0 0.0
    %5641 = vmatprep.subr.mxu0 0.0
    %5642 = vmatpush2.msra.mxu0 0.0
    %5643 = vmatprep.subr.mxu0 0.0
    %5644 = vmatpush2.msra.mxu0 0.0
    %5645 = vmatprep.mubr.f32.mxu0 0.0
    %v5646 = vand.u32 %v5560, 4294901760
    %v5647 = vsub.f32 %v5560, %v5646
    %v5648 = vand.u32 %v5647, 4294901760
    %v5649 = vsub.f32 %v5647, %v5648
    %v5650 = vand.u32 %v5649, 4294901760
    %5651 = vmatmul.mubr.f32.gmra.mxu0 %v5650
    %v5652 = vpop.f32.mrf.mxu0
    %v5653 = vadd.f32 %v5564, %v5652
    %v5654 = vpop.f32.mrf.mxu0
    %5655 = vdwg.mxu0
    %5656 = vmatprep.subr.mxu0 0.0
    %v5657 = vand.u32 %v142, 4294901760
    %v5658 = vsub.f32 %v142, %v5657
    %v5659 = vand.u32 %v5658, 4294901760
    %v5660 = vsub.f32 %v5658, %v5659
    %v5661 = vand.u32 %v5660, 4294901760
    %5662 = vmatpush1.msra.mxu0 %v5661
    %5663 = vmatprep.subr.mxu0 0.0
    %v5664 = vand.u32 %v141, 4294901760
    %v5665 = vsub.f32 %v141, %v5664
    %v5666 = vand.u32 %v5665, 4294901760
    %v5667 = vsub.f32 %v5665, %v5666
    %v5668 = vand.u32 %v5667, 4294901760
    %5669 = vmatpush1.msra.mxu0 %v5668
    %5670 = vmatprep.subr.mxu0 0.0
    %v5671 = vand.u32 %v140, 4294901760
    %v5672 = vsub.f32 %v140, %v5671
    %v5673 = vand.u32 %v5672, 4294901760
    %v5674 = vsub.f32 %v5672, %v5673
    %v5675 = vand.u32 %v5674, 4294901760
    %5676 = vmatpush1.msra.mxu0 %v5675
    %5677 = vmatprep.subr.mxu0 0.0
    %v5678 = vand.u32 %v139, 4294901760
    %v5679 = vsub.f32 %v139, %v5678
    %v5680 = vand.u32 %v5679, 4294901760
    %v5681 = vsub.f32 %v5679, %v5680
    %v5682 = vand.u32 %v5681, 4294901760
    %5683 = vmatpush1.msra.mxu0 %v5682
    %5684 = vmatprep.subr.mxu0 0.0
    %v5685 = vand.u32 %v138, 4294901760
    %v5686 = vsub.f32 %v138, %v5685
    %v5687 = vand.u32 %v5686, 4294901760
    %v5688 = vsub.f32 %v5686, %v5687
    %v5689 = vand.u32 %v5688, 4294901760
    %5690 = vmatpush1.msra.mxu0 %v5689
    %5691 = vmatprep.subr.mxu0 0.0
    %v5692 = vand.u32 %v137, 4294901760
    %v5693 = vsub.f32 %v137, %v5692
    %v5694 = vand.u32 %v5693, 4294901760
    %v5695 = vsub.f32 %v5693, %v5694
    %v5696 = vand.u32 %v5695, 4294901760
    %5697 = vmatpush1.msra.mxu0 %v5696
    %5698 = vmatprep.subr.mxu0 0.0
    %v5699 = vand.u32 %v136, 4294901760
    %v5700 = vsub.f32 %v136, %v5699
    %v5701 = vand.u32 %v5700, 4294901760
    %v5702 = vsub.f32 %v5700, %v5701
    %v5703 = vand.u32 %v5702, 4294901760
    %5704 = vmatpush1.msra.mxu0 %v5703
    %5705 = vmatprep.subr.mxu0 0.0
    %v5706 = vand.u32 %v135, 4294901760
    %v5707 = vsub.f32 %v135, %v5706
    %v5708 = vand.u32 %v5707, 4294901760
    %v5709 = vsub.f32 %v5707, %v5708
    %v5710 = vand.u32 %v5709, 4294901760
    %5711 = vmatpush1.msra.mxu0 %v5710
    %5712 = vmatprep.subr.mxu0 0.0
    %v5713 = vand.u32 %v134, 4294901760
    %v5714 = vsub.f32 %v134, %v5713
    %v5715 = vand.u32 %v5714, 4294901760
    %v5716 = vsub.f32 %v5714, %v5715
    %v5717 = vand.u32 %v5716, 4294901760
    %5718 = vmatpush1.msra.mxu0 %v5717
    %5719 = vmatprep.subr.mxu0 0.0
    %v5720 = vand.u32 %v133, 4294901760
    %v5721 = vsub.f32 %v133, %v5720
    %v5722 = vand.u32 %v5721, 4294901760
    %v5723 = vsub.f32 %v5721, %v5722
    %v5724 = vand.u32 %v5723, 4294901760
    %5725 = vmatpush1.msra.mxu0 %v5724
    %5726 = vmatprep.subr.mxu0 0.0
    %v5727 = vand.u32 %v132, 4294901760
    %v5728 = vsub.f32 %v132, %v5727
    %v5729 = vand.u32 %v5728, 4294901760
    %v5730 = vsub.f32 %v5728, %v5729
    %v5731 = vand.u32 %v5730, 4294901760
    %5732 = vmatpush1.msra.mxu0 %v5731
    %5733 = vmatprep.subr.mxu0 0.0
    %v5734 = vand.u32 %v131, 4294901760
    %v5735 = vsub.f32 %v131, %v5734
    %v5736 = vand.u32 %v5735, 4294901760
    %v5737 = vsub.f32 %v5735, %v5736
    %v5738 = vand.u32 %v5737, 4294901760
    %5739 = vmatpush1.msra.mxu0 %v5738
    %5740 = vmatprep.subr.mxu0 0.0
    %v5741 = vand.u32 %v130, 4294901760
    %v5742 = vsub.f32 %v130, %v5741
    %v5743 = vand.u32 %v5742, 4294901760
    %v5744 = vsub.f32 %v5742, %v5743
    %v5745 = vand.u32 %v5744, 4294901760
    %5746 = vmatpush1.msra.mxu0 %v5745
    %5747 = vmatprep.subr.mxu0 0.0
    %v5748 = vand.u32 %v129, 4294901760
    %v5749 = vsub.f32 %v129, %v5748
    %v5750 = vand.u32 %v5749, 4294901760
    %v5751 = vsub.f32 %v5749, %v5750
    %v5752 = vand.u32 %v5751, 4294901760
    %5753 = vmatpush1.msra.mxu0 %v5752
    %5754 = vmatprep.subr.mxu0 0.0
    %v5755 = vand.u32 %v128, 4294901760
    %v5756 = vsub.f32 %v128, %v5755
    %v5757 = vand.u32 %v5756, 4294901760
    %v5758 = vsub.f32 %v5756, %v5757
    %v5759 = vand.u32 %v5758, 4294901760
    %5760 = vmatpush1.msra.mxu0 %v5759
    %5761 = vmatprep.subr.mxu0 0.0
    %v5762 = vand.u32 %v127, 4294901760
    %v5763 = vsub.f32 %v127, %v5762
    %v5764 = vand.u32 %v5763, 4294901760
    %v5765 = vsub.f32 %v5763, %v5764
    %v5766 = vand.u32 %v5765, 4294901760
    %5767 = vmatpush1.msra.mxu0 %v5766
    %5768 = vmatprep.subr.mxu0 0.0
    %5769 = vmatpush2.msra.mxu0 0.0
    %5770 = vmatprep.subr.mxu0 0.0
    %5771 = vmatpush2.msra.mxu0 0.0
    %5772 = vmatprep.subr.mxu0 0.0
    %5773 = vmatpush2.msra.mxu0 0.0
    %5774 = vmatprep.subr.mxu0 0.0
    %5775 = vmatpush2.msra.mxu0 0.0
    %5776 = vmatprep.subr.mxu0 0.0
    %5777 = vmatpush2.msra.mxu0 0.0
    %5778 = vmatprep.subr.mxu0 0.0
    %5779 = vmatpush2.msra.mxu0 0.0
    %5780 = vmatprep.subr.mxu0 0.0
    %5781 = vmatpush2.msra.mxu0 0.0
    %5782 = vmatprep.subr.mxu0 0.0
    %5783 = vmatpush2.msra.mxu0 0.0
    %5784 = vmatprep.subr.mxu0 0.0
    %5785 = vmatpush2.msra.mxu0 0.0
    %5786 = vmatprep.subr.mxu0 0.0
    %5787 = vmatpush2.msra.mxu0 0.0
    %5788 = vmatprep.subr.mxu0 0.0
    %5789 = vmatpush2.msra.mxu0 0.0
    %5790 = vmatprep.subr.mxu0 0.0
    %5791 = vmatpush2.msra.mxu0 0.0
    %5792 = vmatprep.subr.mxu0 0.0
    %5793 = vmatpush2.msra.mxu0 0.0
    %5794 = vmatprep.subr.mxu0 0.0
    %5795 = vmatpush2.msra.mxu0 0.0
    %5796 = vmatprep.subr.mxu0 0.0
    %5797 = vmatpush2.msra.mxu0 0.0
    %5798 = vmatprep.subr.mxu0 0.0
    %5799 = vmatpush2.msra.mxu0 0.0
    %5800 = vmatprep.mubr.f32.mxu0 0.0
    %v5801 = vand.u32 %v5560, 4294901760
    %5802 = vmatmul.mubr.f32.gmra.mxu0 %v5801
    %v5803 = vpop.f32.mrf.mxu0
    %v5804 = vadd.f32 %v5653, %v5803
    %v5805 = vpop.f32.mrf.mxu0
    %5806 = vdwg.mxu0
    %5807 = vmatprep.subr.mxu0 0.0
    %v5808 = vand.u32 %v142, 4294901760
    %v5809 = vsub.f32 %v142, %v5808
    %5810 = vmatpush1.msra.mxu0 %v5809
    %5811 = vmatprep.subr.mxu0 0.0
    %v5812 = vand.u32 %v141, 4294901760
    %v5813 = vsub.f32 %v141, %v5812
    %5814 = vmatpush1.msra.mxu0 %v5813
    %5815 = vmatprep.subr.mxu0 0.0
    %v5816 = vand.u32 %v140, 4294901760
    %v5817 = vsub.f32 %v140, %v5816
    %5818 = vmatpush1.msra.mxu0 %v5817
    %5819 = vmatprep.subr.mxu0 0.0
    %v5820 = vand.u32 %v139, 4294901760
    %v5821 = vsub.f32 %v139, %v5820
    %5822 = vmatpush1.msra.mxu0 %v5821
    %5823 = vmatprep.subr.mxu0 0.0
    %v5824 = vand.u32 %v138, 4294901760
    %v5825 = vsub.f32 %v138, %v5824
    %5826 = vmatpush1.msra.mxu0 %v5825
    %5827 = vmatprep.subr.mxu0 0.0
    %v5828 = vand.u32 %v137, 4294901760
    %v5829 = vsub.f32 %v137, %v5828
    %5830 = vmatpush1.msra.mxu0 %v5829
    %5831 = vmatprep.subr.mxu0 0.0
    %v5832 = vand.u32 %v136, 4294901760
    %v5833 = vsub.f32 %v136, %v5832
    %5834 = vmatpush1.msra.mxu0 %v5833
    %5835 = vmatprep.subr.mxu0 0.0
    %v5836 = vand.u32 %v135, 4294901760
    %v5837 = vsub.f32 %v135, %v5836
    %5838 = vmatpush1.msra.mxu0 %v5837
    %5839 = vmatprep.subr.mxu0 0.0
    %v5840 = vand.u32 %v134, 4294901760
    %v5841 = vsub.f32 %v134, %v5840
    %5842 = vmatpush1.msra.mxu0 %v5841
    %5843 = vmatprep.subr.mxu0 0.0
    %v5844 = vand.u32 %v133, 4294901760
    %v5845 = vsub.f32 %v133, %v5844
    %5846 = vmatpush1.msra.mxu0 %v5845
    %5847 = vmatprep.subr.mxu0 0.0
    %v5848 = vand.u32 %v132, 4294901760
    %v5849 = vsub.f32 %v132, %v5848
    %5850 = vmatpush1.msra.mxu0 %v5849
    %5851 = vmatprep.subr.mxu0 0.0
    %v5852 = vand.u32 %v131, 4294901760
    %v5853 = vsub.f32 %v131, %v5852
    %5854 = vmatpush1.msra.mxu0 %v5853
    %5855 = vmatprep.subr.mxu0 0.0
    %v5856 = vand.u32 %v130, 4294901760
    %v5857 = vsub.f32 %v130, %v5856
    %5858 = vmatpush1.msra.mxu0 %v5857
    %5859 = vmatprep.subr.mxu0 0.0
    %v5860 = vand.u32 %v129, 4294901760
    %v5861 = vsub.f32 %v129, %v5860
    %5862 = vmatpush1.msra.mxu0 %v5861
    %5863 = vmatprep.subr.mxu0 0.0
    %v5864 = vand.u32 %v128, 4294901760
    %v5865 = vsub.f32 %v128, %v5864
    %5866 = vmatpush1.msra.mxu0 %v5865
    %5867 = vmatprep.subr.mxu0 0.0
    %v5868 = vand.u32 %v127, 4294901760
    %v5869 = vsub.f32 %v127, %v5868
    %5870 = vmatpush1.msra.mxu0 %v5869
    %5871 = vmatprep.subr.mxu0 0.0
    %5872 = vmatpush2.msra.mxu0 0.0
    %5873 = vmatprep.subr.mxu0 0.0
    %5874 = vmatpush2.msra.mxu0 0.0
    %5875 = vmatprep.subr.mxu0 0.0
    %5876 = vmatpush2.msra.mxu0 0.0
    %5877 = vmatprep.subr.mxu0 0.0
    %5878 = vmatpush2.msra.mxu0 0.0
    %5879 = vmatprep.subr.mxu0 0.0
    %5880 = vmatpush2.msra.mxu0 0.0
    %5881 = vmatprep.subr.mxu0 0.0
    %5882 = vmatpush2.msra.mxu0 0.0
    %5883 = vmatprep.subr.mxu0 0.0
    %5884 = vmatpush2.msra.mxu0 0.0
    %5885 = vmatprep.subr.mxu0 0.0
    %5886 = vmatpush2.msra.mxu0 0.0
    %5887 = vmatprep.subr.mxu0 0.0
    %5888 = vmatpush2.msra.mxu0 0.0
    %5889 = vmatprep.subr.mxu0 0.0
    %5890 = vmatpush2.msra.mxu0 0.0
    %5891 = vmatprep.subr.mxu0 0.0
    %5892 = vmatpush2.msra.mxu0 0.0
    %5893 = vmatprep.subr.mxu0 0.0
    %5894 = vmatpush2.msra.mxu0 0.0
    %5895 = vmatprep.subr.mxu0 0.0
    %5896 = vmatpush2.msra.mxu0 0.0
    %5897 = vmatprep.subr.mxu0 0.0
    %5898 = vmatpush2.msra.mxu0 0.0
    %5899 = vmatprep.subr.mxu0 0.0
    %5900 = vmatpush2.msra.mxu0 0.0
    %5901 = vmatprep.subr.mxu0 0.0
    %5902 = vmatpush2.msra.mxu0 0.0
    %5903 = vmatprep.mubr.f32.mxu0 0.0
    %v5904 = vand.u32 %v5560, 4294901760
    %v5905 = vsub.f32 %v5560, %v5904
    %5906 = vmatmul.mubr.f32.gmra.mxu0 %v5905
    %v5907 = vpop.f32.mrf.mxu0
    %v5908 = vadd.f32 %v5804, %v5907
    %v5909 = vpop.f32.mrf.mxu0
    %5910 = vdwg.mxu0
    %5911 = vmatprep.subr.mxu0 0.0
    %v5912 = vand.u32 %v142, 4294901760
    %5913 = vmatpush1.msra.mxu0 %v5912
    %5914 = vmatprep.subr.mxu0 0.0
    %v5915 = vand.u32 %v141, 4294901760
    %5916 = vmatpush1.msra.mxu0 %v5915
    %5917 = vmatprep.subr.mxu0 0.0
    %v5918 = vand.u32 %v140, 4294901760
    %5919 = vmatpush1.msra.mxu0 %v5918
    %5920 = vmatprep.subr.mxu0 0.0
    %v5921 = vand.u32 %v139, 4294901760
    %5922 = vmatpush1.msra.mxu0 %v5921
    %5923 = vmatprep.subr.mxu0 0.0
    %v5924 = vand.u32 %v138, 4294901760
    %5925 = vmatpush1.msra.mxu0 %v5924
    %5926 = vmatprep.subr.mxu0 0.0
    %v5927 = vand.u32 %v137, 4294901760
    %5928 = vmatpush1.msra.mxu0 %v5927
    %5929 = vmatprep.subr.mxu0 0.0
    %v5930 = vand.u32 %v136, 4294901760
    %5931 = vmatpush1.msra.mxu0 %v5930
    %5932 = vmatprep.subr.mxu0 0.0
    %v5933 = vand.u32 %v135, 4294901760
    %5934 = vmatpush1.msra.mxu0 %v5933
    %5935 = vmatprep.subr.mxu0 0.0
    %v5936 = vand.u32 %v134, 4294901760
    %5937 = vmatpush1.msra.mxu0 %v5936
    %5938 = vmatprep.subr.mxu0 0.0
    %v5939 = vand.u32 %v133, 4294901760
    %5940 = vmatpush1.msra.mxu0 %v5939
    %5941 = vmatprep.subr.mxu0 0.0
    %v5942 = vand.u32 %v132, 4294901760
    %5943 = vmatpush1.msra.mxu0 %v5942
    %5944 = vmatprep.subr.mxu0 0.0
    %v5945 = vand.u32 %v131, 4294901760
    %5946 = vmatpush1.msra.mxu0 %v5945
    %5947 = vmatprep.subr.mxu0 0.0
    %v5948 = vand.u32 %v130, 4294901760
    %5949 = vmatpush1.msra.mxu0 %v5948
    %5950 = vmatprep.subr.mxu0 0.0
    %v5951 = vand.u32 %v129, 4294901760
    %5952 = vmatpush1.msra.mxu0 %v5951
    %5953 = vmatprep.subr.mxu0 0.0
    %v5954 = vand.u32 %v128, 4294901760
    %5955 = vmatpush1.msra.mxu0 %v5954
    %5956 = vmatprep.subr.mxu0 0.0
    %v5957 = vand.u32 %v127, 4294901760
    %5958 = vmatpush1.msra.mxu0 %v5957
    %5959 = vmatprep.subr.mxu0 0.0
    %5960 = vmatpush2.msra.mxu0 0.0
    %5961 = vmatprep.subr.mxu0 0.0
    %5962 = vmatpush2.msra.mxu0 0.0
    %5963 = vmatprep.subr.mxu0 0.0
    %5964 = vmatpush2.msra.mxu0 0.0
    %5965 = vmatprep.subr.mxu0 0.0
    %5966 = vmatpush2.msra.mxu0 0.0
    %5967 = vmatprep.subr.mxu0 0.0
    %5968 = vmatpush2.msra.mxu0 0.0
    %5969 = vmatprep.subr.mxu0 0.0
    %5970 = vmatpush2.msra.mxu0 0.0
    %5971 = vmatprep.subr.mxu0 0.0
    %5972 = vmatpush2.msra.mxu0 0.0
    %5973 = vmatprep.subr.mxu0 0.0
    %5974 = vmatpush2.msra.mxu0 0.0
    %5975 = vmatprep.subr.mxu0 0.0
    %5976 = vmatpush2.msra.mxu0 0.0
    %5977 = vmatprep.subr.mxu0 0.0
    %5978 = vmatpush2.msra.mxu0 0.0
    %5979 = vmatprep.subr.mxu0 0.0
    %5980 = vmatpush2.msra.mxu0 0.0
    %5981 = vmatprep.subr.mxu0 0.0
    %5982 = vmatpush2.msra.mxu0 0.0
    %5983 = vmatprep.subr.mxu0 0.0
    %5984 = vmatpush2.msra.mxu0 0.0
    %5985 = vmatprep.subr.mxu0 0.0
    %5986 = vmatpush2.msra.mxu0 0.0
    %5987 = vmatprep.subr.mxu0 0.0
    %5988 = vmatpush2.msra.mxu0 0.0
    %5989 = vmatprep.subr.mxu0 0.0
    %5990 = vmatpush2.msra.mxu0 0.0
    %5991 = vmatprep.mubr.f32.mxu0 0.0
    %v5992 = vand.u32 %v5560, 4294901760
    %v5993 = vsub.f32 %v5560, %v5992
    %v5994 = vand.u32 %v5993, 4294901760
    %5995 = vmatmul.mubr.f32.gmra.mxu0 %v5994
    %v5996 = vpop.f32.mrf.mxu0
    %v5997 = vadd.f32 %v5908, %v5996
    %v5998 = vpop.f32.mrf.mxu0
    %5999 = vdwg.mxu0
    %6000 = vmatprep.subr.mxu0 0.0
    %v6001 = vand.u32 %v142, 4294901760
    %v6002 = vsub.f32 %v142, %v6001
    %v6003 = vand.u32 %v6002, 4294901760
    %6004 = vmatpush1.msra.mxu0 %v6003
    %6005 = vmatprep.subr.mxu0 0.0
    %v6006 = vand.u32 %v141, 4294901760
    %v6007 = vsub.f32 %v141, %v6006
    %v6008 = vand.u32 %v6007, 4294901760
    %6009 = vmatpush1.msra.mxu0 %v6008
    %6010 = vmatprep.subr.mxu0 0.0
    %v6011 = vand.u32 %v140, 4294901760
    %v6012 = vsub.f32 %v140, %v6011
    %v6013 = vand.u32 %v6012, 4294901760
    %6014 = vmatpush1.msra.mxu0 %v6013
    %6015 = vmatprep.subr.mxu0 0.0
    %v6016 = vand.u32 %v139, 4294901760
    %v6017 = vsub.f32 %v139, %v6016
    %v6018 = vand.u32 %v6017, 4294901760
    %6019 = vmatpush1.msra.mxu0 %v6018
    %6020 = vmatprep.subr.mxu0 0.0
    %v6021 = vand.u32 %v138, 4294901760
    %v6022 = vsub.f32 %v138, %v6021
    %v6023 = vand.u32 %v6022, 4294901760
    %6024 = vmatpush1.msra.mxu0 %v6023
    %6025 = vmatprep.subr.mxu0 0.0
    %v6026 = vand.u32 %v137, 4294901760
    %v6027 = vsub.f32 %v137, %v6026
    %v6028 = vand.u32 %v6027, 4294901760
    %6029 = vmatpush1.msra.mxu0 %v6028
    %6030 = vmatprep.subr.mxu0 0.0
    %v6031 = vand.u32 %v136, 4294901760
    %v6032 = vsub.f32 %v136, %v6031
    %v6033 = vand.u32 %v6032, 4294901760
    %6034 = vmatpush1.msra.mxu0 %v6033
    %6035 = vmatprep.subr.mxu0 0.0
    %v6036 = vand.u32 %v135, 4294901760
    %v6037 = vsub.f32 %v135, %v6036
    %v6038 = vand.u32 %v6037, 4294901760
    %6039 = vmatpush1.msra.mxu0 %v6038
    %6040 = vmatprep.subr.mxu0 0.0
    %v6041 = vand.u32 %v134, 4294901760
    %v6042 = vsub.f32 %v134, %v6041
    %v6043 = vand.u32 %v6042, 4294901760
    %6044 = vmatpush1.msra.mxu0 %v6043
    %6045 = vmatprep.subr.mxu0 0.0
    %v6046 = vand.u32 %v133, 4294901760
    %v6047 = vsub.f32 %v133, %v6046
    %v6048 = vand.u32 %v6047, 4294901760
    %6049 = vmatpush1.msra.mxu0 %v6048
    %6050 = vmatprep.subr.mxu0 0.0
    %v6051 = vand.u32 %v132, 4294901760
    %v6052 = vsub.f32 %v132, %v6051
    %v6053 = vand.u32 %v6052, 4294901760
    %6054 = vmatpush1.msra.mxu0 %v6053
    %6055 = vmatprep.subr.mxu0 0.0
    %v6056 = vand.u32 %v131, 4294901760
    %v6057 = vsub.f32 %v131, %v6056
    %v6058 = vand.u32 %v6057, 4294901760
    %6059 = vmatpush1.msra.mxu0 %v6058
    %6060 = vmatprep.subr.mxu0 0.0
    %v6061 = vand.u32 %v130, 4294901760
    %v6062 = vsub.f32 %v130, %v6061
    %v6063 = vand.u32 %v6062, 4294901760
    %6064 = vmatpush1.msra.mxu0 %v6063
    %6065 = vmatprep.subr.mxu0 0.0
    %v6066 = vand.u32 %v129, 4294901760
    %v6067 = vsub.f32 %v129, %v6066
    %v6068 = vand.u32 %v6067, 4294901760
    %6069 = vmatpush1.msra.mxu0 %v6068
    %6070 = vmatprep.subr.mxu0 0.0
    %v6071 = vand.u32 %v128, 4294901760
    %v6072 = vsub.f32 %v128, %v6071
    %v6073 = vand.u32 %v6072, 4294901760
    %6074 = vmatpush1.msra.mxu0 %v6073
    %6075 = vmatprep.subr.mxu0 0.0
    %v6076 = vand.u32 %v127, 4294901760
    %v6077 = vsub.f32 %v127, %v6076
    %v6078 = vand.u32 %v6077, 4294901760
    %6079 = vmatpush1.msra.mxu0 %v6078
    %6080 = vmatprep.subr.mxu0 0.0
    %6081 = vmatpush2.msra.mxu0 0.0
    %6082 = vmatprep.subr.mxu0 0.0
    %6083 = vmatpush2.msra.mxu0 0.0
    %6084 = vmatprep.subr.mxu0 0.0
    %6085 = vmatpush2.msra.mxu0 0.0
    %6086 = vmatprep.subr.mxu0 0.0
    %6087 = vmatpush2.msra.mxu0 0.0
    %6088 = vmatprep.subr.mxu0 0.0
    %6089 = vmatpush2.msra.mxu0 0.0
    %6090 = vmatprep.subr.mxu0 0.0
    %6091 = vmatpush2.msra.mxu0 0.0
    %6092 = vmatprep.subr.mxu0 0.0
    %6093 = vmatpush2.msra.mxu0 0.0
    %6094 = vmatprep.subr.mxu0 0.0
    %6095 = vmatpush2.msra.mxu0 0.0
    %6096 = vmatprep.subr.mxu0 0.0
    %6097 = vmatpush2.msra.mxu0 0.0
    %6098 = vmatprep.subr.mxu0 0.0
    %6099 = vmatpush2.msra.mxu0 0.0
    %6100 = vmatprep.subr.mxu0 0.0
    %6101 = vmatpush2.msra.mxu0 0.0
    %6102 = vmatprep.subr.mxu0 0.0
    %6103 = vmatpush2.msra.mxu0 0.0
    %6104 = vmatprep.subr.mxu0 0.0
    %6105 = vmatpush2.msra.mxu0 0.0
    %6106 = vmatprep.subr.mxu0 0.0
    %6107 = vmatpush2.msra.mxu0 0.0
    %6108 = vmatprep.subr.mxu0 0.0
    %6109 = vmatpush2.msra.mxu0 0.0
    %6110 = vmatprep.subr.mxu0 0.0
    %6111 = vmatpush2.msra.mxu0 0.0
    %6112 = vmatprep.mubr.f32.mxu0 0.0
    %v6113 = vand.u32 %v5560, 4294901760
    %6114 = vmatmul.mubr.f32.gmra.mxu0 %v6113
    %v6115 = vpop.f32.mrf.mxu0
    %v6116 = vadd.f32 %v5997, %v6115
    %v6117 = vpop.f32.mrf.mxu0
    %6118 = vdwg.mxu0
    %6119 = vmatprep.subr.mxu0 0.0
    %v6120 = vand.u32 %v142, 4294901760
    %6121 = vmatpush1.msra.mxu0 %v6120
    %6122 = vmatprep.subr.mxu0 0.0
    %v6123 = vand.u32 %v141, 4294901760
    %6124 = vmatpush1.msra.mxu0 %v6123
    %6125 = vmatprep.subr.mxu0 0.0
    %v6126 = vand.u32 %v140, 4294901760
    %6127 = vmatpush1.msra.mxu0 %v6126
    %6128 = vmatprep.subr.mxu0 0.0
    %v6129 = vand.u32 %v139, 4294901760
    %6130 = vmatpush1.msra.mxu0 %v6129
    %6131 = vmatprep.subr.mxu0 0.0
    %v6132 = vand.u32 %v138, 4294901760
    %6133 = vmatpush1.msra.mxu0 %v6132
    %6134 = vmatprep.subr.mxu0 0.0
    %v6135 = vand.u32 %v137, 4294901760
    %6136 = vmatpush1.msra.mxu0 %v6135
    %6137 = vmatprep.subr.mxu0 0.0
    %v6138 = vand.u32 %v136, 4294901760
    %6139 = vmatpush1.msra.mxu0 %v6138
    %6140 = vmatprep.subr.mxu0 0.0
    %v6141 = vand.u32 %v135, 4294901760
    %6142 = vmatpush1.msra.mxu0 %v6141
    %6143 = vmatprep.subr.mxu0 0.0
    %v6144 = vand.u32 %v134, 4294901760
    %6145 = vmatpush1.msra.mxu0 %v6144
    %6146 = vmatprep.subr.mxu0 0.0
    %v6147 = vand.u32 %v133, 4294901760
    %6148 = vmatpush1.msra.mxu0 %v6147
    %6149 = vmatprep.subr.mxu0 0.0
    %v6150 = vand.u32 %v132, 4294901760
    %6151 = vmatpush1.msra.mxu0 %v6150
    %6152 = vmatprep.subr.mxu0 0.0
    %v6153 = vand.u32 %v131, 4294901760
    %6154 = vmatpush1.msra.mxu0 %v6153
    %6155 = vmatprep.subr.mxu0 0.0
    %v6156 = vand.u32 %v130, 4294901760
    %6157 = vmatpush1.msra.mxu0 %v6156
    %6158 = vmatprep.subr.mxu0 0.0
    %v6159 = vand.u32 %v129, 4294901760
    %6160 = vmatpush1.msra.mxu0 %v6159
    %6161 = vmatprep.subr.mxu0 0.0
    %v6162 = vand.u32 %v128, 4294901760
    %6163 = vmatpush1.msra.mxu0 %v6162
    %6164 = vmatprep.subr.mxu0 0.0
    %v6165 = vand.u32 %v127, 4294901760
    %6166 = vmatpush1.msra.mxu0 %v6165
    %6167 = vmatprep.subr.mxu0 0.0
    %6168 = vmatpush2.msra.mxu0 0.0
    %6169 = vmatprep.subr.mxu0 0.0
    %6170 = vmatpush2.msra.mxu0 0.0
    %6171 = vmatprep.subr.mxu0 0.0
    %6172 = vmatpush2.msra.mxu0 0.0
    %6173 = vmatprep.subr.mxu0 0.0
    %6174 = vmatpush2.msra.mxu0 0.0
    %6175 = vmatprep.subr.mxu0 0.0
    %6176 = vmatpush2.msra.mxu0 0.0
    %6177 = vmatprep.subr.mxu0 0.0
    %6178 = vmatpush2.msra.mxu0 0.0
    %6179 = vmatprep.subr.mxu0 0.0
    %6180 = vmatpush2.msra.mxu0 0.0
    %6181 = vmatprep.subr.mxu0 0.0
    %6182 = vmatpush2.msra.mxu0 0.0
    %6183 = vmatprep.subr.mxu0 0.0
    %6184 = vmatpush2.msra.mxu0 0.0
    %6185 = vmatprep.subr.mxu0 0.0
    %6186 = vmatpush2.msra.mxu0 0.0
    %6187 = vmatprep.subr.mxu0 0.0
    %6188 = vmatpush2.msra.mxu0 0.0
    %6189 = vmatprep.subr.mxu0 0.0
    %6190 = vmatpush2.msra.mxu0 0.0
    %6191 = vmatprep.subr.mxu0 0.0
    %6192 = vmatpush2.msra.mxu0 0.0
    %6193 = vmatprep.subr.mxu0 0.0
    %6194 = vmatpush2.msra.mxu0 0.0
    %6195 = vmatprep.subr.mxu0 0.0
    %6196 = vmatpush2.msra.mxu0 0.0
    %6197 = vmatprep.subr.mxu0 0.0
    %6198 = vmatpush2.msra.mxu0 0.0
    %6199 = vmatprep.mubr.f32.mxu0 0.0
    %v6200 = vand.u32 %v5560, 4294901760
    %6201 = vmatmul.mubr.f32.gmra.mxu0 %v6200
    %v6202 = vpop.f32.mrf.mxu0
    %v6203 = vadd.f32 %v6116, %v6202
    %v6204 = vpop.f32.mrf.mxu0
    %6205 = vdwg.mxu0
    %v6206 = vmul.f32 %v4848, %v4848
    %v6207 = vsel %vm4141, %v6206, 0.0
    %6208 = vadd.xlane.f32.xlu0 %v6207
    %v6209 = vpop.xlane.xlu0 %6208
    %v6210 = vmax.f32 %v6209, 1e-24
    %v6211 = vrsqrt.pop %v6210
    %v6212 = vmul.f32 %v4848, %v6211
    %vm6213 = vcmask 31744
    %v6215 = vsel %vm6213, %v143, 0
    %v6218 = vsel %vm4141, %v6212, 0
    %6220 = vmatprep.subr.mxu0 0.0
    %6221 = vmatpush1.msra.mxu0 0.0
    %6222 = vmatprep.subr.mxu0 0.0
    %6223 = vmatpush1.msra.mxu0 0.0
    %6224 = vmatprep.subr.mxu0 0.0
    %6225 = vmatpush1.msra.mxu0 0.0
    %6226 = vmatprep.subr.mxu0 0.0
    %6227 = vmatpush1.msra.mxu0 0.0
    %6228 = vmatprep.subr.mxu0 0.0
    %6229 = vmatpush1.msra.mxu0 0.0
    %6230 = vmatprep.subr.mxu0 0.0
    %6231 = vmatpush1.msra.mxu0 0.0
    %6232 = vmatprep.subr.mxu0 0.0
    %6233 = vmatpush1.msra.mxu0 0.0
    %6234 = vmatprep.subr.mxu0 0.0
    %6235 = vmatpush1.msra.mxu0 0.0
    %6236 = vmatprep.subr.mxu0 0.0
    %6237 = vmatpush1.msra.mxu0 0.0
    %6238 = vmatprep.subr.mxu0 0.0
    %6239 = vmatpush1.msra.mxu0 0.0
    %6240 = vmatprep.subr.mxu0 0.0
    %6241 = vmatpush1.msra.mxu0 0.0
    %6242 = vmatprep.subr.mxu0 0.0
    %6243 = vmatpush1.msra.mxu0 0.0
    %6244 = vmatprep.subr.mxu0 0.0
    %6245 = vmatpush1.msra.mxu0 0.0
    %6246 = vmatprep.subr.mxu0 0.0
    %6247 = vmatpush1.msra.mxu0 0.0
    %6248 = vmatprep.subr.mxu0 0.0
    %6249 = vmatpush1.msra.mxu0 0.0
    %6250 = vmatprep.subr.mxu0 0.0
    %v6251 = vand.u32 %v6218, 4294901760
    %6252 = vmatpush1.msra.mxu0 %v6251
    %6253 = vmatprep.subr.mxu0 0.0
    %6254 = vmatpush2.msra.mxu0 0.0
    %6255 = vmatprep.subr.mxu0 0.0
    %6256 = vmatpush2.msra.mxu0 0.0
    %6257 = vmatprep.subr.mxu0 0.0
    %6258 = vmatpush2.msra.mxu0 0.0
    %6259 = vmatprep.subr.mxu0 0.0
    %6260 = vmatpush2.msra.mxu0 0.0
    %6261 = vmatprep.subr.mxu0 0.0
    %6262 = vmatpush2.msra.mxu0 0.0
    %6263 = vmatprep.subr.mxu0 0.0
    %6264 = vmatpush2.msra.mxu0 0.0
    %6265 = vmatprep.subr.mxu0 0.0
    %6266 = vmatpush2.msra.mxu0 0.0
    %6267 = vmatprep.subr.mxu0 0.0
    %6268 = vmatpush2.msra.mxu0 0.0
    %6269 = vmatprep.subr.mxu0 0.0
    %6270 = vmatpush2.msra.mxu0 0.0
    %6271 = vmatprep.subr.mxu0 0.0
    %6272 = vmatpush2.msra.mxu0 0.0
    %6273 = vmatprep.subr.mxu0 0.0
    %6274 = vmatpush2.msra.mxu0 0.0
    %6275 = vmatprep.subr.mxu0 0.0
    %6276 = vmatpush2.msra.mxu0 0.0
    %6277 = vmatprep.subr.mxu0 0.0
    %6278 = vmatpush2.msra.mxu0 0.0
    %6279 = vmatprep.subr.mxu0 0.0
    %6280 = vmatpush2.msra.mxu0 0.0
    %6281 = vmatprep.subr.mxu0 0.0
    %6282 = vmatpush2.msra.mxu0 0.0
    %6283 = vmatprep.subr.mxu0 0.0
    %6284 = vmatpush2.msra.mxu0 0.0
    %6285 = vmatprep.mubr.f32.mxu0 0.0
    %v6286 = vand.u32 %v6215, 4294901760
    %v6287 = vsub.f32 %v6215, %v6286
    %v6288 = vand.u32 %v6287, 4294901760
    %v6289 = vsub.f32 %v6287, %v6288
    %v6290 = vand.u32 %v6289, 4294901760
    %6291 = vmatmul.mubr.f32.gmra.mxu0 %v6290
    %v6292 = vpop.f32.mrf.mxu0
    %v6293 = vadd.f32 0.0, %v6292
    %v6294 = vpop.f32.mrf.mxu0
    %6295 = vdwg.mxu0
    %6296 = vmatprep.subr.mxu0 0.0
    %6297 = vmatpush1.msra.mxu0 0.0
    %6298 = vmatprep.subr.mxu0 0.0
    %6299 = vmatpush1.msra.mxu0 0.0
    %6300 = vmatprep.subr.mxu0 0.0
    %6301 = vmatpush1.msra.mxu0 0.0
    %6302 = vmatprep.subr.mxu0 0.0
    %6303 = vmatpush1.msra.mxu0 0.0
    %6304 = vmatprep.subr.mxu0 0.0
    %6305 = vmatpush1.msra.mxu0 0.0
    %6306 = vmatprep.subr.mxu0 0.0
    %6307 = vmatpush1.msra.mxu0 0.0
    %6308 = vmatprep.subr.mxu0 0.0
    %6309 = vmatpush1.msra.mxu0 0.0
    %6310 = vmatprep.subr.mxu0 0.0
    %6311 = vmatpush1.msra.mxu0 0.0
    %6312 = vmatprep.subr.mxu0 0.0
    %6313 = vmatpush1.msra.mxu0 0.0
    %6314 = vmatprep.subr.mxu0 0.0
    %6315 = vmatpush1.msra.mxu0 0.0
    %6316 = vmatprep.subr.mxu0 0.0
    %6317 = vmatpush1.msra.mxu0 0.0
    %6318 = vmatprep.subr.mxu0 0.0
    %6319 = vmatpush1.msra.mxu0 0.0
    %6320 = vmatprep.subr.mxu0 0.0
    %6321 = vmatpush1.msra.mxu0 0.0
    %6322 = vmatprep.subr.mxu0 0.0
    %6323 = vmatpush1.msra.mxu0 0.0
    %6324 = vmatprep.subr.mxu0 0.0
    %6325 = vmatpush1.msra.mxu0 0.0
    %6326 = vmatprep.subr.mxu0 0.0
    %v6327 = vand.u32 %v6218, 4294901760
    %v6328 = vsub.f32 %v6218, %v6327
    %v6329 = vand.u32 %v6328, 4294901760
    %v6330 = vsub.f32 %v6328, %v6329
    %v6331 = vand.u32 %v6330, 4294901760
    %6332 = vmatpush1.msra.mxu0 %v6331
    %6333 = vmatprep.subr.mxu0 0.0
    %6334 = vmatpush2.msra.mxu0 0.0
    %6335 = vmatprep.subr.mxu0 0.0
    %6336 = vmatpush2.msra.mxu0 0.0
    %6337 = vmatprep.subr.mxu0 0.0
    %6338 = vmatpush2.msra.mxu0 0.0
    %6339 = vmatprep.subr.mxu0 0.0
    %6340 = vmatpush2.msra.mxu0 0.0
    %6341 = vmatprep.subr.mxu0 0.0
    %6342 = vmatpush2.msra.mxu0 0.0
    %6343 = vmatprep.subr.mxu0 0.0
    %6344 = vmatpush2.msra.mxu0 0.0
    %6345 = vmatprep.subr.mxu0 0.0
    %6346 = vmatpush2.msra.mxu0 0.0
    %6347 = vmatprep.subr.mxu0 0.0
    %6348 = vmatpush2.msra.mxu0 0.0
    %6349 = vmatprep.subr.mxu0 0.0
    %6350 = vmatpush2.msra.mxu0 0.0
    %6351 = vmatprep.subr.mxu0 0.0
    %6352 = vmatpush2.msra.mxu0 0.0
    %6353 = vmatprep.subr.mxu0 0.0
    %6354 = vmatpush2.msra.mxu0 0.0
    %6355 = vmatprep.subr.mxu0 0.0
    %6356 = vmatpush2.msra.mxu0 0.0
    %6357 = vmatprep.subr.mxu0 0.0
    %6358 = vmatpush2.msra.mxu0 0.0
    %6359 = vmatprep.subr.mxu0 0.0
    %6360 = vmatpush2.msra.mxu0 0.0
    %6361 = vmatprep.subr.mxu0 0.0
    %6362 = vmatpush2.msra.mxu0 0.0
    %6363 = vmatprep.subr.mxu0 0.0
    %6364 = vmatpush2.msra.mxu0 0.0
    %6365 = vmatprep.mubr.f32.mxu0 0.0
    %v6366 = vand.u32 %v6215, 4294901760
    %6367 = vmatmul.mubr.f32.gmra.mxu0 %v6366
    %v6368 = vpop.f32.mrf.mxu0
    %v6369 = vadd.f32 %v6293, %v6368
    %v6370 = vpop.f32.mrf.mxu0
    %6371 = vdwg.mxu0
    %6372 = vmatprep.subr.mxu0 0.0
    %6373 = vmatpush1.msra.mxu0 0.0
    %6374 = vmatprep.subr.mxu0 0.0
    %6375 = vmatpush1.msra.mxu0 0.0
    %6376 = vmatprep.subr.mxu0 0.0
    %6377 = vmatpush1.msra.mxu0 0.0
    %6378 = vmatprep.subr.mxu0 0.0
    %6379 = vmatpush1.msra.mxu0 0.0
    %6380 = vmatprep.subr.mxu0 0.0
    %6381 = vmatpush1.msra.mxu0 0.0
    %6382 = vmatprep.subr.mxu0 0.0
    %6383 = vmatpush1.msra.mxu0 0.0
    %6384 = vmatprep.subr.mxu0 0.0
    %6385 = vmatpush1.msra.mxu0 0.0
    %6386 = vmatprep.subr.mxu0 0.0
    %6387 = vmatpush1.msra.mxu0 0.0
    %6388 = vmatprep.subr.mxu0 0.0
    %6389 = vmatpush1.msra.mxu0 0.0
    %6390 = vmatprep.subr.mxu0 0.0
    %6391 = vmatpush1.msra.mxu0 0.0
    %6392 = vmatprep.subr.mxu0 0.0
    %6393 = vmatpush1.msra.mxu0 0.0
    %6394 = vmatprep.subr.mxu0 0.0
    %6395 = vmatpush1.msra.mxu0 0.0
    %6396 = vmatprep.subr.mxu0 0.0
    %6397 = vmatpush1.msra.mxu0 0.0
    %6398 = vmatprep.subr.mxu0 0.0
    %6399 = vmatpush1.msra.mxu0 0.0
    %6400 = vmatprep.subr.mxu0 0.0
    %6401 = vmatpush1.msra.mxu0 0.0
    %6402 = vmatprep.subr.mxu0 0.0
    %v6403 = vand.u32 %v6218, 4294901760
    %v6404 = vsub.f32 %v6218, %v6403
    %6405 = vmatpush1.msra.mxu0 %v6404
    %6406 = vmatprep.subr.mxu0 0.0
    %6407 = vmatpush2.msra.mxu0 0.0
    %6408 = vmatprep.subr.mxu0 0.0
    %6409 = vmatpush2.msra.mxu0 0.0
    %6410 = vmatprep.subr.mxu0 0.0
    %6411 = vmatpush2.msra.mxu0 0.0
    %6412 = vmatprep.subr.mxu0 0.0
    %6413 = vmatpush2.msra.mxu0 0.0
    %6414 = vmatprep.subr.mxu0 0.0
    %6415 = vmatpush2.msra.mxu0 0.0
    %6416 = vmatprep.subr.mxu0 0.0
    %6417 = vmatpush2.msra.mxu0 0.0
    %6418 = vmatprep.subr.mxu0 0.0
    %6419 = vmatpush2.msra.mxu0 0.0
    %6420 = vmatprep.subr.mxu0 0.0
    %6421 = vmatpush2.msra.mxu0 0.0
    %6422 = vmatprep.subr.mxu0 0.0
    %6423 = vmatpush2.msra.mxu0 0.0
    %6424 = vmatprep.subr.mxu0 0.0
    %6425 = vmatpush2.msra.mxu0 0.0
    %6426 = vmatprep.subr.mxu0 0.0
    %6427 = vmatpush2.msra.mxu0 0.0
    %6428 = vmatprep.subr.mxu0 0.0
    %6429 = vmatpush2.msra.mxu0 0.0
    %6430 = vmatprep.subr.mxu0 0.0
    %6431 = vmatpush2.msra.mxu0 0.0
    %6432 = vmatprep.subr.mxu0 0.0
    %6433 = vmatpush2.msra.mxu0 0.0
    %6434 = vmatprep.subr.mxu0 0.0
    %6435 = vmatpush2.msra.mxu0 0.0
    %6436 = vmatprep.subr.mxu0 0.0
    %6437 = vmatpush2.msra.mxu0 0.0
    %6438 = vmatprep.mubr.f32.mxu0 0.0
    %v6439 = vand.u32 %v6215, 4294901760
    %v6440 = vsub.f32 %v6215, %v6439
    %6441 = vmatmul.mubr.f32.gmra.mxu0 %v6440
    %v6442 = vpop.f32.mrf.mxu0
    %v6443 = vadd.f32 %v6369, %v6442
    %v6444 = vpop.f32.mrf.mxu0
    %6445 = vdwg.mxu0
    %6446 = vmatprep.subr.mxu0 0.0
    %6447 = vmatpush1.msra.mxu0 0.0
    %6448 = vmatprep.subr.mxu0 0.0
    %6449 = vmatpush1.msra.mxu0 0.0
    %6450 = vmatprep.subr.mxu0 0.0
    %6451 = vmatpush1.msra.mxu0 0.0
    %6452 = vmatprep.subr.mxu0 0.0
    %6453 = vmatpush1.msra.mxu0 0.0
    %6454 = vmatprep.subr.mxu0 0.0
    %6455 = vmatpush1.msra.mxu0 0.0
    %6456 = vmatprep.subr.mxu0 0.0
    %6457 = vmatpush1.msra.mxu0 0.0
    %6458 = vmatprep.subr.mxu0 0.0
    %6459 = vmatpush1.msra.mxu0 0.0
    %6460 = vmatprep.subr.mxu0 0.0
    %6461 = vmatpush1.msra.mxu0 0.0
    %6462 = vmatprep.subr.mxu0 0.0
    %6463 = vmatpush1.msra.mxu0 0.0
    %6464 = vmatprep.subr.mxu0 0.0
    %6465 = vmatpush1.msra.mxu0 0.0
    %6466 = vmatprep.subr.mxu0 0.0
    %6467 = vmatpush1.msra.mxu0 0.0
    %6468 = vmatprep.subr.mxu0 0.0
    %6469 = vmatpush1.msra.mxu0 0.0
    %6470 = vmatprep.subr.mxu0 0.0
    %6471 = vmatpush1.msra.mxu0 0.0
    %6472 = vmatprep.subr.mxu0 0.0
    %6473 = vmatpush1.msra.mxu0 0.0
    %6474 = vmatprep.subr.mxu0 0.0
    %6475 = vmatpush1.msra.mxu0 0.0
    %6476 = vmatprep.subr.mxu0 0.0
    %v6477 = vand.u32 %v6218, 4294901760
    %6478 = vmatpush1.msra.mxu0 %v6477
    %6479 = vmatprep.subr.mxu0 0.0
    %6480 = vmatpush2.msra.mxu0 0.0
    %6481 = vmatprep.subr.mxu0 0.0
    %6482 = vmatpush2.msra.mxu0 0.0
    %6483 = vmatprep.subr.mxu0 0.0
    %6484 = vmatpush2.msra.mxu0 0.0
    %6485 = vmatprep.subr.mxu0 0.0
    %6486 = vmatpush2.msra.mxu0 0.0
    %6487 = vmatprep.subr.mxu0 0.0
    %6488 = vmatpush2.msra.mxu0 0.0
    %6489 = vmatprep.subr.mxu0 0.0
    %6490 = vmatpush2.msra.mxu0 0.0
    %6491 = vmatprep.subr.mxu0 0.0
    %6492 = vmatpush2.msra.mxu0 0.0
    %6493 = vmatprep.subr.mxu0 0.0
    %6494 = vmatpush2.msra.mxu0 0.0
    %6495 = vmatprep.subr.mxu0 0.0
    %6496 = vmatpush2.msra.mxu0 0.0
    %6497 = vmatprep.subr.mxu0 0.0
    %6498 = vmatpush2.msra.mxu0 0.0
    %6499 = vmatprep.subr.mxu0 0.0
    %6500 = vmatpush2.msra.mxu0 0.0
    %6501 = vmatprep.subr.mxu0 0.0
    %6502 = vmatpush2.msra.mxu0 0.0
    %6503 = vmatprep.subr.mxu0 0.0
    %6504 = vmatpush2.msra.mxu0 0.0
    %6505 = vmatprep.subr.mxu0 0.0
    %6506 = vmatpush2.msra.mxu0 0.0
    %6507 = vmatprep.subr.mxu0 0.0
    %6508 = vmatpush2.msra.mxu0 0.0
    %6509 = vmatprep.subr.mxu0 0.0
    %6510 = vmatpush2.msra.mxu0 0.0
    %6511 = vmatprep.mubr.f32.mxu0 0.0
    %v6512 = vand.u32 %v6215, 4294901760
    %v6513 = vsub.f32 %v6215, %v6512
    %v6514 = vand.u32 %v6513, 4294901760
    %6515 = vmatmul.mubr.f32.gmra.mxu0 %v6514
    %v6516 = vpop.f32.mrf.mxu0
    %v6517 = vadd.f32 %v6443, %v6516
    %v6518 = vpop.f32.mrf.mxu0
    %6519 = vdwg.mxu0
    %6520 = vmatprep.subr.mxu0 0.0
    %6521 = vmatpush1.msra.mxu0 0.0
    %6522 = vmatprep.subr.mxu0 0.0
    %6523 = vmatpush1.msra.mxu0 0.0
    %6524 = vmatprep.subr.mxu0 0.0
    %6525 = vmatpush1.msra.mxu0 0.0
    %6526 = vmatprep.subr.mxu0 0.0
    %6527 = vmatpush1.msra.mxu0 0.0
    %6528 = vmatprep.subr.mxu0 0.0
    %6529 = vmatpush1.msra.mxu0 0.0
    %6530 = vmatprep.subr.mxu0 0.0
    %6531 = vmatpush1.msra.mxu0 0.0
    %6532 = vmatprep.subr.mxu0 0.0
    %6533 = vmatpush1.msra.mxu0 0.0
    %6534 = vmatprep.subr.mxu0 0.0
    %6535 = vmatpush1.msra.mxu0 0.0
    %6536 = vmatprep.subr.mxu0 0.0
    %6537 = vmatpush1.msra.mxu0 0.0
    %6538 = vmatprep.subr.mxu0 0.0
    %6539 = vmatpush1.msra.mxu0 0.0
    %6540 = vmatprep.subr.mxu0 0.0
    %6541 = vmatpush1.msra.mxu0 0.0
    %6542 = vmatprep.subr.mxu0 0.0
    %6543 = vmatpush1.msra.mxu0 0.0
    %6544 = vmatprep.subr.mxu0 0.0
    %6545 = vmatpush1.msra.mxu0 0.0
    %6546 = vmatprep.subr.mxu0 0.0
    %6547 = vmatpush1.msra.mxu0 0.0
    %6548 = vmatprep.subr.mxu0 0.0
    %6549 = vmatpush1.msra.mxu0 0.0
    %6550 = vmatprep.subr.mxu0 0.0
    %v6551 = vand.u32 %v6218, 4294901760
    %v6552 = vsub.f32 %v6218, %v6551
    %v6553 = vand.u32 %v6552, 4294901760
    %6554 = vmatpush1.msra.mxu0 %v6553
    %6555 = vmatprep.subr.mxu0 0.0
    %6556 = vmatpush2.msra.mxu0 0.0
    %6557 = vmatprep.subr.mxu0 0.0
    %6558 = vmatpush2.msra.mxu0 0.0
    %6559 = vmatprep.subr.mxu0 0.0
    %6560 = vmatpush2.msra.mxu0 0.0
    %6561 = vmatprep.subr.mxu0 0.0
    %6562 = vmatpush2.msra.mxu0 0.0
    %6563 = vmatprep.subr.mxu0 0.0
    %6564 = vmatpush2.msra.mxu0 0.0
    %6565 = vmatprep.subr.mxu0 0.0
    %6566 = vmatpush2.msra.mxu0 0.0
    %6567 = vmatprep.subr.mxu0 0.0
    %6568 = vmatpush2.msra.mxu0 0.0
    %6569 = vmatprep.subr.mxu0 0.0
    %6570 = vmatpush2.msra.mxu0 0.0
    %6571 = vmatprep.subr.mxu0 0.0
    %6572 = vmatpush2.msra.mxu0 0.0
    %6573 = vmatprep.subr.mxu0 0.0
    %6574 = vmatpush2.msra.mxu0 0.0
    %6575 = vmatprep.subr.mxu0 0.0
    %6576 = vmatpush2.msra.mxu0 0.0
    %6577 = vmatprep.subr.mxu0 0.0
    %6578 = vmatpush2.msra.mxu0 0.0
    %6579 = vmatprep.subr.mxu0 0.0
    %6580 = vmatpush2.msra.mxu0 0.0
    %6581 = vmatprep.subr.mxu0 0.0
    %6582 = vmatpush2.msra.mxu0 0.0
    %6583 = vmatprep.subr.mxu0 0.0
    %6584 = vmatpush2.msra.mxu0 0.0
    %6585 = vmatprep.subr.mxu0 0.0
    %6586 = vmatpush2.msra.mxu0 0.0
    %6587 = vmatprep.mubr.f32.mxu0 0.0
    %v6588 = vand.u32 %v6215, 4294901760
    %6589 = vmatmul.mubr.f32.gmra.mxu0 %v6588
    %v6590 = vpop.f32.mrf.mxu0
    %v6591 = vadd.f32 %v6517, %v6590
    %v6592 = vpop.f32.mrf.mxu0
    %6593 = vdwg.mxu0
    %6594 = vmatprep.subr.mxu0 0.0
    %6595 = vmatpush1.msra.mxu0 0.0
    %6596 = vmatprep.subr.mxu0 0.0
    %6597 = vmatpush1.msra.mxu0 0.0
    %6598 = vmatprep.subr.mxu0 0.0
    %6599 = vmatpush1.msra.mxu0 0.0
    %6600 = vmatprep.subr.mxu0 0.0
    %6601 = vmatpush1.msra.mxu0 0.0
    %6602 = vmatprep.subr.mxu0 0.0
    %6603 = vmatpush1.msra.mxu0 0.0
    %6604 = vmatprep.subr.mxu0 0.0
    %6605 = vmatpush1.msra.mxu0 0.0
    %6606 = vmatprep.subr.mxu0 0.0
    %6607 = vmatpush1.msra.mxu0 0.0
    %6608 = vmatprep.subr.mxu0 0.0
    %6609 = vmatpush1.msra.mxu0 0.0
    %6610 = vmatprep.subr.mxu0 0.0
    %6611 = vmatpush1.msra.mxu0 0.0
    %6612 = vmatprep.subr.mxu0 0.0
    %6613 = vmatpush1.msra.mxu0 0.0
    %6614 = vmatprep.subr.mxu0 0.0
    %6615 = vmatpush1.msra.mxu0 0.0
    %6616 = vmatprep.subr.mxu0 0.0
    %6617 = vmatpush1.msra.mxu0 0.0
    %6618 = vmatprep.subr.mxu0 0.0
    %6619 = vmatpush1.msra.mxu0 0.0
    %6620 = vmatprep.subr.mxu0 0.0
    %6621 = vmatpush1.msra.mxu0 0.0
    %6622 = vmatprep.subr.mxu0 0.0
    %6623 = vmatpush1.msra.mxu0 0.0
    %6624 = vmatprep.subr.mxu0 0.0
    %v6625 = vand.u32 %v6218, 4294901760
    %6626 = vmatpush1.msra.mxu0 %v6625
    %6627 = vmatprep.subr.mxu0 0.0
    %6628 = vmatpush2.msra.mxu0 0.0
    %6629 = vmatprep.subr.mxu0 0.0
    %6630 = vmatpush2.msra.mxu0 0.0
    %6631 = vmatprep.subr.mxu0 0.0
    %6632 = vmatpush2.msra.mxu0 0.0
    %6633 = vmatprep.subr.mxu0 0.0
    %6634 = vmatpush2.msra.mxu0 0.0
    %6635 = vmatprep.subr.mxu0 0.0
    %6636 = vmatpush2.msra.mxu0 0.0
    %6637 = vmatprep.subr.mxu0 0.0
    %6638 = vmatpush2.msra.mxu0 0.0
    %6639 = vmatprep.subr.mxu0 0.0
    %6640 = vmatpush2.msra.mxu0 0.0
    %6641 = vmatprep.subr.mxu0 0.0
    %6642 = vmatpush2.msra.mxu0 0.0
    %6643 = vmatprep.subr.mxu0 0.0
    %6644 = vmatpush2.msra.mxu0 0.0
    %6645 = vmatprep.subr.mxu0 0.0
    %6646 = vmatpush2.msra.mxu0 0.0
    %6647 = vmatprep.subr.mxu0 0.0
    %6648 = vmatpush2.msra.mxu0 0.0
    %6649 = vmatprep.subr.mxu0 0.0
    %6650 = vmatpush2.msra.mxu0 0.0
    %6651 = vmatprep.subr.mxu0 0.0
    %6652 = vmatpush2.msra.mxu0 0.0
    %6653 = vmatprep.subr.mxu0 0.0
    %6654 = vmatpush2.msra.mxu0 0.0
    %6655 = vmatprep.subr.mxu0 0.0
    %6656 = vmatpush2.msra.mxu0 0.0
    %6657 = vmatprep.subr.mxu0 0.0
    %6658 = vmatpush2.msra.mxu0 0.0
    %6659 = vmatprep.mubr.f32.mxu0 0.0
    %v6660 = vand.u32 %v6215, 4294901760
    %6661 = vmatmul.mubr.f32.gmra.mxu0 %v6660
    %v6662 = vpop.f32.mrf.mxu0
    %v6663 = vadd.f32 %v6591, %v6662
    %v6664 = vpop.f32.mrf.mxu0
    %6665 = vdwg.mxu0
    %v6666 = vmul.f32 %v6203, %v6203
    %v6667 = vsel %vm4141, %v6666, 0.0
    %6668 = vadd.xlane.f32.xlu0 %v6667
    %v6669 = vpop.xlane.xlu0 %6668
    %v6670 = vmax.f32 %v6669, 1e-24
    %v6671 = vrsqrt.pop %v6670
    %v6672 = vmul.f32 %v6203, %v6671
    %v6673 = vmul.f32 %v6672, %v6663
    %v6674 = vsel %vm4141, %v6673, 0.0
    %6675 = vadd.xlane.f32.xlu0 %v6674
    %v6676 = vpop.xlane.xlu0 %6675
    %v6677 = vsel %vm4141, %v6676, 0.0
    %v6678 = vrot.slane %v6677, 4
    %v6679 = vadd.f32 %v6677, %v6678
    %v6680 = vrot.slane %v6679, 2
    %v6681 = vadd.f32 %v6679, %v6680
    %v6682 = vrot.slane %v6681, 1
    %v6683 = vadd.f32 %v6681, %v6682
    %v6684 = vmul.f32 %v6683, 0.1
    %v6685 = vsub.f32 0.4, %v6684
    %vm6686 = vcmask 0
    %6687 = vst.msk [vmem:[#allocation7] sm:$0x1] %vm6686, %v6685
    // Predicated region
    $region30: #{byol_forward.1} parent=1 // pred_check
      _
    $region31: #{byol_forward.1} parent=1 // pred_check_branch
      %6689 = sbr.rel (0) target = $region33
    $region32: #{byol_forward.1} parent=1 // pred_region
      %s6691 = ssub.s32 16, 16
      %6692 = vsyncadd [#allocation4], %s6691
      %s6694 = sshll.u32 [#allocation7], 4
      %s6695 = int_to_ptr.vmem [resolvable:$true] %s6694
      %6697 = dma.vmem_to_hbm [thread:$0]  %s6695, 16, %s5, [#allocation4]
    $region33: #{byol_forward.1} parent=1 // pred_fallthru
      _
    // Predicated region
    $region34: #{byol_forward.1} parent=1 // pred_check
      _
    $region35: #{byol_forward.1} parent=1 // pred_check_branch
      %6699 = sbr.rel (0) target = $region37
    $region36: #{byol_forward.1} parent=1 // pred_region
      %6700 = dma.done [#allocation4], 16
    $region37: #{byol_forward.1} parent=1 // pred_fallthru
      _
    %6701 = vsyncpa [#allocation3], 1
    %6702 = vsyncpa [#allocation6], 1
    %6703 = vsyncpa [#allocation4], 1

</llo_original>
